<compile_context>
chip_gen: v6e
topology: v6e:2x2x1
jax: 0.10.0
libtpu: 0.0.40
codegen_flags: <defaults>
</compile_context>

<pallas_src>
import jax
import jax.numpy as jnp
from jax.experimental import pallas as pl
from jax.experimental.pallas import tpu as pltpu

NUM_HEADS = 2
LN_EPS = 1e-6
INV_SQRT2 = 0.7071067811865476


def _layernorm(x, g, b):
    mu = jnp.mean(x, axis=-1, keepdims=True)
    var = jnp.mean((x - mu) ** 2, axis=-1, keepdims=True)
    return (x - mu) * jax.lax.rsqrt(var + LN_EPS) * g + b


# ----------------------------------------------------------------------------
# Fused kernel: pos_embed + depth x Block + Temporal_norm + weighted_mean +
#               to_alpha + alpha-weighted frame aggregation.
# ----------------------------------------------------------------------------
def _fused_kernel(x_ref, pos_ref,
                  ln1_g, ln1_b, qkv_w, qkv_b, proj_w, proj_b,
                  ln2_g, ln2_b, fc1_w, fc1_b, fc2_w, fc2_b,
                  tn_g, tn_b, w1_ref, w2_ref, sc_ref, o_ref):
    Bb, F, C = x_ref.shape
    depth = qkv_w.shape[0]
    hd = C // NUM_HEADS
    scale = float(hd) ** -0.5
    T = Bb * F

    # pos_drop / attn_drop / proj_drop / DropPath are identity at inference.
    x = (x_ref[...] + pos_ref[...]).reshape(T, C)            # f32 residual stream

    for d in range(depth):                                   # static unroll over layers
        # ---------------- attention branch ----------------
        xn = _layernorm(x, ln1_g[d], ln1_b[d])               # (T, C) f32
        qkv = jnp.dot(xn.astype(jnp.bfloat16), qkv_w[d],
                      preferred_element_type=jnp.float32) + qkv_b[d]   # (T, 3C) f32
        qkv3 = qkv.reshape(Bb, F, 3 * C)
        pw = proj_w[d]                                       # (C, C) bf16
        attn_proj = None
        for h in range(NUM_HEADS):                           # static unroll over heads
            qh = qkv3[:, :, h * hd:(h + 1) * hd]
            kh = qkv3[:, :, C + h * hd:C + (h + 1) * hd]
            vh = qkv3[:, :, 2 * C + h * hd:2 * C + (h + 1) * hd]
            # no explicit transpose: contract the last dims of q and k
            s = jnp.einsum('bqd,bkd->bqk',
                           qh.astype(jnp.bfloat16), kh.astype(jnp.bfloat16),
                           preferred_element_type=jnp.float32) * scale
            s = s - jnp.max(s, axis=-1, keepdims=True)
            p = jnp.exp(s)
            p = p * pl.reciprocal(jnp.sum(p, axis=-1, keepdims=True), approx=True)
            oh = jnp.einsum('bqk,bkd->bqd',
                            p.astype(jnp.bfloat16), vh.astype(jnp.bfloat16),
                            preferred_element_type=jnp.float32)        # (Bb, F, hd)
            # fold this head's output straight into proj (no concatenate)
            contrib = jnp.dot(oh.reshape(T, hd).astype(jnp.bfloat16),
                              pw[h * hd:(h + 1) * hd, :],
                              preferred_element_type=jnp.float32)      # (T, C)
            attn_proj = contrib if attn_proj is None else attn_proj + contrib
        x = x + attn_proj + proj_b[d]

        # ---------------- MLP branch ----------------
        xn2 = _layernorm(x, ln2_g[d], ln2_b[d])
        h1 = jnp.dot(xn2.astype(jnp.bfloat16), fc1_w[d],
                     preferred_element_type=jnp.float32) + fc1_b[d]
        h1 = 0.5 * h1 * (1.0 + jax.lax.erf(h1 * INV_SQRT2))  # exact GELU, f32
        mlp = jnp.dot(h1.astype(jnp.bfloat16), fc2_w[d],
                      preferred_element_type=jnp.float32) + fc2_b[d]
        x = x + mlp

    # ---- Temporal_norm + weighted_mean (Conv1d k=1) + to_alpha aggregation ----
    xn = _layernorm(x, tn_g[...], tn_b[...])                 # (T, C) f32
    xn3 = xn.reshape(Bb, F, C)

    # Conv1d(F -> 1, k=1): scalar-weighted sum over the frame axis (weights in SMEM).
    x_b = jnp.zeros((Bb, C), jnp.float32)
    for f in range(F):
        x_b = x_b + sc_ref[f] * xn3[:, f, :]
    x_b = x_b + sc_ref[F]                                    # conv bias

    w1 = w1_ref[...]                                         # (1, C)
    w2 = w2_ref[...]                                         # (1, C)
    const = jnp.sum(x_b * w2, axis=-1) + sc_ref[F + 1]       # (Bb,)  to_alpha bias
    alpha = jnp.sum(xn3 * w1, axis=-1) + const[:, None]      # (Bb, F)

    num = jnp.sum(xn3 * alpha[:, :, None], axis=1)           # (Bb, C)
    den = jnp.sum(alpha, axis=1, keepdims=True)              # (Bb, 1)
    o_ref[0] = (num * pl.reciprocal(den, approx=True)).astype(o_ref.dtype)


def run_temp_transformer(x, blocks, final, pos_embed, num_programs=2):
    """x: (B', F, C) WITHOUT pos embed added; returns (B', C)."""
    Bp, F, C = x.shape
    D = len(blocks)
    H = blocks[0]["fc1_w"].shape[1]
    G = num_programs if (Bp % num_programs == 0) else 1
    Bb = Bp // G

    stack = lambda name: jnp.stack([bp[name] for bp in blocks])
    wdt = jnp.bfloat16                      # MXU-native weights, f32 accumulation
    ln1_g, ln1_b = stack("ln1_g"), stack("ln1_b")
    qkv_w, qkv_b = stack("qkv_w").astype(wdt), stack("qkv_b")
    proj_w, proj_b = stack("proj_w").astype(wdt), stack("proj_b")
    ln2_g, ln2_b = stack("ln2_g"), stack("ln2_b")
    fc1_w, fc1_b = stack("fc1_w").astype(wdt), stack("fc1_b")
    fc2_w, fc2_b = stack("fc2_w").astype(wdt), stack("fc2_b")

    scalars = jnp.concatenate([
        final["wm_w"].reshape(F),
        jnp.reshape(final["wm_b"], (1,)),
        jnp.reshape(final["ta_b"], (1,)),
    ]).astype(jnp.float32)                                   # (F + 2,) -> SMEM

    def full(shape):
        return pl.BlockSpec(shape, lambda g, _n=len(shape): (0,) * _n)

    in_specs = [
        pl.BlockSpec((Bb, F, C), lambda g: (g, 0, 0)),       # x chunk per program
        full((1, F, C)),                                     # pos embed
        full((D, 1, C)), full((D, 1, C)),
        full((D, C, 3 * C)), full((D, 1, 3 * C)),
        full((D, C, C)), full((D, 1, C)),
        full((D, 1, C)), full((D, 1, C)),
        full((D, C, H)), full((D, 1, H)),
        full((D, H, C)), full((D, 1, C)),
        full((1, C)), full((1, C)),
        full((1, C)), full((1, C)),
        pl.BlockSpec(memory_space=pltpu.MemorySpace.SMEM),
    ]
    out = pl.pallas_call(
        _fused_kernel,
        out_shape=jax.ShapeDtypeStruct((G, Bb, C), x.dtype),
        grid=(G,),
        in_specs=in_specs,
        out_specs=pl.BlockSpec((1, Bb, C), lambda g: (g, 0, 0)),
        compiler_params=pltpu.CompilerParams(
            dimension_semantics=("parallel",)),              # megacore split on v7x
    )(x, pos_embed,
      ln1_g, ln1_b, qkv_w, qkv_b, proj_w, proj_b,
      ln2_g, ln2_b, fc1_w, fc1_b, fc2_w, fc2_b,
      final["tn_g"], final["tn_b"], final["w1"], final["w2"], scalars)
    return out.reshape(Bp, C)


# ----------------------------------------------------------------------------
# Parameter init (deterministic, synthetic) & pure-JAX reference
# ----------------------------------------------------------------------------
def init_params(key, F, C, H, depth):
    ks = iter(jax.random.split(key, 64))
    nrm = lambda shape, s=0.02: s * jax.random.normal(next(ks), shape, jnp.float32)
    blocks = []
    for _ in range(depth):
        blocks.append(dict(
            ln1_g=1.0 + nrm((1, C), 0.01), ln1_b=nrm((1, C), 0.01),
            qkv_w=nrm((C, 3 * C)), qkv_b=nrm((1, 3 * C)),
            proj_w=nrm((C, C)), proj_b=nrm((1, C)),
            ln2_g=1.0 + nrm((1, C), 0.01), ln2_b=nrm((1, C), 0.01),
            fc1_w=nrm((C, H)), fc1_b=nrm((1, H)),
            fc2_w=nrm((H, C)), fc2_b=nrm((1, C)),
        ))
    final = dict(
        tn_g=1.0 + nrm((1, C), 0.01), tn_b=nrm((1, C), 0.01),
        wm_w=nrm((1, F), 0.1), wm_b=jnp.float32(0.05),
        w1=nrm((1, C)), w2=nrm((1, C)),
        ta_b=jnp.float32(1.0),    # keeps sum(alpha) away from 0
    )
    pos_embed = nrm((1, F, C))
    return blocks, final, pos_embed


def ref_block(x, p):
    B, F, C = x.shape
    hd = C // NUM_HEADS
    xn = _layernorm(x, p["ln1_g"], p["ln1_b"])
    qkv = xn @ p["qkv_w"] + p["qkv_b"]
    qkv = qkv.reshape(B, F, 3, NUM_HEADS, hd)
    q = qkv[:, :, 0].transpose(0, 2, 1, 3)
    k = qkv[:, :, 1].transpose(0, 2, 1, 3)
    v = qkv[:, :, 2].transpose(0, 2, 1, 3)
    a = jnp.einsum("bhqd,bhkd->bhqk", q, k) * (float(hd) ** -0.5)
    a = jax.nn.softmax(a, axis=-1)
    o = jnp.einsum("bhqk,bhkd->bhqd", a, v).transpose(0, 2, 1, 3).reshape(B, F, C)
    x = x + (o @ p["proj_w"] + p["proj_b"])
    xn2 = _layernorm(x, p["ln2_g"], p["ln2_b"])
    h = xn2 @ p["fc1_w"] + p["fc1_b"]
    h = 0.5 * h * (1.0 + jax.lax.erf(h * INV_SQRT2))
    return x + (h @ p["fc2_w"] + p["fc2_b"])


def ref_final(x, p):
    xn = _layernorm(x, p["tn_g"], p["tn_b"])
    x_b = jnp.einsum("f,bfc->bc", p["wm_w"][0], xn) + p["wm_b"]
    alpha = (jnp.einsum("bfc,c->bf", xn, p["w1"][0])
             + (jnp.einsum("bc,c->b", x_b, p["w2"][0]) + p["ta_b"])[:, None])
    num = jnp.einsum("bf,bfc->bc", alpha, xn)
    den = jnp.sum(alpha, axis=1, keepdims=True)
    return num / den


def temp_transformer_forward(x_bfpc, blocks, final, pos_embed, use_kernel=True):
    b, f, p, c = x_bfpc.shape
    x = jnp.transpose(x_bfpc, (0, 2, 1, 3)).reshape(b * p, f, c)   # (b p) f c
    if use_kernel:
        return run_temp_transformer(x, blocks, final, pos_embed)
    x = x + pos_embed                                              # pos_drop = id
    for bp in blocks:
        x = ref_block(x, bp)
    return ref_final(x, final)


if __name__ == "__main__":
    # small shapes: batch=2, num_frame=8, num_joints=3, embed_dim_ratio=256
    # (embed_dim_ratio kept at 256 because Block hardcodes norm1 = LayerNorm(256))
    b, f, p, c = 2, 8, 3, 256
    depth, mlp_ratio = 2, 2.0
    H = int(c * mlp_ratio)

    key = jax.random.PRNGKey(0)
    k_param, k_x = jax.random.split(key)
    blocks, final, pos_embed = init_params(k_param, f, c, H, depth)
    x = jax.random.normal(k_x, (b, f, p, c), jnp.float32)

    out = temp_transformer_forward(x, blocks, final, pos_embed, use_kernel=True)
    out = jax.block_until_ready(out)

    ref = temp_transformer_forward(x, blocks, final, pos_embed, use_kernel=False)
    ref = jax.block_until_ready(ref)

    assert out.shape == (b * p, c), out.shape
    assert not bool(jnp.any(jnp.isnan(out)))
    assert bool(jnp.allclose(out, ref, rtol=2e-2, atol=2e-2)), (
        float(jnp.max(jnp.abs(out - ref))))
    print("KERNEL_OK")
</pallas_src>

<mosaic_0001>
module attributes {stable_mosaic.version = 11 : i64} {
  func.func @_fused_kernel(%arg0: i32, %arg1: memref<3x8x256xf32, #tpu.memory_space<vmem>>, %arg2: memref<1x8x256xf32, #tpu.memory_space<vmem>>, %arg3: memref<2x1x256xf32, #tpu.memory_space<vmem>>, %arg4: memref<2x1x256xf32, #tpu.memory_space<vmem>>, %arg5: memref<2x256x768xbf16, #tpu.memory_space<vmem>>, %arg6: memref<2x1x768xf32, #tpu.memory_space<vmem>>, %arg7: memref<2x256x256xbf16, #tpu.memory_space<vmem>>, %arg8: memref<2x1x256xf32, #tpu.memory_space<vmem>>, %arg9: memref<2x1x256xf32, #tpu.memory_space<vmem>>, %arg10: memref<2x1x256xf32, #tpu.memory_space<vmem>>, %arg11: memref<2x256x512xbf16, #tpu.memory_space<vmem>>, %arg12: memref<2x1x512xf32, #tpu.memory_space<vmem>>, %arg13: memref<2x512x256xbf16, #tpu.memory_space<vmem>>, %arg14: memref<2x1x256xf32, #tpu.memory_space<vmem>>, %arg15: memref<1x256xf32, #tpu.memory_space<vmem>>, %arg16: memref<1x256xf32, #tpu.memory_space<vmem>>, %arg17: memref<1x256xf32, #tpu.memory_space<vmem>>, %arg18: memref<1x256xf32, #tpu.memory_space<vmem>>, %arg19: memref<10xf32, #tpu.memory_space<smem>>, %arg20: memref<1x3x256xf32, #tpu.memory_space<vmem>>) attributes {dimension_semantics = [#tpu.dimension_semantics<parallel>], iteration_bounds = array<i64: 2>, scalar_prefetch = 0 : i64, scratch_operands = 0 : i64, tpu.core_type = #tpu.core_type<tc>, window_params = [{transform_indices = @transform_0, window_bounds = array<i64: 3, 8, 256>}, {pipeline_mode = #tpu.pipeline_mode<synchronous>, transform_indices = @transform_1, window_bounds = array<i64: 1, 8, 256>}, {pipeline_mode = #tpu.pipeline_mode<synchronous>, transform_indices = @transform_2, window_bounds = array<i64: 2, 1, 256>}, {pipeline_mode = #tpu.pipeline_mode<synchronous>, transform_indices = @transform_3, window_bounds = array<i64: 2, 1, 256>}, {pipeline_mode = #tpu.pipeline_mode<synchronous>, transform_indices = @transform_4, window_bounds = array<i64: 2, 256, 768>}, {pipeline_mode = #tpu.pipeline_mode<synchronous>, transform_indices = @transform_5, window_bounds = array<i64: 2, 1, 768>}, {pipeline_mode = #tpu.pipeline_mode<synchronous>, transform_indices = @transform_6, window_bounds = array<i64: 2, 256, 256>}, {pipeline_mode = #tpu.pipeline_mode<synchronous>, transform_indices = @transform_7, window_bounds = array<i64: 2, 1, 256>}, {pipeline_mode = #tpu.pipeline_mode<synchronous>, transform_indices = @transform_8, window_bounds = array<i64: 2, 1, 256>}, {pipeline_mode = #tpu.pipeline_mode<synchronous>, transform_indices = @transform_9, window_bounds = array<i64: 2, 1, 256>}, {pipeline_mode = #tpu.pipeline_mode<synchronous>, transform_indices = @transform_10, window_bounds = array<i64: 2, 256, 512>}, {pipeline_mode = #tpu.pipeline_mode<synchronous>, transform_indices = @transform_11, window_bounds = array<i64: 2, 1, 512>}, {pipeline_mode = #tpu.pipeline_mode<synchronous>, transform_indices = @transform_12, window_bounds = array<i64: 2, 512, 256>}, {pipeline_mode = #tpu.pipeline_mode<synchronous>, transform_indices = @transform_13, window_bounds = array<i64: 2, 1, 256>}, {pipeline_mode = #tpu.pipeline_mode<synchronous>, transform_indices = @transform_14, window_bounds = array<i64: 1, 256>}, {pipeline_mode = #tpu.pipeline_mode<synchronous>, transform_indices = @transform_15, window_bounds = array<i64: 1, 256>}, {pipeline_mode = #tpu.pipeline_mode<synchronous>, transform_indices = @transform_16, window_bounds = array<i64: 1, 256>}, {pipeline_mode = #tpu.pipeline_mode<synchronous>, transform_indices = @transform_17, window_bounds = array<i64: 1, 256>}, {transform_indices = @transform_18, window_bounds = array<i64: 10>}, {transform_indices = @transform_19, window_bounds = array<i64: 1, 3, 256>}]} {
    %c0 = arith.constant 0 : index
    %c0_0 = arith.constant 0 : index
    %c0_1 = arith.constant 0 : index
    %0 = vector.load %arg1[%c0, %c0_0, %c0_1] : memref<3x8x256xf32, #tpu.memory_space<vmem>>, vector<3x8x256xf32>
    %c0_2 = arith.constant 0 : index
    %c0_3 = arith.constant 0 : index
    %c0_4 = arith.constant 0 : index
    %1 = vector.load %arg2[%c0_2, %c0_3, %c0_4] : memref<1x8x256xf32, #tpu.memory_space<vmem>>, vector<1x8x256xf32>
    %2 = vector.broadcast %1 : vector<1x8x256xf32> to vector<3x8x256xf32>
    %3 = arith.addf %0, %2 : vector<3x8x256xf32>
    %4 = vector.shape_cast %3 : vector<3x8x256xf32> to vector<24x256xf32>
    %c0_5 = arith.constant 0 : index
    %c0_6 = arith.constant 0 : index
    %c0_7 = arith.constant 0 : index
    %5 = vector.load %arg3[%c0_5, %c0_6, %c0_7] : memref<2x1x256xf32, #tpu.memory_space<vmem>>, vector<1x1x256xf32>
    %6 = vector.shape_cast %5 : vector<1x1x256xf32> to vector<1x256xf32>
    %c0_8 = arith.constant 0 : index
    %c0_9 = arith.constant 0 : index
    %c0_10 = arith.constant 0 : index
    %7 = vector.load %arg4[%c0_8, %c0_9, %c0_10] : memref<2x1x256xf32, #tpu.memory_space<vmem>>, vector<1x1x256xf32>
    %8 = vector.shape_cast %7 : vector<1x1x256xf32> to vector<1x256xf32>
    %cst = arith.constant dense<0.000000e+00> : vector<24xf32>
    %9 = vector.multi_reduction <add>, %4, %cst [1] : vector<24x256xf32> to vector<24xf32>
    %10 = vector.shape_cast %9 : vector<24xf32> to vector<24x1xf32>
    %cst_11 = arith.constant 2.560000e+02 : f32
    %11 = vector.broadcast %cst_11 : f32 to vector<24x1xf32>
    %12 = arith.divf %10, %11 : vector<24x1xf32>
    %13 = vector.broadcast %12 : vector<24x1xf32> to vector<24x256xf32>
    %14 = arith.subf %4, %13 : vector<24x256xf32>
    %15 = arith.mulf %14, %14 : vector<24x256xf32>
    %cst_12 = arith.constant dense<0.000000e+00> : vector<24xf32>
    %16 = vector.multi_reduction <add>, %15, %cst_12 [1] : vector<24x256xf32> to vector<24xf32>
    %17 = vector.shape_cast %16 : vector<24xf32> to vector<24x1xf32>
    %cst_13 = arith.constant 2.560000e+02 : f32
    %18 = vector.broadcast %cst_13 : f32 to vector<24x1xf32>
    %19 = arith.divf %17, %18 : vector<24x1xf32>
    %20 = vector.broadcast %12 : vector<24x1xf32> to vector<24x256xf32>
    %21 = arith.subf %4, %20 : vector<24x256xf32>
    %cst_14 = arith.constant 9.99999997E-7 : f32
    %22 = vector.broadcast %cst_14 : f32 to vector<24x1xf32>
    %23 = arith.addf %19, %22 : vector<24x1xf32>
    %24 = math.rsqrt %23 : vector<24x1xf32>
    %25 = vector.broadcast %24 : vector<24x1xf32> to vector<24x256xf32>
    %26 = arith.mulf %21, %25 : vector<24x256xf32>
    %27 = vector.broadcast %6 : vector<1x256xf32> to vector<24x256xf32>
    %28 = arith.mulf %26, %27 : vector<24x256xf32>
    %29 = vector.broadcast %8 : vector<1x256xf32> to vector<24x256xf32>
    %30 = arith.addf %28, %29 : vector<24x256xf32>
    %31 = arith.truncf %30 : vector<24x256xf32> to vector<24x256xbf16>
    %c0_15 = arith.constant 0 : index
    %c0_16 = arith.constant 0 : index
    %c0_17 = arith.constant 0 : index
    %32 = vector.load %arg5[%c0_15, %c0_16, %c0_17] : memref<2x256x768xbf16, #tpu.memory_space<vmem>>, vector<1x256x768xbf16>
    %33 = vector.shape_cast %32 : vector<1x256x768xbf16> to vector<256x768xbf16>
    %cst_18 = arith.constant dense<0.000000e+00> : vector<24x768xf32>
    %34 = tpu.matmul %31, %33, %cst_18 {dimension_numbers = #tpu.dot_dimension_numbers<[1], [0], [0], [1], [0, 0, 1, 1], [], []>} : vector<24x256xbf16>, vector<256x768xbf16>, vector<24x768xf32> -> vector<24x768xf32>
    %c0_19 = arith.constant 0 : index
    %c0_20 = arith.constant 0 : index
    %c0_21 = arith.constant 0 : index
    %35 = vector.load %arg6[%c0_19, %c0_20, %c0_21] : memref<2x1x768xf32, #tpu.memory_space<vmem>>, vector<1x1x768xf32>
    %36 = vector.shape_cast %35 : vector<1x1x768xf32> to vector<1x768xf32>
    %37 = vector.broadcast %36 : vector<1x768xf32> to vector<24x768xf32>
    %38 = arith.addf %34, %37 : vector<24x768xf32>
    %39 = vector.shape_cast %38 : vector<24x768xf32> to vector<3x8x768xf32>
    %c0_22 = arith.constant 0 : index
    %c0_23 = arith.constant 0 : index
    %c0_24 = arith.constant 0 : index
    %40 = vector.load %arg7[%c0_22, %c0_23, %c0_24] : memref<2x256x256xbf16, #tpu.memory_space<vmem>>, vector<1x256x256xbf16>
    %41 = vector.shape_cast %40 : vector<1x256x256xbf16> to vector<256x256xbf16>
    %42 = vector.extract_strided_slice %39 {offsets = [0, 0, 0], sizes = [3, 8, 128], strides = [1, 1, 1]} : vector<3x8x768xf32> to vector<3x8x128xf32>
    %43 = vector.extract_strided_slice %39 {offsets = [0, 0, 256], sizes = [3, 8, 128], strides = [1, 1, 1]} : vector<3x8x768xf32> to vector<3x8x128xf32>
    %44 = vector.extract_strided_slice %39 {offsets = [0, 0, 512], sizes = [3, 8, 128], strides = [1, 1, 1]} : vector<3x8x768xf32> to vector<3x8x128xf32>
    %45 = arith.truncf %42 : vector<3x8x128xf32> to vector<3x8x128xbf16>
    %46 = arith.truncf %43 : vector<3x8x128xf32> to vector<3x8x128xbf16>
    "tpu.trace_start"() <{level = 10 : i32, message = "bqd,bkd->bqk"}> : () -> ()
    %cst_25 = arith.constant dense<0.000000e+00> : vector<3x8x8xf32>
    %47 = tpu.matmul %45, %46, %cst_25 {dimension_numbers = #tpu.dot_dimension_numbers<[2], [2], [1], [1], [0, 0, 0, 1, 1, 1], [0], [0]>} : vector<3x8x128xbf16>, vector<3x8x128xbf16>, vector<3x8x8xf32> -> vector<3x8x8xf32>
    "tpu.trace_stop"() : () -> ()
    %cst_26 = arith.constant 0.0883883461 : f32
    %48 = vector.broadcast %cst_26 : f32 to vector<3x8x8xf32>
    %49 = arith.mulf %47, %48 : vector<3x8x8xf32>
    %cst_27 = arith.constant dense<0xFF800000> : vector<3x8xf32>
    %50 = vector.multi_reduction <maximumf>, %49, %cst_27 [2] : vector<3x8x8xf32> to vector<3x8xf32>
    %51 = vector.shape_cast %50 : vector<3x8xf32> to vector<3x8x1xf32>
    %52 = vector.broadcast %51 : vector<3x8x1xf32> to vector<3x8x8xf32>
    %53 = arith.subf %49, %52 : vector<3x8x8xf32>
    %54 = math.exp %53 : vector<3x8x8xf32>
    %cst_28 = arith.constant dense<0.000000e+00> : vector<3x8xf32>
    %55 = vector.multi_reduction <add>, %54, %cst_28 [2] : vector<3x8x8xf32> to vector<3x8xf32>
    %56 = vector.shape_cast %55 : vector<3x8xf32> to vector<3x8x1xf32>
    %57 = tpu.reciprocal %56 {approx = true} : vector<3x8x1xf32> -> vector<3x8x1xf32>
    %58 = vector.broadcast %57 : vector<3x8x1xf32> to vector<3x8x8xf32>
    %59 = arith.mulf %54, %58 : vector<3x8x8xf32>
    %60 = arith.truncf %59 : vector<3x8x8xf32> to vector<3x8x8xbf16>
    %61 = arith.truncf %44 : vector<3x8x128xf32> to vector<3x8x128xbf16>
    "tpu.trace_start"() <{level = 10 : i32, message = "bqk,bkd->bqd"}> : () -> ()
    %cst_29 = arith.constant dense<0.000000e+00> : vector<3x8x128xf32>
    %62 = tpu.matmul %60, %61, %cst_29 {dimension_numbers = #tpu.dot_dimension_numbers<[2], [1], [1], [2], [0, 0, 0, 1, 1, 2], [0], [0]>} : vector<3x8x8xbf16>, vector<3x8x128xbf16>, vector<3x8x128xf32> -> vector<3x8x128xf32>
    "tpu.trace_stop"() : () -> ()
    %63 = vector.shape_cast %62 : vector<3x8x128xf32> to vector<24x128xf32>
    %64 = arith.truncf %63 : vector<24x128xf32> to vector<24x128xbf16>
    %65 = vector.extract_strided_slice %41 {offsets = [0, 0], sizes = [128, 256], strides = [1, 1]} : vector<256x256xbf16> to vector<128x256xbf16>
    %cst_30 = arith.constant dense<0.000000e+00> : vector<24x256xf32>
    %66 = tpu.matmul %64, %65, %cst_30 {dimension_numbers = #tpu.dot_dimension_numbers<[1], [0], [0], [1], [0, 0, 1, 1], [], []>} : vector<24x128xbf16>, vector<128x256xbf16>, vector<24x256xf32> -> vector<24x256xf32>
    %67 = vector.extract_strided_slice %39 {offsets = [0, 0, 128], sizes = [3, 8, 128], strides = [1, 1, 1]} : vector<3x8x768xf32> to vector<3x8x128xf32>
    %68 = vector.extract_strided_slice %39 {offsets = [0, 0, 384], sizes = [3, 8, 128], strides = [1, 1, 1]} : vector<3x8x768xf32> to vector<3x8x128xf32>
    %69 = vector.extract_strided_slice %39 {offsets = [0, 0, 640], sizes = [3, 8, 128], strides = [1, 1, 1]} : vector<3x8x768xf32> to vector<3x8x128xf32>
    %70 = arith.truncf %67 : vector<3x8x128xf32> to vector<3x8x128xbf16>
    %71 = arith.truncf %68 : vector<3x8x128xf32> to vector<3x8x128xbf16>
    "tpu.trace_start"() <{level = 10 : i32, message = "bqd,bkd->bqk"}> : () -> ()
    %cst_31 = arith.constant dense<0.000000e+00> : vector<3x8x8xf32>
    %72 = tpu.matmul %70, %71, %cst_31 {dimension_numbers = #tpu.dot_dimension_numbers<[2], [2], [1], [1], [0, 0, 0, 1, 1, 1], [0], [0]>} : vector<3x8x128xbf16>, vector<3x8x128xbf16>, vector<3x8x8xf32> -> vector<3x8x8xf32>
    "tpu.trace_stop"() : () -> ()
    %cst_32 = arith.constant 0.0883883461 : f32
    %73 = vector.broadcast %cst_32 : f32 to vector<3x8x8xf32>
    %74 = arith.mulf %72, %73 : vector<3x8x8xf32>
    %cst_33 = arith.constant dense<0xFF800000> : vector<3x8xf32>
    %75 = vector.multi_reduction <maximumf>, %74, %cst_33 [2] : vector<3x8x8xf32> to vector<3x8xf32>
    %76 = vector.shape_cast %75 : vector<3x8xf32> to vector<3x8x1xf32>
    %77 = vector.broadcast %76 : vector<3x8x1xf32> to vector<3x8x8xf32>
    %78 = arith.subf %74, %77 : vector<3x8x8xf32>
    %79 = math.exp %78 : vector<3x8x8xf32>
    %cst_34 = arith.constant dense<0.000000e+00> : vector<3x8xf32>
    %80 = vector.multi_reduction <add>, %79, %cst_34 [2] : vector<3x8x8xf32> to vector<3x8xf32>
    %81 = vector.shape_cast %80 : vector<3x8xf32> to vector<3x8x1xf32>
    %82 = tpu.reciprocal %81 {approx = true} : vector<3x8x1xf32> -> vector<3x8x1xf32>
    %83 = vector.broadcast %82 : vector<3x8x1xf32> to vector<3x8x8xf32>
    %84 = arith.mulf %79, %83 : vector<3x8x8xf32>
    %85 = arith.truncf %84 : vector<3x8x8xf32> to vector<3x8x8xbf16>
    %86 = arith.truncf %69 : vector<3x8x128xf32> to vector<3x8x128xbf16>
    "tpu.trace_start"() <{level = 10 : i32, message = "bqk,bkd->bqd"}> : () -> ()
    %cst_35 = arith.constant dense<0.000000e+00> : vector<3x8x128xf32>
    %87 = tpu.matmul %85, %86, %cst_35 {dimension_numbers = #tpu.dot_dimension_numbers<[2], [1], [1], [2], [0, 0, 0, 1, 1, 2], [0], [0]>} : vector<3x8x8xbf16>, vector<3x8x128xbf16>, vector<3x8x128xf32> -> vector<3x8x128xf32>
    "tpu.trace_stop"() : () -> ()
    %88 = vector.shape_cast %87 : vector<3x8x128xf32> to vector<24x128xf32>
    %89 = arith.truncf %88 : vector<24x128xf32> to vector<24x128xbf16>
    %90 = vector.extract_strided_slice %41 {offsets = [128, 0], sizes = [128, 256], strides = [1, 1]} : vector<256x256xbf16> to vector<128x256xbf16>
    %cst_36 = arith.constant dense<0.000000e+00> : vector<24x256xf32>
    %91 = tpu.matmul %89, %90, %cst_36 {dimension_numbers = #tpu.dot_dimension_numbers<[1], [0], [0], [1], [0, 0, 1, 1], [], []>} : vector<24x128xbf16>, vector<128x256xbf16>, vector<24x256xf32> -> vector<24x256xf32>
    %92 = arith.addf %66, %91 : vector<24x256xf32>
    %93 = arith.addf %4, %92 : vector<24x256xf32>
    %c0_37 = arith.constant 0 : index
    %c0_38 = arith.constant 0 : index
    %c0_39 = arith.constant 0 : index
    %94 = vector.load %arg8[%c0_37, %c0_38, %c0_39] : memref<2x1x256xf32, #tpu.memory_space<vmem>>, vector<1x1x256xf32>
    %95 = vector.shape_cast %94 : vector<1x1x256xf32> to vector<1x256xf32>
    %96 = vector.broadcast %95 : vector<1x256xf32> to vector<24x256xf32>
    %97 = arith.addf %93, %96 : vector<24x256xf32>
    %c0_40 = arith.constant 0 : index
    %c0_41 = arith.constant 0 : index
    %c0_42 = arith.constant 0 : index
    %98 = vector.load %arg9[%c0_40, %c0_41, %c0_42] : memref<2x1x256xf32, #tpu.memory_space<vmem>>, vector<1x1x256xf32>
    %99 = vector.shape_cast %98 : vector<1x1x256xf32> to vector<1x256xf32>
    %c0_43 = arith.constant 0 : index
    %c0_44 = arith.constant 0 : index
    %c0_45 = arith.constant 0 : index
    %100 = vector.load %arg10[%c0_43, %c0_44, %c0_45] : memref<2x1x256xf32, #tpu.memory_space<vmem>>, vector<1x1x256xf32>
    %101 = vector.shape_cast %100 : vector<1x1x256xf32> to vector<1x256xf32>
    %cst_46 = arith.constant dense<0.000000e+00> : vector<24xf32>
    %102 = vector.multi_reduction <add>, %97, %cst_46 [1] : vector<24x256xf32> to vector<24xf32>
    %103 = vector.shape_cast %102 : vector<24xf32> to vector<24x1xf32>
    %cst_47 = arith.constant 2.560000e+02 : f32
    %104 = vector.broadcast %cst_47 : f32 to vector<24x1xf32>
    %105 = arith.divf %103, %104 : vector<24x1xf32>
    %106 = vector.broadcast %105 : vector<24x1xf32> to vector<24x256xf32>
    %107 = arith.subf %97, %106 : vector<24x256xf32>
    %108 = arith.mulf %107, %107 : vector<24x256xf32>
    %cst_48 = arith.constant dense<0.000000e+00> : vector<24xf32>
    %109 = vector.multi_reduction <add>, %108, %cst_48 [1] : vector<24x256xf32> to vector<24xf32>
    %110 = vector.shape_cast %109 : vector<24xf32> to vector<24x1xf32>
    %cst_49 = arith.constant 2.560000e+02 : f32
    %111 = vector.broadcast %cst_49 : f32 to vector<24x1xf32>
    %112 = arith.divf %110, %111 : vector<24x1xf32>
    %113 = vector.broadcast %105 : vector<24x1xf32> to vector<24x256xf32>
    %114 = arith.subf %97, %113 : vector<24x256xf32>
    %cst_50 = arith.constant 9.99999997E-7 : f32
    %115 = vector.broadcast %cst_50 : f32 to vector<24x1xf32>
    %116 = arith.addf %112, %115 : vector<24x1xf32>
    %117 = math.rsqrt %116 : vector<24x1xf32>
    %118 = vector.broadcast %117 : vector<24x1xf32> to vector<24x256xf32>
    %119 = arith.mulf %114, %118 : vector<24x256xf32>
    %120 = vector.broadcast %99 : vector<1x256xf32> to vector<24x256xf32>
    %121 = arith.mulf %119, %120 : vector<24x256xf32>
    %122 = vector.broadcast %101 : vector<1x256xf32> to vector<24x256xf32>
    %123 = arith.addf %121, %122 : vector<24x256xf32>
    %124 = arith.truncf %123 : vector<24x256xf32> to vector<24x256xbf16>
    %c0_51 = arith.constant 0 : index
    %c0_52 = arith.constant 0 : index
    %c0_53 = arith.constant 0 : index
    %125 = vector.load %arg11[%c0_51, %c0_52, %c0_53] : memref<2x256x512xbf16, #tpu.memory_space<vmem>>, vector<1x256x512xbf16>
    %126 = vector.shape_cast %125 : vector<1x256x512xbf16> to vector<256x512xbf16>
    %cst_54 = arith.constant dense<0.000000e+00> : vector<24x512xf32>
    %127 = tpu.matmul %124, %126, %cst_54 {dimension_numbers = #tpu.dot_dimension_numbers<[1], [0], [0], [1], [0, 0, 1, 1], [], []>} : vector<24x256xbf16>, vector<256x512xbf16>, vector<24x512xf32> -> vector<24x512xf32>
    %c0_55 = arith.constant 0 : index
    %c0_56 = arith.constant 0 : index
    %c0_57 = arith.constant 0 : index
    %128 = vector.load %arg12[%c0_55, %c0_56, %c0_57] : memref<2x1x512xf32, #tpu.memory_space<vmem>>, vector<1x1x512xf32>
    %129 = vector.shape_cast %128 : vector<1x1x512xf32> to vector<1x512xf32>
    %130 = vector.broadcast %129 : vector<1x512xf32> to vector<24x512xf32>
    %131 = arith.addf %127, %130 : vector<24x512xf32>
    %cst_58 = arith.constant 5.000000e-01 : f32
    %132 = vector.broadcast %cst_58 : f32 to vector<24x512xf32>
    %133 = arith.mulf %132, %131 : vector<24x512xf32>
    %cst_59 = arith.constant 0.707106769 : f32
    %134 = vector.broadcast %cst_59 : f32 to vector<24x512xf32>
    %135 = arith.mulf %131, %134 : vector<24x512xf32>
    %136 = math.erf %135 : vector<24x512xf32>
    %cst_60 = arith.constant 1.000000e+00 : f32
    %137 = vector.broadcast %cst_60 : f32 to vector<24x512xf32>
    %138 = arith.addf %137, %136 : vector<24x512xf32>
    %139 = arith.mulf %133, %138 : vector<24x512xf32>
    %140 = arith.truncf %139 : vector<24x512xf32> to vector<24x512xbf16>
    %c0_61 = arith.constant 0 : index
    %c0_62 = arith.constant 0 : index
    %c0_63 = arith.constant 0 : index
    %141 = vector.load %arg13[%c0_61, %c0_62, %c0_63] : memref<2x512x256xbf16, #tpu.memory_space<vmem>>, vector<1x512x256xbf16>
    %142 = vector.shape_cast %141 : vector<1x512x256xbf16> to vector<512x256xbf16>
    %cst_64 = arith.constant dense<0.000000e+00> : vector<24x256xf32>
    %143 = tpu.matmul %140, %142, %cst_64 {dimension_numbers = #tpu.dot_dimension_numbers<[1], [0], [0], [1], [0, 0, 1, 1], [], []>} : vector<24x512xbf16>, vector<512x256xbf16>, vector<24x256xf32> -> vector<24x256xf32>
    %c0_65 = arith.constant 0 : index
    %c0_66 = arith.constant 0 : index
    %c0_67 = arith.constant 0 : index
    %144 = vector.load %arg14[%c0_65, %c0_66, %c0_67] : memref<2x1x256xf32, #tpu.memory_space<vmem>>, vector<1x1x256xf32>
    %145 = vector.shape_cast %144 : vector<1x1x256xf32> to vector<1x256xf32>
    %146 = vector.broadcast %145 : vector<1x256xf32> to vector<24x256xf32>
    %147 = arith.addf %143, %146 : vector<24x256xf32>
    %148 = arith.addf %97, %147 : vector<24x256xf32>
    %c1 = arith.constant 1 : index
    %c0_68 = arith.constant 0 : index
    %c0_69 = arith.constant 0 : index
    %149 = vector.load %arg3[%c1, %c0_68, %c0_69] : memref<2x1x256xf32, #tpu.memory_space<vmem>>, vector<1x1x256xf32>
    %150 = vector.shape_cast %149 : vector<1x1x256xf32> to vector<1x256xf32>
    %c1_70 = arith.constant 1 : index
    %c0_71 = arith.constant 0 : index
    %c0_72 = arith.constant 0 : index
    %151 = vector.load %arg4[%c1_70, %c0_71, %c0_72] : memref<2x1x256xf32, #tpu.memory_space<vmem>>, vector<1x1x256xf32>
    %152 = vector.shape_cast %151 : vector<1x1x256xf32> to vector<1x256xf32>
    %cst_73 = arith.constant dense<0.000000e+00> : vector<24xf32>
    %153 = vector.multi_reduction <add>, %148, %cst_73 [1] : vector<24x256xf32> to vector<24xf32>
    %154 = vector.shape_cast %153 : vector<24xf32> to vector<24x1xf32>
    %cst_74 = arith.constant 2.560000e+02 : f32
    %155 = vector.broadcast %cst_74 : f32 to vector<24x1xf32>
    %156 = arith.divf %154, %155 : vector<24x1xf32>
    %157 = vector.broadcast %156 : vector<24x1xf32> to vector<24x256xf32>
    %158 = arith.subf %148, %157 : vector<24x256xf32>
    %159 = arith.mulf %158, %158 : vector<24x256xf32>
    %cst_75 = arith.constant dense<0.000000e+00> : vector<24xf32>
    %160 = vector.multi_reduction <add>, %159, %cst_75 [1] : vector<24x256xf32> to vector<24xf32>
    %161 = vector.shape_cast %160 : vector<24xf32> to vector<24x1xf32>
    %cst_76 = arith.constant 2.560000e+02 : f32
    %162 = vector.broadcast %cst_76 : f32 to vector<24x1xf32>
    %163 = arith.divf %161, %162 : vector<24x1xf32>
    %164 = vector.broadcast %156 : vector<24x1xf32> to vector<24x256xf32>
    %165 = arith.subf %148, %164 : vector<24x256xf32>
    %cst_77 = arith.constant 9.99999997E-7 : f32
    %166 = vector.broadcast %cst_77 : f32 to vector<24x1xf32>
    %167 = arith.addf %163, %166 : vector<24x1xf32>
    %168 = math.rsqrt %167 : vector<24x1xf32>
    %169 = vector.broadcast %168 : vector<24x1xf32> to vector<24x256xf32>
    %170 = arith.mulf %165, %169 : vector<24x256xf32>
    %171 = vector.broadcast %150 : vector<1x256xf32> to vector<24x256xf32>
    %172 = arith.mulf %170, %171 : vector<24x256xf32>
    %173 = vector.broadcast %152 : vector<1x256xf32> to vector<24x256xf32>
    %174 = arith.addf %172, %173 : vector<24x256xf32>
    %175 = arith.truncf %174 : vector<24x256xf32> to vector<24x256xbf16>
    %c1_78 = arith.constant 1 : index
    %c0_79 = arith.constant 0 : index
    %c0_80 = arith.constant 0 : index
    %176 = vector.load %arg5[%c1_78, %c0_79, %c0_80] : memref<2x256x768xbf16, #tpu.memory_space<vmem>>, vector<1x256x768xbf16>
    %177 = vector.shape_cast %176 : vector<1x256x768xbf16> to vector<256x768xbf16>
    %cst_81 = arith.constant dense<0.000000e+00> : vector<24x768xf32>
    %178 = tpu.matmul %175, %177, %cst_81 {dimension_numbers = #tpu.dot_dimension_numbers<[1], [0], [0], [1], [0, 0, 1, 1], [], []>} : vector<24x256xbf16>, vector<256x768xbf16>, vector<24x768xf32> -> vector<24x768xf32>
    %c1_82 = arith.constant 1 : index
    %c0_83 = arith.constant 0 : index
    %c0_84 = arith.constant 0 : index
    %179 = vector.load %arg6[%c1_82, %c0_83, %c0_84] : memref<2x1x768xf32, #tpu.memory_space<vmem>>, vector<1x1x768xf32>
    %180 = vector.shape_cast %179 : vector<1x1x768xf32> to vector<1x768xf32>
    %181 = vector.broadcast %180 : vector<1x768xf32> to vector<24x768xf32>
    %182 = arith.addf %178, %181 : vector<24x768xf32>
    %183 = vector.shape_cast %182 : vector<24x768xf32> to vector<3x8x768xf32>
    %c1_85 = arith.constant 1 : index
    %c0_86 = arith.constant 0 : index
    %c0_87 = arith.constant 0 : index
    %184 = vector.load %arg7[%c1_85, %c0_86, %c0_87] : memref<2x256x256xbf16, #tpu.memory_space<vmem>>, vector<1x256x256xbf16>
    %185 = vector.shape_cast %184 : vector<1x256x256xbf16> to vector<256x256xbf16>
    %186 = vector.extract_strided_slice %183 {offsets = [0, 0, 0], sizes = [3, 8, 128], strides = [1, 1, 1]} : vector<3x8x768xf32> to vector<3x8x128xf32>
    %187 = vector.extract_strided_slice %183 {offsets = [0, 0, 256], sizes = [3, 8, 128], strides = [1, 1, 1]} : vector<3x8x768xf32> to vector<3x8x128xf32>
    %188 = vector.extract_strided_slice %183 {offsets = [0, 0, 512], sizes = [3, 8, 128], strides = [1, 1, 1]} : vector<3x8x768xf32> to vector<3x8x128xf32>
    %189 = arith.truncf %186 : vector<3x8x128xf32> to vector<3x8x128xbf16>
    %190 = arith.truncf %187 : vector<3x8x128xf32> to vector<3x8x128xbf16>
    "tpu.trace_start"() <{level = 10 : i32, message = "bqd,bkd->bqk"}> : () -> ()
    %cst_88 = arith.constant dense<0.000000e+00> : vector<3x8x8xf32>
    %191 = tpu.matmul %189, %190, %cst_88 {dimension_numbers = #tpu.dot_dimension_numbers<[2], [2], [1], [1], [0, 0, 0, 1, 1, 1], [0], [0]>} : vector<3x8x128xbf16>, vector<3x8x128xbf16>, vector<3x8x8xf32> -> vector<3x8x8xf32>
    "tpu.trace_stop"() : () -> ()
    %cst_89 = arith.constant 0.0883883461 : f32
    %192 = vector.broadcast %cst_89 : f32 to vector<3x8x8xf32>
    %193 = arith.mulf %191, %192 : vector<3x8x8xf32>
    %cst_90 = arith.constant dense<0xFF800000> : vector<3x8xf32>
    %194 = vector.multi_reduction <maximumf>, %193, %cst_90 [2] : vector<3x8x8xf32> to vector<3x8xf32>
    %195 = vector.shape_cast %194 : vector<3x8xf32> to vector<3x8x1xf32>
    %196 = vector.broadcast %195 : vector<3x8x1xf32> to vector<3x8x8xf32>
    %197 = arith.subf %193, %196 : vector<3x8x8xf32>
    %198 = math.exp %197 : vector<3x8x8xf32>
    %cst_91 = arith.constant dense<0.000000e+00> : vector<3x8xf32>
    %199 = vector.multi_reduction <add>, %198, %cst_91 [2] : vector<3x8x8xf32> to vector<3x8xf32>
    %200 = vector.shape_cast %199 : vector<3x8xf32> to vector<3x8x1xf32>
    %201 = tpu.reciprocal %200 {approx = true} : vector<3x8x1xf32> -> vector<3x8x1xf32>
    %202 = vector.broadcast %201 : vector<3x8x1xf32> to vector<3x8x8xf32>
    %203 = arith.mulf %198, %202 : vector<3x8x8xf32>
    %204 = arith.truncf %203 : vector<3x8x8xf32> to vector<3x8x8xbf16>
    %205 = arith.truncf %188 : vector<3x8x128xf32> to vector<3x8x128xbf16>
    "tpu.trace_start"() <{level = 10 : i32, message = "bqk,bkd->bqd"}> : () -> ()
    %cst_92 = arith.constant dense<0.000000e+00> : vector<3x8x128xf32>
    %206 = tpu.matmul %204, %205, %cst_92 {dimension_numbers = #tpu.dot_dimension_numbers<[2], [1], [1], [2], [0, 0, 0, 1, 1, 2], [0], [0]>} : vector<3x8x8xbf16>, vector<3x8x128xbf16>, vector<3x8x128xf32> -> vector<3x8x128xf32>
    "tpu.trace_stop"() : () -> ()
    %207 = vector.shape_cast %206 : vector<3x8x128xf32> to vector<24x128xf32>
    %208 = arith.truncf %207 : vector<24x128xf32> to vector<24x128xbf16>
    %209 = vector.extract_strided_slice %185 {offsets = [0, 0], sizes = [128, 256], strides = [1, 1]} : vector<256x256xbf16> to vector<128x256xbf16>
    %cst_93 = arith.constant dense<0.000000e+00> : vector<24x256xf32>
    %210 = tpu.matmul %208, %209, %cst_93 {dimension_numbers = #tpu.dot_dimension_numbers<[1], [0], [0], [1], [0, 0, 1, 1], [], []>} : vector<24x128xbf16>, vector<128x256xbf16>, vector<24x256xf32> -> vector<24x256xf32>
    %211 = vector.extract_strided_slice %183 {offsets = [0, 0, 128], sizes = [3, 8, 128], strides = [1, 1, 1]} : vector<3x8x768xf32> to vector<3x8x128xf32>
    %212 = vector.extract_strided_slice %183 {offsets = [0, 0, 384], sizes = [3, 8, 128], strides = [1, 1, 1]} : vector<3x8x768xf32> to vector<3x8x128xf32>
    %213 = vector.extract_strided_slice %183 {offsets = [0, 0, 640], sizes = [3, 8, 128], strides = [1, 1, 1]} : vector<3x8x768xf32> to vector<3x8x128xf32>
    %214 = arith.truncf %211 : vector<3x8x128xf32> to vector<3x8x128xbf16>
    %215 = arith.truncf %212 : vector<3x8x128xf32> to vector<3x8x128xbf16>
    "tpu.trace_start"() <{level = 10 : i32, message = "bqd,bkd->bqk"}> : () -> ()
    %cst_94 = arith.constant dense<0.000000e+00> : vector<3x8x8xf32>
    %216 = tpu.matmul %214, %215, %cst_94 {dimension_numbers = #tpu.dot_dimension_numbers<[2], [2], [1], [1], [0, 0, 0, 1, 1, 1], [0], [0]>} : vector<3x8x128xbf16>, vector<3x8x128xbf16>, vector<3x8x8xf32> -> vector<3x8x8xf32>
    "tpu.trace_stop"() : () -> ()
    %cst_95 = arith.constant 0.0883883461 : f32
    %217 = vector.broadcast %cst_95 : f32 to vector<3x8x8xf32>
    %218 = arith.mulf %216, %217 : vector<3x8x8xf32>
    %cst_96 = arith.constant dense<0xFF800000> : vector<3x8xf32>
    %219 = vector.multi_reduction <maximumf>, %218, %cst_96 [2] : vector<3x8x8xf32> to vector<3x8xf32>
    %220 = vector.shape_cast %219 : vector<3x8xf32> to vector<3x8x1xf32>
    %221 = vector.broadcast %220 : vector<3x8x1xf32> to vector<3x8x8xf32>
    %222 = arith.subf %218, %221 : vector<3x8x8xf32>
    %223 = math.exp %222 : vector<3x8x8xf32>
    %cst_97 = arith.constant dense<0.000000e+00> : vector<3x8xf32>
    %224 = vector.multi_reduction <add>, %223, %cst_97 [2] : vector<3x8x8xf32> to vector<3x8xf32>
    %225 = vector.shape_cast %224 : vector<3x8xf32> to vector<3x8x1xf32>
    %226 = tpu.reciprocal %225 {approx = true} : vector<3x8x1xf32> -> vector<3x8x1xf32>
    %227 = vector.broadcast %226 : vector<3x8x1xf32> to vector<3x8x8xf32>
    %228 = arith.mulf %223, %227 : vector<3x8x8xf32>
    %229 = arith.truncf %228 : vector<3x8x8xf32> to vector<3x8x8xbf16>
    %230 = arith.truncf %213 : vector<3x8x128xf32> to vector<3x8x128xbf16>
    "tpu.trace_start"() <{level = 10 : i32, message = "bqk,bkd->bqd"}> : () -> ()
    %cst_98 = arith.constant dense<0.000000e+00> : vector<3x8x128xf32>
    %231 = tpu.matmul %229, %230, %cst_98 {dimension_numbers = #tpu.dot_dimension_numbers<[2], [1], [1], [2], [0, 0, 0, 1, 1, 2], [0], [0]>} : vector<3x8x8xbf16>, vector<3x8x128xbf16>, vector<3x8x128xf32> -> vector<3x8x128xf32>
    "tpu.trace_stop"() : () -> ()
    %232 = vector.shape_cast %231 : vector<3x8x128xf32> to vector<24x128xf32>
    %233 = arith.truncf %232 : vector<24x128xf32> to vector<24x128xbf16>
    %234 = vector.extract_strided_slice %185 {offsets = [128, 0], sizes = [128, 256], strides = [1, 1]} : vector<256x256xbf16> to vector<128x256xbf16>
    %cst_99 = arith.constant dense<0.000000e+00> : vector<24x256xf32>
    %235 = tpu.matmul %233, %234, %cst_99 {dimension_numbers = #tpu.dot_dimension_numbers<[1], [0], [0], [1], [0, 0, 1, 1], [], []>} : vector<24x128xbf16>, vector<128x256xbf16>, vector<24x256xf32> -> vector<24x256xf32>
    %236 = arith.addf %210, %235 : vector<24x256xf32>
    %237 = arith.addf %148, %236 : vector<24x256xf32>
    %c1_100 = arith.constant 1 : index
    %c0_101 = arith.constant 0 : index
    %c0_102 = arith.constant 0 : index
    %238 = vector.load %arg8[%c1_100, %c0_101, %c0_102] : memref<2x1x256xf32, #tpu.memory_space<vmem>>, vector<1x1x256xf32>
    %239 = vector.shape_cast %238 : vector<1x1x256xf32> to vector<1x256xf32>
    %240 = vector.broadcast %239 : vector<1x256xf32> to vector<24x256xf32>
    %241 = arith.addf %237, %240 : vector<24x256xf32>
    %c1_103 = arith.constant 1 : index
    %c0_104 = arith.constant 0 : index
    %c0_105 = arith.constant 0 : index
    %242 = vector.load %arg9[%c1_103, %c0_104, %c0_105] : memref<2x1x256xf32, #tpu.memory_space<vmem>>, vector<1x1x256xf32>
    %243 = vector.shape_cast %242 : vector<1x1x256xf32> to vector<1x256xf32>
    %c1_106 = arith.constant 1 : index
    %c0_107 = arith.constant 0 : index
    %c0_108 = arith.constant 0 : index
    %244 = vector.load %arg10[%c1_106, %c0_107, %c0_108] : memref<2x1x256xf32, #tpu.memory_space<vmem>>, vector<1x1x256xf32>
    %245 = vector.shape_cast %244 : vector<1x1x256xf32> to vector<1x256xf32>
    %cst_109 = arith.constant dense<0.000000e+00> : vector<24xf32>
    %246 = vector.multi_reduction <add>, %241, %cst_109 [1] : vector<24x256xf32> to vector<24xf32>
    %247 = vector.shape_cast %246 : vector<24xf32> to vector<24x1xf32>
    %cst_110 = arith.constant 2.560000e+02 : f32
    %248 = vector.broadcast %cst_110 : f32 to vector<24x1xf32>
    %249 = arith.divf %247, %248 : vector<24x1xf32>
    %250 = vector.broadcast %249 : vector<24x1xf32> to vector<24x256xf32>
    %251 = arith.subf %241, %250 : vector<24x256xf32>
    %252 = arith.mulf %251, %251 : vector<24x256xf32>
    %cst_111 = arith.constant dense<0.000000e+00> : vector<24xf32>
    %253 = vector.multi_reduction <add>, %252, %cst_111 [1] : vector<24x256xf32> to vector<24xf32>
    %254 = vector.shape_cast %253 : vector<24xf32> to vector<24x1xf32>
    %cst_112 = arith.constant 2.560000e+02 : f32
    %255 = vector.broadcast %cst_112 : f32 to vector<24x1xf32>
    %256 = arith.divf %254, %255 : vector<24x1xf32>
    %257 = vector.broadcast %249 : vector<24x1xf32> to vector<24x256xf32>
    %258 = arith.subf %241, %257 : vector<24x256xf32>
    %cst_113 = arith.constant 9.99999997E-7 : f32
    %259 = vector.broadcast %cst_113 : f32 to vector<24x1xf32>
    %260 = arith.addf %256, %259 : vector<24x1xf32>
    %261 = math.rsqrt %260 : vector<24x1xf32>
    %262 = vector.broadcast %261 : vector<24x1xf32> to vector<24x256xf32>
    %263 = arith.mulf %258, %262 : vector<24x256xf32>
    %264 = vector.broadcast %243 : vector<1x256xf32> to vector<24x256xf32>
    %265 = arith.mulf %263, %264 : vector<24x256xf32>
    %266 = vector.broadcast %245 : vector<1x256xf32> to vector<24x256xf32>
    %267 = arith.addf %265, %266 : vector<24x256xf32>
    %268 = arith.truncf %267 : vector<24x256xf32> to vector<24x256xbf16>
    %c1_114 = arith.constant 1 : index
    %c0_115 = arith.constant 0 : index
    %c0_116 = arith.constant 0 : index
    %269 = vector.load %arg11[%c1_114, %c0_115, %c0_116] : memref<2x256x512xbf16, #tpu.memory_space<vmem>>, vector<1x256x512xbf16>
    %270 = vector.shape_cast %269 : vector<1x256x512xbf16> to vector<256x512xbf16>
    %cst_117 = arith.constant dense<0.000000e+00> : vector<24x512xf32>
    %271 = tpu.matmul %268, %270, %cst_117 {dimension_numbers = #tpu.dot_dimension_numbers<[1], [0], [0], [1], [0, 0, 1, 1], [], []>} : vector<24x256xbf16>, vector<256x512xbf16>, vector<24x512xf32> -> vector<24x512xf32>
    %c1_118 = arith.constant 1 : index
    %c0_119 = arith.constant 0 : index
    %c0_120 = arith.constant 0 : index
    %272 = vector.load %arg12[%c1_118, %c0_119, %c0_120] : memref<2x1x512xf32, #tpu.memory_space<vmem>>, vector<1x1x512xf32>
    %273 = vector.shape_cast %272 : vector<1x1x512xf32> to vector<1x512xf32>
    %274 = vector.broadcast %273 : vector<1x512xf32> to vector<24x512xf32>
    %275 = arith.addf %271, %274 : vector<24x512xf32>
    %cst_121 = arith.constant 5.000000e-01 : f32
    %276 = vector.broadcast %cst_121 : f32 to vector<24x512xf32>
    %277 = arith.mulf %276, %275 : vector<24x512xf32>
    %cst_122 = arith.constant 0.707106769 : f32
    %278 = vector.broadcast %cst_122 : f32 to vector<24x512xf32>
    %279 = arith.mulf %275, %278 : vector<24x512xf32>
    %280 = math.erf %279 : vector<24x512xf32>
    %cst_123 = arith.constant 1.000000e+00 : f32
    %281 = vector.broadcast %cst_123 : f32 to vector<24x512xf32>
    %282 = arith.addf %281, %280 : vector<24x512xf32>
    %283 = arith.mulf %277, %282 : vector<24x512xf32>
    %284 = arith.truncf %283 : vector<24x512xf32> to vector<24x512xbf16>
    %c1_124 = arith.constant 1 : index
    %c0_125 = arith.constant 0 : index
    %c0_126 = arith.constant 0 : index
    %285 = vector.load %arg13[%c1_124, %c0_125, %c0_126] : memref<2x512x256xbf16, #tpu.memory_space<vmem>>, vector<1x512x256xbf16>
    %286 = vector.shape_cast %285 : vector<1x512x256xbf16> to vector<512x256xbf16>
    %cst_127 = arith.constant dense<0.000000e+00> : vector<24x256xf32>
    %287 = tpu.matmul %284, %286, %cst_127 {dimension_numbers = #tpu.dot_dimension_numbers<[1], [0], [0], [1], [0, 0, 1, 1], [], []>} : vector<24x512xbf16>, vector<512x256xbf16>, vector<24x256xf32> -> vector<24x256xf32>
    %c1_128 = arith.constant 1 : index
    %c0_129 = arith.constant 0 : index
    %c0_130 = arith.constant 0 : index
    %288 = vector.load %arg14[%c1_128, %c0_129, %c0_130] : memref<2x1x256xf32, #tpu.memory_space<vmem>>, vector<1x1x256xf32>
    %289 = vector.shape_cast %288 : vector<1x1x256xf32> to vector<1x256xf32>
    %290 = vector.broadcast %289 : vector<1x256xf32> to vector<24x256xf32>
    %291 = arith.addf %287, %290 : vector<24x256xf32>
    %292 = arith.addf %241, %291 : vector<24x256xf32>
    %c0_131 = arith.constant 0 : index
    %c0_132 = arith.constant 0 : index
    %293 = vector.load %arg15[%c0_131, %c0_132] : memref<1x256xf32, #tpu.memory_space<vmem>>, vector<1x256xf32>
    %c0_133 = arith.constant 0 : index
    %c0_134 = arith.constant 0 : index
    %294 = vector.load %arg16[%c0_133, %c0_134] : memref<1x256xf32, #tpu.memory_space<vmem>>, vector<1x256xf32>
    %cst_135 = arith.constant dense<0.000000e+00> : vector<24xf32>
    %295 = vector.multi_reduction <add>, %292, %cst_135 [1] : vector<24x256xf32> to vector<24xf32>
    %296 = vector.shape_cast %295 : vector<24xf32> to vector<24x1xf32>
    %cst_136 = arith.constant 2.560000e+02 : f32
    %297 = vector.broadcast %cst_136 : f32 to vector<24x1xf32>
    %298 = arith.divf %296, %297 : vector<24x1xf32>
    %299 = vector.broadcast %298 : vector<24x1xf32> to vector<24x256xf32>
    %300 = arith.subf %292, %299 : vector<24x256xf32>
    %301 = arith.mulf %300, %300 : vector<24x256xf32>
    %cst_137 = arith.constant dense<0.000000e+00> : vector<24xf32>
    %302 = vector.multi_reduction <add>, %301, %cst_137 [1] : vector<24x256xf32> to vector<24xf32>
    %303 = vector.shape_cast %302 : vector<24xf32> to vector<24x1xf32>
    %cst_138 = arith.constant 2.560000e+02 : f32
    %304 = vector.broadcast %cst_138 : f32 to vector<24x1xf32>
    %305 = arith.divf %303, %304 : vector<24x1xf32>
    %306 = vector.broadcast %298 : vector<24x1xf32> to vector<24x256xf32>
    %307 = arith.subf %292, %306 : vector<24x256xf32>
    %cst_139 = arith.constant 9.99999997E-7 : f32
    %308 = vector.broadcast %cst_139 : f32 to vector<24x1xf32>
    %309 = arith.addf %305, %308 : vector<24x1xf32>
    %310 = math.rsqrt %309 : vector<24x1xf32>
    %311 = vector.broadcast %310 : vector<24x1xf32> to vector<24x256xf32>
    %312 = arith.mulf %307, %311 : vector<24x256xf32>
    %313 = vector.broadcast %293 : vector<1x256xf32> to vector<24x256xf32>
    %314 = arith.mulf %312, %313 : vector<24x256xf32>
    %315 = vector.broadcast %294 : vector<1x256xf32> to vector<24x256xf32>
    %316 = arith.addf %314, %315 : vector<24x256xf32>
    %317 = vector.shape_cast %316 : vector<24x256xf32> to vector<3x8x256xf32>
    %cst_140 = arith.constant 0.000000e+00 : f32
    %318 = vector.broadcast %cst_140 : f32 to vector<3x256xf32>
    %c0_141 = arith.constant 0 : index
    %319 = memref.load %arg19[%c0_141] : memref<10xf32, #tpu.memory_space<smem>>
    %320 = vector.extract_strided_slice %317 {offsets = [0, 0, 0], sizes = [3, 1, 256], strides = [1, 1, 1]} : vector<3x8x256xf32> to vector<3x1x256xf32>
    %321 = vector.shape_cast %320 : vector<3x1x256xf32> to vector<3x256xf32>
    %322 = vector.broadcast %319 : f32 to vector<3x256xf32>
    %323 = arith.mulf %322, %321 : vector<3x256xf32>
    %324 = arith.addf %318, %323 : vector<3x256xf32>
    %c1_142 = arith.constant 1 : index
    %325 = memref.load %arg19[%c1_142] : memref<10xf32, #tpu.memory_space<smem>>
    %326 = vector.extract_strided_slice %317 {offsets = [0, 1, 0], sizes = [3, 1, 256], strides = [1, 1, 1]} : vector<3x8x256xf32> to vector<3x1x256xf32>
    %327 = vector.shape_cast %326 : vector<3x1x256xf32> to vector<3x256xf32>
    %328 = vector.broadcast %325 : f32 to vector<3x256xf32>
    %329 = arith.mulf %328, %327 : vector<3x256xf32>
    %330 = arith.addf %324, %329 : vector<3x256xf32>
    %c2 = arith.constant 2 : index
    %331 = memref.load %arg19[%c2] : memref<10xf32, #tpu.memory_space<smem>>
    %332 = vector.extract_strided_slice %317 {offsets = [0, 2, 0], sizes = [3, 1, 256], strides = [1, 1, 1]} : vector<3x8x256xf32> to vector<3x1x256xf32>
    %333 = vector.shape_cast %332 : vector<3x1x256xf32> to vector<3x256xf32>
    %334 = vector.broadcast %331 : f32 to vector<3x256xf32>
    %335 = arith.mulf %334, %333 : vector<3x256xf32>
    %336 = arith.addf %330, %335 : vector<3x256xf32>
    %c3 = arith.constant 3 : index
    %337 = memref.load %arg19[%c3] : memref<10xf32, #tpu.memory_space<smem>>
    %338 = vector.extract_strided_slice %317 {offsets = [0, 3, 0], sizes = [3, 1, 256], strides = [1, 1, 1]} : vector<3x8x256xf32> to vector<3x1x256xf32>
    %339 = vector.shape_cast %338 : vector<3x1x256xf32> to vector<3x256xf32>
    %340 = vector.broadcast %337 : f32 to vector<3x256xf32>
    %341 = arith.mulf %340, %339 : vector<3x256xf32>
    %342 = arith.addf %336, %341 : vector<3x256xf32>
    %c4 = arith.constant 4 : index
    %343 = memref.load %arg19[%c4] : memref<10xf32, #tpu.memory_space<smem>>
    %344 = vector.extract_strided_slice %317 {offsets = [0, 4, 0], sizes = [3, 1, 256], strides = [1, 1, 1]} : vector<3x8x256xf32> to vector<3x1x256xf32>
    %345 = vector.shape_cast %344 : vector<3x1x256xf32> to vector<3x256xf32>
    %346 = vector.broadcast %343 : f32 to vector<3x256xf32>
    %347 = arith.mulf %346, %345 : vector<3x256xf32>
    %348 = arith.addf %342, %347 : vector<3x256xf32>
    %c5 = arith.constant 5 : index
    %349 = memref.load %arg19[%c5] : memref<10xf32, #tpu.memory_space<smem>>
    %350 = vector.extract_strided_slice %317 {offsets = [0, 5, 0], sizes = [3, 1, 256], strides = [1, 1, 1]} : vector<3x8x256xf32> to vector<3x1x256xf32>
    %351 = vector.shape_cast %350 : vector<3x1x256xf32> to vector<3x256xf32>
    %352 = vector.broadcast %349 : f32 to vector<3x256xf32>
    %353 = arith.mulf %352, %351 : vector<3x256xf32>
    %354 = arith.addf %348, %353 : vector<3x256xf32>
    %c6 = arith.constant 6 : index
    %355 = memref.load %arg19[%c6] : memref<10xf32, #tpu.memory_space<smem>>
    %356 = vector.extract_strided_slice %317 {offsets = [0, 6, 0], sizes = [3, 1, 256], strides = [1, 1, 1]} : vector<3x8x256xf32> to vector<3x1x256xf32>
    %357 = vector.shape_cast %356 : vector<3x1x256xf32> to vector<3x256xf32>
    %358 = vector.broadcast %355 : f32 to vector<3x256xf32>
    %359 = arith.mulf %358, %357 : vector<3x256xf32>
    %360 = arith.addf %354, %359 : vector<3x256xf32>
    %c7 = arith.constant 7 : index
    %361 = memref.load %arg19[%c7] : memref<10xf32, #tpu.memory_space<smem>>
    %362 = vector.extract_strided_slice %317 {offsets = [0, 7, 0], sizes = [3, 1, 256], strides = [1, 1, 1]} : vector<3x8x256xf32> to vector<3x1x256xf32>
    %363 = vector.shape_cast %362 : vector<3x1x256xf32> to vector<3x256xf32>
    %364 = vector.broadcast %361 : f32 to vector<3x256xf32>
    %365 = arith.mulf %364, %363 : vector<3x256xf32>
    %366 = arith.addf %360, %365 : vector<3x256xf32>
    %c8 = arith.constant 8 : index
    %367 = memref.load %arg19[%c8] : memref<10xf32, #tpu.memory_space<smem>>
    %368 = vector.broadcast %367 : f32 to vector<3x256xf32>
    %369 = arith.addf %366, %368 : vector<3x256xf32>
    %c0_143 = arith.constant 0 : index
    %c0_144 = arith.constant 0 : index
    %370 = vector.load %arg17[%c0_143, %c0_144] : memref<1x256xf32, #tpu.memory_space<vmem>>, vector<1x256xf32>
    %c0_145 = arith.constant 0 : index
    %c0_146 = arith.constant 0 : index
    %371 = vector.load %arg18[%c0_145, %c0_146] : memref<1x256xf32, #tpu.memory_space<vmem>>, vector<1x256xf32>
    %372 = vector.broadcast %371 : vector<1x256xf32> to vector<3x256xf32>
    %373 = arith.mulf %369, %372 : vector<3x256xf32>
    %cst_147 = arith.constant dense<0.000000e+00> : vector<3xf32>
    %374 = vector.multi_reduction <add>, %373, %cst_147 [1] : vector<3x256xf32> to vector<3xf32>
    %c9 = arith.constant 9 : index
    %375 = memref.load %arg19[%c9] : memref<10xf32, #tpu.memory_space<smem>>
    %376 = vector.broadcast %375 : f32 to vector<3xf32>
    %377 = arith.addf %374, %376 : vector<3xf32>
    %378 = vector.shape_cast %370 : vector<1x256xf32> to vector<1x1x256xf32>
    %379 = vector.broadcast %378 : vector<1x1x256xf32> to vector<3x8x256xf32>
    %380 = arith.mulf %317, %379 : vector<3x8x256xf32>
    %cst_148 = arith.constant dense<0.000000e+00> : vector<3x8xf32>
    %381 = vector.multi_reduction <add>, %380, %cst_148 [2] : vector<3x8x256xf32> to vector<3x8xf32>
    %382 = vector.shape_cast %377 : vector<3xf32> to vector<3x1xf32>
    %383 = vector.broadcast %382 : vector<3x1xf32> to vector<3x8xf32>
    %384 = arith.addf %381, %383 : vector<3x8xf32>
    %385 = vector.shape_cast %384 : vector<3x8xf32> to vector<3x8x1xf32>
    %386 = vector.broadcast %385 : vector<3x8x1xf32> to vector<3x8x256xf32>
    %387 = arith.mulf %317, %386 : vector<3x8x256xf32>
    %cst_149 = arith.constant dense<0.000000e+00> : vector<3x256xf32>
    %388 = vector.multi_reduction <add>, %387, %cst_149 [1] : vector<3x8x256xf32> to vector<3x256xf32>
    %cst_150 = arith.constant dense<0.000000e+00> : vector<3xf32>
    %389 = vector.multi_reduction <add>, %384, %cst_150 [1] : vector<3x8xf32> to vector<3xf32>
    %390 = vector.shape_cast %389 : vector<3xf32> to vector<3x1xf32>
    %391 = tpu.reciprocal %390 {approx = true} : vector<3x1xf32> -> vector<3x1xf32>
    %392 = vector.broadcast %391 : vector<3x1xf32> to vector<3x256xf32>
    %393 = arith.mulf %388, %392 : vector<3x256xf32>
    %c0_151 = arith.constant 0 : index
    %c0_152 = arith.constant 0 : index
    %c0_153 = arith.constant 0 : index
    %394 = vector.load %arg20[%c0_151, %c0_152, %c0_153] : memref<1x3x256xf32, #tpu.memory_space<vmem>>, vector<1x3x256xf32>
    %395 = vector.shape_cast %394 : vector<1x3x256xf32> to vector<3x256xf32>
    %396 = vector.shape_cast %393 : vector<3x256xf32> to vector<1x3x256xf32>
    tpu.vector_store %arg20[%c0_151, %c0_152, %c0_153], %396 {strides = array<i32>} : memref<1x3x256xf32, #tpu.memory_space<vmem>>, vector<1x3x256xf32>,
    return
  }
  func.func @transform_0(%arg0: i32) -> (i32, i32, i32) {
    %c0_i32 = arith.constant 0 : i32
    %c0_i32_0 = arith.constant 0 : i32
    %c0_i32_1 = arith.constant 0 : i32
    return %arg0, %c0_i32, %c0_i32_0 : i32, i32, i32
  }
  func.func @transform_1(%arg0: i32) -> (i32, i32, i32) {
    %c0_i32 = arith.constant 0 : i32
    %c0_i32_0 = arith.constant 0 : i32
    %c0_i32_1 = arith.constant 0 : i32
    %c0_i32_2 = arith.constant 0 : i32
    return %c0_i32, %c0_i32_0, %c0_i32_1 : i32, i32, i32
  }
  func.func @transform_2(%arg0: i32) -> (i32, i32, i32) {
    %c0_i32 = arith.constant 0 : i32
    %c0_i32_0 = arith.constant 0 : i32
    %c0_i32_1 = arith.constant 0 : i32
    %c0_i32_2 = arith.constant 0 : i32
    return %c0_i32, %c0_i32_0, %c0_i32_1 : i32, i32, i32
  }
  func.func @transform_3(%arg0: i32) -> (i32, i32, i32) {
    %c0_i32 = arith.constant 0 : i32
    %c0_i32_0 = arith.constant 0 : i32
    %c0_i32_1 = arith.constant 0 : i32
    %c0_i32_2 = arith.constant 0 : i32
    return %c0_i32, %c0_i32_0, %c0_i32_1 : i32, i32, i32
  }
  func.func @transform_4(%arg0: i32) -> (i32, i32, i32) {
    %c0_i32 = arith.constant 0 : i32
    %c0_i32_0 = arith.constant 0 : i32
    %c0_i32_1 = arith.constant 0 : i32
    %c0_i32_2 = arith.constant 0 : i32
    return %c0_i32, %c0_i32_0, %c0_i32_1 : i32, i32, i32
  }
  func.func @transform_5(%arg0: i32) -> (i32, i32, i32) {
    %c0_i32 = arith.constant 0 : i32
    %c0_i32_0 = arith.constant 0 : i32
    %c0_i32_1 = arith.constant 0 : i32
    %c0_i32_2 = arith.constant 0 : i32
    return %c0_i32, %c0_i32_0, %c0_i32_1 : i32, i32, i32
  }
  func.func @transform_6(%arg0: i32) -> (i32, i32, i32) {
    %c0_i32 = arith.constant 0 : i32
    %c0_i32_0 = arith.constant 0 : i32
    %c0_i32_1 = arith.constant 0 : i32
    %c0_i32_2 = arith.constant 0 : i32
    return %c0_i32, %c0_i32_0, %c0_i32_1 : i32, i32, i32
  }
  func.func @transform_7(%arg0: i32) -> (i32, i32, i32) {
    %c0_i32 = arith.constant 0 : i32
    %c0_i32_0 = arith.constant 0 : i32
    %c0_i32_1 = arith.constant 0 : i32
    %c0_i32_2 = arith.constant 0 : i32
    return %c0_i32, %c0_i32_0, %c0_i32_1 : i32, i32, i32
  }
  func.func @transform_8(%arg0: i32) -> (i32, i32, i32) {
    %c0_i32 = arith.constant 0 : i32
    %c0_i32_0 = arith.constant 0 : i32
    %c0_i32_1 = arith.constant 0 : i32
    %c0_i32_2 = arith.constant 0 : i32
    return %c0_i32, %c0_i32_0, %c0_i32_1 : i32, i32, i32
  }
  func.func @transform_9(%arg0: i32) -> (i32, i32, i32) {
    %c0_i32 = arith.constant 0 : i32
    %c0_i32_0 = arith.constant 0 : i32
    %c0_i32_1 = arith.constant 0 : i32
    %c0_i32_2 = arith.constant 0 : i32
    return %c0_i32, %c0_i32_0, %c0_i32_1 : i32, i32, i32
  }
  func.func @transform_10(%arg0: i32) -> (i32, i32, i32) {
    %c0_i32 = arith.constant 0 : i32
    %c0_i32_0 = arith.constant 0 : i32
    %c0_i32_1 = arith.constant 0 : i32
    %c0_i32_2 = arith.constant 0 : i32
    return %c0_i32, %c0_i32_0, %c0_i32_1 : i32, i32, i32
  }
  func.func @transform_11(%arg0: i32) -> (i32, i32, i32) {
    %c0_i32 = arith.constant 0 : i32
    %c0_i32_0 = arith.constant 0 : i32
    %c0_i32_1 = arith.constant 0 : i32
    %c0_i32_2 = arith.constant 0 : i32
    return %c0_i32, %c0_i32_0, %c0_i32_1 : i32, i32, i32
  }
  func.func @transform_12(%arg0: i32) -> (i32, i32, i32) {
    %c0_i32 = arith.constant 0 : i32
    %c0_i32_0 = arith.constant 0 : i32
    %c0_i32_1 = arith.constant 0 : i32
    %c0_i32_2 = arith.constant 0 : i32
    return %c0_i32, %c0_i32_0, %c0_i32_1 : i32, i32, i32
  }
  func.func @transform_13(%arg0: i32) -> (i32, i32, i32) {
    %c0_i32 = arith.constant 0 : i32
    %c0_i32_0 = arith.constant 0 : i32
    %c0_i32_1 = arith.constant 0 : i32
    %c0_i32_2 = arith.constant 0 : i32
    return %c0_i32, %c0_i32_0, %c0_i32_1 : i32, i32, i32
  }
  func.func @transform_14(%arg0: i32) -> (i32, i32) {
    %c0_i32 = arith.constant 0 : i32
    %c0_i32_0 = arith.constant 0 : i32
    %c0_i32_1 = arith.constant 0 : i32
    return %c0_i32, %c0_i32_0 : i32, i32
  }
  func.func @transform_15(%arg0: i32) -> (i32, i32) {
    %c0_i32 = arith.constant 0 : i32
    %c0_i32_0 = arith.constant 0 : i32
    %c0_i32_1 = arith.constant 0 : i32
    return %c0_i32, %c0_i32_0 : i32, i32
  }
  func.func @transform_16(%arg0: i32) -> (i32, i32) {
    %c0_i32 = arith.constant 0 : i32
    %c0_i32_0 = arith.constant 0 : i32
    %c0_i32_1 = arith.constant 0 : i32
    return %c0_i32, %c0_i32_0 : i32, i32
  }
  func.func @transform_17(%arg0: i32) -> (i32, i32) {
    %c0_i32 = arith.constant 0 : i32
    %c0_i32_0 = arith.constant 0 : i32
    %c0_i32_1 = arith.constant 0 : i32
    return %c0_i32, %c0_i32_0 : i32, i32
  }
  func.func @transform_18(%arg0: i32) -> i32 {
    %c0_i32 = arith.constant 0 : i32
    %c0_i32_0 = arith.constant 0 : i32
    return %c0_i32 : i32
  }
  func.func @transform_19(%arg0: i32) -> (i32, i32, i32) {
    %c0_i32 = arith.constant 0 : i32
    %c0_i32_0 = arith.constant 0 : i32
    %c0_i32_1 = arith.constant 0 : i32
    return %arg0, %c0_i32, %c0_i32_0 : i32, i32, i32
  }
}

</mosaic_0001>

<llo_original>
// kernel: tpu_custom_call.1
$region0: #{tpu_custom_call.1}
  #allocation0 [shape = 'u32[]', space=smem, size = 0x4, offset = 0x4, fixed_abs, tag = 'smem constant byte address 0x4 - core index']
  #allocation1 [shape = 'u32[144,128]{1,0:T(1,128)}', space=vmem, size = 0x12000, scoped, tag = 'internal scratch']
  %s0 = inlined_call_operand.hbm [shape: f32[6,8,256], index: 0, kind: input, shape index: {}]
  %s1 = inlined_call_operand.hbm [shape: f32[1,8,256], index: 1, kind: input, shape index: {}]
  %s2 = inlined_call_operand.hbm [shape: f32[2,1,256], index: 2, kind: input, shape index: {}]
  %s3 = inlined_call_operand.vmem [shape: f32[2,1,256], index: 3, kind: input, shape index: {}]
  %s4 = inlined_call_operand.hbm [shape: bf16[2,256,768], index: 4, kind: input, shape index: {}]
  %s5 = inlined_call_operand.hbm [shape: f32[2,1,768], index: 5, kind: input, shape index: {}]
  %s6 = inlined_call_operand.hbm [shape: bf16[2,256,256], index: 6, kind: input, shape index: {}]
  %s7 = inlined_call_operand.vmem [shape: f32[2,1,256], index: 7, kind: input, shape index: {}]
  %s8 = inlined_call_operand.hbm [shape: f32[2,1,256], index: 8, kind: input, shape index: {}]
  %s9 = inlined_call_operand.hbm [shape: f32[2,1,256], index: 9, kind: input, shape index: {}]
  %s10 = inlined_call_operand.hbm [shape: bf16[2,256,512], index: 10, kind: input, shape index: {}]
  %s11 = inlined_call_operand.vmem [shape: f32[2,1,512], index: 11, kind: input, shape index: {}]
  %s12 = inlined_call_operand.hbm [shape: bf16[2,512,256], index: 12, kind: input, shape index: {}]
  %s13 = inlined_call_operand.vmem [shape: f32[2,1,256], index: 13, kind: input, shape index: {}]
  %s14 = inlined_call_operand.vmem [shape: f32[1,256], index: 14, kind: input, shape index: {}]
  %s15 = inlined_call_operand.vmem [shape: f32[1,256], index: 15, kind: input, shape index: {}]
  %s16 = inlined_call_operand.vmem [shape: f32[1,256], index: 16, kind: input, shape index: {}]
  %s17 = inlined_call_operand.vmem [shape: f32[1,256], index: 17, kind: input, shape index: {}]
  %s18 = inlined_call_operand.vmem [shape: f32[10], index: 18, kind: input, shape index: {}]
  %s19 = inlined_call_operand.vmem [shape: f32[2,3,256], index: 19, kind: output, shape index: {}]
  %s20 = sld [smem:[#allocation0]]
  $region153: #{tpu_custom_call.1} parent=0
    _
  %s22 = ssub.s32 1, %s20
  %s23 = scalar_select 0, %s22, %s20
  $region1: #{tpu_custom_call.1} parent=0
    #allocation2 [shape = 'u8[49152]{0}', space=vmem, size = 0xc000, scoped, tag = 'input window, operand 0']
    #allocation3 [shape = 's32[2]{0}', space=sflag, size = 0x8, scoped, tag = 'scoped memory for tpu_custom_call.1']
    #allocation4 [shape = 's32[2]{0}', space=sflag, size = 0x8, scoped, tag = 'scoped memory for tpu_custom_call.1']
    #allocation5 [shape = 'u8[8192]{0}', space=vmem, size = 0x2000, scoped, tag = 'input window, operand 1, single buffered']
    #allocation6 [shape = 's32[1]{0}', space=sflag, size = 0x4, scoped, tag = 'scoped memory for tpu_custom_call.1']
    #allocation7 [shape = 'u8[2048]{0}', space=vmem, size = 0x800, scoped, tag = 'input window, operand 2, single buffered']
    #allocation8 [shape = 'u8[786432]{0}', space=vmem, size = 0xc0000, scoped, tag = 'input window, operand 4, single buffered']
    #allocation9 [shape = 's32[1]{0}', space=sflag, size = 0x4, scoped, tag = 'scoped memory for tpu_custom_call.1']
    #allocation10 [shape = 'u8[6144]{0}', space=vmem, size = 0x1800, scoped, tag = 'input window, operand 5, single buffered']
    #allocation11 [shape = 'u8[262144]{0}', space=vmem, size = 0x40000, scoped, tag = 'input window, operand 6, single buffered']
    #allocation12 [shape = 's32[1]{0}', space=sflag, size = 0x4, scoped, tag = 'scoped memory for tpu_custom_call.1']
    #allocation13 [shape = 'u8[2048]{0}', space=vmem, size = 0x800, scoped, tag = 'input window, operand 8, single buffered']
    #allocation14 [shape = 'u8[2048]{0}', space=vmem, size = 0x800, scoped, tag = 'input window, operand 9, single buffered']
    #allocation15 [shape = 's32[1]{0}', space=sflag, size = 0x4, scoped, tag = 'scoped memory for tpu_custom_call.1']
    #allocation16 [shape = 'u8[524288]{0}', space=vmem, size = 0x80000, scoped, tag = 'input window, operand 10, single buffered']
    #allocation17 [shape = 'u8[524288]{0}', space=vmem, size = 0x80000, scoped, tag = 'input window, operand 12, single buffered']
    #allocation18 [shape = 's32[1]{0}', space=sflag, size = 0x4, scoped, tag = 'scoped memory for tpu_custom_call.1']
    #allocation19 [shape = 'u8[512]{0}', space=smem, size = 0x200, scoped, tag = 'input window, operand 18, single buffered']
    %24 = vsyncpa [#allocation3], 0
    %s25 = scalar_lea.sflag [#allocation3], 1
    %26 = vsyncpa %s25, 0
    %27 = vsyncpa [#allocation6], 0
    %28 = vsyncpa [#allocation9], 0
    %29 = vsyncpa [#allocation12], 0
    %30 = vsyncpa [#allocation15], 0
    %31 = vsyncpa [#allocation18], 0
    %32 = vsyncpa [#allocation4], 0
    loop: start=0, step=1, limit=4
    $region2: #{tpu_custom_call.1} parent=1 // loop_pre_header
      _
    $region3: #{tpu_custom_call.1} parent=1 // loop_header
      %s34 = sphi 0, %s38
      %p35 = scmp.ge.s32.totalorder %s34, 4
      %s44 = sphi 0, %s46
      %s47 = sphi 0, %s44
      %s48 = sphi 0, %s47
      %s64 = sphi 0, %s48
      %s68 = sphi 0, %s68
      %s70 = sphi 0, %s68
      %s71 = sphi 0, %s70
      %s85 = sphi 0, %s71
      %s89 = sphi 0, %s89
      %s91 = sphi 0, %s89
      %s92 = sphi 0, %s91
      %s106 = sphi 0, %s92
      %s110 = sphi 0, %s110
      %s112 = sphi 0, %s110
      %s113 = sphi 0, %s112
      %s127 = sphi 0, %s113
      %s131 = sphi 0, %s131
      %s133 = sphi 0, %s131
      %s134 = sphi 0, %s133
      %s148 = sphi 0, %s134
      %s152 = sphi 0, %s152
      %s154 = sphi 0, %s152
      %s155 = sphi 0, %s154
      %s169 = sphi 0, %s155
      %s173 = sphi 0, %s173
      %s175 = sphi 0, %s173
      %s176 = sphi 0, %s175
      %s190 = sphi 0, %s176
      %s194 = sphi 0, %s194
      %s196 = sphi 0, %s194
      %s197 = sphi 0, %s196
      %s211 = sphi 0, %s197
      %s215 = sphi 0, %s215
      %s217 = sphi 0, %s215
      %s218 = sphi 0, %s217
      %s232 = sphi 0, %s218
      %s236 = sphi 0, %s236
      %s238 = sphi 0, %s236
      %s239 = sphi 0, %s238
      %s253 = sphi 0, %s239
      %s257 = sphi 0, %s257
      %s259 = sphi 0, %s257
      %s260 = sphi 0, %s259
      %s274 = sphi 0, %s260
      %s278 = sphi 0, %s278
      %s280 = sphi 0, %s278
      %s281 = sphi 0, %s280
      %s295 = sphi 0, %s281
      %s299 = sphi 0, %s299
      %s301 = sphi 0, %s299
      %s302 = sphi 0, %s301
      %s316 = sphi 0, %s302
      %s320 = sphi 0, %s320
      %s322 = sphi 0, %s320
      %s323 = sphi 0, %s322
      %s337 = sphi 0, %s323
      %s341 = sphi 0, %s341
      %s343 = sphi 0, %s341
      %s344 = sphi 0, %s343
      %s358 = sphi 0, %s344
      %s362 = sphi 0, %s362
      %s364 = sphi 0, %s362
      %s365 = sphi 0, %s364
      %s379 = sphi 0, %s365
      %s383 = sphi 0, %s383
      %s385 = sphi 0, %s383
      %s386 = sphi 0, %s385
      %s400 = sphi 0, %s386
      %s404 = sphi 0, %s404
      %s406 = sphi 0, %s404
      %s407 = sphi 0, %s406
      %s421 = sphi 0, %s407
      %s425 = sphi 0, %s425
      %s427 = sphi 0, %s425
      %s428 = sphi 0, %s427
      %s442 = sphi 0, %s428
      %s448 = sphi 0, %s450
      %s451 = sphi 0, %s448
      %s452 = sphi 0, %s451
      %s468 = sphi 0, %s452
    $region4: #{tpu_custom_call.1} parent=1 // loop_header_branch
      %37 = sbr.rel (%p35) target = $region8
    $region5: #{tpu_custom_call.1} parent=1 // loop_body
      %s39 = ssub.s32 %s34, 1
      %s40 = ssub.s32 %s34, 2
      %s41 = sadd.s32 %s34, 1
      %s42 = ssub.s32 %s34, %s41
      %p43 = scmp.eq.s32.totalorder %s42, 0
      %s45 = sadd.s32 %s44, 1
      %s46 = scalar_select %p43, %s44, %s45
      %p49 = pneg %p43
      %p50 = scmp.eq.s32.totalorder %s34, 1
      %p51 = por %p49, %p50
      %p52 = scmp.ne.s32.totalorder %s44, %s47
      %p53 = scmp.eq.s32.totalorder %s34, 0
      %p54 = por %p52, %p53
      %p55 = scmp.ne.s32.totalorder %s44, %s47
      %p56 = scmp.eq.s32.totalorder %s39, 1
      %p57 = por %p55, %p56
      %p58 = scmp.ne.s32.totalorder %s47, %s48
      %p59 = scmp.eq.s32.totalorder %s39, 0
      %p60 = por %p58, %p59
      %p61 = scmp.ne.s32.totalorder %s47, %s48
      %p62 = scmp.eq.s32.totalorder %s40, 1
      %p63 = por %p61, %p62
      %p65 = scmp.ne.s32.totalorder %s48, %s64
      %p66 = scmp.eq.s32.totalorder %s40, 0
      %p67 = por %p65, %p66
      %s69 = sadd.s32 %s68, 1
      %p72 = scmp.eq.s32.totalorder %s34, 1
      %p73 = scmp.ne.s32.totalorder %s68, %s70
      %p74 = scmp.eq.s32.totalorder %s34, 0
      %p75 = por %p73, %p74
      %p76 = scmp.ne.s32.totalorder %s68, %s70
      %p77 = scmp.eq.s32.totalorder %s39, 1
      %p78 = por %p76, %p77
      %p79 = scmp.ne.s32.totalorder %s70, %s71
      %p80 = scmp.eq.s32.totalorder %s39, 0
      %p81 = por %p79, %p80
      %p82 = scmp.ne.s32.totalorder %s70, %s71
      %p83 = scmp.eq.s32.totalorder %s40, 1
      %p84 = por %p82, %p83
      %p86 = scmp.ne.s32.totalorder %s71, %s85
      %p87 = scmp.eq.s32.totalorder %s40, 0
      %p88 = por %p86, %p87
      %s90 = sadd.s32 %s89, 1
      %p93 = scmp.eq.s32.totalorder %s34, 1
      %p94 = scmp.ne.s32.totalorder %s89, %s91
      %p95 = scmp.eq.s32.totalorder %s34, 0
      %p96 = por %p94, %p95
      %p97 = scmp.ne.s32.totalorder %s89, %s91
      %p98 = scmp.eq.s32.totalorder %s39, 1
      %p99 = por %p97, %p98
      %p100 = scmp.ne.s32.totalorder %s91, %s92
      %p101 = scmp.eq.s32.totalorder %s39, 0
      %p102 = por %p100, %p101
      %p103 = scmp.ne.s32.totalorder %s91, %s92
      %p104 = scmp.eq.s32.totalorder %s40, 1
      %p105 = por %p103, %p104
      %p107 = scmp.ne.s32.totalorder %s92, %s106
      %p108 = scmp.eq.s32.totalorder %s40, 0
      %p109 = por %p107, %p108
      %s111 = sadd.s32 %s110, 1
      %p114 = scmp.eq.s32.totalorder %s34, 1
      %p115 = scmp.ne.s32.totalorder %s110, %s112
      %p116 = scmp.eq.s32.totalorder %s34, 0
      %p117 = por %p115, %p116
      %p118 = scmp.ne.s32.totalorder %s110, %s112
      %p119 = scmp.eq.s32.totalorder %s39, 1
      %p120 = por %p118, %p119
      %p121 = scmp.ne.s32.totalorder %s112, %s113
      %p122 = scmp.eq.s32.totalorder %s39, 0
      %p123 = por %p121, %p122
      %p124 = scmp.ne.s32.totalorder %s112, %s113
      %p125 = scmp.eq.s32.totalorder %s40, 1
      %p126 = por %p124, %p125
      %p128 = scmp.ne.s32.totalorder %s113, %s127
      %p129 = scmp.eq.s32.totalorder %s40, 0
      %p130 = por %p128, %p129
      %s132 = sadd.s32 %s131, 1
      %p135 = scmp.eq.s32.totalorder %s34, 1
      %p136 = scmp.ne.s32.totalorder %s131, %s133
      %p137 = scmp.eq.s32.totalorder %s34, 0
      %p138 = por %p136, %p137
      %p139 = scmp.ne.s32.totalorder %s131, %s133
      %p140 = scmp.eq.s32.totalorder %s39, 1
      %p141 = por %p139, %p140
      %p142 = scmp.ne.s32.totalorder %s133, %s134
      %p143 = scmp.eq.s32.totalorder %s39, 0
      %p144 = por %p142, %p143
      %p145 = scmp.ne.s32.totalorder %s133, %s134
      %p146 = scmp.eq.s32.totalorder %s40, 1
      %p147 = por %p145, %p146
      %p149 = scmp.ne.s32.totalorder %s134, %s148
      %p150 = scmp.eq.s32.totalorder %s40, 0
      %p151 = por %p149, %p150
      %s153 = sadd.s32 %s152, 1
      %p156 = scmp.eq.s32.totalorder %s34, 1
      %p157 = scmp.ne.s32.totalorder %s152, %s154
      %p158 = scmp.eq.s32.totalorder %s34, 0
      %p159 = por %p157, %p158
      %p160 = scmp.ne.s32.totalorder %s152, %s154
      %p161 = scmp.eq.s32.totalorder %s39, 1
      %p162 = por %p160, %p161
      %p163 = scmp.ne.s32.totalorder %s154, %s155
      %p164 = scmp.eq.s32.totalorder %s39, 0
      %p165 = por %p163, %p164
      %p166 = scmp.ne.s32.totalorder %s154, %s155
      %p167 = scmp.eq.s32.totalorder %s40, 1
      %p168 = por %p166, %p167
      %p170 = scmp.ne.s32.totalorder %s155, %s169
      %p171 = scmp.eq.s32.totalorder %s40, 0
      %p172 = por %p170, %p171
      %s174 = sadd.s32 %s173, 1
      %p177 = scmp.eq.s32.totalorder %s34, 1
      %p178 = scmp.ne.s32.totalorder %s173, %s175
      %p179 = scmp.eq.s32.totalorder %s34, 0
      %p180 = por %p178, %p179
      %p181 = scmp.ne.s32.totalorder %s173, %s175
      %p182 = scmp.eq.s32.totalorder %s39, 1
      %p183 = por %p181, %p182
      %p184 = scmp.ne.s32.totalorder %s175, %s176
      %p185 = scmp.eq.s32.totalorder %s39, 0
      %p186 = por %p184, %p185
      %p187 = scmp.ne.s32.totalorder %s175, %s176
      %p188 = scmp.eq.s32.totalorder %s40, 1
      %p189 = por %p187, %p188
      %p191 = scmp.ne.s32.totalorder %s176, %s190
      %p192 = scmp.eq.s32.totalorder %s40, 0
      %p193 = por %p191, %p192
      %s195 = sadd.s32 %s194, 1
      %p198 = scmp.eq.s32.totalorder %s34, 1
      %p199 = scmp.ne.s32.totalorder %s194, %s196
      %p200 = scmp.eq.s32.totalorder %s34, 0
      %p201 = por %p199, %p200
      %p202 = scmp.ne.s32.totalorder %s194, %s196
      %p203 = scmp.eq.s32.totalorder %s39, 1
      %p204 = por %p202, %p203
      %p205 = scmp.ne.s32.totalorder %s196, %s197
      %p206 = scmp.eq.s32.totalorder %s39, 0
      %p207 = por %p205, %p206
      %p208 = scmp.ne.s32.totalorder %s196, %s197
      %p209 = scmp.eq.s32.totalorder %s40, 1
      %p210 = por %p208, %p209
      %p212 = scmp.ne.s32.totalorder %s197, %s211
      %p213 = scmp.eq.s32.totalorder %s40, 0
      %p214 = por %p212, %p213
      %s216 = sadd.s32 %s215, 1
      %p219 = scmp.eq.s32.totalorder %s34, 1
      %p220 = scmp.ne.s32.totalorder %s215, %s217
      %p221 = scmp.eq.s32.totalorder %s34, 0
      %p222 = por %p220, %p221
      %p223 = scmp.ne.s32.totalorder %s215, %s217
      %p224 = scmp.eq.s32.totalorder %s39, 1
      %p225 = por %p223, %p224
      %p226 = scmp.ne.s32.totalorder %s217, %s218
      %p227 = scmp.eq.s32.totalorder %s39, 0
      %p228 = por %p226, %p227
      %p229 = scmp.ne.s32.totalorder %s217, %s218
      %p230 = scmp.eq.s32.totalorder %s40, 1
      %p231 = por %p229, %p230
      %p233 = scmp.ne.s32.totalorder %s218, %s232
      %p234 = scmp.eq.s32.totalorder %s40, 0
      %p235 = por %p233, %p234
      %s237 = sadd.s32 %s236, 1
      %p240 = scmp.eq.s32.totalorder %s34, 1
      %p241 = scmp.ne.s32.totalorder %s236, %s238
      %p242 = scmp.eq.s32.totalorder %s34, 0
      %p243 = por %p241, %p242
      %p244 = scmp.ne.s32.totalorder %s236, %s238
      %p245 = scmp.eq.s32.totalorder %s39, 1
      %p246 = por %p244, %p245
      %p247 = scmp.ne.s32.totalorder %s238, %s239
      %p248 = scmp.eq.s32.totalorder %s39, 0
      %p249 = por %p247, %p248
      %p250 = scmp.ne.s32.totalorder %s238, %s239
      %p251 = scmp.eq.s32.totalorder %s40, 1
      %p252 = por %p250, %p251
      %p254 = scmp.ne.s32.totalorder %s239, %s253
      %p255 = scmp.eq.s32.totalorder %s40, 0
      %p256 = por %p254, %p255
      %s258 = sadd.s32 %s257, 1
      %p261 = scmp.eq.s32.totalorder %s34, 1
      %p262 = scmp.ne.s32.totalorder %s257, %s259
      %p263 = scmp.eq.s32.totalorder %s34, 0
      %p264 = por %p262, %p263
      %p265 = scmp.ne.s32.totalorder %s257, %s259
      %p266 = scmp.eq.s32.totalorder %s39, 1
      %p267 = por %p265, %p266
      %p268 = scmp.ne.s32.totalorder %s259, %s260
      %p269 = scmp.eq.s32.totalorder %s39, 0
      %p270 = por %p268, %p269
      %p271 = scmp.ne.s32.totalorder %s259, %s260
      %p272 = scmp.eq.s32.totalorder %s40, 1
      %p273 = por %p271, %p272
      %p275 = scmp.ne.s32.totalorder %s260, %s274
      %p276 = scmp.eq.s32.totalorder %s40, 0
      %p277 = por %p275, %p276
      %s279 = sadd.s32 %s278, 1
      %p282 = scmp.eq.s32.totalorder %s34, 1
      %p283 = scmp.ne.s32.totalorder %s278, %s280
      %p284 = scmp.eq.s32.totalorder %s34, 0
      %p285 = por %p283, %p284
      %p286 = scmp.ne.s32.totalorder %s278, %s280
      %p287 = scmp.eq.s32.totalorder %s39, 1
      %p288 = por %p286, %p287
      %p289 = scmp.ne.s32.totalorder %s280, %s281
      %p290 = scmp.eq.s32.totalorder %s39, 0
      %p291 = por %p289, %p290
      %p292 = scmp.ne.s32.totalorder %s280, %s281
      %p293 = scmp.eq.s32.totalorder %s40, 1
      %p294 = por %p292, %p293
      %p296 = scmp.ne.s32.totalorder %s281, %s295
      %p297 = scmp.eq.s32.totalorder %s40, 0
      %p298 = por %p296, %p297
      %s300 = sadd.s32 %s299, 1
      %p303 = scmp.eq.s32.totalorder %s34, 1
      %p304 = scmp.ne.s32.totalorder %s299, %s301
      %p305 = scmp.eq.s32.totalorder %s34, 0
      %p306 = por %p304, %p305
      %p307 = scmp.ne.s32.totalorder %s299, %s301
      %p308 = scmp.eq.s32.totalorder %s39, 1
      %p309 = por %p307, %p308
      %p310 = scmp.ne.s32.totalorder %s301, %s302
      %p311 = scmp.eq.s32.totalorder %s39, 0
      %p312 = por %p310, %p311
      %p313 = scmp.ne.s32.totalorder %s301, %s302
      %p314 = scmp.eq.s32.totalorder %s40, 1
      %p315 = por %p313, %p314
      %p317 = scmp.ne.s32.totalorder %s302, %s316
      %p318 = scmp.eq.s32.totalorder %s40, 0
      %p319 = por %p317, %p318
      %s321 = sadd.s32 %s320, 1
      %p324 = scmp.eq.s32.totalorder %s34, 1
      %p325 = scmp.ne.s32.totalorder %s320, %s322
      %p326 = scmp.eq.s32.totalorder %s34, 0
      %p327 = por %p325, %p326
      %p328 = scmp.ne.s32.totalorder %s320, %s322
      %p329 = scmp.eq.s32.totalorder %s39, 1
      %p330 = por %p328, %p329
      %p331 = scmp.ne.s32.totalorder %s322, %s323
      %p332 = scmp.eq.s32.totalorder %s39, 0
      %p333 = por %p331, %p332
      %p334 = scmp.ne.s32.totalorder %s322, %s323
      %p335 = scmp.eq.s32.totalorder %s40, 1
      %p336 = por %p334, %p335
      %p338 = scmp.ne.s32.totalorder %s323, %s337
      %p339 = scmp.eq.s32.totalorder %s40, 0
      %p340 = por %p338, %p339
      %s342 = sadd.s32 %s341, 1
      %p345 = scmp.eq.s32.totalorder %s34, 1
      %p346 = scmp.ne.s32.totalorder %s341, %s343
      %p347 = scmp.eq.s32.totalorder %s34, 0
      %p348 = por %p346, %p347
      %p349 = scmp.ne.s32.totalorder %s341, %s343
      %p350 = scmp.eq.s32.totalorder %s39, 1
      %p351 = por %p349, %p350
      %p352 = scmp.ne.s32.totalorder %s343, %s344
      %p353 = scmp.eq.s32.totalorder %s39, 0
      %p354 = por %p352, %p353
      %p355 = scmp.ne.s32.totalorder %s343, %s344
      %p356 = scmp.eq.s32.totalorder %s40, 1
      %p357 = por %p355, %p356
      %p359 = scmp.ne.s32.totalorder %s344, %s358
      %p360 = scmp.eq.s32.totalorder %s40, 0
      %p361 = por %p359, %p360
      %s363 = sadd.s32 %s362, 1
      %p366 = scmp.eq.s32.totalorder %s34, 1
      %p367 = scmp.ne.s32.totalorder %s362, %s364
      %p368 = scmp.eq.s32.totalorder %s34, 0
      %p369 = por %p367, %p368
      %p370 = scmp.ne.s32.totalorder %s362, %s364
      %p371 = scmp.eq.s32.totalorder %s39, 1
      %p372 = por %p370, %p371
      %p373 = scmp.ne.s32.totalorder %s364, %s365
      %p374 = scmp.eq.s32.totalorder %s39, 0
      %p375 = por %p373, %p374
      %p376 = scmp.ne.s32.totalorder %s364, %s365
      %p377 = scmp.eq.s32.totalorder %s40, 1
      %p378 = por %p376, %p377
      %p380 = scmp.ne.s32.totalorder %s365, %s379
      %p381 = scmp.eq.s32.totalorder %s40, 0
      %p382 = por %p380, %p381
      %s384 = sadd.s32 %s383, 1
      %p387 = scmp.eq.s32.totalorder %s34, 1
      %p388 = scmp.ne.s32.totalorder %s383, %s385
      %p389 = scmp.eq.s32.totalorder %s34, 0
      %p390 = por %p388, %p389
      %p391 = scmp.ne.s32.totalorder %s383, %s385
      %p392 = scmp.eq.s32.totalorder %s39, 1
      %p393 = por %p391, %p392
      %p394 = scmp.ne.s32.totalorder %s385, %s386
      %p395 = scmp.eq.s32.totalorder %s39, 0
      %p396 = por %p394, %p395
      %p397 = scmp.ne.s32.totalorder %s385, %s386
      %p398 = scmp.eq.s32.totalorder %s40, 1
      %p399 = por %p397, %p398
      %p401 = scmp.ne.s32.totalorder %s386, %s400
      %p402 = scmp.eq.s32.totalorder %s40, 0
      %p403 = por %p401, %p402
      %s405 = sadd.s32 %s404, 1
      %p408 = scmp.eq.s32.totalorder %s34, 1
      %p409 = scmp.ne.s32.totalorder %s404, %s406
      %p410 = scmp.eq.s32.totalorder %s34, 0
      %p411 = por %p409, %p410
      %p412 = scmp.ne.s32.totalorder %s404, %s406
      %p413 = scmp.eq.s32.totalorder %s39, 1
      %p414 = por %p412, %p413
      %p415 = scmp.ne.s32.totalorder %s406, %s407
      %p416 = scmp.eq.s32.totalorder %s39, 0
      %p417 = por %p415, %p416
      %p418 = scmp.ne.s32.totalorder %s406, %s407
      %p419 = scmp.eq.s32.totalorder %s40, 1
      %p420 = por %p418, %p419
      %p422 = scmp.ne.s32.totalorder %s407, %s421
      %p423 = scmp.eq.s32.totalorder %s40, 0
      %p424 = por %p422, %p423
      %s426 = sadd.s32 %s425, 1
      %p429 = scmp.eq.s32.totalorder %s34, 1
      %p430 = scmp.ne.s32.totalorder %s425, %s427
      %p431 = scmp.eq.s32.totalorder %s34, 0
      %p432 = por %p430, %p431
      %p433 = scmp.ne.s32.totalorder %s425, %s427
      %p434 = scmp.eq.s32.totalorder %s39, 1
      %p435 = por %p433, %p434
      %p436 = scmp.ne.s32.totalorder %s427, %s428
      %p437 = scmp.eq.s32.totalorder %s39, 0
      %p438 = por %p436, %p437
      %p439 = scmp.ne.s32.totalorder %s427, %s428
      %p440 = scmp.eq.s32.totalorder %s40, 1
      %p441 = por %p439, %p440
      %p443 = scmp.ne.s32.totalorder %s428, %s442
      %p444 = scmp.eq.s32.totalorder %s40, 0
      %p445 = por %p443, %p444
      %s446 = ssub.s32 %s34, %s41
      %p447 = scmp.eq.s32.totalorder %s446, 0
      %s449 = sadd.s32 %s448, 1
      %s450 = scalar_select %p447, %s448, %s449
      %p453 = pneg %p447
      %p454 = scmp.eq.s32.totalorder %s34, 1
      %p455 = por %p453, %p454
      %p456 = scmp.ne.s32.totalorder %s448, %s451
      %p457 = scmp.eq.s32.totalorder %s34, 0
      %p458 = por %p456, %p457
      %p459 = scmp.ne.s32.totalorder %s448, %s451
      %p460 = scmp.eq.s32.totalorder %s39, 1
      %p461 = por %p459, %p460
      %p462 = scmp.ne.s32.totalorder %s451, %s452
      %p463 = scmp.eq.s32.totalorder %s39, 0
      %p464 = por %p462, %p463
      %p465 = scmp.ne.s32.totalorder %s451, %s452
      %p466 = scmp.eq.s32.totalorder %s40, 1
      %p467 = por %p465, %p466
      %p469 = scmp.ne.s32.totalorder %s452, %s468
      %p470 = scmp.eq.s32.totalorder %s40, 0
      %p471 = por %p469, %p470
      %p472 = scmp.le.s32.totalorder 1, %s34
      %p473 = scmp.lt.s32.totalorder %s34, 3
      %p474 = pnand %p472, %p473
      %p475 = pneg %p474
      // Predicated region
      $region9: #{tpu_custom_call.1} parent=5 // pred_check
        _
      $region10: #{tpu_custom_call.1} parent=5 // pred_check_branch
        %477 = sbr.rel (%p474) target = $region12
      $region11: #{tpu_custom_call.1} parent=5 // pred_region
        %s478 = ssub.s32 %s34, 1
        // Predicated region
        $region13: #{tpu_custom_call.1} parent=11 // pred_check
          %p479 = pneg %p81
        $region14: #{tpu_custom_call.1} parent=11 // pred_check_branch
          %481 = sbr.rel (%p479) target = $region16
        $region15: #{tpu_custom_call.1} parent=11 // pred_region
          %s483 = ssub.s32 256, 256
          %484 = vsyncadd [#allocation6], %s483
          %s486 = sshll.u32 [#allocation5], 4
          %s487 = int_to_ptr.vmem [resolvable:$true] %s486
          %489 = dma.hbm_to_vmem [thread:$0]  %s1, 256, %s487, [#allocation6]
        $region16: #{tpu_custom_call.1} parent=11 // pred_fallthru
          _
        // Predicated region
        $region17: #{tpu_custom_call.1} parent=11 // pred_check
          %p490 = pneg %p102
        $region18: #{tpu_custom_call.1} parent=11 // pred_check_branch
          %492 = sbr.rel (%p490) target = $region20
        $region19: #{tpu_custom_call.1} parent=11 // pred_region
          %s494 = ssub.s32 64, 64
          %495 = vsyncadd [#allocation6], %s494
          %s496 = sshll.u32 [#allocation7], 4
          %s497 = int_to_ptr.vmem [resolvable:$true] %s496
          %502 = dma.hbm_to_vmem [thread:$0]  %s2, 64, %s497, [#allocation6], 32, 32, 2
        $region20: #{tpu_custom_call.1} parent=11 // pred_fallthru
          _
        // Predicated region
        $region21: #{tpu_custom_call.1} parent=11 // pred_check
          %p503 = pneg %p123
        $region22: #{tpu_custom_call.1} parent=11 // pred_check_branch
          %505 = sbr.rel (%p503) target = $region24
        $region23: #{tpu_custom_call.1} parent=11 // pred_region
          _
        $region24: #{tpu_custom_call.1} parent=11 // pred_fallthru
          _
        // Predicated region
        $region25: #{tpu_custom_call.1} parent=11 // pred_check
          %p506 = pneg %p144
        $region26: #{tpu_custom_call.1} parent=11 // pred_check_branch
          %508 = sbr.rel (%p506) target = $region28
        $region27: #{tpu_custom_call.1} parent=11 // pred_region
          %s510 = ssub.s32 24576, 24576
          %511 = vsyncadd [#allocation9], %s510
          %s512 = sshll.u32 [#allocation8], 4
          %s513 = int_to_ptr.vmem [resolvable:$true] %s512
          %518 = dma.hbm_to_vmem [thread:$0]  %s4, 24576, %s513, [#allocation9], 384, 384, 24
        $region28: #{tpu_custom_call.1} parent=11 // pred_fallthru
          _
        // Predicated region
        $region29: #{tpu_custom_call.1} parent=11 // pred_check
          %p519 = pneg %p165
        $region30: #{tpu_custom_call.1} parent=11 // pred_check_branch
          %521 = sbr.rel (%p519) target = $region32
        $region31: #{tpu_custom_call.1} parent=11 // pred_region
          %s523 = ssub.s32 192, 192
          %524 = vsyncadd [#allocation9], %s523
          %s525 = sshll.u32 [#allocation10], 4
          %s526 = int_to_ptr.vmem [resolvable:$true] %s525
          %531 = dma.hbm_to_vmem [thread:$0]  %s5, 192, %s526, [#allocation9], 96, 96, 6
        $region32: #{tpu_custom_call.1} parent=11 // pred_fallthru
          _
        // Predicated region
        $region33: #{tpu_custom_call.1} parent=11 // pred_check
          %p532 = pneg %p186
        $region34: #{tpu_custom_call.1} parent=11 // pred_check_branch
          %534 = sbr.rel (%p532) target = $region36
        $region35: #{tpu_custom_call.1} parent=11 // pred_region
          %s536 = ssub.s32 8192, 8192
          %537 = vsyncadd [#allocation12], %s536
          %s538 = sshll.u32 [#allocation11], 4
          %s539 = int_to_ptr.vmem [resolvable:$true] %s538
          %544 = dma.hbm_to_vmem [thread:$0]  %s6, 8192, %s539, [#allocation12], 128, 128, 8
        $region36: #{tpu_custom_call.1} parent=11 // pred_fallthru
          _
        // Predicated region
        $region37: #{tpu_custom_call.1} parent=11 // pred_check
          %p545 = pneg %p207
        $region38: #{tpu_custom_call.1} parent=11 // pred_check_branch
          %547 = sbr.rel (%p545) target = $region40
        $region39: #{tpu_custom_call.1} parent=11 // pred_region
          _
        $region40: #{tpu_custom_call.1} parent=11 // pred_fallthru
          _
        // Predicated region
        $region41: #{tpu_custom_call.1} parent=11 // pred_check
          %p548 = pneg %p228
        $region42: #{tpu_custom_call.1} parent=11 // pred_check_branch
          %550 = sbr.rel (%p548) target = $region44
        $region43: #{tpu_custom_call.1} parent=11 // pred_region
          %s552 = ssub.s32 64, 64
          %553 = vsyncadd [#allocation12], %s552
          %s554 = sshll.u32 [#allocation13], 4
          %s555 = int_to_ptr.vmem [resolvable:$true] %s554
          %560 = dma.hbm_to_vmem [thread:$0]  %s8, 64, %s555, [#allocation12], 32, 32, 2
        $region44: #{tpu_custom_call.1} parent=11 // pred_fallthru
          _
        // Predicated region
        $region45: #{tpu_custom_call.1} parent=11 // pred_check
          %p561 = pneg %p249
        $region46: #{tpu_custom_call.1} parent=11 // pred_check_branch
          %563 = sbr.rel (%p561) target = $region48
        $region47: #{tpu_custom_call.1} parent=11 // pred_region
          %s565 = ssub.s32 64, 64
          %566 = vsyncadd [#allocation15], %s565
          %s567 = sshll.u32 [#allocation14], 4
          %s568 = int_to_ptr.vmem [resolvable:$true] %s567
          %573 = dma.hbm_to_vmem [thread:$0]  %s9, 64, %s568, [#allocation15], 32, 32, 2
        $region48: #{tpu_custom_call.1} parent=11 // pred_fallthru
          _
        // Predicated region
        $region49: #{tpu_custom_call.1} parent=11 // pred_check
          %p574 = pneg %p270
        $region50: #{tpu_custom_call.1} parent=11 // pred_check_branch
          %576 = sbr.rel (%p574) target = $region52
        $region51: #{tpu_custom_call.1} parent=11 // pred_region
          %s578 = ssub.s32 16384, 16384
          %579 = vsyncadd [#allocation15], %s578
          %s580 = sshll.u32 [#allocation16], 4
          %s581 = int_to_ptr.vmem [resolvable:$true] %s580
          %586 = dma.hbm_to_vmem [thread:$0]  %s10, 16384, %s581, [#allocation15], 256, 256, 16
        $region52: #{tpu_custom_call.1} parent=11 // pred_fallthru
          _
        // Predicated region
        $region53: #{tpu_custom_call.1} parent=11 // pred_check
          %p587 = pneg %p291
        $region54: #{tpu_custom_call.1} parent=11 // pred_check_branch
          %589 = sbr.rel (%p587) target = $region56
        $region55: #{tpu_custom_call.1} parent=11 // pred_region
          _
        $region56: #{tpu_custom_call.1} parent=11 // pred_fallthru
          _
        // Predicated region
        $region57: #{tpu_custom_call.1} parent=11 // pred_check
          %p590 = pneg %p312
        $region58: #{tpu_custom_call.1} parent=11 // pred_check_branch
          %592 = sbr.rel (%p590) target = $region60
        $region59: #{tpu_custom_call.1} parent=11 // pred_region
          %s594 = ssub.s32 16384, 16384
          %595 = vsyncadd [#allocation18], %s594
          %s596 = sshll.u32 [#allocation17], 4
          %s597 = int_to_ptr.vmem [resolvable:$true] %s596
          %602 = dma.hbm_to_vmem [thread:$0]  %s12, 16384, %s597, [#allocation18], 128, 128, 8
        $region60: #{tpu_custom_call.1} parent=11 // pred_fallthru
          _
        // Predicated region
        $region61: #{tpu_custom_call.1} parent=11 // pred_check
          %p603 = pneg %p333
        $region62: #{tpu_custom_call.1} parent=11 // pred_check_branch
          %605 = sbr.rel (%p603) target = $region64
        $region63: #{tpu_custom_call.1} parent=11 // pred_region
          _
        $region64: #{tpu_custom_call.1} parent=11 // pred_fallthru
          _
        // Predicated region
        $region65: #{tpu_custom_call.1} parent=11 // pred_check
          %p606 = pneg %p354
        $region66: #{tpu_custom_call.1} parent=11 // pred_check_branch
          %608 = sbr.rel (%p606) target = $region68
        $region67: #{tpu_custom_call.1} parent=11 // pred_region
          _
        $region68: #{tpu_custom_call.1} parent=11 // pred_fallthru
          _
        // Predicated region
        $region69: #{tpu_custom_call.1} parent=11 // pred_check
          %p609 = pneg %p375
        $region70: #{tpu_custom_call.1} parent=11 // pred_check_branch
          %611 = sbr.rel (%p609) target = $region72
        $region71: #{tpu_custom_call.1} parent=11 // pred_region
          _
        $region72: #{tpu_custom_call.1} parent=11 // pred_fallthru
          _
        // Predicated region
        $region73: #{tpu_custom_call.1} parent=11 // pred_check
          %p612 = pneg %p396
        $region74: #{tpu_custom_call.1} parent=11 // pred_check_branch
          %614 = sbr.rel (%p612) target = $region76
        $region75: #{tpu_custom_call.1} parent=11 // pred_region
          _
        $region76: #{tpu_custom_call.1} parent=11 // pred_fallthru
          _
        // Predicated region
        $region77: #{tpu_custom_call.1} parent=11 // pred_check
          %p615 = pneg %p417
        $region78: #{tpu_custom_call.1} parent=11 // pred_check_branch
          %617 = sbr.rel (%p615) target = $region80
        $region79: #{tpu_custom_call.1} parent=11 // pred_region
          _
        $region80: #{tpu_custom_call.1} parent=11 // pred_fallthru
          _
        // Predicated region
        $region81: #{tpu_custom_call.1} parent=11 // pred_check
          %p618 = pneg %p438
        $region82: #{tpu_custom_call.1} parent=11 // pred_check_branch
          %620 = sbr.rel (%p618) target = $region84
        $region83: #{tpu_custom_call.1} parent=11 // pred_region
          %s622 = ssub.s32 16, 16
          %623 = vsyncadd [#allocation4], %s622
          %s625 = sshll.u32 %s18, 4
          %s626 = int_to_ptr.vmem [resolvable:$true] %s625
          %628 = dma.vmem_to_smem %s626, 16, [#allocation19], [#allocation4]
        $region84: #{tpu_custom_call.1} parent=11 // pred_fallthru
          _
      $region12: #{tpu_custom_call.1} parent=5 // pred_fallthru
        _
      %p629 = scmp.lt.s32.totalorder %s34, 2
      // Predicated region
      $region85: #{tpu_custom_call.1} parent=5 // pred_check
        %p630 = pneg %p629
      $region86: #{tpu_custom_call.1} parent=5 // pred_check_branch
        %632 = sbr.rel (%p630) target = $region88
      $region87: #{tpu_custom_call.1} parent=5 // pred_region
        // Predicated region
        $region89: #{tpu_custom_call.1} parent=87 // pred_check
          %p633 = pneg %p54
        $region90: #{tpu_custom_call.1} parent=87 // pred_check_branch
          %635 = sbr.rel (%p633) target = $region92
        $region91: #{tpu_custom_call.1} parent=87 // pred_region
          %s636 = sand.u32 %s44, 1
          %s637 = scalar_lea.sflag [#allocation3], %s636
          %s638 = sand.u32 %s44, 1
          %s639 = smul.addr %s638, 48
          %s640 = scalar_lea.vmem [#allocation2], %s639
          %s641 = smul.u32 3, %s34
          %s643 = ssub.s32 768, 768
          %644 = vsyncadd %s637, %s643
          %s645 = smul.addr %s641, 2
          %s646 = smul.addr %s645, 128
          %s647 = scalar_lea.hbm %s0, %s646
          %s648 = sshll.u32 %s640, 4
          %s649 = int_to_ptr.vmem [resolvable:$true] %s648
          %654 = dma.hbm_to_vmem [thread:$0]  %s647, 768, %s649, %s637, 256, 256, 16
        $region92: #{tpu_custom_call.1} parent=87 // pred_fallthru
          _
      $region88: #{tpu_custom_call.1} parent=5 // pred_fallthru
        _
      %p655 = scmp.le.s32.totalorder 1, %s34
      %p656 = scmp.lt.s32.totalorder %s34, 3
      %p657 = pnand %p655, %p656
      %p658 = pneg %p657
      // Predicated region
      $region93: #{tpu_custom_call.1} parent=5 // pred_check
        _
      $region94: #{tpu_custom_call.1} parent=5 // pred_check_branch
        %660 = sbr.rel (%p657) target = $region96
      $region95: #{tpu_custom_call.1} parent=5 // pred_region
        %s661 = ssub.s32 %s34, 1
        %s662 = sand.u32 %s47, 1
        %s663 = scalar_lea.sflag [#allocation3], %s662
        %s664 = sand.u32 %s47, 1
        %s665 = smul.addr %s664, 48
        %s666 = scalar_lea.vmem [#allocation2], %s665
        // Predicated region
        $region97: #{tpu_custom_call.1} parent=95 // pred_check
          %p667 = pneg %p60
        $region98: #{tpu_custom_call.1} parent=95 // pred_check_branch
          %669 = sbr.rel (%p667) target = $region100
        $region99: #{tpu_custom_call.1} parent=95 // pred_region
          %670 = dma.done %s663, 768
        $region100: #{tpu_custom_call.1} parent=95 // pred_fallthru
          _
        // Predicated region
        $region101: #{tpu_custom_call.1} parent=95 // pred_check
          %p671 = pneg %p81
        $region102: #{tpu_custom_call.1} parent=95 // pred_check_branch
          %673 = sbr.rel (%p671) target = $region104
        $region103: #{tpu_custom_call.1} parent=95 // pred_region
          %674 = dma.done [#allocation6], 256
        $region104: #{tpu_custom_call.1} parent=95 // pred_fallthru
          _
        // Predicated region
        $region105: #{tpu_custom_call.1} parent=95 // pred_check
          %p675 = pneg %p102
        $region106: #{tpu_custom_call.1} parent=95 // pred_check_branch
          %677 = sbr.rel (%p675) target = $region108
        $region107: #{tpu_custom_call.1} parent=95 // pred_region
          %678 = dma.done [#allocation6], 64
        $region108: #{tpu_custom_call.1} parent=95 // pred_fallthru
          _
        // Predicated region
        $region109: #{tpu_custom_call.1} parent=95 // pred_check
          %p679 = pneg %p144
        $region110: #{tpu_custom_call.1} parent=95 // pred_check_branch
          %681 = sbr.rel (%p679) target = $region112
        $region111: #{tpu_custom_call.1} parent=95 // pred_region
          %682 = dma.done [#allocation9], 24576
        $region112: #{tpu_custom_call.1} parent=95 // pred_fallthru
          _
        // Predicated region
        $region113: #{tpu_custom_call.1} parent=95 // pred_check
          %p683 = pneg %p165
        $region114: #{tpu_custom_call.1} parent=95 // pred_check_branch
          %685 = sbr.rel (%p683) target = $region116
        $region115: #{tpu_custom_call.1} parent=95 // pred_region
          %686 = dma.done [#allocation9], 192
        $region116: #{tpu_custom_call.1} parent=95 // pred_fallthru
          _
        // Predicated region
        $region117: #{tpu_custom_call.1} parent=95 // pred_check
          %p687 = pneg %p186
        $region118: #{tpu_custom_call.1} parent=95 // pred_check_branch
          %689 = sbr.rel (%p687) target = $region120
        $region119: #{tpu_custom_call.1} parent=95 // pred_region
          %690 = dma.done [#allocation12], 8192
        $region120: #{tpu_custom_call.1} parent=95 // pred_fallthru
          _
        // Predicated region
        $region121: #{tpu_custom_call.1} parent=95 // pred_check
          %p691 = pneg %p228
        $region122: #{tpu_custom_call.1} parent=95 // pred_check_branch
          %693 = sbr.rel (%p691) target = $region124
        $region123: #{tpu_custom_call.1} parent=95 // pred_region
          %694 = dma.done [#allocation12], 64
        $region124: #{tpu_custom_call.1} parent=95 // pred_fallthru
          _
        // Predicated region
        $region125: #{tpu_custom_call.1} parent=95 // pred_check
          %p695 = pneg %p249
        $region126: #{tpu_custom_call.1} parent=95 // pred_check_branch
          %697 = sbr.rel (%p695) target = $region128
        $region127: #{tpu_custom_call.1} parent=95 // pred_region
          %698 = dma.done [#allocation15], 64
        $region128: #{tpu_custom_call.1} parent=95 // pred_fallthru
          _
        // Predicated region
        $region129: #{tpu_custom_call.1} parent=95 // pred_check
          %p699 = pneg %p270
        $region130: #{tpu_custom_call.1} parent=95 // pred_check_branch
          %701 = sbr.rel (%p699) target = $region132
        $region131: #{tpu_custom_call.1} parent=95 // pred_region
          %702 = dma.done [#allocation15], 16384
        $region132: #{tpu_custom_call.1} parent=95 // pred_fallthru
          _
        // Predicated region
        $region133: #{tpu_custom_call.1} parent=95 // pred_check
          %p703 = pneg %p312
        $region134: #{tpu_custom_call.1} parent=95 // pred_check_branch
          %705 = sbr.rel (%p703) target = $region136
        $region135: #{tpu_custom_call.1} parent=95 // pred_region
          %706 = dma.done [#allocation18], 16384
        $region136: #{tpu_custom_call.1} parent=95 // pred_fallthru
          _
        // Predicated region
        $region137: #{tpu_custom_call.1} parent=95 // pred_check
          %p707 = pneg %p438
        $region138: #{tpu_custom_call.1} parent=95 // pred_check_branch
          %709 = sbr.rel (%p707) target = $region140
        $region139: #{tpu_custom_call.1} parent=95 // pred_region
          %710 = dma.done [#allocation4], 16
        $region140: #{tpu_custom_call.1} parent=95 // pred_fallthru
          _
        %711 = sfence
        %s712 = sand.u32 %s47, 1
        %s713 = scalar_lea.sflag [#allocation3], %s712
        %s714 = sand.u32 %s47, 1
        %s715 = smul.addr %s714, 48
        %s716 = scalar_lea.vmem [#allocation2], %s715
        %p717 = pneg %p60
        %p718 = pneg %p57
        %p719 = pneg %p81
        %p720 = pneg %p78
        %p721 = pneg %p102
        %p722 = pneg %p99
        %p723 = pneg %p123
        %p724 = pneg %p120
        %p725 = pneg %p144
        %p726 = pneg %p141
        %p727 = pneg %p165
        %p728 = pneg %p162
        %p729 = pneg %p186
        %p730 = pneg %p183
        %p731 = pneg %p207
        %p732 = pneg %p204
        %p733 = pneg %p228
        %p734 = pneg %p225
        %p735 = pneg %p249
        %p736 = pneg %p246
        %p737 = pneg %p270
        %p738 = pneg %p267
        %p739 = pneg %p291
        %p740 = pneg %p288
        %p741 = pneg %p312
        %p742 = pneg %p309
        %p743 = pneg %p333
        %p744 = pneg %p330
        %p745 = pneg %p354
        %p746 = pneg %p351
        %p747 = pneg %p375
        %p748 = pneg %p372
        %p749 = pneg %p396
        %p750 = pneg %p393
        %p751 = pneg %p417
        %p752 = pneg %p414
        %p753 = pneg %p438
        %p754 = pneg %p435
        %p755 = pneg %p464
        %p756 = pneg %p461
        %p757 = scmp.lt.s32.totalorder %s39, 1
        %s758 = scalar_select %p757, %s39, 1
        %s759 = smul.addr %s758, 2
        %s760 = smul.addr %s759, 4
        %s761 = scalar_lea.vmem %s19, %s760
        %s762 = smul.u32 3, %s39
        %p763 = scmp.lt.s32.totalorder %s39, 1
        %s764 = scalar_select %p763, %s39, 1
        %s765 = smul.addr %s764, 2
        %s766 = smul.addr %s765, 4
        %s767 = scalar_lea.vmem %s19, %s766
        %v769 = vld [vmem:[%s666] sm:$0xff]
        %v770 = vld [vmem:[%s666 + $0x8] sm:$0xff]
        %v771 = vld [vmem:[%s666 + $0x10] sm:$0xff]
        %v772 = vld [vmem:[%s666 + $0x18] sm:$0xff]
        %v773 = vld [vmem:[%s666 + $0x20] sm:$0xff]
        %v774 = vld [vmem:[%s666 + $0x28] sm:$0xff]
        %v775 = vld [vmem:[#allocation5] sm:$0xff]
        %v776 = vld [vmem:[#allocation5 + $0x8] sm:$0xff]
        %v777 = vadd.f32 %v769, %v775
        %v778 = vadd.f32 %v770, %v776
        %v779 = vadd.f32 %v771, %v775
        %v780 = vadd.f32 %v772, %v776
        %v781 = vadd.f32 %v773, %v775
        %v782 = vadd.f32 %v774, %v776
        %v783 = vld [vmem:[#allocation7] sm:$0x3]
        %v784 = vld [vmem:[%s3] sm:$0x3]
        %v785 = vadd.f32 %v777, %v778
        %786 = vadd.xlane.f32.xlu0 %v785
        %v787 = vpop.xlane.xlu0 %786
        %v788 = vadd.f32 %v779, %v780
        %789 = vadd.xlane.f32.xlu0 %v788
        %v790 = vpop.xlane.xlu0 %789
        %v791 = vadd.f32 %v781, %v782
        %792 = vadd.xlane.f32.xlu0 %v791
        %v793 = vpop.xlane.xlu0 %792
        %v794 = vrcp.pop 256.0
        %v795 = vmul.f32 %v787, %v794
        %v796 = vmul.f32 %v790, %v794
        %v797 = vmul.f32 %v793, %v794
        %v798 = vsub.f32 %v777, %v795
        %v799 = vsub.f32 %v778, %v795
        %v800 = vsub.f32 %v779, %v796
        %v801 = vsub.f32 %v780, %v796
        %v802 = vsub.f32 %v781, %v797
        %v803 = vsub.f32 %v782, %v797
        %v804 = vmul.f32 %v798, %v798
        %v805 = vmul.f32 %v799, %v799
        %v806 = vmul.f32 %v800, %v800
        %v807 = vmul.f32 %v801, %v801
        %v808 = vmul.f32 %v802, %v802
        %v809 = vmul.f32 %v803, %v803
        %v810 = vadd.f32 %v804, %v805
        %811 = vadd.xlane.f32.xlu0 %v810
        %v812 = vpop.xlane.xlu0 %811
        %v813 = vadd.f32 %v806, %v807
        %814 = vadd.xlane.f32.xlu0 %v813
        %v815 = vpop.xlane.xlu0 %814
        %v816 = vadd.f32 %v808, %v809
        %817 = vadd.xlane.f32.xlu0 %v816
        %v818 = vpop.xlane.xlu0 %817
        %v819 = vmul.f32 %v812, %v794
        %v820 = vmul.f32 %v815, %v794
        %v821 = vmul.f32 %v818, %v794
        %v822 = vadd.f32 %v819, 1e-06
        %v823 = vadd.f32 %v820, 1e-06
        %v824 = vadd.f32 %v821, 1e-06
        %v825 = vrsqrt.pop %v822
        %v826 = vrsqrt.pop %v823
        %v827 = vrsqrt.pop %v824
        %v828 = vmul.f32 %v798, %v825
        %v829 = vmul.f32 %v799, %v825
        %v830 = vmul.f32 %v800, %v826
        %v831 = vmul.f32 %v801, %v826
        %v832 = vmul.f32 %v802, %v827
        %v833 = vmul.f32 %v803, %v827
        %v835 = vlaneseq
        %v836 = vshrl.u32 %v835, 7
        %v837 = vsub.s32 0, %v836
        %v838 = vrot.slane %v783, %v837
        %v839 = vlaneseq
        %v840 = vshrl.u32 %v839, 7
        %v841 = vsub.s32 1, %v840
        %v842 = vrot.slane %v783, %v841
        %v845 = vmul.f32 %v828, %v838
        %v846 = vmul.f32 %v829, %v842
        %v847 = vmul.f32 %v830, %v838
        %v848 = vmul.f32 %v831, %v842
        %v849 = vmul.f32 %v832, %v838
        %v850 = vmul.f32 %v833, %v842
        %v852 = vlaneseq
        %v853 = vshrl.u32 %v852, 7
        %v854 = vsub.s32 0, %v853
        %v855 = vrot.slane %v784, %v854
        %v856 = vlaneseq
        %v857 = vshrl.u32 %v856, 7
        %v858 = vsub.s32 1, %v857
        %v859 = vrot.slane %v784, %v858
        %v862 = vadd.f32 %v845, %v855
        %v863 = vadd.f32 %v846, %v859
        %v864 = vadd.f32 %v847, %v855
        %v865 = vadd.f32 %v848, %v859
        %v866 = vadd.f32 %v849, %v855
        %v867 = vadd.f32 %v850, %v859
        %v868 = vpack.c.bf16 %v864, %v862
        %v869 = vpack.c.bf16 %v865, %v863
        %v870 = vpack.c.bf16 %v866, %v866
        %v871 = vpack.c.bf16 %v867, %v867
        %v872 = vld [vmem:[#allocation8] sm:$0xff]
        %v873 = vld [vmem:[#allocation8 + $0x8] sm:$0xff]
        %v874 = vld [vmem:[#allocation8 + $0x10] sm:$0xff]
        %v875 = vld [vmem:[#allocation8 + $0x18] sm:$0xff]
        %v876 = vld [vmem:[#allocation8 + $0x20] sm:$0xff]
        %v877 = vld [vmem:[#allocation8 + $0x28] sm:$0xff]
        %v878 = vld [vmem:[#allocation8 + $0x30] sm:$0xff]
        %v879 = vld [vmem:[#allocation8 + $0x38] sm:$0xff]
        %v880 = vld [vmem:[#allocation8 + $0x40] sm:$0xff]
        %v881 = vld [vmem:[#allocation8 + $0x48] sm:$0xff]
        %v882 = vld [vmem:[#allocation8 + $0x50] sm:$0xff]
        %v883 = vld [vmem:[#allocation8 + $0x58] sm:$0xff]
        %v884 = vld [vmem:[#allocation8 + $0x60] sm:$0xff]
        %v885 = vld [vmem:[#allocation8 + $0x68] sm:$0xff]
        %v886 = vld [vmem:[#allocation8 + $0x70] sm:$0xff]
        %v887 = vld [vmem:[#allocation8 + $0x78] sm:$0xff]
        %v888 = vld [vmem:[#allocation8 + $0x80] sm:$0xff]
        %v889 = vld [vmem:[#allocation8 + $0x88] sm:$0xff]
        %v890 = vld [vmem:[#allocation8 + $0x90] sm:$0xff]
        %v891 = vld [vmem:[#allocation8 + $0x98] sm:$0xff]
        %v892 = vld [vmem:[#allocation8 + $0xa0] sm:$0xff]
        %v893 = vld [vmem:[#allocation8 + $0xa8] sm:$0xff]
        %v894 = vld [vmem:[#allocation8 + $0xb0] sm:$0xff]
        %v895 = vld [vmem:[#allocation8 + $0xb8] sm:$0xff]
        %v896 = vld [vmem:[#allocation8 + $0xc0] sm:$0xff]
        %v897 = vld [vmem:[#allocation8 + $0xc8] sm:$0xff]
        %v898 = vld [vmem:[#allocation8 + $0xd0] sm:$0xff]
        %v899 = vld [vmem:[#allocation8 + $0xd8] sm:$0xff]
        %v900 = vld [vmem:[#allocation8 + $0xe0] sm:$0xff]
        %v901 = vld [vmem:[#allocation8 + $0xe8] sm:$0xff]
        %v902 = vld [vmem:[#allocation8 + $0xf0] sm:$0xff]
        %v903 = vld [vmem:[#allocation8 + $0xf8] sm:$0xff]
        %v904 = vld [vmem:[#allocation8 + $0x100] sm:$0xff]
        %v905 = vld [vmem:[#allocation8 + $0x108] sm:$0xff]
        %v906 = vld [vmem:[#allocation8 + $0x110] sm:$0xff]
        %v907 = vld [vmem:[#allocation8 + $0x118] sm:$0xff]
        %v908 = vld [vmem:[#allocation8 + $0x120] sm:$0xff]
        %v909 = vld [vmem:[#allocation8 + $0x128] sm:$0xff]
        %v910 = vld [vmem:[#allocation8 + $0x130] sm:$0xff]
        %v911 = vld [vmem:[#allocation8 + $0x138] sm:$0xff]
        %v912 = vld [vmem:[#allocation8 + $0x140] sm:$0xff]
        %v913 = vld [vmem:[#allocation8 + $0x148] sm:$0xff]
        %v914 = vld [vmem:[#allocation8 + $0x150] sm:$0xff]
        %v915 = vld [vmem:[#allocation8 + $0x158] sm:$0xff]
        %v916 = vld [vmem:[#allocation8 + $0x160] sm:$0xff]
        %v917 = vld [vmem:[#allocation8 + $0x168] sm:$0xff]
        %v918 = vld [vmem:[#allocation8 + $0x170] sm:$0xff]
        %v919 = vld [vmem:[#allocation8 + $0x178] sm:$0xff]
        %v920 = vld [vmem:[#allocation8 + $0x180] sm:$0xff]
        %v921 = vld [vmem:[#allocation8 + $0x188] sm:$0xff]
        %v922 = vld [vmem:[#allocation8 + $0x190] sm:$0xff]
        %v923 = vld [vmem:[#allocation8 + $0x198] sm:$0xff]
        %v924 = vld [vmem:[#allocation8 + $0x1a0] sm:$0xff]
        %v925 = vld [vmem:[#allocation8 + $0x1a8] sm:$0xff]
        %v926 = vld [vmem:[#allocation8 + $0x1b0] sm:$0xff]
        %v927 = vld [vmem:[#allocation8 + $0x1b8] sm:$0xff]
        %v928 = vld [vmem:[#allocation8 + $0x1c0] sm:$0xff]
        %v929 = vld [vmem:[#allocation8 + $0x1c8] sm:$0xff]
        %v930 = vld [vmem:[#allocation8 + $0x1d0] sm:$0xff]
        %v931 = vld [vmem:[#allocation8 + $0x1d8] sm:$0xff]
        %v932 = vld [vmem:[#allocation8 + $0x1e0] sm:$0xff]
        %v933 = vld [vmem:[#allocation8 + $0x1e8] sm:$0xff]
        %v934 = vld [vmem:[#allocation8 + $0x1f0] sm:$0xff]
        %v935 = vld [vmem:[#allocation8 + $0x1f8] sm:$0xff]
        %v936 = vld [vmem:[#allocation8 + $0x200] sm:$0xff]
        %v937 = vld [vmem:[#allocation8 + $0x208] sm:$0xff]
        %v938 = vld [vmem:[#allocation8 + $0x210] sm:$0xff]
        %v939 = vld [vmem:[#allocation8 + $0x218] sm:$0xff]
        %v940 = vld [vmem:[#allocation8 + $0x220] sm:$0xff]
        %v941 = vld [vmem:[#allocation8 + $0x228] sm:$0xff]
        %v942 = vld [vmem:[#allocation8 + $0x230] sm:$0xff]
        %v943 = vld [vmem:[#allocation8 + $0x238] sm:$0xff]
        %v944 = vld [vmem:[#allocation8 + $0x240] sm:$0xff]
        %v945 = vld [vmem:[#allocation8 + $0x248] sm:$0xff]
        %v946 = vld [vmem:[#allocation8 + $0x250] sm:$0xff]
        %v947 = vld [vmem:[#allocation8 + $0x258] sm:$0xff]
        %v948 = vld [vmem:[#allocation8 + $0x260] sm:$0xff]
        %v949 = vld [vmem:[#allocation8 + $0x268] sm:$0xff]
        %v950 = vld [vmem:[#allocation8 + $0x270] sm:$0xff]
        %v951 = vld [vmem:[#allocation8 + $0x278] sm:$0xff]
        %v952 = vld [vmem:[#allocation8 + $0x280] sm:$0xff]
        %v953 = vld [vmem:[#allocation8 + $0x288] sm:$0xff]
        %v954 = vld [vmem:[#allocation8 + $0x290] sm:$0xff]
        %v955 = vld [vmem:[#allocation8 + $0x298] sm:$0xff]
        %v956 = vld [vmem:[#allocation8 + $0x2a0] sm:$0xff]
        %v957 = vld [vmem:[#allocation8 + $0x2a8] sm:$0xff]
        %v958 = vld [vmem:[#allocation8 + $0x2b0] sm:$0xff]
        %v959 = vld [vmem:[#allocation8 + $0x2b8] sm:$0xff]
        %v960 = vld [vmem:[#allocation8 + $0x2c0] sm:$0xff]
        %v961 = vld [vmem:[#allocation8 + $0x2c8] sm:$0xff]
        %v962 = vld [vmem:[#allocation8 + $0x2d0] sm:$0xff]
        %v963 = vld [vmem:[#allocation8 + $0x2d8] sm:$0xff]
        %v964 = vld [vmem:[#allocation8 + $0x2e0] sm:$0xff]
        %v965 = vld [vmem:[#allocation8 + $0x2e8] sm:$0xff]
        %v966 = vld [vmem:[#allocation8 + $0x2f0] sm:$0xff]
        %v967 = vld [vmem:[#allocation8 + $0x2f8] sm:$0xff]
        %v968 = vld [vmem:[#allocation10] sm:$0x3f]
        %v970 = vlaneseq
        %v971 = vshrl.u32 %v970, 7
        %v972 = vsub.s32 0, %v971
        %v973 = vrot.slane %v968, %v972
        %v974 = vlaneseq
        %v975 = vshrl.u32 %v974, 7
        %v976 = vsub.s32 1, %v975
        %v977 = vrot.slane %v968, %v976
        %v978 = vlaneseq
        %v979 = vshrl.u32 %v978, 7
        %v980 = vsub.s32 2, %v979
        %v981 = vrot.slane %v968, %v980
        %v982 = vlaneseq
        %v983 = vshrl.u32 %v982, 7
        %v984 = vsub.s32 3, %v983
        %v985 = vrot.slane %v968, %v984
        %v986 = vlaneseq
        %v987 = vshrl.u32 %v986, 7
        %v988 = vsub.s32 4, %v987
        %v989 = vrot.slane %v968, %v988
        %v990 = vlaneseq
        %v991 = vshrl.u32 %v990, 7
        %v992 = vsub.s32 5, %v991
        %v993 = vrot.slane %v968, %v992
        %v1096 = vunpack.c.l.b16 %v872
        %v1097 = vunpack.c.h.b16 %v872
        %v1098 = vunpack.c.l.b16 %v873
        %v1099 = vunpack.c.h.b16 %v873
        %v1100 = vunpack.c.l.b16 %v874
        %v1101 = vunpack.c.h.b16 %v874
        %v1102 = vunpack.c.l.b16 %v875
        %v1103 = vunpack.c.h.b16 %v875
        %v1104 = vunpack.c.l.b16 %v876
        %v1105 = vunpack.c.h.b16 %v876
        %v1106 = vunpack.c.l.b16 %v877
        %v1107 = vunpack.c.h.b16 %v877
        %v1108 = vunpack.c.l.b16 %v878
        %v1109 = vunpack.c.h.b16 %v878
        %v1110 = vunpack.c.l.b16 %v879
        %v1111 = vunpack.c.h.b16 %v879
        %v1112 = vunpack.c.l.b16 %v880
        %v1113 = vunpack.c.h.b16 %v880
        %v1114 = vunpack.c.l.b16 %v881
        %v1115 = vunpack.c.h.b16 %v881
        %v1116 = vunpack.c.l.b16 %v882
        %v1117 = vunpack.c.h.b16 %v882
        %v1118 = vunpack.c.l.b16 %v883
        %v1119 = vunpack.c.h.b16 %v883
        %v1120 = vunpack.c.l.b16 %v884
        %v1121 = vunpack.c.h.b16 %v884
        %v1122 = vunpack.c.l.b16 %v885
        %v1123 = vunpack.c.h.b16 %v885
        %v1124 = vunpack.c.l.b16 %v886
        %v1125 = vunpack.c.h.b16 %v886
        %v1126 = vunpack.c.l.b16 %v887
        %v1127 = vunpack.c.h.b16 %v887
        %v1128 = vunpack.c.l.b16 %v888
        %v1129 = vunpack.c.h.b16 %v888
        %v1130 = vunpack.c.l.b16 %v889
        %v1131 = vunpack.c.h.b16 %v889
        %v1132 = vunpack.c.l.b16 %v890
        %v1133 = vunpack.c.h.b16 %v890
        %v1134 = vunpack.c.l.b16 %v891
        %v1135 = vunpack.c.h.b16 %v891
        %v1136 = vunpack.c.l.b16 %v892
        %v1137 = vunpack.c.h.b16 %v892
        %v1138 = vunpack.c.l.b16 %v893
        %v1139 = vunpack.c.h.b16 %v893
        %v1140 = vunpack.c.l.b16 %v894
        %v1141 = vunpack.c.h.b16 %v894
        %v1142 = vunpack.c.l.b16 %v895
        %v1143 = vunpack.c.h.b16 %v895
        %v1144 = vunpack.c.l.b16 %v896
        %v1145 = vunpack.c.h.b16 %v896
        %v1146 = vunpack.c.l.b16 %v897
        %v1147 = vunpack.c.h.b16 %v897
        %v1148 = vunpack.c.l.b16 %v898
        %v1149 = vunpack.c.h.b16 %v898
        %v1150 = vunpack.c.l.b16 %v899
        %v1151 = vunpack.c.h.b16 %v899
        %v1152 = vunpack.c.l.b16 %v900
        %v1153 = vunpack.c.h.b16 %v900
        %v1154 = vunpack.c.l.b16 %v901
        %v1155 = vunpack.c.h.b16 %v901
        %v1156 = vunpack.c.l.b16 %v902
        %v1157 = vunpack.c.h.b16 %v902
        %v1158 = vunpack.c.l.b16 %v903
        %v1159 = vunpack.c.h.b16 %v903
        %v1160 = vunpack.c.l.b16 %v904
        %v1161 = vunpack.c.h.b16 %v904
        %v1162 = vunpack.c.l.b16 %v905
        %v1163 = vunpack.c.h.b16 %v905
        %v1164 = vunpack.c.l.b16 %v906
        %v1165 = vunpack.c.h.b16 %v906
        %v1166 = vunpack.c.l.b16 %v907
        %v1167 = vunpack.c.h.b16 %v907
        %v1168 = vunpack.c.l.b16 %v908
        %v1169 = vunpack.c.h.b16 %v908
        %v1170 = vunpack.c.l.b16 %v909
        %v1171 = vunpack.c.h.b16 %v909
        %v1172 = vunpack.c.l.b16 %v910
        %v1173 = vunpack.c.h.b16 %v910
        %v1174 = vunpack.c.l.b16 %v911
        %v1175 = vunpack.c.h.b16 %v911
        %v1176 = vunpack.c.l.b16 %v912
        %v1177 = vunpack.c.h.b16 %v912
        %v1178 = vunpack.c.l.b16 %v913
        %v1179 = vunpack.c.h.b16 %v913
        %v1180 = vunpack.c.l.b16 %v914
        %v1181 = vunpack.c.h.b16 %v914
        %v1182 = vunpack.c.l.b16 %v915
        %v1183 = vunpack.c.h.b16 %v915
        %v1184 = vunpack.c.l.b16 %v916
        %v1185 = vunpack.c.h.b16 %v916
        %v1186 = vunpack.c.l.b16 %v917
        %v1187 = vunpack.c.h.b16 %v917
        %v1188 = vunpack.c.l.b16 %v918
        %v1189 = vunpack.c.h.b16 %v918
        %v1190 = vunpack.c.l.b16 %v919
        %v1191 = vunpack.c.h.b16 %v919
        %v1192 = vunpack.c.l.b16 %v920
        %v1193 = vunpack.c.h.b16 %v920
        %v1194 = vunpack.c.l.b16 %v921
        %v1195 = vunpack.c.h.b16 %v921
        %v1196 = vunpack.c.l.b16 %v922
        %v1197 = vunpack.c.h.b16 %v922
        %v1198 = vunpack.c.l.b16 %v923
        %v1199 = vunpack.c.h.b16 %v923
        %v1200 = vunpack.c.l.b16 %v924
        %v1201 = vunpack.c.h.b16 %v924
        %v1202 = vunpack.c.l.b16 %v925
        %v1203 = vunpack.c.h.b16 %v925
        %v1204 = vunpack.c.l.b16 %v926
        %v1205 = vunpack.c.h.b16 %v926
        %v1206 = vunpack.c.l.b16 %v927
        %v1207 = vunpack.c.h.b16 %v927
        %v1208 = vunpack.c.l.b16 %v928
        %v1209 = vunpack.c.h.b16 %v928
        %v1210 = vunpack.c.l.b16 %v929
        %v1211 = vunpack.c.h.b16 %v929
        %v1212 = vunpack.c.l.b16 %v930
        %v1213 = vunpack.c.h.b16 %v930
        %v1214 = vunpack.c.l.b16 %v931
        %v1215 = vunpack.c.h.b16 %v931
        %v1216 = vunpack.c.l.b16 %v932
        %v1217 = vunpack.c.h.b16 %v932
        %v1218 = vunpack.c.l.b16 %v933
        %v1219 = vunpack.c.h.b16 %v933
        %v1220 = vunpack.c.l.b16 %v934
        %v1221 = vunpack.c.h.b16 %v934
        %v1222 = vunpack.c.l.b16 %v935
        %v1223 = vunpack.c.h.b16 %v935
        %v1224 = vunpack.c.l.b16 %v936
        %v1225 = vunpack.c.h.b16 %v936
        %v1226 = vunpack.c.l.b16 %v937
        %v1227 = vunpack.c.h.b16 %v937
        %v1228 = vunpack.c.l.b16 %v938
        %v1229 = vunpack.c.h.b16 %v938
        %v1230 = vunpack.c.l.b16 %v939
        %v1231 = vunpack.c.h.b16 %v939
        %v1232 = vunpack.c.l.b16 %v940
        %v1233 = vunpack.c.h.b16 %v940
        %v1234 = vunpack.c.l.b16 %v941
        %v1235 = vunpack.c.h.b16 %v941
        %v1236 = vunpack.c.l.b16 %v942
        %v1237 = vunpack.c.h.b16 %v942
        %v1238 = vunpack.c.l.b16 %v943
        %v1239 = vunpack.c.h.b16 %v943
        %v1240 = vunpack.c.l.b16 %v944
        %v1241 = vunpack.c.h.b16 %v944
        %v1242 = vunpack.c.l.b16 %v945
        %v1243 = vunpack.c.h.b16 %v945
        %v1244 = vunpack.c.l.b16 %v946
        %v1245 = vunpack.c.h.b16 %v946
        %v1246 = vunpack.c.l.b16 %v947
        %v1247 = vunpack.c.h.b16 %v947
        %v1248 = vunpack.c.l.b16 %v948
        %v1249 = vunpack.c.h.b16 %v948
        %v1250 = vunpack.c.l.b16 %v949
        %v1251 = vunpack.c.h.b16 %v949
        %v1252 = vunpack.c.l.b16 %v950
        %v1253 = vunpack.c.h.b16 %v950
        %v1254 = vunpack.c.l.b16 %v951
        %v1255 = vunpack.c.h.b16 %v951
        %v1256 = vunpack.c.l.b16 %v952
        %v1257 = vunpack.c.h.b16 %v952
        %v1258 = vunpack.c.l.b16 %v953
        %v1259 = vunpack.c.h.b16 %v953
        %v1260 = vunpack.c.l.b16 %v954
        %v1261 = vunpack.c.h.b16 %v954
        %v1262 = vunpack.c.l.b16 %v955
        %v1263 = vunpack.c.h.b16 %v955
        %v1264 = vunpack.c.l.b16 %v956
        %v1265 = vunpack.c.h.b16 %v956
        %v1266 = vunpack.c.l.b16 %v957
        %v1267 = vunpack.c.h.b16 %v957
        %v1268 = vunpack.c.l.b16 %v958
        %v1269 = vunpack.c.h.b16 %v958
        %v1270 = vunpack.c.l.b16 %v959
        %v1271 = vunpack.c.h.b16 %v959
        %v1272 = vunpack.c.l.b16 %v960
        %v1273 = vunpack.c.h.b16 %v960
        %v1274 = vunpack.c.l.b16 %v961
        %v1275 = vunpack.c.h.b16 %v961
        %v1276 = vunpack.c.l.b16 %v962
        %v1277 = vunpack.c.h.b16 %v962
        %v1278 = vunpack.c.l.b16 %v963
        %v1279 = vunpack.c.h.b16 %v963
        %v1280 = vunpack.c.l.b16 %v964
        %v1281 = vunpack.c.h.b16 %v964
        %v1282 = vunpack.c.l.b16 %v965
        %v1283 = vunpack.c.h.b16 %v965
        %v1284 = vunpack.c.l.b16 %v966
        %v1285 = vunpack.c.h.b16 %v966
        %v1286 = vunpack.c.l.b16 %v967
        %v1287 = vunpack.c.h.b16 %v967
        %v1288 = vpack.c.b16 %v1102, %v1096
        %v1289 = vpack.c.b16 %v1103, %v1097
        %v1290 = vpack.c.b16 %v1104, %v1098
        %v1291 = vpack.c.b16 %v1105, %v1099
        %v1292 = vpack.c.b16 %v1106, %v1100
        %v1293 = vpack.c.b16 %v1107, %v1101
        %v1294 = vpack.c.b16 %v1114, %v1108
        %v1295 = vpack.c.b16 %v1115, %v1109
        %v1296 = vpack.c.b16 %v1116, %v1110
        %v1297 = vpack.c.b16 %v1117, %v1111
        %v1298 = vpack.c.b16 %v1118, %v1112
        %v1299 = vpack.c.b16 %v1119, %v1113
        %v1300 = vpack.c.b16 %v1126, %v1120
        %v1301 = vpack.c.b16 %v1127, %v1121
        %v1302 = vpack.c.b16 %v1128, %v1122
        %v1303 = vpack.c.b16 %v1129, %v1123
        %v1304 = vpack.c.b16 %v1130, %v1124
        %v1305 = vpack.c.b16 %v1131, %v1125
        %v1306 = vpack.c.b16 %v1138, %v1132
        %v1307 = vpack.c.b16 %v1139, %v1133
        %v1308 = vpack.c.b16 %v1140, %v1134
        %v1309 = vpack.c.b16 %v1141, %v1135
        %v1310 = vpack.c.b16 %v1142, %v1136
        %v1311 = vpack.c.b16 %v1143, %v1137
        %v1312 = vpack.c.b16 %v1150, %v1144
        %v1313 = vpack.c.b16 %v1151, %v1145
        %v1314 = vpack.c.b16 %v1152, %v1146
        %v1315 = vpack.c.b16 %v1153, %v1147
        %v1316 = vpack.c.b16 %v1154, %v1148
        %v1317 = vpack.c.b16 %v1155, %v1149
        %v1318 = vpack.c.b16 %v1162, %v1156
        %v1319 = vpack.c.b16 %v1163, %v1157
        %v1320 = vpack.c.b16 %v1164, %v1158
        %v1321 = vpack.c.b16 %v1165, %v1159
        %v1322 = vpack.c.b16 %v1166, %v1160
        %v1323 = vpack.c.b16 %v1167, %v1161
        %v1324 = vpack.c.b16 %v1174, %v1168
        %v1325 = vpack.c.b16 %v1175, %v1169
        %v1326 = vpack.c.b16 %v1176, %v1170
        %v1327 = vpack.c.b16 %v1177, %v1171
        %v1328 = vpack.c.b16 %v1178, %v1172
        %v1329 = vpack.c.b16 %v1179, %v1173
        %v1330 = vpack.c.b16 %v1186, %v1180
        %v1331 = vpack.c.b16 %v1187, %v1181
        %v1332 = vpack.c.b16 %v1188, %v1182
        %v1333 = vpack.c.b16 %v1189, %v1183
        %v1334 = vpack.c.b16 %v1190, %v1184
        %v1335 = vpack.c.b16 %v1191, %v1185
        %v1336 = vpack.c.b16 %v1198, %v1192
        %v1337 = vpack.c.b16 %v1199, %v1193
        %v1338 = vpack.c.b16 %v1200, %v1194
        %v1339 = vpack.c.b16 %v1201, %v1195
        %v1340 = vpack.c.b16 %v1202, %v1196
        %v1341 = vpack.c.b16 %v1203, %v1197
        %v1342 = vpack.c.b16 %v1210, %v1204
        %v1343 = vpack.c.b16 %v1211, %v1205
        %v1344 = vpack.c.b16 %v1212, %v1206
        %v1345 = vpack.c.b16 %v1213, %v1207
        %v1346 = vpack.c.b16 %v1214, %v1208
        %v1347 = vpack.c.b16 %v1215, %v1209
        %v1348 = vpack.c.b16 %v1222, %v1216
        %v1349 = vpack.c.b16 %v1223, %v1217
        %v1350 = vpack.c.b16 %v1224, %v1218
        %v1351 = vpack.c.b16 %v1225, %v1219
        %v1352 = vpack.c.b16 %v1226, %v1220
        %v1353 = vpack.c.b16 %v1227, %v1221
        %v1354 = vpack.c.b16 %v1234, %v1228
        %v1355 = vpack.c.b16 %v1235, %v1229
        %v1356 = vpack.c.b16 %v1236, %v1230
        %v1357 = vpack.c.b16 %v1237, %v1231
        %v1358 = vpack.c.b16 %v1238, %v1232
        %v1359 = vpack.c.b16 %v1239, %v1233
        %v1360 = vpack.c.b16 %v1246, %v1240
        %v1361 = vpack.c.b16 %v1247, %v1241
        %v1362 = vpack.c.b16 %v1248, %v1242
        %v1363 = vpack.c.b16 %v1249, %v1243
        %v1364 = vpack.c.b16 %v1250, %v1244
        %v1365 = vpack.c.b16 %v1251, %v1245
        %v1366 = vpack.c.b16 %v1258, %v1252
        %v1367 = vpack.c.b16 %v1259, %v1253
        %v1368 = vpack.c.b16 %v1260, %v1254
        %v1369 = vpack.c.b16 %v1261, %v1255
        %v1370 = vpack.c.b16 %v1262, %v1256
        %v1371 = vpack.c.b16 %v1263, %v1257
        %v1372 = vpack.c.b16 %v1270, %v1264
        %v1373 = vpack.c.b16 %v1271, %v1265
        %v1374 = vpack.c.b16 %v1272, %v1266
        %v1375 = vpack.c.b16 %v1273, %v1267
        %v1376 = vpack.c.b16 %v1274, %v1268
        %v1377 = vpack.c.b16 %v1275, %v1269
        %v1378 = vpack.c.b16 %v1282, %v1276
        %v1379 = vpack.c.b16 %v1283, %v1277
        %v1380 = vpack.c.b16 %v1284, %v1278
        %v1381 = vpack.c.b16 %v1285, %v1279
        %v1382 = vpack.c.b16 %v1286, %v1280
        %v1383 = vpack.c.b16 %v1287, %v1281
        %1480 = vmatprep.subr.bf16.mxu0 %v1331
        %1481 = vmatpush1.bf16.msra.mxu0 %v1330
        %1482 = vmatprep.subr.bf16.mxu0 %v1325
        %1483 = vmatpush1.bf16.msra.mxu0 %v1324
        %1484 = vmatprep.subr.bf16.mxu0 %v1319
        %1485 = vmatpush1.bf16.msra.mxu0 %v1318
        %1486 = vmatprep.subr.bf16.mxu0 %v1313
        %1487 = vmatpush1.bf16.msra.mxu0 %v1312
        %1488 = vmatprep.subr.bf16.mxu0 %v1307
        %1489 = vmatpush1.bf16.msra.mxu0 %v1306
        %1490 = vmatprep.subr.bf16.mxu0 %v1301
        %1491 = vmatpush1.bf16.msra.mxu0 %v1300
        %1492 = vmatprep.subr.bf16.mxu0 %v1295
        %1493 = vmatpush1.bf16.msra.mxu0 %v1294
        %1494 = vmatprep.subr.bf16.mxu0 %v1289
        %1495 = vmatpush1.bf16.msra.mxu0 %v1288
        %1496 = vmatprep.subr.bf16.mxu0 %v1379
        %1497 = vmatpush2.bf16.msra.mxu0 %v1378
        %1498 = vmatprep.subr.bf16.mxu0 %v1373
        %1499 = vmatpush2.bf16.msra.mxu0 %v1372
        %1500 = vmatprep.subr.bf16.mxu0 %v1367
        %1501 = vmatpush2.bf16.msra.mxu0 %v1366
        %1502 = vmatprep.subr.bf16.mxu0 %v1361
        %1503 = vmatpush2.bf16.msra.mxu0 %v1360
        %1504 = vmatprep.subr.bf16.mxu0 %v1355
        %1505 = vmatpush2.bf16.msra.mxu0 %v1354
        %1506 = vmatprep.subr.bf16.mxu0 %v1349
        %1507 = vmatpush2.bf16.msra.mxu0 %v1348
        %1508 = vmatprep.subr.bf16.mxu0 %v1343
        %1509 = vmatpush2.bf16.msra.mxu0 %v1342
        %1510 = vmatprep.subr.bf16.mxu0 %v1337
        %1511 = vmatpush2.bf16.msra.mxu0 %v1336
        %1512 = vmatprep.mubr.bf16.mxu0 %v869
        %1513 = vmatmul.mubr.bf16.gmra.mxu0 %v868
        %v1514 = vpop.f32.mrf.mxu0
        %v1515 = vadd.f32 %v973, %v1514
        %v1516 = vpop.f32.mrf.mxu0
        %v1517 = vadd.f32 %v977, %v1516
        %v1518 = vpop.f32.mrf.mxu0
        %v1519 = vadd.f32 %v973, %v1518
        %v1520 = vpop.f32.mrf.mxu0
        %v1521 = vadd.f32 %v977, %v1520
        %1522 = vmatprep.mubr.bf16.mxu0 %v871
        %1523 = vmatmul.mubr.bf16.gmra.mxu0 %v870
        %v1524 = vpop.f32.mrf.mxu0
        %v1525 = vadd.f32 %v973, %v1524
        %v1526 = vpop.f32.mrf.mxu0
        %v1527 = vadd.f32 %v977, %v1526
        %v1528 = vpop.f32.mrf.mxu0
        %v1529 = vpop.f32.mrf.mxu0
        %1530 = vdwg.mxu0
        %1531 = vmatprep.subr.bf16.mxu0 %v1333
        %1532 = vmatpush1.bf16.msra.mxu0 %v1332
        %1533 = vmatprep.subr.bf16.mxu0 %v1327
        %1534 = vmatpush1.bf16.msra.mxu0 %v1326
        %1535 = vmatprep.subr.bf16.mxu0 %v1321
        %1536 = vmatpush1.bf16.msra.mxu0 %v1320
        %1537 = vmatprep.subr.bf16.mxu0 %v1315
        %1538 = vmatpush1.bf16.msra.mxu0 %v1314
        %1539 = vmatprep.subr.bf16.mxu0 %v1309
        %1540 = vmatpush1.bf16.msra.mxu0 %v1308
        %1541 = vmatprep.subr.bf16.mxu0 %v1303
        %1542 = vmatpush1.bf16.msra.mxu0 %v1302
        %1543 = vmatprep.subr.bf16.mxu0 %v1297
        %1544 = vmatpush1.bf16.msra.mxu0 %v1296
        %1545 = vmatprep.subr.bf16.mxu0 %v1291
        %1546 = vmatpush1.bf16.msra.mxu0 %v1290
        %1547 = vmatprep.subr.bf16.mxu0 %v1381
        %1548 = vmatpush2.bf16.msra.mxu0 %v1380
        %1549 = vmatprep.subr.bf16.mxu0 %v1375
        %1550 = vmatpush2.bf16.msra.mxu0 %v1374
        %1551 = vmatprep.subr.bf16.mxu0 %v1369
        %1552 = vmatpush2.bf16.msra.mxu0 %v1368
        %1553 = vmatprep.subr.bf16.mxu0 %v1363
        %1554 = vmatpush2.bf16.msra.mxu0 %v1362
        %1555 = vmatprep.subr.bf16.mxu0 %v1357
        %1556 = vmatpush2.bf16.msra.mxu0 %v1356
        %1557 = vmatprep.subr.bf16.mxu0 %v1351
        %1558 = vmatpush2.bf16.msra.mxu0 %v1350
        %1559 = vmatprep.subr.bf16.mxu0 %v1345
        %1560 = vmatpush2.bf16.msra.mxu0 %v1344
        %1561 = vmatprep.subr.bf16.mxu0 %v1339
        %1562 = vmatpush2.bf16.msra.mxu0 %v1338
        %1563 = vmatprep.mubr.bf16.mxu0 %v869
        %1564 = vmatmul.mubr.bf16.gmra.mxu0 %v868
        %v1565 = vpop.f32.mrf.mxu0
        %v1566 = vadd.f32 %v981, %v1565
        %v1567 = vpop.f32.mrf.mxu0
        %v1568 = vadd.f32 %v985, %v1567
        %v1569 = vpop.f32.mrf.mxu0
        %v1570 = vadd.f32 %v981, %v1569
        %v1571 = vpop.f32.mrf.mxu0
        %v1572 = vadd.f32 %v985, %v1571
        %1573 = vmatprep.mubr.bf16.mxu0 %v871
        %1574 = vmatmul.mubr.bf16.gmra.mxu0 %v870
        %v1575 = vpop.f32.mrf.mxu0
        %v1576 = vadd.f32 %v981, %v1575
        %v1577 = vpop.f32.mrf.mxu0
        %v1578 = vadd.f32 %v985, %v1577
        %v1579 = vpop.f32.mrf.mxu0
        %v1580 = vpop.f32.mrf.mxu0
        %1581 = vdwg.mxu0
        %1582 = vmatprep.subr.bf16.mxu0 %v1335
        %1583 = vmatpush1.bf16.msra.mxu0 %v1334
        %1584 = vmatprep.subr.bf16.mxu0 %v1329
        %1585 = vmatpush1.bf16.msra.mxu0 %v1328
        %1586 = vmatprep.subr.bf16.mxu0 %v1323
        %1587 = vmatpush1.bf16.msra.mxu0 %v1322
        %1588 = vmatprep.subr.bf16.mxu0 %v1317
        %1589 = vmatpush1.bf16.msra.mxu0 %v1316
        %1590 = vmatprep.subr.bf16.mxu0 %v1311
        %1591 = vmatpush1.bf16.msra.mxu0 %v1310
        %1592 = vmatprep.subr.bf16.mxu0 %v1305
        %1593 = vmatpush1.bf16.msra.mxu0 %v1304
        %1594 = vmatprep.subr.bf16.mxu0 %v1299
        %1595 = vmatpush1.bf16.msra.mxu0 %v1298
        %1596 = vmatprep.subr.bf16.mxu0 %v1293
        %1597 = vmatpush1.bf16.msra.mxu0 %v1292
        %1598 = vmatprep.subr.bf16.mxu0 %v1383
        %1599 = vmatpush2.bf16.msra.mxu0 %v1382
        %1600 = vmatprep.subr.bf16.mxu0 %v1377
        %1601 = vmatpush2.bf16.msra.mxu0 %v1376
        %1602 = vmatprep.subr.bf16.mxu0 %v1371
        %1603 = vmatpush2.bf16.msra.mxu0 %v1370
        %1604 = vmatprep.subr.bf16.mxu0 %v1365
        %1605 = vmatpush2.bf16.msra.mxu0 %v1364
        %1606 = vmatprep.subr.bf16.mxu0 %v1359
        %1607 = vmatpush2.bf16.msra.mxu0 %v1358
        %1608 = vmatprep.subr.bf16.mxu0 %v1353
        %1609 = vmatpush2.bf16.msra.mxu0 %v1352
        %1610 = vmatprep.subr.bf16.mxu0 %v1347
        %1611 = vmatpush2.bf16.msra.mxu0 %v1346
        %1612 = vmatprep.subr.bf16.mxu0 %v1341
        %1613 = vmatpush2.bf16.msra.mxu0 %v1340
        %1614 = vmatprep.mubr.bf16.mxu0 %v869
        %1615 = vmatmul.mubr.bf16.gmra.mxu0 %v868
        %v1616 = vpop.f32.mrf.mxu0
        %v1617 = vadd.f32 %v989, %v1616
        %v1618 = vpop.f32.mrf.mxu0
        %v1619 = vadd.f32 %v993, %v1618
        %v1620 = vpop.f32.mrf.mxu0
        %v1621 = vadd.f32 %v989, %v1620
        %v1622 = vpop.f32.mrf.mxu0
        %v1623 = vadd.f32 %v993, %v1622
        %1624 = vmatprep.mubr.bf16.mxu0 %v871
        %1625 = vmatmul.mubr.bf16.gmra.mxu0 %v870
        %v1626 = vpop.f32.mrf.mxu0
        %v1627 = vadd.f32 %v989, %v1626
        %v1628 = vpop.f32.mrf.mxu0
        %v1629 = vadd.f32 %v993, %v1628
        %v1630 = vpop.f32.mrf.mxu0
        %v1631 = vpop.f32.mrf.mxu0
        %1632 = vdwg.mxu0
        %v1633 = vld [vmem:[#allocation11] sm:$0xff]
        %v1634 = vld [vmem:[#allocation11 + $0x8] sm:$0xff]
        %v1635 = vld [vmem:[#allocation11 + $0x10] sm:$0xff]
        %v1636 = vld [vmem:[#allocation11 + $0x18] sm:$0xff]
        %v1637 = vld [vmem:[#allocation11 + $0x20] sm:$0xff]
        %v1638 = vld [vmem:[#allocation11 + $0x28] sm:$0xff]
        %v1639 = vld [vmem:[#allocation11 + $0x30] sm:$0xff]
        %v1640 = vld [vmem:[#allocation11 + $0x38] sm:$0xff]
        %v1641 = vld [vmem:[#allocation11 + $0x40] sm:$0xff]
        %v1642 = vld [vmem:[#allocation11 + $0x48] sm:$0xff]
        %v1643 = vld [vmem:[#allocation11 + $0x50] sm:$0xff]
        %v1644 = vld [vmem:[#allocation11 + $0x58] sm:$0xff]
        %v1645 = vld [vmem:[#allocation11 + $0x60] sm:$0xff]
        %v1646 = vld [vmem:[#allocation11 + $0x68] sm:$0xff]
        %v1647 = vld [vmem:[#allocation11 + $0x70] sm:$0xff]
        %v1648 = vld [vmem:[#allocation11 + $0x78] sm:$0xff]
        %v1649 = vld [vmem:[#allocation11 + $0x80] sm:$0xff]
        %v1650 = vld [vmem:[#allocation11 + $0x88] sm:$0xff]
        %v1651 = vld [vmem:[#allocation11 + $0x90] sm:$0xff]
        %v1652 = vld [vmem:[#allocation11 + $0x98] sm:$0xff]
        %v1653 = vld [vmem:[#allocation11 + $0xa0] sm:$0xff]
        %v1654 = vld [vmem:[#allocation11 + $0xa8] sm:$0xff]
        %v1655 = vld [vmem:[#allocation11 + $0xb0] sm:$0xff]
        %v1656 = vld [vmem:[#allocation11 + $0xb8] sm:$0xff]
        %v1657 = vld [vmem:[#allocation11 + $0xc0] sm:$0xff]
        %v1658 = vld [vmem:[#allocation11 + $0xc8] sm:$0xff]
        %v1659 = vld [vmem:[#allocation11 + $0xd0] sm:$0xff]
        %v1660 = vld [vmem:[#allocation11 + $0xd8] sm:$0xff]
        %v1661 = vld [vmem:[#allocation11 + $0xe0] sm:$0xff]
        %v1662 = vld [vmem:[#allocation11 + $0xe8] sm:$0xff]
        %v1663 = vld [vmem:[#allocation11 + $0xf0] sm:$0xff]
        %v1664 = vld [vmem:[#allocation11 + $0xf8] sm:$0xff]
        %v1665 = vpack.c.bf16 %v1515, %v1515
        %v1666 = vpack.c.bf16 %v1519, %v1519
        %v1667 = vpack.c.bf16 %v1525, %v1525
        %v1668 = vpack.c.bf16 %v1566, %v1566
        %v1669 = vpack.c.bf16 %v1570, %v1570
        %v1670 = vpack.c.bf16 %v1576, %v1576
        %1671 = vmatprep.subr.bf16.mxu0 0
        %1672 = vmatpush1.bf16.xpose.msra.mxu0 0
        %1673 = vmatprep.subr.bf16.mxu0 0
        %1674 = vmatpush1.bf16.xpose.msra.mxu0 0
        %1675 = vmatprep.subr.bf16.mxu0 0
        %1676 = vmatpush1.bf16.xpose.msra.mxu0 0
        %1677 = vmatprep.subr.bf16.mxu0 0
        %1678 = vmatpush1.bf16.xpose.msra.mxu0 0
        %1679 = vmatprep.subr.bf16.mxu0 0
        %1680 = vmatpush1.bf16.xpose.msra.mxu0 0
        %1681 = vmatprep.subr.bf16.mxu0 0
        %1682 = vmatpush1.bf16.xpose.msra.mxu0 0
        %1683 = vmatprep.subr.bf16.mxu0 0
        %1684 = vmatpush1.bf16.xpose.msra.mxu0 0
        %1685 = vmatprep.subr.bf16.mxu0 0
        %1686 = vmatpush1.bf16.xpose.msra.mxu0 %v1668
        %1687 = vmatprep.subr.bf16.mxu0 0
        %1688 = vmatpush2.bf16.xpose.msra.mxu0 0
        %1689 = vmatprep.subr.bf16.mxu0 0
        %1690 = vmatpush2.bf16.xpose.msra.mxu0 0
        %1691 = vmatprep.subr.bf16.mxu0 0
        %1692 = vmatpush2.bf16.xpose.msra.mxu0 0
        %1693 = vmatprep.subr.bf16.mxu0 0
        %1694 = vmatpush2.bf16.xpose.msra.mxu0 0
        %1695 = vmatprep.subr.bf16.mxu0 0
        %1696 = vmatpush2.bf16.xpose.msra.mxu0 0
        %1697 = vmatprep.subr.bf16.mxu0 0
        %1698 = vmatpush2.bf16.xpose.msra.mxu0 0
        %1699 = vmatprep.subr.bf16.mxu0 0
        %1700 = vmatpush2.bf16.xpose.msra.mxu0 0
        %1701 = vmatprep.subr.bf16.mxu0 0
        %1702 = vmatpush2.bf16.xpose.msra.mxu0 0
        %1703 = vmatprep.mubr.bf16.mxu0 0
        %1704 = vmatmul.mubr.bf16.gmra.mxu0 %v1665
        %v1705 = vpop.f32.mrf.mxu0
        %v1706 = vadd.f32 0.0, %v1705
        %v1707 = vpop.f32.mrf.mxu0
        %v1708 = vpop.f32.mrf.mxu0
        %v1709 = vpop.f32.mrf.mxu0
        %1710 = vdwg.mxu0
        %1711 = vmatprep.subr.bf16.mxu0 0
        %1712 = vmatpush1.bf16.xpose.msra.mxu0 0
        %1713 = vmatprep.subr.bf16.mxu0 0
        %1714 = vmatpush1.bf16.xpose.msra.mxu0 0
        %1715 = vmatprep.subr.bf16.mxu0 0
        %1716 = vmatpush1.bf16.xpose.msra.mxu0 0
        %1717 = vmatprep.subr.bf16.mxu0 0
        %1718 = vmatpush1.bf16.xpose.msra.mxu0 0
        %1719 = vmatprep.subr.bf16.mxu0 0
        %1720 = vmatpush1.bf16.xpose.msra.mxu0 0
        %1721 = vmatprep.subr.bf16.mxu0 0
        %1722 = vmatpush1.bf16.xpose.msra.mxu0 0
        %1723 = vmatprep.subr.bf16.mxu0 0
        %1724 = vmatpush1.bf16.xpose.msra.mxu0 0
        %1725 = vmatprep.subr.bf16.mxu0 0
        %1726 = vmatpush1.bf16.xpose.msra.mxu0 %v1669
        %1727 = vmatprep.subr.bf16.mxu0 0
        %1728 = vmatpush2.bf16.xpose.msra.mxu0 0
        %1729 = vmatprep.subr.bf16.mxu0 0
        %1730 = vmatpush2.bf16.xpose.msra.mxu0 0
        %1731 = vmatprep.subr.bf16.mxu0 0
        %1732 = vmatpush2.bf16.xpose.msra.mxu0 0
        %1733 = vmatprep.subr.bf16.mxu0 0
        %1734 = vmatpush2.bf16.xpose.msra.mxu0 0
        %1735 = vmatprep.subr.bf16.mxu0 0
        %1736 = vmatpush2.bf16.xpose.msra.mxu0 0
        %1737 = vmatprep.subr.bf16.mxu0 0
        %1738 = vmatpush2.bf16.xpose.msra.mxu0 0
        %1739 = vmatprep.subr.bf16.mxu0 0
        %1740 = vmatpush2.bf16.xpose.msra.mxu0 0
        %1741 = vmatprep.subr.bf16.mxu0 0
        %1742 = vmatpush2.bf16.xpose.msra.mxu0 0
        %1743 = vmatprep.mubr.bf16.mxu0 0
        %1744 = vmatmul.mubr.bf16.gmra.mxu0 %v1666
        %v1745 = vpop.f32.mrf.mxu0
        %v1746 = vadd.f32 0.0, %v1745
        %v1747 = vpop.f32.mrf.mxu0
        %v1748 = vpop.f32.mrf.mxu0
        %v1749 = vpop.f32.mrf.mxu0
        %1750 = vdwg.mxu0
        %1751 = vmatprep.subr.bf16.mxu0 0
        %1752 = vmatpush1.bf16.xpose.msra.mxu0 0
        %1753 = vmatprep.subr.bf16.mxu0 0
        %1754 = vmatpush1.bf16.xpose.msra.mxu0 0
        %1755 = vmatprep.subr.bf16.mxu0 0
        %1756 = vmatpush1.bf16.xpose.msra.mxu0 0
        %1757 = vmatprep.subr.bf16.mxu0 0
        %1758 = vmatpush1.bf16.xpose.msra.mxu0 0
        %1759 = vmatprep.subr.bf16.mxu0 0
        %1760 = vmatpush1.bf16.xpose.msra.mxu0 0
        %1761 = vmatprep.subr.bf16.mxu0 0
        %1762 = vmatpush1.bf16.xpose.msra.mxu0 0
        %1763 = vmatprep.subr.bf16.mxu0 0
        %1764 = vmatpush1.bf16.xpose.msra.mxu0 0
        %1765 = vmatprep.subr.bf16.mxu0 0
        %1766 = vmatpush1.bf16.xpose.msra.mxu0 %v1670
        %1767 = vmatprep.subr.bf16.mxu0 0
        %1768 = vmatpush2.bf16.xpose.msra.mxu0 0
        %1769 = vmatprep.subr.bf16.mxu0 0
        %1770 = vmatpush2.bf16.xpose.msra.mxu0 0
        %1771 = vmatprep.subr.bf16.mxu0 0
        %1772 = vmatpush2.bf16.xpose.msra.mxu0 0
        %1773 = vmatprep.subr.bf16.mxu0 0
        %1774 = vmatpush2.bf16.xpose.msra.mxu0 0
        %1775 = vmatprep.subr.bf16.mxu0 0
        %1776 = vmatpush2.bf16.xpose.msra.mxu0 0
        %1777 = vmatprep.subr.bf16.mxu0 0
        %1778 = vmatpush2.bf16.xpose.msra.mxu0 0
        %1779 = vmatprep.subr.bf16.mxu0 0
        %1780 = vmatpush2.bf16.xpose.msra.mxu0 0
        %1781 = vmatprep.subr.bf16.mxu0 0
        %1782 = vmatpush2.bf16.xpose.msra.mxu0 0
        %1783 = vmatprep.mubr.bf16.mxu0 0
        %1784 = vmatmul.mubr.bf16.gmra.mxu0 %v1667
        %v1785 = vpop.f32.mrf.mxu0
        %v1786 = vadd.f32 0.0, %v1785
        %v1787 = vpop.f32.mrf.mxu0
        %v1788 = vpop.f32.mrf.mxu0
        %v1789 = vpop.f32.mrf.mxu0
        %1790 = vdwg.mxu0
        %v1791 = vmul.f32 %v1706, 0.088388346
        %v1792 = vmul.f32 %v1746, 0.088388346
        %v1793 = vmul.f32 %v1786, 0.088388346
        %vm1794 = vcmask 64512
        %v1795 = vsel %vm1794, %v1791, -inf
        %1796 = vmax.xlane.f32.xlu0 %v1795
        %v1797 = vpop.xlane.xlu0 %1796
        %v1798 = vsel %vm1794, %v1792, -inf
        %1799 = vmax.xlane.f32.xlu0 %v1798
        %v1800 = vpop.xlane.xlu0 %1799
        %v1801 = vsel %vm1794, %v1793, -inf
        %1802 = vmax.xlane.f32.xlu0 %v1801
        %v1803 = vpop.xlane.xlu0 %1802
        %v1804 = vsub.f32 %v1791, %v1797
        %v1805 = vsub.f32 %v1792, %v1800
        %v1806 = vsub.f32 %v1793, %v1803
        %v1807 = vmul.f32 %v1804, 1.442695
        %v1808 = vpow.pop %v1807
        %v1809 = vmul.f32 %v1805, 1.442695
        %v1810 = vpow.pop %v1809
        %v1811 = vmul.f32 %v1806, 1.442695
        %v1812 = vpow.pop %v1811
        %v1813 = vsel %vm1794, %v1808, 0.0
        %1814 = vadd.xlane.f32.xlu0 %v1813
        %v1815 = vpop.xlane.xlu0 %1814
        %v1816 = vsel %vm1794, %v1810, 0.0
        %1817 = vadd.xlane.f32.xlu0 %v1816
        %v1818 = vpop.xlane.xlu0 %1817
        %v1819 = vsel %vm1794, %v1812, 0.0
        %1820 = vadd.xlane.f32.xlu0 %v1819
        %v1821 = vpop.xlane.xlu0 %1820
        %v1822 = vrcp.pop %v1815
        %v1823 = vrcp.pop %v1818
        %v1824 = vrcp.pop %v1821
        %v1825 = vmul.f32 %v1808, %v1822
        %v1826 = vmul.f32 %v1810, %v1823
        %v1827 = vmul.f32 %v1812, %v1824
        %v1828 = vpack.c.bf16 %v1825, %v1825
        %v1829 = vpack.c.bf16 %v1826, %v1826
        %v1830 = vpack.c.bf16 %v1827, %v1827
        %v1831 = vpack.c.bf16 %v1617, %v1617
        %v1832 = vpack.c.bf16 %v1621, %v1621
        %v1833 = vpack.c.bf16 %v1627, %v1627
        %v1835 = vsel %vm1794, %v1828, 0
        %vm1837 = vcmask 1043456
        %v1839 = vsel %vm1837, %v1831, 0
        %1841 = vmatprep.subr.bf16.mxu0 0
        %1842 = vmatpush1.bf16.msra.mxu0 0
        %1843 = vmatprep.subr.bf16.mxu0 0
        %1844 = vmatpush1.bf16.msra.mxu0 0
        %1845 = vmatprep.subr.bf16.mxu0 0
        %1846 = vmatpush1.bf16.msra.mxu0 0
        %1847 = vmatprep.subr.bf16.mxu0 0
        %1848 = vmatpush1.bf16.msra.mxu0 0
        %1849 = vmatprep.subr.bf16.mxu0 0
        %1850 = vmatpush1.bf16.msra.mxu0 0
        %1851 = vmatprep.subr.bf16.mxu0 0
        %1852 = vmatpush1.bf16.msra.mxu0 0
        %1853 = vmatprep.subr.bf16.mxu0 0
        %1854 = vmatpush1.bf16.msra.mxu0 0
        %1855 = vmatprep.subr.bf16.mxu0 0
        %1856 = vmatpush1.bf16.msra.mxu0 %v1839
        %1857 = vmatprep.subr.bf16.mxu0 0
        %1858 = vmatpush2.bf16.msra.mxu0 0
        %1859 = vmatprep.subr.bf16.mxu0 0
        %1860 = vmatpush2.bf16.msra.mxu0 0
        %1861 = vmatprep.subr.bf16.mxu0 0
        %1862 = vmatpush2.bf16.msra.mxu0 0
        %1863 = vmatprep.subr.bf16.mxu0 0
        %1864 = vmatpush2.bf16.msra.mxu0 0
        %1865 = vmatprep.subr.bf16.mxu0 0
        %1866 = vmatpush2.bf16.msra.mxu0 0
        %1867 = vmatprep.subr.bf16.mxu0 0
        %1868 = vmatpush2.bf16.msra.mxu0 0
        %1869 = vmatprep.subr.bf16.mxu0 0
        %1870 = vmatpush2.bf16.msra.mxu0 0
        %1871 = vmatprep.subr.bf16.mxu0 0
        %1872 = vmatpush2.bf16.msra.mxu0 0
        %1873 = vmatprep.mubr.bf16.mxu0 0
        %1874 = vmatmul.mubr.bf16.gmra.mxu0 %v1835
        %v1875 = vpop.f32.mrf.mxu0
        %v1876 = vadd.f32 0.0, %v1875
        %v1877 = vpop.f32.mrf.mxu0
        %v1878 = vpop.f32.mrf.mxu0
        %v1879 = vpop.f32.mrf.mxu0
        %1880 = vdwg.mxu0
        %v1882 = vsel %vm1794, %v1829, 0
        %v1885 = vsel %vm1837, %v1832, 0
        %1887 = vmatprep.subr.bf16.mxu0 0
        %1888 = vmatpush1.bf16.msra.mxu0 0
        %1889 = vmatprep.subr.bf16.mxu0 0
        %1890 = vmatpush1.bf16.msra.mxu0 0
        %1891 = vmatprep.subr.bf16.mxu0 0
        %1892 = vmatpush1.bf16.msra.mxu0 0
        %1893 = vmatprep.subr.bf16.mxu0 0
        %1894 = vmatpush1.bf16.msra.mxu0 0
        %1895 = vmatprep.subr.bf16.mxu0 0
        %1896 = vmatpush1.bf16.msra.mxu0 0
        %1897 = vmatprep.subr.bf16.mxu0 0
        %1898 = vmatpush1.bf16.msra.mxu0 0
        %1899 = vmatprep.subr.bf16.mxu0 0
        %1900 = vmatpush1.bf16.msra.mxu0 0
        %1901 = vmatprep.subr.bf16.mxu0 0
        %1902 = vmatpush1.bf16.msra.mxu0 %v1885
        %1903 = vmatprep.subr.bf16.mxu0 0
        %1904 = vmatpush2.bf16.msra.mxu0 0
        %1905 = vmatprep.subr.bf16.mxu0 0
        %1906 = vmatpush2.bf16.msra.mxu0 0
        %1907 = vmatprep.subr.bf16.mxu0 0
        %1908 = vmatpush2.bf16.msra.mxu0 0
        %1909 = vmatprep.subr.bf16.mxu0 0
        %1910 = vmatpush2.bf16.msra.mxu0 0
        %1911 = vmatprep.subr.bf16.mxu0 0
        %1912 = vmatpush2.bf16.msra.mxu0 0
        %1913 = vmatprep.subr.bf16.mxu0 0
        %1914 = vmatpush2.bf16.msra.mxu0 0
        %1915 = vmatprep.subr.bf16.mxu0 0
        %1916 = vmatpush2.bf16.msra.mxu0 0
        %1917 = vmatprep.subr.bf16.mxu0 0
        %1918 = vmatpush2.bf16.msra.mxu0 0
        %1919 = vmatprep.mubr.bf16.mxu0 0
        %1920 = vmatmul.mubr.bf16.gmra.mxu0 %v1882
        %v1921 = vpop.f32.mrf.mxu0
        %v1922 = vadd.f32 0.0, %v1921
        %v1923 = vpop.f32.mrf.mxu0
        %v1924 = vpop.f32.mrf.mxu0
        %v1925 = vpop.f32.mrf.mxu0
        %1926 = vdwg.mxu0
        %v1928 = vsel %vm1794, %v1830, 0
        %v1931 = vsel %vm1837, %v1833, 0
        %1933 = vmatprep.subr.bf16.mxu0 0
        %1934 = vmatpush1.bf16.msra.mxu0 0
        %1935 = vmatprep.subr.bf16.mxu0 0
        %1936 = vmatpush1.bf16.msra.mxu0 0
        %1937 = vmatprep.subr.bf16.mxu0 0
        %1938 = vmatpush1.bf16.msra.mxu0 0
        %1939 = vmatprep.subr.bf16.mxu0 0
        %1940 = vmatpush1.bf16.msra.mxu0 0
        %1941 = vmatprep.subr.bf16.mxu0 0
        %1942 = vmatpush1.bf16.msra.mxu0 0
        %1943 = vmatprep.subr.bf16.mxu0 0
        %1944 = vmatpush1.bf16.msra.mxu0 0
        %1945 = vmatprep.subr.bf16.mxu0 0
        %1946 = vmatpush1.bf16.msra.mxu0 0
        %1947 = vmatprep.subr.bf16.mxu0 0
        %1948 = vmatpush1.bf16.msra.mxu0 %v1931
        %1949 = vmatprep.subr.bf16.mxu0 0
        %1950 = vmatpush2.bf16.msra.mxu0 0
        %1951 = vmatprep.subr.bf16.mxu0 0
        %1952 = vmatpush2.bf16.msra.mxu0 0
        %1953 = vmatprep.subr.bf16.mxu0 0
        %1954 = vmatpush2.bf16.msra.mxu0 0
        %1955 = vmatprep.subr.bf16.mxu0 0
        %1956 = vmatpush2.bf16.msra.mxu0 0
        %1957 = vmatprep.subr.bf16.mxu0 0
        %1958 = vmatpush2.bf16.msra.mxu0 0
        %1959 = vmatprep.subr.bf16.mxu0 0
        %1960 = vmatpush2.bf16.msra.mxu0 0
        %1961 = vmatprep.subr.bf16.mxu0 0
        %1962 = vmatpush2.bf16.msra.mxu0 0
        %1963 = vmatprep.subr.bf16.mxu0 0
        %1964 = vmatpush2.bf16.msra.mxu0 0
        %1965 = vmatprep.mubr.bf16.mxu0 0
        %1966 = vmatmul.mubr.bf16.gmra.mxu0 %v1928
        %v1967 = vpop.f32.mrf.mxu0
        %v1968 = vadd.f32 0.0, %v1967
        %v1969 = vpop.f32.mrf.mxu0
        %v1970 = vpop.f32.mrf.mxu0
        %v1971 = vpop.f32.mrf.mxu0
        %1972 = vdwg.mxu0
        %v1973 = vpack.c.bf16 %v1922, %v1876
        %v1974 = vpack.c.bf16 %v1968, %v1968
        %v1975 = vpack.c.bf16 %v1517, %v1517
        %v1976 = vpack.c.bf16 %v1521, %v1521
        %v1977 = vpack.c.bf16 %v1527, %v1527
        %v1978 = vpack.c.bf16 %v1568, %v1568
        %v1979 = vpack.c.bf16 %v1572, %v1572
        %v1980 = vpack.c.bf16 %v1578, %v1578
        %1981 = vmatprep.subr.bf16.mxu0 0
        %1982 = vmatpush1.bf16.xpose.msra.mxu0 0
        %1983 = vmatprep.subr.bf16.mxu0 0
        %1984 = vmatpush1.bf16.xpose.msra.mxu0 0
        %1985 = vmatprep.subr.bf16.mxu0 0
        %1986 = vmatpush1.bf16.xpose.msra.mxu0 0
        %1987 = vmatprep.subr.bf16.mxu0 0
        %1988 = vmatpush1.bf16.xpose.msra.mxu0 0
        %1989 = vmatprep.subr.bf16.mxu0 0
        %1990 = vmatpush1.bf16.xpose.msra.mxu0 0
        %1991 = vmatprep.subr.bf16.mxu0 0
        %1992 = vmatpush1.bf16.xpose.msra.mxu0 0
        %1993 = vmatprep.subr.bf16.mxu0 0
        %1994 = vmatpush1.bf16.xpose.msra.mxu0 0
        %1995 = vmatprep.subr.bf16.mxu0 0
        %1996 = vmatpush1.bf16.xpose.msra.mxu0 %v1978
        %1997 = vmatprep.subr.bf16.mxu0 0
        %1998 = vmatpush2.bf16.xpose.msra.mxu0 0
        %1999 = vmatprep.subr.bf16.mxu0 0
        %2000 = vmatpush2.bf16.xpose.msra.mxu0 0
        %2001 = vmatprep.subr.bf16.mxu0 0
        %2002 = vmatpush2.bf16.xpose.msra.mxu0 0
        %2003 = vmatprep.subr.bf16.mxu0 0
        %2004 = vmatpush2.bf16.xpose.msra.mxu0 0
        %2005 = vmatprep.subr.bf16.mxu0 0
        %2006 = vmatpush2.bf16.xpose.msra.mxu0 0
        %2007 = vmatprep.subr.bf16.mxu0 0
        %2008 = vmatpush2.bf16.xpose.msra.mxu0 0
        %2009 = vmatprep.subr.bf16.mxu0 0
        %2010 = vmatpush2.bf16.xpose.msra.mxu0 0
        %2011 = vmatprep.subr.bf16.mxu0 0
        %2012 = vmatpush2.bf16.xpose.msra.mxu0 0
        %2013 = vmatprep.mubr.bf16.mxu0 0
        %2014 = vmatmul.mubr.bf16.gmra.mxu0 %v1975
        %v2015 = vpop.f32.mrf.mxu0
        %v2016 = vadd.f32 0.0, %v2015
        %v2017 = vpop.f32.mrf.mxu0
        %v2018 = vpop.f32.mrf.mxu0
        %v2019 = vpop.f32.mrf.mxu0
        %2020 = vdwg.mxu0
        %2021 = vmatprep.subr.bf16.mxu0 0
        %2022 = vmatpush1.bf16.xpose.msra.mxu0 0
        %2023 = vmatprep.subr.bf16.mxu0 0
        %2024 = vmatpush1.bf16.xpose.msra.mxu0 0
        %2025 = vmatprep.subr.bf16.mxu0 0
        %2026 = vmatpush1.bf16.xpose.msra.mxu0 0
        %2027 = vmatprep.subr.bf16.mxu0 0
        %2028 = vmatpush1.bf16.xpose.msra.mxu0 0
        %2029 = vmatprep.subr.bf16.mxu0 0
        %2030 = vmatpush1.bf16.xpose.msra.mxu0 0
        %2031 = vmatprep.subr.bf16.mxu0 0
        %2032 = vmatpush1.bf16.xpose.msra.mxu0 0
        %2033 = vmatprep.subr.bf16.mxu0 0
        %2034 = vmatpush1.bf16.xpose.msra.mxu0 0
        %2035 = vmatprep.subr.bf16.mxu0 0
        %2036 = vmatpush1.bf16.xpose.msra.mxu0 %v1979
        %2037 = vmatprep.subr.bf16.mxu0 0
        %2038 = vmatpush2.bf16.xpose.msra.mxu0 0
        %2039 = vmatprep.subr.bf16.mxu0 0
        %2040 = vmatpush2.bf16.xpose.msra.mxu0 0
        %2041 = vmatprep.subr.bf16.mxu0 0
        %2042 = vmatpush2.bf16.xpose.msra.mxu0 0
        %2043 = vmatprep.subr.bf16.mxu0 0
        %2044 = vmatpush2.bf16.xpose.msra.mxu0 0
        %2045 = vmatprep.subr.bf16.mxu0 0
        %2046 = vmatpush2.bf16.xpose.msra.mxu0 0
        %2047 = vmatprep.subr.bf16.mxu0 0
        %2048 = vmatpush2.bf16.xpose.msra.mxu0 0
        %2049 = vmatprep.subr.bf16.mxu0 0
        %2050 = vmatpush2.bf16.xpose.msra.mxu0 0
        %2051 = vmatprep.subr.bf16.mxu0 0
        %2052 = vmatpush2.bf16.xpose.msra.mxu0 0
        %2053 = vmatprep.mubr.bf16.mxu0 0
        %2054 = vmatmul.mubr.bf16.gmra.mxu0 %v1976
        %v2055 = vpop.f32.mrf.mxu0
        %v2056 = vadd.f32 0.0, %v2055
        %v2057 = vpop.f32.mrf.mxu0
        %v2058 = vpop.f32.mrf.mxu0
        %v2059 = vpop.f32.mrf.mxu0
        %2060 = vdwg.mxu0
        %2061 = vmatprep.subr.bf16.mxu0 0
        %2062 = vmatpush1.bf16.xpose.msra.mxu0 0
        %2063 = vmatprep.subr.bf16.mxu0 0
        %2064 = vmatpush1.bf16.xpose.msra.mxu0 0
        %2065 = vmatprep.subr.bf16.mxu0 0
        %2066 = vmatpush1.bf16.xpose.msra.mxu0 0
        %2067 = vmatprep.subr.bf16.mxu0 0
        %2068 = vmatpush1.bf16.xpose.msra.mxu0 0
        %2069 = vmatprep.subr.bf16.mxu0 0
        %2070 = vmatpush1.bf16.xpose.msra.mxu0 0
        %2071 = vmatprep.subr.bf16.mxu0 0
        %2072 = vmatpush1.bf16.xpose.msra.mxu0 0
        %2073 = vmatprep.subr.bf16.mxu0 0
        %2074 = vmatpush1.bf16.xpose.msra.mxu0 0
        %2075 = vmatprep.subr.bf16.mxu0 0
        %2076 = vmatpush1.bf16.xpose.msra.mxu0 %v1980
        %2077 = vmatprep.subr.bf16.mxu0 0
        %2078 = vmatpush2.bf16.xpose.msra.mxu0 0
        %2079 = vmatprep.subr.bf16.mxu0 0
        %2080 = vmatpush2.bf16.xpose.msra.mxu0 0
        %2081 = vmatprep.subr.bf16.mxu0 0
        %2082 = vmatpush2.bf16.xpose.msra.mxu0 0
        %2083 = vmatprep.subr.bf16.mxu0 0
        %2084 = vmatpush2.bf16.xpose.msra.mxu0 0
        %2085 = vmatprep.subr.bf16.mxu0 0
        %2086 = vmatpush2.bf16.xpose.msra.mxu0 0
        %2087 = vmatprep.subr.bf16.mxu0 0
        %2088 = vmatpush2.bf16.xpose.msra.mxu0 0
        %2089 = vmatprep.subr.bf16.mxu0 0
        %2090 = vmatpush2.bf16.xpose.msra.mxu0 0
        %2091 = vmatprep.subr.bf16.mxu0 0
        %2092 = vmatpush2.bf16.xpose.msra.mxu0 0
        %2093 = vmatprep.mubr.bf16.mxu0 0
        %2094 = vmatmul.mubr.bf16.gmra.mxu0 %v1977
        %v2095 = vpop.f32.mrf.mxu0
        %v2096 = vadd.f32 0.0, %v2095
        %v2097 = vpop.f32.mrf.mxu0
        %v2098 = vpop.f32.mrf.mxu0
        %v2099 = vpop.f32.mrf.mxu0
        %2100 = vdwg.mxu0
        %v2101 = vmul.f32 %v2016, 0.088388346
        %v2102 = vmul.f32 %v2056, 0.088388346
        %v2103 = vmul.f32 %v2096, 0.088388346
        %v2104 = vsel %vm1794, %v2101, -inf
        %2105 = vmax.xlane.f32.xlu0 %v2104
        %v2106 = vpop.xlane.xlu0 %2105
        %v2107 = vsel %vm1794, %v2102, -inf
        %2108 = vmax.xlane.f32.xlu0 %v2107
        %v2109 = vpop.xlane.xlu0 %2108
        %v2110 = vsel %vm1794, %v2103, -inf
        %2111 = vmax.xlane.f32.xlu0 %v2110
        %v2112 = vpop.xlane.xlu0 %2111
        %v2113 = vsub.f32 %v2101, %v2106
        %v2114 = vsub.f32 %v2102, %v2109
        %v2115 = vsub.f32 %v2103, %v2112
        %v2116 = vmul.f32 %v2113, 1.442695
        %v2117 = vpow.pop %v2116
        %v2118 = vmul.f32 %v2114, 1.442695
        %v2119 = vpow.pop %v2118
        %v2120 = vmul.f32 %v2115, 1.442695
        %v2121 = vpow.pop %v2120
        %v2122 = vsel %vm1794, %v2117, 0.0
        %2123 = vadd.xlane.f32.xlu0 %v2122
        %v2124 = vpop.xlane.xlu0 %2123
        %v2125 = vsel %vm1794, %v2119, 0.0
        %2126 = vadd.xlane.f32.xlu0 %v2125
        %v2127 = vpop.xlane.xlu0 %2126
        %v2128 = vsel %vm1794, %v2121, 0.0
        %2129 = vadd.xlane.f32.xlu0 %v2128
        %v2130 = vpop.xlane.xlu0 %2129
        %v2131 = vrcp.pop %v2124
        %v2132 = vrcp.pop %v2127
        %v2133 = vrcp.pop %v2130
        %v2134 = vmul.f32 %v2117, %v2131
        %v2135 = vmul.f32 %v2119, %v2132
        %v2136 = vmul.f32 %v2121, %v2133
        %v2137 = vpack.c.bf16 %v2134, %v2134
        %v2138 = vpack.c.bf16 %v2135, %v2135
        %v2139 = vpack.c.bf16 %v2136, %v2136
        %v2140 = vpack.c.bf16 %v1619, %v1619
        %v2141 = vpack.c.bf16 %v1623, %v1623
        %v2142 = vpack.c.bf16 %v1629, %v1629
        %v2144 = vsel %vm1794, %v2137, 0
        %v2147 = vsel %vm1837, %v2140, 0
        %2149 = vmatprep.subr.bf16.mxu0 0
        %2150 = vmatpush1.bf16.msra.mxu0 0
        %2151 = vmatprep.subr.bf16.mxu0 0
        %2152 = vmatpush1.bf16.msra.mxu0 0
        %2153 = vmatprep.subr.bf16.mxu0 0
        %2154 = vmatpush1.bf16.msra.mxu0 0
        %2155 = vmatprep.subr.bf16.mxu0 0
        %2156 = vmatpush1.bf16.msra.mxu0 0
        %2157 = vmatprep.subr.bf16.mxu0 0
        %2158 = vmatpush1.bf16.msra.mxu0 0
        %2159 = vmatprep.subr.bf16.mxu0 0
        %2160 = vmatpush1.bf16.msra.mxu0 0
        %2161 = vmatprep.subr.bf16.mxu0 0
        %2162 = vmatpush1.bf16.msra.mxu0 0
        %2163 = vmatprep.subr.bf16.mxu0 0
        %2164 = vmatpush1.bf16.msra.mxu0 %v2147
        %2165 = vmatprep.subr.bf16.mxu0 0
        %2166 = vmatpush2.bf16.msra.mxu0 0
        %2167 = vmatprep.subr.bf16.mxu0 0
        %2168 = vmatpush2.bf16.msra.mxu0 0
        %2169 = vmatprep.subr.bf16.mxu0 0
        %2170 = vmatpush2.bf16.msra.mxu0 0
        %2171 = vmatprep.subr.bf16.mxu0 0
        %2172 = vmatpush2.bf16.msra.mxu0 0
        %2173 = vmatprep.subr.bf16.mxu0 0
        %2174 = vmatpush2.bf16.msra.mxu0 0
        %2175 = vmatprep.subr.bf16.mxu0 0
        %2176 = vmatpush2.bf16.msra.mxu0 0
        %2177 = vmatprep.subr.bf16.mxu0 0
        %2178 = vmatpush2.bf16.msra.mxu0 0
        %2179 = vmatprep.subr.bf16.mxu0 0
        %2180 = vmatpush2.bf16.msra.mxu0 0
        %2181 = vmatprep.mubr.bf16.mxu0 0
        %2182 = vmatmul.mubr.bf16.gmra.mxu0 %v2144
        %v2183 = vpop.f32.mrf.mxu0
        %v2184 = vadd.f32 0.0, %v2183
        %v2185 = vpop.f32.mrf.mxu0
        %v2186 = vpop.f32.mrf.mxu0
        %v2187 = vpop.f32.mrf.mxu0
        %2188 = vdwg.mxu0
        %v2190 = vsel %vm1794, %v2138, 0
        %v2193 = vsel %vm1837, %v2141, 0
        %2195 = vmatprep.subr.bf16.mxu0 0
        %2196 = vmatpush1.bf16.msra.mxu0 0
        %2197 = vmatprep.subr.bf16.mxu0 0
        %2198 = vmatpush1.bf16.msra.mxu0 0
        %2199 = vmatprep.subr.bf16.mxu0 0
        %2200 = vmatpush1.bf16.msra.mxu0 0
        %2201 = vmatprep.subr.bf16.mxu0 0
        %2202 = vmatpush1.bf16.msra.mxu0 0
        %2203 = vmatprep.subr.bf16.mxu0 0
        %2204 = vmatpush1.bf16.msra.mxu0 0
        %2205 = vmatprep.subr.bf16.mxu0 0
        %2206 = vmatpush1.bf16.msra.mxu0 0
        %2207 = vmatprep.subr.bf16.mxu0 0
        %2208 = vmatpush1.bf16.msra.mxu0 0
        %2209 = vmatprep.subr.bf16.mxu0 0
        %2210 = vmatpush1.bf16.msra.mxu0 %v2193
        %2211 = vmatprep.subr.bf16.mxu0 0
        %2212 = vmatpush2.bf16.msra.mxu0 0
        %2213 = vmatprep.subr.bf16.mxu0 0
        %2214 = vmatpush2.bf16.msra.mxu0 0
        %2215 = vmatprep.subr.bf16.mxu0 0
        %2216 = vmatpush2.bf16.msra.mxu0 0
        %2217 = vmatprep.subr.bf16.mxu0 0
        %2218 = vmatpush2.bf16.msra.mxu0 0
        %2219 = vmatprep.subr.bf16.mxu0 0
        %2220 = vmatpush2.bf16.msra.mxu0 0
        %2221 = vmatprep.subr.bf16.mxu0 0
        %2222 = vmatpush2.bf16.msra.mxu0 0
        %2223 = vmatprep.subr.bf16.mxu0 0
        %2224 = vmatpush2.bf16.msra.mxu0 0
        %2225 = vmatprep.subr.bf16.mxu0 0
        %2226 = vmatpush2.bf16.msra.mxu0 0
        %2227 = vmatprep.mubr.bf16.mxu0 0
        %2228 = vmatmul.mubr.bf16.gmra.mxu0 %v2190
        %v2229 = vpop.f32.mrf.mxu0
        %v2230 = vadd.f32 0.0, %v2229
        %v2231 = vpop.f32.mrf.mxu0
        %v2232 = vpop.f32.mrf.mxu0
        %v2233 = vpop.f32.mrf.mxu0
        %2234 = vdwg.mxu0
        %v2236 = vsel %vm1794, %v2139, 0
        %v2239 = vsel %vm1837, %v2142, 0
        %2241 = vmatprep.subr.bf16.mxu0 0
        %2242 = vmatpush1.bf16.msra.mxu0 0
        %2243 = vmatprep.subr.bf16.mxu0 0
        %2244 = vmatpush1.bf16.msra.mxu0 0
        %2245 = vmatprep.subr.bf16.mxu0 0
        %2246 = vmatpush1.bf16.msra.mxu0 0
        %2247 = vmatprep.subr.bf16.mxu0 0
        %2248 = vmatpush1.bf16.msra.mxu0 0
        %2249 = vmatprep.subr.bf16.mxu0 0
        %2250 = vmatpush1.bf16.msra.mxu0 0
        %2251 = vmatprep.subr.bf16.mxu0 0
        %2252 = vmatpush1.bf16.msra.mxu0 0
        %2253 = vmatprep.subr.bf16.mxu0 0
        %2254 = vmatpush1.bf16.msra.mxu0 0
        %2255 = vmatprep.subr.bf16.mxu0 0
        %2256 = vmatpush1.bf16.msra.mxu0 %v2239
        %2257 = vmatprep.subr.bf16.mxu0 0
        %2258 = vmatpush2.bf16.msra.mxu0 0
        %2259 = vmatprep.subr.bf16.mxu0 0
        %2260 = vmatpush2.bf16.msra.mxu0 0
        %2261 = vmatprep.subr.bf16.mxu0 0
        %2262 = vmatpush2.bf16.msra.mxu0 0
        %2263 = vmatprep.subr.bf16.mxu0 0
        %2264 = vmatpush2.bf16.msra.mxu0 0
        %2265 = vmatprep.subr.bf16.mxu0 0
        %2266 = vmatpush2.bf16.msra.mxu0 0
        %2267 = vmatprep.subr.bf16.mxu0 0
        %2268 = vmatpush2.bf16.msra.mxu0 0
        %2269 = vmatprep.subr.bf16.mxu0 0
        %2270 = vmatpush2.bf16.msra.mxu0 0
        %2271 = vmatprep.subr.bf16.mxu0 0
        %2272 = vmatpush2.bf16.msra.mxu0 0
        %2273 = vmatprep.mubr.bf16.mxu0 0
        %2274 = vmatmul.mubr.bf16.gmra.mxu0 %v2236
        %v2275 = vpop.f32.mrf.mxu0
        %v2276 = vadd.f32 0.0, %v2275
        %v2277 = vpop.f32.mrf.mxu0
        %v2278 = vpop.f32.mrf.mxu0
        %v2279 = vpop.f32.mrf.mxu0
        %2280 = vdwg.mxu0
        %v2281 = vpack.c.bf16 %v2230, %v2184
        %v2282 = vpack.c.bf16 %v2276, %v2276
        %v2299 = vunpack.c.l.b16 %v1649
        %v2300 = vunpack.c.h.b16 %v1649
        %v2301 = vunpack.c.l.b16 %v1650
        %v2302 = vunpack.c.h.b16 %v1650
        %v2303 = vunpack.c.l.b16 %v1651
        %v2304 = vunpack.c.h.b16 %v1651
        %v2305 = vunpack.c.l.b16 %v1652
        %v2306 = vunpack.c.h.b16 %v1652
        %v2307 = vunpack.c.l.b16 %v1653
        %v2308 = vunpack.c.h.b16 %v1653
        %v2309 = vunpack.c.l.b16 %v1654
        %v2310 = vunpack.c.h.b16 %v1654
        %v2311 = vunpack.c.l.b16 %v1655
        %v2312 = vunpack.c.h.b16 %v1655
        %v2313 = vunpack.c.l.b16 %v1656
        %v2314 = vunpack.c.h.b16 %v1656
        %v2315 = vunpack.c.l.b16 %v1657
        %v2316 = vunpack.c.h.b16 %v1657
        %v2317 = vunpack.c.l.b16 %v1658
        %v2318 = vunpack.c.h.b16 %v1658
        %v2319 = vunpack.c.l.b16 %v1659
        %v2320 = vunpack.c.h.b16 %v1659
        %v2321 = vunpack.c.l.b16 %v1660
        %v2322 = vunpack.c.h.b16 %v1660
        %v2323 = vunpack.c.l.b16 %v1661
        %v2324 = vunpack.c.h.b16 %v1661
        %v2325 = vunpack.c.l.b16 %v1662
        %v2326 = vunpack.c.h.b16 %v1662
        %v2327 = vunpack.c.l.b16 %v1663
        %v2328 = vunpack.c.h.b16 %v1663
        %v2329 = vunpack.c.l.b16 %v1664
        %v2330 = vunpack.c.h.b16 %v1664
        %v2331 = vpack.c.b16 %v2301, %v2299
        %v2332 = vpack.c.b16 %v2302, %v2300
        %v2333 = vpack.c.b16 %v2305, %v2303
        %v2334 = vpack.c.b16 %v2306, %v2304
        %v2335 = vpack.c.b16 %v2309, %v2307
        %v2336 = vpack.c.b16 %v2310, %v2308
        %v2337 = vpack.c.b16 %v2313, %v2311
        %v2338 = vpack.c.b16 %v2314, %v2312
        %v2339 = vpack.c.b16 %v2317, %v2315
        %v2340 = vpack.c.b16 %v2318, %v2316
        %v2341 = vpack.c.b16 %v2321, %v2319
        %v2342 = vpack.c.b16 %v2322, %v2320
        %v2343 = vpack.c.b16 %v2325, %v2323
        %v2344 = vpack.c.b16 %v2326, %v2324
        %v2345 = vpack.c.b16 %v2329, %v2327
        %v2346 = vpack.c.b16 %v2330, %v2328
        %2363 = vmatprep.subr.bf16.mxu0 %v2346
        %2364 = vmatpush1.bf16.msra.mxu0 %v2345
        %2365 = vmatprep.subr.bf16.mxu0 %v2344
        %2366 = vmatpush1.bf16.msra.mxu0 %v2343
        %2367 = vmatprep.subr.bf16.mxu0 %v2342
        %2368 = vmatpush1.bf16.msra.mxu0 %v2341
        %2369 = vmatprep.subr.bf16.mxu0 %v2340
        %2370 = vmatpush1.bf16.msra.mxu0 %v2339
        %2371 = vmatprep.subr.bf16.mxu0 %v2338
        %2372 = vmatpush1.bf16.msra.mxu0 %v2337
        %2373 = vmatprep.subr.bf16.mxu0 %v2336
        %2374 = vmatpush1.bf16.msra.mxu0 %v2335
        %2375 = vmatprep.subr.bf16.mxu0 %v2334
        %2376 = vmatpush1.bf16.msra.mxu0 %v2333
        %2377 = vmatprep.subr.bf16.mxu0 %v2332
        %2378 = vmatpush1.bf16.msra.mxu0 %v2331
        %2379 = vmatprep.subr.bf16.mxu0 0
        %2380 = vmatpush2.bf16.msra.mxu0 0
        %2381 = vmatprep.subr.bf16.mxu0 0
        %2382 = vmatpush2.bf16.msra.mxu0 0
        %2383 = vmatprep.subr.bf16.mxu0 0
        %2384 = vmatpush2.bf16.msra.mxu0 0
        %2385 = vmatprep.subr.bf16.mxu0 0
        %2386 = vmatpush2.bf16.msra.mxu0 0
        %2387 = vmatprep.subr.bf16.mxu0 0
        %2388 = vmatpush2.bf16.msra.mxu0 0
        %2389 = vmatprep.subr.bf16.mxu0 0
        %2390 = vmatpush2.bf16.msra.mxu0 0
        %2391 = vmatprep.subr.bf16.mxu0 0
        %2392 = vmatpush2.bf16.msra.mxu0 0
        %2393 = vmatprep.subr.bf16.mxu0 0
        %2394 = vmatpush2.bf16.msra.mxu0 0
        %2395 = vmatprep.mubr.bf16.mxu0 0
        %2396 = vmatmul.mubr.bf16.gmra.mxu0 %v2281
        %v2397 = vpop.f32.mrf.mxu0
        %v2398 = vadd.f32 0.0, %v2397
        %v2399 = vpop.f32.mrf.mxu0
        %v2400 = vadd.f32 0.0, %v2399
        %v2401 = vpop.f32.mrf.mxu0
        %v2402 = vadd.f32 0.0, %v2401
        %v2403 = vpop.f32.mrf.mxu0
        %v2404 = vadd.f32 0.0, %v2403
        %2405 = vmatprep.mubr.bf16.mxu0 0
        %2406 = vmatmul.mubr.bf16.gmra.mxu0 %v2282
        %v2407 = vpop.f32.mrf.mxu0
        %v2408 = vadd.f32 0.0, %v2407
        %v2409 = vpop.f32.mrf.mxu0
        %v2410 = vadd.f32 0.0, %v2409
        %v2411 = vpop.f32.mrf.mxu0
        %v2412 = vpop.f32.mrf.mxu0
        %2413 = vdwg.mxu0
        %v2430 = vunpack.c.l.b16 %v1633
        %v2431 = vunpack.c.h.b16 %v1633
        %v2432 = vunpack.c.l.b16 %v1634
        %v2433 = vunpack.c.h.b16 %v1634
        %v2434 = vunpack.c.l.b16 %v1635
        %v2435 = vunpack.c.h.b16 %v1635
        %v2436 = vunpack.c.l.b16 %v1636
        %v2437 = vunpack.c.h.b16 %v1636
        %v2438 = vunpack.c.l.b16 %v1637
        %v2439 = vunpack.c.h.b16 %v1637
        %v2440 = vunpack.c.l.b16 %v1638
        %v2441 = vunpack.c.h.b16 %v1638
        %v2442 = vunpack.c.l.b16 %v1639
        %v2443 = vunpack.c.h.b16 %v1639
        %v2444 = vunpack.c.l.b16 %v1640
        %v2445 = vunpack.c.h.b16 %v1640
        %v2446 = vunpack.c.l.b16 %v1641
        %v2447 = vunpack.c.h.b16 %v1641
        %v2448 = vunpack.c.l.b16 %v1642
        %v2449 = vunpack.c.h.b16 %v1642
        %v2450 = vunpack.c.l.b16 %v1643
        %v2451 = vunpack.c.h.b16 %v1643
        %v2452 = vunpack.c.l.b16 %v1644
        %v2453 = vunpack.c.h.b16 %v1644
        %v2454 = vunpack.c.l.b16 %v1645
        %v2455 = vunpack.c.h.b16 %v1645
        %v2456 = vunpack.c.l.b16 %v1646
        %v2457 = vunpack.c.h.b16 %v1646
        %v2458 = vunpack.c.l.b16 %v1647
        %v2459 = vunpack.c.h.b16 %v1647
        %v2460 = vunpack.c.l.b16 %v1648
        %v2461 = vunpack.c.h.b16 %v1648
        %v2462 = vpack.c.b16 %v2432, %v2430
        %v2463 = vpack.c.b16 %v2433, %v2431
        %v2464 = vpack.c.b16 %v2436, %v2434
        %v2465 = vpack.c.b16 %v2437, %v2435
        %v2466 = vpack.c.b16 %v2440, %v2438
        %v2467 = vpack.c.b16 %v2441, %v2439
        %v2468 = vpack.c.b16 %v2444, %v2442
        %v2469 = vpack.c.b16 %v2445, %v2443
        %v2470 = vpack.c.b16 %v2448, %v2446
        %v2471 = vpack.c.b16 %v2449, %v2447
        %v2472 = vpack.c.b16 %v2452, %v2450
        %v2473 = vpack.c.b16 %v2453, %v2451
        %v2474 = vpack.c.b16 %v2456, %v2454
        %v2475 = vpack.c.b16 %v2457, %v2455
        %v2476 = vpack.c.b16 %v2460, %v2458
        %v2477 = vpack.c.b16 %v2461, %v2459
        %2494 = vmatprep.subr.bf16.mxu0 %v2477
        %2495 = vmatpush1.bf16.msra.mxu0 %v2476
        %2496 = vmatprep.subr.bf16.mxu0 %v2475
        %2497 = vmatpush1.bf16.msra.mxu0 %v2474
        %2498 = vmatprep.subr.bf16.mxu0 %v2473
        %2499 = vmatpush1.bf16.msra.mxu0 %v2472
        %2500 = vmatprep.subr.bf16.mxu0 %v2471
        %2501 = vmatpush1.bf16.msra.mxu0 %v2470
        %2502 = vmatprep.subr.bf16.mxu0 %v2469
        %2503 = vmatpush1.bf16.msra.mxu0 %v2468
        %2504 = vmatprep.subr.bf16.mxu0 %v2467
        %2505 = vmatpush1.bf16.msra.mxu0 %v2466
        %2506 = vmatprep.subr.bf16.mxu0 %v2465
        %2507 = vmatpush1.bf16.msra.mxu0 %v2464
        %2508 = vmatprep.subr.bf16.mxu0 %v2463
        %2509 = vmatpush1.bf16.msra.mxu0 %v2462
        %2510 = vmatprep.subr.bf16.mxu0 0
        %2511 = vmatpush2.bf16.msra.mxu0 0
        %2512 = vmatprep.subr.bf16.mxu0 0
        %2513 = vmatpush2.bf16.msra.mxu0 0
        %2514 = vmatprep.subr.bf16.mxu0 0
        %2515 = vmatpush2.bf16.msra.mxu0 0
        %2516 = vmatprep.subr.bf16.mxu0 0
        %2517 = vmatpush2.bf16.msra.mxu0 0
        %2518 = vmatprep.subr.bf16.mxu0 0
        %2519 = vmatpush2.bf16.msra.mxu0 0
        %2520 = vmatprep.subr.bf16.mxu0 0
        %2521 = vmatpush2.bf16.msra.mxu0 0
        %2522 = vmatprep.subr.bf16.mxu0 0
        %2523 = vmatpush2.bf16.msra.mxu0 0
        %2524 = vmatprep.subr.bf16.mxu0 0
        %2525 = vmatpush2.bf16.msra.mxu0 0
        %2526 = vmatprep.mubr.bf16.mxu0 0
        %2527 = vmatmul.mubr.bf16.gmra.mxu0 %v1973
        %v2528 = vpop.f32.mrf.mxu0
        %v2529 = vadd.f32 %v2398, %v2528
        %v2530 = vpop.f32.mrf.mxu0
        %v2531 = vadd.f32 %v2400, %v2530
        %v2532 = vpop.f32.mrf.mxu0
        %v2533 = vadd.f32 %v2402, %v2532
        %v2534 = vpop.f32.mrf.mxu0
        %v2535 = vadd.f32 %v2404, %v2534
        %2536 = vmatprep.mubr.bf16.mxu0 0
        %2537 = vmatmul.mubr.bf16.gmra.mxu0 %v1974
        %v2538 = vpop.f32.mrf.mxu0
        %v2539 = vadd.f32 %v2408, %v2538
        %v2540 = vpop.f32.mrf.mxu0
        %v2541 = vadd.f32 %v2410, %v2540
        %v2542 = vpop.f32.mrf.mxu0
        %v2543 = vpop.f32.mrf.mxu0
        %2544 = vdwg.mxu0
        %v2545 = vadd.f32 %v777, %v2529
        %v2546 = vadd.f32 %v778, %v2531
        %v2547 = vadd.f32 %v779, %v2533
        %v2548 = vadd.f32 %v780, %v2535
        %v2549 = vadd.f32 %v781, %v2539
        %v2550 = vadd.f32 %v782, %v2541
        %v2551 = vld [vmem:[%s7] sm:$0x3]
        %v2553 = vlaneseq
        %v2554 = vshrl.u32 %v2553, 7
        %v2555 = vsub.s32 0, %v2554
        %v2556 = vrot.slane %v2551, %v2555
        %v2557 = vlaneseq
        %v2558 = vshrl.u32 %v2557, 7
        %v2559 = vsub.s32 1, %v2558
        %v2560 = vrot.slane %v2551, %v2559
        %v2563 = vadd.f32 %v2545, %v2556
        %v2564 = vadd.f32 %v2546, %v2560
        %v2565 = vadd.f32 %v2547, %v2556
        %v2566 = vadd.f32 %v2548, %v2560
        %v2567 = vadd.f32 %v2549, %v2556
        %v2568 = vadd.f32 %v2550, %v2560
        %v2569 = vld [vmem:[#allocation13] sm:$0x3]
        %v2570 = vld [vmem:[#allocation14] sm:$0x3]
        %v2571 = vadd.f32 %v2563, %v2564
        %2572 = vadd.xlane.f32.xlu0 %v2571
        %v2573 = vpop.xlane.xlu0 %2572
        %v2574 = vadd.f32 %v2565, %v2566
        %2575 = vadd.xlane.f32.xlu0 %v2574
        %v2576 = vpop.xlane.xlu0 %2575
        %v2577 = vadd.f32 %v2567, %v2568
        %2578 = vadd.xlane.f32.xlu0 %v2577
        %v2579 = vpop.xlane.xlu0 %2578
        %v2580 = vmul.f32 %v2573, %v794
        %v2581 = vmul.f32 %v2576, %v794
        %v2582 = vmul.f32 %v2579, %v794
        %v2583 = vsub.f32 %v2563, %v2580
        %v2584 = vsub.f32 %v2564, %v2580
        %v2585 = vsub.f32 %v2565, %v2581
        %v2586 = vsub.f32 %v2566, %v2581
        %v2587 = vsub.f32 %v2567, %v2582
        %v2588 = vsub.f32 %v2568, %v2582
        %v2589 = vmul.f32 %v2583, %v2583
        %v2590 = vmul.f32 %v2584, %v2584
        %v2591 = vmul.f32 %v2585, %v2585
        %v2592 = vmul.f32 %v2586, %v2586
        %v2593 = vmul.f32 %v2587, %v2587
        %v2594 = vmul.f32 %v2588, %v2588
        %v2595 = vadd.f32 %v2589, %v2590
        %2596 = vadd.xlane.f32.xlu0 %v2595
        %v2597 = vpop.xlane.xlu0 %2596
        %v2598 = vadd.f32 %v2591, %v2592
        %2599 = vadd.xlane.f32.xlu0 %v2598
        %v2600 = vpop.xlane.xlu0 %2599
        %v2601 = vadd.f32 %v2593, %v2594
        %2602 = vadd.xlane.f32.xlu0 %v2601
        %v2603 = vpop.xlane.xlu0 %2602
        %v2604 = vmul.f32 %v2597, %v794
        %v2605 = vmul.f32 %v2600, %v794
        %v2606 = vmul.f32 %v2603, %v794
        %v2607 = vadd.f32 %v2604, 1e-06
        %v2608 = vadd.f32 %v2605, 1e-06
        %v2609 = vadd.f32 %v2606, 1e-06
        %v2610 = vrsqrt.pop %v2607
        %v2611 = vrsqrt.pop %v2608
        %v2612 = vrsqrt.pop %v2609
        %v2613 = vmul.f32 %v2583, %v2610
        %v2614 = vmul.f32 %v2584, %v2610
        %v2615 = vmul.f32 %v2585, %v2611
        %v2616 = vmul.f32 %v2586, %v2611
        %v2617 = vmul.f32 %v2587, %v2612
        %v2618 = vmul.f32 %v2588, %v2612
        %v2620 = vlaneseq
        %v2621 = vshrl.u32 %v2620, 7
        %v2622 = vsub.s32 0, %v2621
        %v2623 = vrot.slane %v2569, %v2622
        %v2624 = vlaneseq
        %v2625 = vshrl.u32 %v2624, 7
        %v2626 = vsub.s32 1, %v2625
        %v2627 = vrot.slane %v2569, %v2626
        %v2630 = vmul.f32 %v2613, %v2623
        %v2631 = vmul.f32 %v2614, %v2627
        %v2632 = vmul.f32 %v2615, %v2623
        %v2633 = vmul.f32 %v2616, %v2627
        %v2634 = vmul.f32 %v2617, %v2623
        %v2635 = vmul.f32 %v2618, %v2627
        %v2637 = vlaneseq
        %v2638 = vshrl.u32 %v2637, 7
        %v2639 = vsub.s32 0, %v2638
        %v2640 = vrot.slane %v2570, %v2639
        %v2641 = vlaneseq
        %v2642 = vshrl.u32 %v2641, 7
        %v2643 = vsub.s32 1, %v2642
        %v2644 = vrot.slane %v2570, %v2643
        %v2647 = vadd.f32 %v2630, %v2640
        %v2648 = vadd.f32 %v2631, %v2644
        %v2649 = vadd.f32 %v2632, %v2640
        %v2650 = vadd.f32 %v2633, %v2644
        %v2651 = vadd.f32 %v2634, %v2640
        %v2652 = vadd.f32 %v2635, %v2644
        %v2653 = vpack.c.bf16 %v2649, %v2647
        %v2654 = vpack.c.bf16 %v2650, %v2648
        %v2655 = vpack.c.bf16 %v2651, %v2651
        %v2656 = vpack.c.bf16 %v2652, %v2652
        %v2657 = vld [vmem:[#allocation16] sm:$0xff]
        %v2658 = vld [vmem:[#allocation16 + $0x8] sm:$0xff]
        %v2659 = vld [vmem:[#allocation16 + $0x10] sm:$0xff]
        %v2660 = vld [vmem:[#allocation16 + $0x18] sm:$0xff]
        %v2661 = vld [vmem:[#allocation16 + $0x20] sm:$0xff]
        %v2662 = vld [vmem:[#allocation16 + $0x28] sm:$0xff]
        %v2663 = vld [vmem:[#allocation16 + $0x30] sm:$0xff]
        %v2664 = vld [vmem:[#allocation16 + $0x38] sm:$0xff]
        %v2665 = vld [vmem:[#allocation16 + $0x40] sm:$0xff]
        %v2666 = vld [vmem:[#allocation16 + $0x48] sm:$0xff]
        %v2667 = vld [vmem:[#allocation16 + $0x50] sm:$0xff]
        %v2668 = vld [vmem:[#allocation16 + $0x58] sm:$0xff]
        %v2669 = vld [vmem:[#allocation16 + $0x60] sm:$0xff]
        %v2670 = vld [vmem:[#allocation16 + $0x68] sm:$0xff]
        %v2671 = vld [vmem:[#allocation16 + $0x70] sm:$0xff]
        %v2672 = vld [vmem:[#allocation16 + $0x78] sm:$0xff]
        %v2673 = vld [vmem:[#allocation16 + $0x80] sm:$0xff]
        %v2674 = vld [vmem:[#allocation16 + $0x88] sm:$0xff]
        %v2675 = vld [vmem:[#allocation16 + $0x90] sm:$0xff]
        %v2676 = vld [vmem:[#allocation16 + $0x98] sm:$0xff]
        %v2677 = vld [vmem:[#allocation16 + $0xa0] sm:$0xff]
        %v2678 = vld [vmem:[#allocation16 + $0xa8] sm:$0xff]
        %v2679 = vld [vmem:[#allocation16 + $0xb0] sm:$0xff]
        %v2680 = vld [vmem:[#allocation16 + $0xb8] sm:$0xff]
        %v2681 = vld [vmem:[#allocation16 + $0xc0] sm:$0xff]
        %v2682 = vld [vmem:[#allocation16 + $0xc8] sm:$0xff]
        %v2683 = vld [vmem:[#allocation16 + $0xd0] sm:$0xff]
        %v2684 = vld [vmem:[#allocation16 + $0xd8] sm:$0xff]
        %v2685 = vld [vmem:[#allocation16 + $0xe0] sm:$0xff]
        %v2686 = vld [vmem:[#allocation16 + $0xe8] sm:$0xff]
        %v2687 = vld [vmem:[#allocation16 + $0xf0] sm:$0xff]
        %v2688 = vld [vmem:[#allocation16 + $0xf8] sm:$0xff]
        %v2689 = vld [vmem:[#allocation16 + $0x100] sm:$0xff]
        %v2690 = vld [vmem:[#allocation16 + $0x108] sm:$0xff]
        %v2691 = vld [vmem:[#allocation16 + $0x110] sm:$0xff]
        %v2692 = vld [vmem:[#allocation16 + $0x118] sm:$0xff]
        %v2693 = vld [vmem:[#allocation16 + $0x120] sm:$0xff]
        %v2694 = vld [vmem:[#allocation16 + $0x128] sm:$0xff]
        %v2695 = vld [vmem:[#allocation16 + $0x130] sm:$0xff]
        %v2696 = vld [vmem:[#allocation16 + $0x138] sm:$0xff]
        %v2697 = vld [vmem:[#allocation16 + $0x140] sm:$0xff]
        %v2698 = vld [vmem:[#allocation16 + $0x148] sm:$0xff]
        %v2699 = vld [vmem:[#allocation16 + $0x150] sm:$0xff]
        %v2700 = vld [vmem:[#allocation16 + $0x158] sm:$0xff]
        %v2701 = vld [vmem:[#allocation16 + $0x160] sm:$0xff]
        %v2702 = vld [vmem:[#allocation16 + $0x168] sm:$0xff]
        %v2703 = vld [vmem:[#allocation16 + $0x170] sm:$0xff]
        %v2704 = vld [vmem:[#allocation16 + $0x178] sm:$0xff]
        %v2705 = vld [vmem:[#allocation16 + $0x180] sm:$0xff]
        %v2706 = vld [vmem:[#allocation16 + $0x188] sm:$0xff]
        %v2707 = vld [vmem:[#allocation16 + $0x190] sm:$0xff]
        %v2708 = vld [vmem:[#allocation16 + $0x198] sm:$0xff]
        %v2709 = vld [vmem:[#allocation16 + $0x1a0] sm:$0xff]
        %v2710 = vld [vmem:[#allocation16 + $0x1a8] sm:$0xff]
        %v2711 = vld [vmem:[#allocation16 + $0x1b0] sm:$0xff]
        %v2712 = vld [vmem:[#allocation16 + $0x1b8] sm:$0xff]
        %v2713 = vld [vmem:[#allocation16 + $0x1c0] sm:$0xff]
        %v2714 = vld [vmem:[#allocation16 + $0x1c8] sm:$0xff]
        %v2715 = vld [vmem:[#allocation16 + $0x1d0] sm:$0xff]
        %v2716 = vld [vmem:[#allocation16 + $0x1d8] sm:$0xff]
        %v2717 = vld [vmem:[#allocation16 + $0x1e0] sm:$0xff]
        %v2718 = vld [vmem:[#allocation16 + $0x1e8] sm:$0xff]
        %v2719 = vld [vmem:[#allocation16 + $0x1f0] sm:$0xff]
        %v2720 = vld [vmem:[#allocation16 + $0x1f8] sm:$0xff]
        %v2721 = vld [vmem:[%s11] sm:$0xf]
        %v2723 = vlaneseq
        %v2724 = vshrl.u32 %v2723, 7
        %v2725 = vsub.s32 0, %v2724
        %v2726 = vrot.slane %v2721, %v2725
        %v2727 = vlaneseq
        %v2728 = vshrl.u32 %v2727, 7
        %v2729 = vsub.s32 1, %v2728
        %v2730 = vrot.slane %v2721, %v2729
        %v2731 = vlaneseq
        %v2732 = vshrl.u32 %v2731, 7
        %v2733 = vsub.s32 2, %v2732
        %v2734 = vrot.slane %v2721, %v2733
        %v2735 = vlaneseq
        %v2736 = vshrl.u32 %v2735, 7
        %v2737 = vsub.s32 3, %v2736
        %v2738 = vrot.slane %v2721, %v2737
        %v2807 = vunpack.c.l.b16 %v2657
        %v2808 = vunpack.c.h.b16 %v2657
        %v2809 = vunpack.c.l.b16 %v2658
        %v2810 = vunpack.c.h.b16 %v2658
        %v2811 = vunpack.c.l.b16 %v2659
        %v2812 = vunpack.c.h.b16 %v2659
        %v2813 = vunpack.c.l.b16 %v2660
        %v2814 = vunpack.c.h.b16 %v2660
        %v2815 = vunpack.c.l.b16 %v2661
        %v2816 = vunpack.c.h.b16 %v2661
        %v2817 = vunpack.c.l.b16 %v2662
        %v2818 = vunpack.c.h.b16 %v2662
        %v2819 = vunpack.c.l.b16 %v2663
        %v2820 = vunpack.c.h.b16 %v2663
        %v2821 = vunpack.c.l.b16 %v2664
        %v2822 = vunpack.c.h.b16 %v2664
        %v2823 = vunpack.c.l.b16 %v2665
        %v2824 = vunpack.c.h.b16 %v2665
        %v2825 = vunpack.c.l.b16 %v2666
        %v2826 = vunpack.c.h.b16 %v2666
        %v2827 = vunpack.c.l.b16 %v2667
        %v2828 = vunpack.c.h.b16 %v2667
        %v2829 = vunpack.c.l.b16 %v2668
        %v2830 = vunpack.c.h.b16 %v2668
        %v2831 = vunpack.c.l.b16 %v2669
        %v2832 = vunpack.c.h.b16 %v2669
        %v2833 = vunpack.c.l.b16 %v2670
        %v2834 = vunpack.c.h.b16 %v2670
        %v2835 = vunpack.c.l.b16 %v2671
        %v2836 = vunpack.c.h.b16 %v2671
        %v2837 = vunpack.c.l.b16 %v2672
        %v2838 = vunpack.c.h.b16 %v2672
        %v2839 = vunpack.c.l.b16 %v2673
        %v2840 = vunpack.c.h.b16 %v2673
        %v2841 = vunpack.c.l.b16 %v2674
        %v2842 = vunpack.c.h.b16 %v2674
        %v2843 = vunpack.c.l.b16 %v2675
        %v2844 = vunpack.c.h.b16 %v2675
        %v2845 = vunpack.c.l.b16 %v2676
        %v2846 = vunpack.c.h.b16 %v2676
        %v2847 = vunpack.c.l.b16 %v2677
        %v2848 = vunpack.c.h.b16 %v2677
        %v2849 = vunpack.c.l.b16 %v2678
        %v2850 = vunpack.c.h.b16 %v2678
        %v2851 = vunpack.c.l.b16 %v2679
        %v2852 = vunpack.c.h.b16 %v2679
        %v2853 = vunpack.c.l.b16 %v2680
        %v2854 = vunpack.c.h.b16 %v2680
        %v2855 = vunpack.c.l.b16 %v2681
        %v2856 = vunpack.c.h.b16 %v2681
        %v2857 = vunpack.c.l.b16 %v2682
        %v2858 = vunpack.c.h.b16 %v2682
        %v2859 = vunpack.c.l.b16 %v2683
        %v2860 = vunpack.c.h.b16 %v2683
        %v2861 = vunpack.c.l.b16 %v2684
        %v2862 = vunpack.c.h.b16 %v2684
        %v2863 = vunpack.c.l.b16 %v2685
        %v2864 = vunpack.c.h.b16 %v2685
        %v2865 = vunpack.c.l.b16 %v2686
        %v2866 = vunpack.c.h.b16 %v2686
        %v2867 = vunpack.c.l.b16 %v2687
        %v2868 = vunpack.c.h.b16 %v2687
        %v2869 = vunpack.c.l.b16 %v2688
        %v2870 = vunpack.c.h.b16 %v2688
        %v2871 = vunpack.c.l.b16 %v2689
        %v2872 = vunpack.c.h.b16 %v2689
        %v2873 = vunpack.c.l.b16 %v2690
        %v2874 = vunpack.c.h.b16 %v2690
        %v2875 = vunpack.c.l.b16 %v2691
        %v2876 = vunpack.c.h.b16 %v2691
        %v2877 = vunpack.c.l.b16 %v2692
        %v2878 = vunpack.c.h.b16 %v2692
        %v2879 = vunpack.c.l.b16 %v2693
        %v2880 = vunpack.c.h.b16 %v2693
        %v2881 = vunpack.c.l.b16 %v2694
        %v2882 = vunpack.c.h.b16 %v2694
        %v2883 = vunpack.c.l.b16 %v2695
        %v2884 = vunpack.c.h.b16 %v2695
        %v2885 = vunpack.c.l.b16 %v2696
        %v2886 = vunpack.c.h.b16 %v2696
        %v2887 = vunpack.c.l.b16 %v2697
        %v2888 = vunpack.c.h.b16 %v2697
        %v2889 = vunpack.c.l.b16 %v2698
        %v2890 = vunpack.c.h.b16 %v2698
        %v2891 = vunpack.c.l.b16 %v2699
        %v2892 = vunpack.c.h.b16 %v2699
        %v2893 = vunpack.c.l.b16 %v2700
        %v2894 = vunpack.c.h.b16 %v2700
        %v2895 = vunpack.c.l.b16 %v2701
        %v2896 = vunpack.c.h.b16 %v2701
        %v2897 = vunpack.c.l.b16 %v2702
        %v2898 = vunpack.c.h.b16 %v2702
        %v2899 = vunpack.c.l.b16 %v2703
        %v2900 = vunpack.c.h.b16 %v2703
        %v2901 = vunpack.c.l.b16 %v2704
        %v2902 = vunpack.c.h.b16 %v2704
        %v2903 = vunpack.c.l.b16 %v2705
        %v2904 = vunpack.c.h.b16 %v2705
        %v2905 = vunpack.c.l.b16 %v2706
        %v2906 = vunpack.c.h.b16 %v2706
        %v2907 = vunpack.c.l.b16 %v2707
        %v2908 = vunpack.c.h.b16 %v2707
        %v2909 = vunpack.c.l.b16 %v2708
        %v2910 = vunpack.c.h.b16 %v2708
        %v2911 = vunpack.c.l.b16 %v2709
        %v2912 = vunpack.c.h.b16 %v2709
        %v2913 = vunpack.c.l.b16 %v2710
        %v2914 = vunpack.c.h.b16 %v2710
        %v2915 = vunpack.c.l.b16 %v2711
        %v2916 = vunpack.c.h.b16 %v2711
        %v2917 = vunpack.c.l.b16 %v2712
        %v2918 = vunpack.c.h.b16 %v2712
        %v2919 = vunpack.c.l.b16 %v2713
        %v2920 = vunpack.c.h.b16 %v2713
        %v2921 = vunpack.c.l.b16 %v2714
        %v2922 = vunpack.c.h.b16 %v2714
        %v2923 = vunpack.c.l.b16 %v2715
        %v2924 = vunpack.c.h.b16 %v2715
        %v2925 = vunpack.c.l.b16 %v2716
        %v2926 = vunpack.c.h.b16 %v2716
        %v2927 = vunpack.c.l.b16 %v2717
        %v2928 = vunpack.c.h.b16 %v2717
        %v2929 = vunpack.c.l.b16 %v2718
        %v2930 = vunpack.c.h.b16 %v2718
        %v2931 = vunpack.c.l.b16 %v2719
        %v2932 = vunpack.c.h.b16 %v2719
        %v2933 = vunpack.c.l.b16 %v2720
        %v2934 = vunpack.c.h.b16 %v2720
        %v2935 = vpack.c.b16 %v2811, %v2807
        %v2936 = vpack.c.b16 %v2812, %v2808
        %v2937 = vpack.c.b16 %v2813, %v2809
        %v2938 = vpack.c.b16 %v2814, %v2810
        %v2939 = vpack.c.b16 %v2819, %v2815
        %v2940 = vpack.c.b16 %v2820, %v2816
        %v2941 = vpack.c.b16 %v2821, %v2817
        %v2942 = vpack.c.b16 %v2822, %v2818
        %v2943 = vpack.c.b16 %v2827, %v2823
        %v2944 = vpack.c.b16 %v2828, %v2824
        %v2945 = vpack.c.b16 %v2829, %v2825
        %v2946 = vpack.c.b16 %v2830, %v2826
        %v2947 = vpack.c.b16 %v2835, %v2831
        %v2948 = vpack.c.b16 %v2836, %v2832
        %v2949 = vpack.c.b16 %v2837, %v2833
        %v2950 = vpack.c.b16 %v2838, %v2834
        %v2951 = vpack.c.b16 %v2843, %v2839
        %v2952 = vpack.c.b16 %v2844, %v2840
        %v2953 = vpack.c.b16 %v2845, %v2841
        %v2954 = vpack.c.b16 %v2846, %v2842
        %v2955 = vpack.c.b16 %v2851, %v2847
        %v2956 = vpack.c.b16 %v2852, %v2848
        %v2957 = vpack.c.b16 %v2853, %v2849
        %v2958 = vpack.c.b16 %v2854, %v2850
        %v2959 = vpack.c.b16 %v2859, %v2855
        %v2960 = vpack.c.b16 %v2860, %v2856
        %v2961 = vpack.c.b16 %v2861, %v2857
        %v2962 = vpack.c.b16 %v2862, %v2858
        %v2963 = vpack.c.b16 %v2867, %v2863
        %v2964 = vpack.c.b16 %v2868, %v2864
        %v2965 = vpack.c.b16 %v2869, %v2865
        %v2966 = vpack.c.b16 %v2870, %v2866
        %v2967 = vpack.c.b16 %v2875, %v2871
        %v2968 = vpack.c.b16 %v2876, %v2872
        %v2969 = vpack.c.b16 %v2877, %v2873
        %v2970 = vpack.c.b16 %v2878, %v2874
        %v2971 = vpack.c.b16 %v2883, %v2879
        %v2972 = vpack.c.b16 %v2884, %v2880
        %v2973 = vpack.c.b16 %v2885, %v2881
        %v2974 = vpack.c.b16 %v2886, %v2882
        %v2975 = vpack.c.b16 %v2891, %v2887
        %v2976 = vpack.c.b16 %v2892, %v2888
        %v2977 = vpack.c.b16 %v2893, %v2889
        %v2978 = vpack.c.b16 %v2894, %v2890
        %v2979 = vpack.c.b16 %v2899, %v2895
        %v2980 = vpack.c.b16 %v2900, %v2896
        %v2981 = vpack.c.b16 %v2901, %v2897
        %v2982 = vpack.c.b16 %v2902, %v2898
        %v2983 = vpack.c.b16 %v2907, %v2903
        %v2984 = vpack.c.b16 %v2908, %v2904
        %v2985 = vpack.c.b16 %v2909, %v2905
        %v2986 = vpack.c.b16 %v2910, %v2906
        %v2987 = vpack.c.b16 %v2915, %v2911
        %v2988 = vpack.c.b16 %v2916, %v2912
        %v2989 = vpack.c.b16 %v2917, %v2913
        %v2990 = vpack.c.b16 %v2918, %v2914
        %v2991 = vpack.c.b16 %v2923, %v2919
        %v2992 = vpack.c.b16 %v2924, %v2920
        %v2993 = vpack.c.b16 %v2925, %v2921
        %v2994 = vpack.c.b16 %v2926, %v2922
        %v2995 = vpack.c.b16 %v2931, %v2927
        %v2996 = vpack.c.b16 %v2932, %v2928
        %v2997 = vpack.c.b16 %v2933, %v2929
        %v2998 = vpack.c.b16 %v2934, %v2930
        %3063 = vmatprep.subr.bf16.mxu0 %v2964
        %3064 = vmatpush1.bf16.msra.mxu0 %v2963
        %3065 = vmatprep.subr.bf16.mxu0 %v2960
        %3066 = vmatpush1.bf16.msra.mxu0 %v2959
        %3067 = vmatprep.subr.bf16.mxu0 %v2956
        %3068 = vmatpush1.bf16.msra.mxu0 %v2955
        %3069 = vmatprep.subr.bf16.mxu0 %v2952
        %3070 = vmatpush1.bf16.msra.mxu0 %v2951
        %3071 = vmatprep.subr.bf16.mxu0 %v2948
        %3072 = vmatpush1.bf16.msra.mxu0 %v2947
        %3073 = vmatprep.subr.bf16.mxu0 %v2944
        %3074 = vmatpush1.bf16.msra.mxu0 %v2943
        %3075 = vmatprep.subr.bf16.mxu0 %v2940
        %3076 = vmatpush1.bf16.msra.mxu0 %v2939
        %3077 = vmatprep.subr.bf16.mxu0 %v2936
        %3078 = vmatpush1.bf16.msra.mxu0 %v2935
        %3079 = vmatprep.subr.bf16.mxu0 %v2996
        %3080 = vmatpush2.bf16.msra.mxu0 %v2995
        %3081 = vmatprep.subr.bf16.mxu0 %v2992
        %3082 = vmatpush2.bf16.msra.mxu0 %v2991
        %3083 = vmatprep.subr.bf16.mxu0 %v2988
        %3084 = vmatpush2.bf16.msra.mxu0 %v2987
        %3085 = vmatprep.subr.bf16.mxu0 %v2984
        %3086 = vmatpush2.bf16.msra.mxu0 %v2983
        %3087 = vmatprep.subr.bf16.mxu0 %v2980
        %3088 = vmatpush2.bf16.msra.mxu0 %v2979
        %3089 = vmatprep.subr.bf16.mxu0 %v2976
        %3090 = vmatpush2.bf16.msra.mxu0 %v2975
        %3091 = vmatprep.subr.bf16.mxu0 %v2972
        %3092 = vmatpush2.bf16.msra.mxu0 %v2971
        %3093 = vmatprep.subr.bf16.mxu0 %v2968
        %3094 = vmatpush2.bf16.msra.mxu0 %v2967
        %3095 = vmatprep.mubr.bf16.mxu0 %v2654
        %3096 = vmatmul.mubr.bf16.gmra.mxu0 %v2653
        %v3097 = vpop.f32.mrf.mxu0
        %v3098 = vadd.f32 %v2726, %v3097
        %v3099 = vpop.f32.mrf.mxu0
        %v3100 = vadd.f32 %v2730, %v3099
        %v3101 = vpop.f32.mrf.mxu0
        %v3102 = vadd.f32 %v2726, %v3101
        %v3103 = vpop.f32.mrf.mxu0
        %v3104 = vadd.f32 %v2730, %v3103
        %3105 = vmatprep.mubr.bf16.mxu0 %v2656
        %3106 = vmatmul.mubr.bf16.gmra.mxu0 %v2655
        %v3107 = vpop.f32.mrf.mxu0
        %v3108 = vadd.f32 %v2726, %v3107
        %v3109 = vpop.f32.mrf.mxu0
        %v3110 = vadd.f32 %v2730, %v3109
        %v3111 = vpop.f32.mrf.mxu0
        %v3112 = vpop.f32.mrf.mxu0
        %3113 = vdwg.mxu0
        %3114 = vmatprep.subr.bf16.mxu0 %v2966
        %3115 = vmatpush1.bf16.msra.mxu0 %v2965
        %3116 = vmatprep.subr.bf16.mxu0 %v2962
        %3117 = vmatpush1.bf16.msra.mxu0 %v2961
        %3118 = vmatprep.subr.bf16.mxu0 %v2958
        %3119 = vmatpush1.bf16.msra.mxu0 %v2957
        %3120 = vmatprep.subr.bf16.mxu0 %v2954
        %3121 = vmatpush1.bf16.msra.mxu0 %v2953
        %3122 = vmatprep.subr.bf16.mxu0 %v2950
        %3123 = vmatpush1.bf16.msra.mxu0 %v2949
        %3124 = vmatprep.subr.bf16.mxu0 %v2946
        %3125 = vmatpush1.bf16.msra.mxu0 %v2945
        %3126 = vmatprep.subr.bf16.mxu0 %v2942
        %3127 = vmatpush1.bf16.msra.mxu0 %v2941
        %3128 = vmatprep.subr.bf16.mxu0 %v2938
        %3129 = vmatpush1.bf16.msra.mxu0 %v2937
        %3130 = vmatprep.subr.bf16.mxu0 %v2998
        %3131 = vmatpush2.bf16.msra.mxu0 %v2997
        %3132 = vmatprep.subr.bf16.mxu0 %v2994
        %3133 = vmatpush2.bf16.msra.mxu0 %v2993
        %3134 = vmatprep.subr.bf16.mxu0 %v2990
        %3135 = vmatpush2.bf16.msra.mxu0 %v2989
        %3136 = vmatprep.subr.bf16.mxu0 %v2986
        %3137 = vmatpush2.bf16.msra.mxu0 %v2985
        %3138 = vmatprep.subr.bf16.mxu0 %v2982
        %3139 = vmatpush2.bf16.msra.mxu0 %v2981
        %3140 = vmatprep.subr.bf16.mxu0 %v2978
        %3141 = vmatpush2.bf16.msra.mxu0 %v2977
        %3142 = vmatprep.subr.bf16.mxu0 %v2974
        %3143 = vmatpush2.bf16.msra.mxu0 %v2973
        %3144 = vmatprep.subr.bf16.mxu0 %v2970
        %3145 = vmatpush2.bf16.msra.mxu0 %v2969
        %3146 = vmatprep.mubr.bf16.mxu0 %v2654
        %3147 = vmatmul.mubr.bf16.gmra.mxu0 %v2653
        %v3148 = vpop.f32.mrf.mxu0
        %v3149 = vadd.f32 %v2734, %v3148
        %v3150 = vpop.f32.mrf.mxu0
        %v3151 = vadd.f32 %v2738, %v3150
        %v3152 = vpop.f32.mrf.mxu0
        %v3153 = vadd.f32 %v2734, %v3152
        %v3154 = vpop.f32.mrf.mxu0
        %v3155 = vadd.f32 %v2738, %v3154
        %3156 = vmatprep.mubr.bf16.mxu0 %v2656
        %3157 = vmatmul.mubr.bf16.gmra.mxu0 %v2655
        %v3158 = vpop.f32.mrf.mxu0
        %v3159 = vadd.f32 %v2734, %v3158
        %v3160 = vpop.f32.mrf.mxu0
        %v3161 = vadd.f32 %v2738, %v3160
        %v3162 = vpop.f32.mrf.mxu0
        %v3163 = vpop.f32.mrf.mxu0
        %3164 = vdwg.mxu0
        %v3165 = vmul.f32 %v3098, 0.5
        %v3166 = vmul.f32 %v3100, 0.5
        %v3167 = vmul.f32 %v3149, 0.5
        %v3168 = vmul.f32 %v3151, 0.5
        %v3169 = vmul.f32 %v3102, 0.5
        %v3170 = vmul.f32 %v3104, 0.5
        %v3171 = vmul.f32 %v3153, 0.5
        %v3172 = vmul.f32 %v3155, 0.5
        %v3173 = vmul.f32 %v3108, 0.5
        %v3174 = vmul.f32 %v3110, 0.5
        %v3175 = vmul.f32 %v3159, 0.5
        %v3176 = vmul.f32 %v3161, 0.5
        %v3177 = vmul.f32 %v3098, 0.70710677
        %v3178 = vmul.f32 %v3100, 0.70710677
        %v3179 = vmul.f32 %v3149, 0.70710677
        %v3180 = vmul.f32 %v3151, 0.70710677
        %v3181 = vmul.f32 %v3102, 0.70710677
        %v3182 = vmul.f32 %v3104, 0.70710677
        %v3183 = vmul.f32 %v3153, 0.70710677
        %v3184 = vmul.f32 %v3155, 0.70710677
        %v3185 = vmul.f32 %v3108, 0.70710677
        %v3186 = vmul.f32 %v3110, 0.70710677
        %v3187 = vmul.f32 %v3159, 0.70710677
        %v3188 = vmul.f32 %v3161, 0.70710677
        %v3189 = verf.f32.pop %v3177
        %v3190 = verf.f32.pop %v3178
        %v3191 = verf.f32.pop %v3179
        %v3192 = verf.f32.pop %v3180
        %v3193 = verf.f32.pop %v3181
        %v3194 = verf.f32.pop %v3182
        %v3195 = verf.f32.pop %v3183
        %v3196 = verf.f32.pop %v3184
        %v3197 = verf.f32.pop %v3185
        %v3198 = verf.f32.pop %v3186
        %v3199 = verf.f32.pop %v3187
        %v3200 = verf.f32.pop %v3188
        %v3201 = vadd.f32 %v3189, 1.0
        %v3202 = vadd.f32 %v3190, 1.0
        %v3203 = vadd.f32 %v3191, 1.0
        %v3204 = vadd.f32 %v3192, 1.0
        %v3205 = vadd.f32 %v3193, 1.0
        %v3206 = vadd.f32 %v3194, 1.0
        %v3207 = vadd.f32 %v3195, 1.0
        %v3208 = vadd.f32 %v3196, 1.0
        %v3209 = vadd.f32 %v3197, 1.0
        %v3210 = vadd.f32 %v3198, 1.0
        %v3211 = vadd.f32 %v3199, 1.0
        %v3212 = vadd.f32 %v3200, 1.0
        %v3213 = vmul.f32 %v3165, %v3201
        %v3214 = vmul.f32 %v3166, %v3202
        %v3215 = vmul.f32 %v3167, %v3203
        %v3216 = vmul.f32 %v3168, %v3204
        %v3217 = vmul.f32 %v3169, %v3205
        %v3218 = vmul.f32 %v3170, %v3206
        %v3219 = vmul.f32 %v3171, %v3207
        %v3220 = vmul.f32 %v3172, %v3208
        %v3221 = vmul.f32 %v3173, %v3209
        %v3222 = vmul.f32 %v3174, %v3210
        %v3223 = vmul.f32 %v3175, %v3211
        %v3224 = vmul.f32 %v3176, %v3212
        %v3225 = vpack.c.bf16 %v3217, %v3213
        %v3226 = vpack.c.bf16 %v3218, %v3214
        %v3227 = vpack.c.bf16 %v3219, %v3215
        %v3228 = vpack.c.bf16 %v3220, %v3216
        %v3229 = vpack.c.bf16 %v3221, %v3221
        %v3230 = vpack.c.bf16 %v3222, %v3222
        %v3231 = vpack.c.bf16 %v3223, %v3223
        %v3232 = vpack.c.bf16 %v3224, %v3224
        %v3233 = vld [vmem:[#allocation17] sm:$0xff]
        %v3234 = vld [vmem:[#allocation17 + $0x8] sm:$0xff]
        %v3235 = vld [vmem:[#allocation17 + $0x10] sm:$0xff]
        %v3236 = vld [vmem:[#allocation17 + $0x18] sm:$0xff]
        %v3237 = vld [vmem:[#allocation17 + $0x20] sm:$0xff]
        %v3238 = vld [vmem:[#allocation17 + $0x28] sm:$0xff]
        %v3239 = vld [vmem:[#allocation17 + $0x30] sm:$0xff]
        %v3240 = vld [vmem:[#allocation17 + $0x38] sm:$0xff]
        %v3241 = vld [vmem:[#allocation17 + $0x40] sm:$0xff]
        %v3242 = vld [vmem:[#allocation17 + $0x48] sm:$0xff]
        %v3243 = vld [vmem:[#allocation17 + $0x50] sm:$0xff]
        %v3244 = vld [vmem:[#allocation17 + $0x58] sm:$0xff]
        %v3245 = vld [vmem:[#allocation17 + $0x60] sm:$0xff]
        %v3246 = vld [vmem:[#allocation17 + $0x68] sm:$0xff]
        %v3247 = vld [vmem:[#allocation17 + $0x70] sm:$0xff]
        %v3248 = vld [vmem:[#allocation17 + $0x78] sm:$0xff]
        %v3249 = vld [vmem:[#allocation17 + $0x80] sm:$0xff]
        %v3250 = vld [vmem:[#allocation17 + $0x88] sm:$0xff]
        %v3251 = vld [vmem:[#allocation17 + $0x90] sm:$0xff]
        %v3252 = vld [vmem:[#allocation17 + $0x98] sm:$0xff]
        %v3253 = vld [vmem:[#allocation17 + $0xa0] sm:$0xff]
        %v3254 = vld [vmem:[#allocation17 + $0xa8] sm:$0xff]
        %v3255 = vld [vmem:[#allocation17 + $0xb0] sm:$0xff]
        %v3256 = vld [vmem:[#allocation17 + $0xb8] sm:$0xff]
        %v3257 = vld [vmem:[#allocation17 + $0xc0] sm:$0xff]
        %v3258 = vld [vmem:[#allocation17 + $0xc8] sm:$0xff]
        %v3259 = vld [vmem:[#allocation17 + $0xd0] sm:$0xff]
        %v3260 = vld [vmem:[#allocation17 + $0xd8] sm:$0xff]
        %v3261 = vld [vmem:[#allocation17 + $0xe0] sm:$0xff]
        %v3262 = vld [vmem:[#allocation17 + $0xe8] sm:$0xff]
        %v3263 = vld [vmem:[#allocation17 + $0xf0] sm:$0xff]
        %v3264 = vld [vmem:[#allocation17 + $0xf8] sm:$0xff]
        %v3265 = vld [vmem:[#allocation17 + $0x100] sm:$0xff]
        %v3266 = vld [vmem:[#allocation17 + $0x108] sm:$0xff]
        %v3267 = vld [vmem:[#allocation17 + $0x110] sm:$0xff]
        %v3268 = vld [vmem:[#allocation17 + $0x118] sm:$0xff]
        %v3269 = vld [vmem:[#allocation17 + $0x120] sm:$0xff]
        %v3270 = vld [vmem:[#allocation17 + $0x128] sm:$0xff]
        %v3271 = vld [vmem:[#allocation17 + $0x130] sm:$0xff]
        %v3272 = vld [vmem:[#allocation17 + $0x138] sm:$0xff]
        %v3273 = vld [vmem:[#allocation17 + $0x140] sm:$0xff]
        %v3274 = vld [vmem:[#allocation17 + $0x148] sm:$0xff]
        %v3275 = vld [vmem:[#allocation17 + $0x150] sm:$0xff]
        %v3276 = vld [vmem:[#allocation17 + $0x158] sm:$0xff]
        %v3277 = vld [vmem:[#allocation17 + $0x160] sm:$0xff]
        %v3278 = vld [vmem:[#allocation17 + $0x168] sm:$0xff]
        %v3279 = vld [vmem:[#allocation17 + $0x170] sm:$0xff]
        %v3280 = vld [vmem:[#allocation17 + $0x178] sm:$0xff]
        %v3281 = vld [vmem:[#allocation17 + $0x180] sm:$0xff]
        %v3282 = vld [vmem:[#allocation17 + $0x188] sm:$0xff]
        %v3283 = vld [vmem:[#allocation17 + $0x190] sm:$0xff]
        %v3284 = vld [vmem:[#allocation17 + $0x198] sm:$0xff]
        %v3285 = vld [vmem:[#allocation17 + $0x1a0] sm:$0xff]
        %v3286 = vld [vmem:[#allocation17 + $0x1a8] sm:$0xff]
        %v3287 = vld [vmem:[#allocation17 + $0x1b0] sm:$0xff]
        %v3288 = vld [vmem:[#allocation17 + $0x1b8] sm:$0xff]
        %v3289 = vld [vmem:[#allocation17 + $0x1c0] sm:$0xff]
        %v3290 = vld [vmem:[#allocation17 + $0x1c8] sm:$0xff]
        %v3291 = vld [vmem:[#allocation17 + $0x1d0] sm:$0xff]
        %v3292 = vld [vmem:[#allocation17 + $0x1d8] sm:$0xff]
        %v3293 = vld [vmem:[#allocation17 + $0x1e0] sm:$0xff]
        %v3294 = vld [vmem:[#allocation17 + $0x1e8] sm:$0xff]
        %v3295 = vld [vmem:[#allocation17 + $0x1f0] sm:$0xff]
        %v3296 = vld [vmem:[#allocation17 + $0x1f8] sm:$0xff]
        %v3297 = vld [vmem:[%s13] sm:$0x3]
        %v3299 = vlaneseq
        %v3300 = vshrl.u32 %v3299, 7
        %v3301 = vsub.s32 0, %v3300
        %v3302 = vrot.slane %v3297, %v3301
        %v3303 = vlaneseq
        %v3304 = vshrl.u32 %v3303, 7
        %v3305 = vsub.s32 1, %v3304
        %v3306 = vrot.slane %v3297, %v3305
        %v3373 = vunpack.c.l.b16 %v3233
        %v3374 = vunpack.c.h.b16 %v3233
        %v3375 = vunpack.c.l.b16 %v3234
        %v3376 = vunpack.c.h.b16 %v3234
        %v3377 = vunpack.c.l.b16 %v3235
        %v3378 = vunpack.c.h.b16 %v3235
        %v3379 = vunpack.c.l.b16 %v3236
        %v3380 = vunpack.c.h.b16 %v3236
        %v3381 = vunpack.c.l.b16 %v3237
        %v3382 = vunpack.c.h.b16 %v3237
        %v3383 = vunpack.c.l.b16 %v3238
        %v3384 = vunpack.c.h.b16 %v3238
        %v3385 = vunpack.c.l.b16 %v3239
        %v3386 = vunpack.c.h.b16 %v3239
        %v3387 = vunpack.c.l.b16 %v3240
        %v3388 = vunpack.c.h.b16 %v3240
        %v3389 = vunpack.c.l.b16 %v3241
        %v3390 = vunpack.c.h.b16 %v3241
        %v3391 = vunpack.c.l.b16 %v3242
        %v3392 = vunpack.c.h.b16 %v3242
        %v3393 = vunpack.c.l.b16 %v3243
        %v3394 = vunpack.c.h.b16 %v3243
        %v3395 = vunpack.c.l.b16 %v3244
        %v3396 = vunpack.c.h.b16 %v3244
        %v3397 = vunpack.c.l.b16 %v3245
        %v3398 = vunpack.c.h.b16 %v3245
        %v3399 = vunpack.c.l.b16 %v3246
        %v3400 = vunpack.c.h.b16 %v3246
        %v3401 = vunpack.c.l.b16 %v3247
        %v3402 = vunpack.c.h.b16 %v3247
        %v3403 = vunpack.c.l.b16 %v3248
        %v3404 = vunpack.c.h.b16 %v3248
        %v3405 = vunpack.c.l.b16 %v3249
        %v3406 = vunpack.c.h.b16 %v3249
        %v3407 = vunpack.c.l.b16 %v3250
        %v3408 = vunpack.c.h.b16 %v3250
        %v3409 = vunpack.c.l.b16 %v3251
        %v3410 = vunpack.c.h.b16 %v3251
        %v3411 = vunpack.c.l.b16 %v3252
        %v3412 = vunpack.c.h.b16 %v3252
        %v3413 = vunpack.c.l.b16 %v3253
        %v3414 = vunpack.c.h.b16 %v3253
        %v3415 = vunpack.c.l.b16 %v3254
        %v3416 = vunpack.c.h.b16 %v3254
        %v3417 = vunpack.c.l.b16 %v3255
        %v3418 = vunpack.c.h.b16 %v3255
        %v3419 = vunpack.c.l.b16 %v3256
        %v3420 = vunpack.c.h.b16 %v3256
        %v3421 = vunpack.c.l.b16 %v3257
        %v3422 = vunpack.c.h.b16 %v3257
        %v3423 = vunpack.c.l.b16 %v3258
        %v3424 = vunpack.c.h.b16 %v3258
        %v3425 = vunpack.c.l.b16 %v3259
        %v3426 = vunpack.c.h.b16 %v3259
        %v3427 = vunpack.c.l.b16 %v3260
        %v3428 = vunpack.c.h.b16 %v3260
        %v3429 = vunpack.c.l.b16 %v3261
        %v3430 = vunpack.c.h.b16 %v3261
        %v3431 = vunpack.c.l.b16 %v3262
        %v3432 = vunpack.c.h.b16 %v3262
        %v3433 = vunpack.c.l.b16 %v3263
        %v3434 = vunpack.c.h.b16 %v3263
        %v3435 = vunpack.c.l.b16 %v3264
        %v3436 = vunpack.c.h.b16 %v3264
        %v3437 = vunpack.c.l.b16 %v3265
        %v3438 = vunpack.c.h.b16 %v3265
        %v3439 = vunpack.c.l.b16 %v3266
        %v3440 = vunpack.c.h.b16 %v3266
        %v3441 = vunpack.c.l.b16 %v3267
        %v3442 = vunpack.c.h.b16 %v3267
        %v3443 = vunpack.c.l.b16 %v3268
        %v3444 = vunpack.c.h.b16 %v3268
        %v3445 = vunpack.c.l.b16 %v3269
        %v3446 = vunpack.c.h.b16 %v3269
        %v3447 = vunpack.c.l.b16 %v3270
        %v3448 = vunpack.c.h.b16 %v3270
        %v3449 = vunpack.c.l.b16 %v3271
        %v3450 = vunpack.c.h.b16 %v3271
        %v3451 = vunpack.c.l.b16 %v3272
        %v3452 = vunpack.c.h.b16 %v3272
        %v3453 = vunpack.c.l.b16 %v3273
        %v3454 = vunpack.c.h.b16 %v3273
        %v3455 = vunpack.c.l.b16 %v3274
        %v3456 = vunpack.c.h.b16 %v3274
        %v3457 = vunpack.c.l.b16 %v3275
        %v3458 = vunpack.c.h.b16 %v3275
        %v3459 = vunpack.c.l.b16 %v3276
        %v3460 = vunpack.c.h.b16 %v3276
        %v3461 = vunpack.c.l.b16 %v3277
        %v3462 = vunpack.c.h.b16 %v3277
        %v3463 = vunpack.c.l.b16 %v3278
        %v3464 = vunpack.c.h.b16 %v3278
        %v3465 = vunpack.c.l.b16 %v3279
        %v3466 = vunpack.c.h.b16 %v3279
        %v3467 = vunpack.c.l.b16 %v3280
        %v3468 = vunpack.c.h.b16 %v3280
        %v3469 = vunpack.c.l.b16 %v3281
        %v3470 = vunpack.c.h.b16 %v3281
        %v3471 = vunpack.c.l.b16 %v3282
        %v3472 = vunpack.c.h.b16 %v3282
        %v3473 = vunpack.c.l.b16 %v3283
        %v3474 = vunpack.c.h.b16 %v3283
        %v3475 = vunpack.c.l.b16 %v3284
        %v3476 = vunpack.c.h.b16 %v3284
        %v3477 = vunpack.c.l.b16 %v3285
        %v3478 = vunpack.c.h.b16 %v3285
        %v3479 = vunpack.c.l.b16 %v3286
        %v3480 = vunpack.c.h.b16 %v3286
        %v3481 = vunpack.c.l.b16 %v3287
        %v3482 = vunpack.c.h.b16 %v3287
        %v3483 = vunpack.c.l.b16 %v3288
        %v3484 = vunpack.c.h.b16 %v3288
        %v3485 = vunpack.c.l.b16 %v3289
        %v3486 = vunpack.c.h.b16 %v3289
        %v3487 = vunpack.c.l.b16 %v3290
        %v3488 = vunpack.c.h.b16 %v3290
        %v3489 = vunpack.c.l.b16 %v3291
        %v3490 = vunpack.c.h.b16 %v3291
        %v3491 = vunpack.c.l.b16 %v3292
        %v3492 = vunpack.c.h.b16 %v3292
        %v3493 = vunpack.c.l.b16 %v3293
        %v3494 = vunpack.c.h.b16 %v3293
        %v3495 = vunpack.c.l.b16 %v3294
        %v3496 = vunpack.c.h.b16 %v3294
        %v3497 = vunpack.c.l.b16 %v3295
        %v3498 = vunpack.c.h.b16 %v3295
        %v3499 = vunpack.c.l.b16 %v3296
        %v3500 = vunpack.c.h.b16 %v3296
        %v3501 = vpack.c.b16 %v3375, %v3373
        %v3502 = vpack.c.b16 %v3376, %v3374
        %v3503 = vpack.c.b16 %v3379, %v3377
        %v3504 = vpack.c.b16 %v3380, %v3378
        %v3505 = vpack.c.b16 %v3383, %v3381
        %v3506 = vpack.c.b16 %v3384, %v3382
        %v3507 = vpack.c.b16 %v3387, %v3385
        %v3508 = vpack.c.b16 %v3388, %v3386
        %v3509 = vpack.c.b16 %v3391, %v3389
        %v3510 = vpack.c.b16 %v3392, %v3390
        %v3511 = vpack.c.b16 %v3395, %v3393
        %v3512 = vpack.c.b16 %v3396, %v3394
        %v3513 = vpack.c.b16 %v3399, %v3397
        %v3514 = vpack.c.b16 %v3400, %v3398
        %v3515 = vpack.c.b16 %v3403, %v3401
        %v3516 = vpack.c.b16 %v3404, %v3402
        %v3517 = vpack.c.b16 %v3407, %v3405
        %v3518 = vpack.c.b16 %v3408, %v3406
        %v3519 = vpack.c.b16 %v3411, %v3409
        %v3520 = vpack.c.b16 %v3412, %v3410
        %v3521 = vpack.c.b16 %v3415, %v3413
        %v3522 = vpack.c.b16 %v3416, %v3414
        %v3523 = vpack.c.b16 %v3419, %v3417
        %v3524 = vpack.c.b16 %v3420, %v3418
        %v3525 = vpack.c.b16 %v3423, %v3421
        %v3526 = vpack.c.b16 %v3424, %v3422
        %v3527 = vpack.c.b16 %v3427, %v3425
        %v3528 = vpack.c.b16 %v3428, %v3426
        %v3529 = vpack.c.b16 %v3431, %v3429
        %v3530 = vpack.c.b16 %v3432, %v3430
        %v3531 = vpack.c.b16 %v3435, %v3433
        %v3532 = vpack.c.b16 %v3436, %v3434
        %v3533 = vpack.c.b16 %v3439, %v3437
        %v3534 = vpack.c.b16 %v3440, %v3438
        %v3535 = vpack.c.b16 %v3443, %v3441
        %v3536 = vpack.c.b16 %v3444, %v3442
        %v3537 = vpack.c.b16 %v3447, %v3445
        %v3538 = vpack.c.b16 %v3448, %v3446
        %v3539 = vpack.c.b16 %v3451, %v3449
        %v3540 = vpack.c.b16 %v3452, %v3450
        %v3541 = vpack.c.b16 %v3455, %v3453
        %v3542 = vpack.c.b16 %v3456, %v3454
        %v3543 = vpack.c.b16 %v3459, %v3457
        %v3544 = vpack.c.b16 %v3460, %v3458
        %v3545 = vpack.c.b16 %v3463, %v3461
        %v3546 = vpack.c.b16 %v3464, %v3462
        %v3547 = vpack.c.b16 %v3467, %v3465
        %v3548 = vpack.c.b16 %v3468, %v3466
        %v3549 = vpack.c.b16 %v3471, %v3469
        %v3550 = vpack.c.b16 %v3472, %v3470
        %v3551 = vpack.c.b16 %v3475, %v3473
        %v3552 = vpack.c.b16 %v3476, %v3474
        %v3553 = vpack.c.b16 %v3479, %v3477
        %v3554 = vpack.c.b16 %v3480, %v3478
        %v3555 = vpack.c.b16 %v3483, %v3481
        %v3556 = vpack.c.b16 %v3484, %v3482
        %v3557 = vpack.c.b16 %v3487, %v3485
        %v3558 = vpack.c.b16 %v3488, %v3486
        %v3559 = vpack.c.b16 %v3491, %v3489
        %v3560 = vpack.c.b16 %v3492, %v3490
        %v3561 = vpack.c.b16 %v3495, %v3493
        %v3562 = vpack.c.b16 %v3496, %v3494
        %v3563 = vpack.c.b16 %v3499, %v3497
        %v3564 = vpack.c.b16 %v3500, %v3498
        %3629 = vmatprep.subr.bf16.mxu0 %v3516
        %3630 = vmatpush1.bf16.msra.mxu0 %v3515
        %3631 = vmatprep.subr.bf16.mxu0 %v3514
        %3632 = vmatpush1.bf16.msra.mxu0 %v3513
        %3633 = vmatprep.subr.bf16.mxu0 %v3512
        %3634 = vmatpush1.bf16.msra.mxu0 %v3511
        %3635 = vmatprep.subr.bf16.mxu0 %v3510
        %3636 = vmatpush1.bf16.msra.mxu0 %v3509
        %3637 = vmatprep.subr.bf16.mxu0 %v3508
        %3638 = vmatpush1.bf16.msra.mxu0 %v3507
        %3639 = vmatprep.subr.bf16.mxu0 %v3506
        %3640 = vmatpush1.bf16.msra.mxu0 %v3505
        %3641 = vmatprep.subr.bf16.mxu0 %v3504
        %3642 = vmatpush1.bf16.msra.mxu0 %v3503
        %3643 = vmatprep.subr.bf16.mxu0 %v3502
        %3644 = vmatpush1.bf16.msra.mxu0 %v3501
        %3645 = vmatprep.subr.bf16.mxu0 %v3532
        %3646 = vmatpush2.bf16.msra.mxu0 %v3531
        %3647 = vmatprep.subr.bf16.mxu0 %v3530
        %3648 = vmatpush2.bf16.msra.mxu0 %v3529
        %3649 = vmatprep.subr.bf16.mxu0 %v3528
        %3650 = vmatpush2.bf16.msra.mxu0 %v3527
        %3651 = vmatprep.subr.bf16.mxu0 %v3526
        %3652 = vmatpush2.bf16.msra.mxu0 %v3525
        %3653 = vmatprep.subr.bf16.mxu0 %v3524
        %3654 = vmatpush2.bf16.msra.mxu0 %v3523
        %3655 = vmatprep.subr.bf16.mxu0 %v3522
        %3656 = vmatpush2.bf16.msra.mxu0 %v3521
        %3657 = vmatprep.subr.bf16.mxu0 %v3520
        %3658 = vmatpush2.bf16.msra.mxu0 %v3519
        %3659 = vmatprep.subr.bf16.mxu0 %v3518
        %3660 = vmatpush2.bf16.msra.mxu0 %v3517
        %3661 = vmatprep.mubr.bf16.mxu0 %v3226
        %3662 = vmatmul.mubr.bf16.gmra.mxu0 %v3225
        %v3663 = vpop.f32.mrf.mxu0
        %v3664 = vadd.f32 %v3302, %v3663
        %v3665 = vpop.f32.mrf.mxu0
        %v3666 = vadd.f32 %v3306, %v3665
        %v3667 = vpop.f32.mrf.mxu0
        %v3668 = vadd.f32 %v3302, %v3667
        %v3669 = vpop.f32.mrf.mxu0
        %v3670 = vadd.f32 %v3306, %v3669
        %3671 = vmatprep.mubr.bf16.mxu0 %v3230
        %3672 = vmatmul.mubr.bf16.gmra.mxu0 %v3229
        %v3673 = vpop.f32.mrf.mxu0
        %v3674 = vadd.f32 %v3302, %v3673
        %v3675 = vpop.f32.mrf.mxu0
        %v3676 = vadd.f32 %v3306, %v3675
        %v3677 = vpop.f32.mrf.mxu0
        %v3678 = vpop.f32.mrf.mxu0
        %3679 = vdwg.mxu0
        %3680 = vmatprep.subr.bf16.mxu0 %v3548
        %3681 = vmatpush1.bf16.msra.mxu0 %v3547
        %3682 = vmatprep.subr.bf16.mxu0 %v3546
        %3683 = vmatpush1.bf16.msra.mxu0 %v3545
        %3684 = vmatprep.subr.bf16.mxu0 %v3544
        %3685 = vmatpush1.bf16.msra.mxu0 %v3543
        %3686 = vmatprep.subr.bf16.mxu0 %v3542
        %3687 = vmatpush1.bf16.msra.mxu0 %v3541
        %3688 = vmatprep.subr.bf16.mxu0 %v3540
        %3689 = vmatpush1.bf16.msra.mxu0 %v3539
        %3690 = vmatprep.subr.bf16.mxu0 %v3538
        %3691 = vmatpush1.bf16.msra.mxu0 %v3537
        %3692 = vmatprep.subr.bf16.mxu0 %v3536
        %3693 = vmatpush1.bf16.msra.mxu0 %v3535
        %3694 = vmatprep.subr.bf16.mxu0 %v3534
        %3695 = vmatpush1.bf16.msra.mxu0 %v3533
        %3696 = vmatprep.subr.bf16.mxu0 %v3564
        %3697 = vmatpush2.bf16.msra.mxu0 %v3563
        %3698 = vmatprep.subr.bf16.mxu0 %v3562
        %3699 = vmatpush2.bf16.msra.mxu0 %v3561
        %3700 = vmatprep.subr.bf16.mxu0 %v3560
        %3701 = vmatpush2.bf16.msra.mxu0 %v3559
        %3702 = vmatprep.subr.bf16.mxu0 %v3558
        %3703 = vmatpush2.bf16.msra.mxu0 %v3557
        %3704 = vmatprep.subr.bf16.mxu0 %v3556
        %3705 = vmatpush2.bf16.msra.mxu0 %v3555
        %3706 = vmatprep.subr.bf16.mxu0 %v3554
        %3707 = vmatpush2.bf16.msra.mxu0 %v3553
        %3708 = vmatprep.subr.bf16.mxu0 %v3552
        %3709 = vmatpush2.bf16.msra.mxu0 %v3551
        %3710 = vmatprep.subr.bf16.mxu0 %v3550
        %3711 = vmatpush2.bf16.msra.mxu0 %v3549
        %3712 = vmatprep.mubr.bf16.mxu0 %v3228
        %3713 = vmatmul.mubr.bf16.gmra.mxu0 %v3227
        %v3714 = vpop.f32.mrf.mxu0
        %v3715 = vadd.f32 %v3664, %v3714
        %v3716 = vpop.f32.mrf.mxu0
        %v3717 = vadd.f32 %v3666, %v3716
        %v3718 = vpop.f32.mrf.mxu0
        %v3719 = vadd.f32 %v3668, %v3718
        %v3720 = vpop.f32.mrf.mxu0
        %v3721 = vadd.f32 %v3670, %v3720
        %3722 = vmatprep.mubr.bf16.mxu0 %v3232
        %3723 = vmatmul.mubr.bf16.gmra.mxu0 %v3231
        %v3724 = vpop.f32.mrf.mxu0
        %v3725 = vadd.f32 %v3674, %v3724
        %v3726 = vpop.f32.mrf.mxu0
        %v3727 = vadd.f32 %v3676, %v3726
        %v3728 = vpop.f32.mrf.mxu0
        %v3729 = vpop.f32.mrf.mxu0
        %3730 = vdwg.mxu0
        %v3731 = vadd.f32 %v2563, %v3715
        %v3732 = vadd.f32 %v2564, %v3717
        %v3733 = vadd.f32 %v2565, %v3719
        %v3734 = vadd.f32 %v2566, %v3721
        %v3735 = vadd.f32 %v2567, %v3725
        %v3736 = vadd.f32 %v2568, %v3727
        %s3737 = scalar_lea.vmem [#allocation7], 2
        %v3738 = vld [vmem:[%s3737] sm:$0x3]
        %s3739 = scalar_lea.vmem %s3, 2
        %v3740 = vld [vmem:[%s3739] sm:$0x3]
        %v3741 = vadd.f32 %v3731, %v3732
        %3742 = vadd.xlane.f32.xlu0 %v3741
        %v3743 = vpop.xlane.xlu0 %3742
        %v3744 = vadd.f32 %v3733, %v3734
        %3745 = vadd.xlane.f32.xlu0 %v3744
        %v3746 = vpop.xlane.xlu0 %3745
        %v3747 = vadd.f32 %v3735, %v3736
        %3748 = vadd.xlane.f32.xlu0 %v3747
        %v3749 = vpop.xlane.xlu0 %3748
        %v3750 = vmul.f32 %v3743, %v794
        %v3751 = vmul.f32 %v3746, %v794
        %v3752 = vmul.f32 %v3749, %v794
        %v3753 = vsub.f32 %v3731, %v3750
        %v3754 = vsub.f32 %v3732, %v3750
        %v3755 = vsub.f32 %v3733, %v3751
        %v3756 = vsub.f32 %v3734, %v3751
        %v3757 = vsub.f32 %v3735, %v3752
        %v3758 = vsub.f32 %v3736, %v3752
        %v3759 = vmul.f32 %v3753, %v3753
        %v3760 = vmul.f32 %v3754, %v3754
        %v3761 = vmul.f32 %v3755, %v3755
        %v3762 = vmul.f32 %v3756, %v3756
        %v3763 = vmul.f32 %v3757, %v3757
        %v3764 = vmul.f32 %v3758, %v3758
        %v3765 = vadd.f32 %v3759, %v3760
        %3766 = vadd.xlane.f32.xlu0 %v3765
        %v3767 = vpop.xlane.xlu0 %3766
        %v3768 = vadd.f32 %v3761, %v3762
        %3769 = vadd.xlane.f32.xlu0 %v3768
        %v3770 = vpop.xlane.xlu0 %3769
        %v3771 = vadd.f32 %v3763, %v3764
        %3772 = vadd.xlane.f32.xlu0 %v3771
        %v3773 = vpop.xlane.xlu0 %3772
        %v3774 = vmul.f32 %v3767, %v794
        %v3775 = vmul.f32 %v3770, %v794
        %v3776 = vmul.f32 %v3773, %v794
        %v3777 = vadd.f32 %v3774, 1e-06
        %v3778 = vadd.f32 %v3775, 1e-06
        %v3779 = vadd.f32 %v3776, 1e-06
        %v3780 = vrsqrt.pop %v3777
        %v3781 = vrsqrt.pop %v3778
        %v3782 = vrsqrt.pop %v3779
        %v3783 = vmul.f32 %v3753, %v3780
        %v3784 = vmul.f32 %v3754, %v3780
        %v3785 = vmul.f32 %v3755, %v3781
        %v3786 = vmul.f32 %v3756, %v3781
        %v3787 = vmul.f32 %v3757, %v3782
        %v3788 = vmul.f32 %v3758, %v3782
        %v3790 = vlaneseq
        %v3791 = vshrl.u32 %v3790, 7
        %v3792 = vsub.s32 0, %v3791
        %v3793 = vrot.slane %v3738, %v3792
        %v3794 = vlaneseq
        %v3795 = vshrl.u32 %v3794, 7
        %v3796 = vsub.s32 1, %v3795
        %v3797 = vrot.slane %v3738, %v3796
        %v3800 = vmul.f32 %v3783, %v3793
        %v3801 = vmul.f32 %v3784, %v3797
        %v3802 = vmul.f32 %v3785, %v3793
        %v3803 = vmul.f32 %v3786, %v3797
        %v3804 = vmul.f32 %v3787, %v3793
        %v3805 = vmul.f32 %v3788, %v3797
        %v3807 = vlaneseq
        %v3808 = vshrl.u32 %v3807, 7
        %v3809 = vsub.s32 0, %v3808
        %v3810 = vrot.slane %v3740, %v3809
        %v3811 = vlaneseq
        %v3812 = vshrl.u32 %v3811, 7
        %v3813 = vsub.s32 1, %v3812
        %v3814 = vrot.slane %v3740, %v3813
        %v3817 = vadd.f32 %v3800, %v3810
        %v3818 = vadd.f32 %v3801, %v3814
        %v3819 = vadd.f32 %v3802, %v3810
        %v3820 = vadd.f32 %v3803, %v3814
        %v3821 = vadd.f32 %v3804, %v3810
        %v3822 = vadd.f32 %v3805, %v3814
        %v3823 = vpack.c.bf16 %v3819, %v3817
        %v3824 = vpack.c.bf16 %v3820, %v3818
        %v3825 = vpack.c.bf16 %v3821, %v3821
        %v3826 = vpack.c.bf16 %v3822, %v3822
        %s3827 = scalar_lea.vmem [#allocation8], 768
        %v3828 = vld [vmem:[%s3827] sm:$0xff]
        %v3829 = vld [vmem:[%s3827 + $0x8] sm:$0xff]
        %v3830 = vld [vmem:[%s3827 + $0x10] sm:$0xff]
        %v3831 = vld [vmem:[%s3827 + $0x18] sm:$0xff]
        %v3832 = vld [vmem:[%s3827 + $0x20] sm:$0xff]
        %v3833 = vld [vmem:[%s3827 + $0x28] sm:$0xff]
        %v3834 = vld [vmem:[%s3827 + $0x30] sm:$0xff]
        %v3835 = vld [vmem:[%s3827 + $0x38] sm:$0xff]
        %v3836 = vld [vmem:[%s3827 + $0x40] sm:$0xff]
        %v3837 = vld [vmem:[%s3827 + $0x48] sm:$0xff]
        %v3838 = vld [vmem:[%s3827 + $0x50] sm:$0xff]
        %v3839 = vld [vmem:[%s3827 + $0x58] sm:$0xff]
        %v3840 = vld [vmem:[%s3827 + $0x60] sm:$0xff]
        %v3841 = vld [vmem:[%s3827 + $0x68] sm:$0xff]
        %v3842 = vld [vmem:[%s3827 + $0x70] sm:$0xff]
        %v3843 = vld [vmem:[%s3827 + $0x78] sm:$0xff]
        %v3844 = vld [vmem:[%s3827 + $0x80] sm:$0xff]
        %v3845 = vld [vmem:[%s3827 + $0x88] sm:$0xff]
        %v3846 = vld [vmem:[%s3827 + $0x90] sm:$0xff]
        %v3847 = vld [vmem:[%s3827 + $0x98] sm:$0xff]
        %v3848 = vld [vmem:[%s3827 + $0xa0] sm:$0xff]
        %v3849 = vld [vmem:[%s3827 + $0xa8] sm:$0xff]
        %v3850 = vld [vmem:[%s3827 + $0xb0] sm:$0xff]
        %v3851 = vld [vmem:[%s3827 + $0xb8] sm:$0xff]
        %v3852 = vld [vmem:[%s3827 + $0xc0] sm:$0xff]
        %v3853 = vld [vmem:[%s3827 + $0xc8] sm:$0xff]
        %v3854 = vld [vmem:[%s3827 + $0xd0] sm:$0xff]
        %v3855 = vld [vmem:[%s3827 + $0xd8] sm:$0xff]
        %v3856 = vld [vmem:[%s3827 + $0xe0] sm:$0xff]
        %v3857 = vld [vmem:[%s3827 + $0xe8] sm:$0xff]
        %v3858 = vld [vmem:[%s3827 + $0xf0] sm:$0xff]
        %v3859 = vld [vmem:[%s3827 + $0xf8] sm:$0xff]
        %v3860 = vld [vmem:[%s3827 + $0x100] sm:$0xff]
        %v3861 = vld [vmem:[%s3827 + $0x108] sm:$0xff]
        %v3862 = vld [vmem:[%s3827 + $0x110] sm:$0xff]
        %v3863 = vld [vmem:[%s3827 + $0x118] sm:$0xff]
        %v3864 = vld [vmem:[%s3827 + $0x120] sm:$0xff]
        %v3865 = vld [vmem:[%s3827 + $0x128] sm:$0xff]
        %v3866 = vld [vmem:[%s3827 + $0x130] sm:$0xff]
        %v3867 = vld [vmem:[%s3827 + $0x138] sm:$0xff]
        %v3868 = vld [vmem:[%s3827 + $0x140] sm:$0xff]
        %v3869 = vld [vmem:[%s3827 + $0x148] sm:$0xff]
        %v3870 = vld [vmem:[%s3827 + $0x150] sm:$0xff]
        %v3871 = vld [vmem:[%s3827 + $0x158] sm:$0xff]
        %v3872 = vld [vmem:[%s3827 + $0x160] sm:$0xff]
        %v3873 = vld [vmem:[%s3827 + $0x168] sm:$0xff]
        %v3874 = vld [vmem:[%s3827 + $0x170] sm:$0xff]
        %v3875 = vld [vmem:[%s3827 + $0x178] sm:$0xff]
        %v3876 = vld [vmem:[%s3827 + $0x180] sm:$0xff]
        %v3877 = vld [vmem:[%s3827 + $0x188] sm:$0xff]
        %v3878 = vld [vmem:[%s3827 + $0x190] sm:$0xff]
        %v3879 = vld [vmem:[%s3827 + $0x198] sm:$0xff]
        %v3880 = vld [vmem:[%s3827 + $0x1a0] sm:$0xff]
        %v3881 = vld [vmem:[%s3827 + $0x1a8] sm:$0xff]
        %v3882 = vld [vmem:[%s3827 + $0x1b0] sm:$0xff]
        %v3883 = vld [vmem:[%s3827 + $0x1b8] sm:$0xff]
        %v3884 = vld [vmem:[%s3827 + $0x1c0] sm:$0xff]
        %v3885 = vld [vmem:[%s3827 + $0x1c8] sm:$0xff]
        %v3886 = vld [vmem:[%s3827 + $0x1d0] sm:$0xff]
        %v3887 = vld [vmem:[%s3827 + $0x1d8] sm:$0xff]
        %v3888 = vld [vmem:[%s3827 + $0x1e0] sm:$0xff]
        %v3889 = vld [vmem:[%s3827 + $0x1e8] sm:$0xff]
        %v3890 = vld [vmem:[%s3827 + $0x1f0] sm:$0xff]
        %v3891 = vld [vmem:[%s3827 + $0x1f8] sm:$0xff]
        %v3892 = vld [vmem:[%s3827 + $0x200] sm:$0xff]
        %v3893 = vld [vmem:[%s3827 + $0x208] sm:$0xff]
        %v3894 = vld [vmem:[%s3827 + $0x210] sm:$0xff]
        %v3895 = vld [vmem:[%s3827 + $0x218] sm:$0xff]
        %v3896 = vld [vmem:[%s3827 + $0x220] sm:$0xff]
        %v3897 = vld [vmem:[%s3827 + $0x228] sm:$0xff]
        %v3898 = vld [vmem:[%s3827 + $0x230] sm:$0xff]
        %v3899 = vld [vmem:[%s3827 + $0x238] sm:$0xff]
        %v3900 = vld [vmem:[%s3827 + $0x240] sm:$0xff]
        %v3901 = vld [vmem:[%s3827 + $0x248] sm:$0xff]
        %v3902 = vld [vmem:[%s3827 + $0x250] sm:$0xff]
        %v3903 = vld [vmem:[%s3827 + $0x258] sm:$0xff]
        %v3904 = vld [vmem:[%s3827 + $0x260] sm:$0xff]
        %v3905 = vld [vmem:[%s3827 + $0x268] sm:$0xff]
        %v3906 = vld [vmem:[%s3827 + $0x270] sm:$0xff]
        %v3907 = vld [vmem:[%s3827 + $0x278] sm:$0xff]
        %v3908 = vld [vmem:[%s3827 + $0x280] sm:$0xff]
        %v3909 = vld [vmem:[%s3827 + $0x288] sm:$0xff]
        %v3910 = vld [vmem:[%s3827 + $0x290] sm:$0xff]
        %v3911 = vld [vmem:[%s3827 + $0x298] sm:$0xff]
        %v3912 = vld [vmem:[%s3827 + $0x2a0] sm:$0xff]
        %v3913 = vld [vmem:[%s3827 + $0x2a8] sm:$0xff]
        %v3914 = vld [vmem:[%s3827 + $0x2b0] sm:$0xff]
        %v3915 = vld [vmem:[%s3827 + $0x2b8] sm:$0xff]
        %v3916 = vld [vmem:[%s3827 + $0x2c0] sm:$0xff]
        %v3917 = vld [vmem:[%s3827 + $0x2c8] sm:$0xff]
        %v3918 = vld [vmem:[%s3827 + $0x2d0] sm:$0xff]
        %v3919 = vld [vmem:[%s3827 + $0x2d8] sm:$0xff]
        %v3920 = vld [vmem:[%s3827 + $0x2e0] sm:$0xff]
        %v3921 = vld [vmem:[%s3827 + $0x2e8] sm:$0xff]
        %v3922 = vld [vmem:[%s3827 + $0x2f0] sm:$0xff]
        %v3923 = vld [vmem:[%s3827 + $0x2f8] sm:$0xff]
        %s3924 = scalar_lea.vmem [#allocation10], 6
        %v3925 = vld [vmem:[%s3924] sm:$0x3f]
        %v3927 = vlaneseq
        %v3928 = vshrl.u32 %v3927, 7
        %v3929 = vsub.s32 0, %v3928
        %v3930 = vrot.slane %v3925, %v3929
        %v3931 = vlaneseq
        %v3932 = vshrl.u32 %v3931, 7
        %v3933 = vsub.s32 1, %v3932
        %v3934 = vrot.slane %v3925, %v3933
        %v3935 = vlaneseq
        %v3936 = vshrl.u32 %v3935, 7
        %v3937 = vsub.s32 2, %v3936
        %v3938 = vrot.slane %v3925, %v3937
        %v3939 = vlaneseq
        %v3940 = vshrl.u32 %v3939, 7
        %v3941 = vsub.s32 3, %v3940
        %v3942 = vrot.slane %v3925, %v3941
        %v3943 = vlaneseq
        %v3944 = vshrl.u32 %v3943, 7
        %v3945 = vsub.s32 4, %v3944
        %v3946 = vrot.slane %v3925, %v3945
        %v3947 = vlaneseq
        %v3948 = vshrl.u32 %v3947, 7
        %v3949 = vsub.s32 5, %v3948
        %v3950 = vrot.slane %v3925, %v3949
        %v4053 = vunpack.c.l.b16 %v3828
        %v4054 = vunpack.c.h.b16 %v3828
        %v4055 = vunpack.c.l.b16 %v3829
        %v4056 = vunpack.c.h.b16 %v3829
        %v4057 = vunpack.c.l.b16 %v3830
        %v4058 = vunpack.c.h.b16 %v3830
        %v4059 = vunpack.c.l.b16 %v3831
        %v4060 = vunpack.c.h.b16 %v3831
        %v4061 = vunpack.c.l.b16 %v3832
        %v4062 = vunpack.c.h.b16 %v3832
        %v4063 = vunpack.c.l.b16 %v3833
        %v4064 = vunpack.c.h.b16 %v3833
        %v4065 = vunpack.c.l.b16 %v3834
        %v4066 = vunpack.c.h.b16 %v3834
        %v4067 = vunpack.c.l.b16 %v3835
        %v4068 = vunpack.c.h.b16 %v3835
        %v4069 = vunpack.c.l.b16 %v3836
        %v4070 = vunpack.c.h.b16 %v3836
        %v4071 = vunpack.c.l.b16 %v3837
        %v4072 = vunpack.c.h.b16 %v3837
        %v4073 = vunpack.c.l.b16 %v3838
        %v4074 = vunpack.c.h.b16 %v3838
        %v4075 = vunpack.c.l.b16 %v3839
        %v4076 = vunpack.c.h.b16 %v3839
        %v4077 = vunpack.c.l.b16 %v3840
        %v4078 = vunpack.c.h.b16 %v3840
        %v4079 = vunpack.c.l.b16 %v3841
        %v4080 = vunpack.c.h.b16 %v3841
        %v4081 = vunpack.c.l.b16 %v3842
        %v4082 = vunpack.c.h.b16 %v3842
        %v4083 = vunpack.c.l.b16 %v3843
        %v4084 = vunpack.c.h.b16 %v3843
        %v4085 = vunpack.c.l.b16 %v3844
        %v4086 = vunpack.c.h.b16 %v3844
        %v4087 = vunpack.c.l.b16 %v3845
        %v4088 = vunpack.c.h.b16 %v3845
        %v4089 = vunpack.c.l.b16 %v3846
        %v4090 = vunpack.c.h.b16 %v3846
        %v4091 = vunpack.c.l.b16 %v3847
        %v4092 = vunpack.c.h.b16 %v3847
        %v4093 = vunpack.c.l.b16 %v3848
        %v4094 = vunpack.c.h.b16 %v3848
        %v4095 = vunpack.c.l.b16 %v3849
        %v4096 = vunpack.c.h.b16 %v3849
        %v4097 = vunpack.c.l.b16 %v3850
        %v4098 = vunpack.c.h.b16 %v3850
        %v4099 = vunpack.c.l.b16 %v3851
        %v4100 = vunpack.c.h.b16 %v3851
        %v4101 = vunpack.c.l.b16 %v3852
        %v4102 = vunpack.c.h.b16 %v3852
        %v4103 = vunpack.c.l.b16 %v3853
        %v4104 = vunpack.c.h.b16 %v3853
        %v4105 = vunpack.c.l.b16 %v3854
        %v4106 = vunpack.c.h.b16 %v3854
        %v4107 = vunpack.c.l.b16 %v3855
        %v4108 = vunpack.c.h.b16 %v3855
        %v4109 = vunpack.c.l.b16 %v3856
        %v4110 = vunpack.c.h.b16 %v3856
        %v4111 = vunpack.c.l.b16 %v3857
        %v4112 = vunpack.c.h.b16 %v3857
        %v4113 = vunpack.c.l.b16 %v3858
        %v4114 = vunpack.c.h.b16 %v3858
        %v4115 = vunpack.c.l.b16 %v3859
        %v4116 = vunpack.c.h.b16 %v3859
        %v4117 = vunpack.c.l.b16 %v3860
        %v4118 = vunpack.c.h.b16 %v3860
        %v4119 = vunpack.c.l.b16 %v3861
        %v4120 = vunpack.c.h.b16 %v3861
        %v4121 = vunpack.c.l.b16 %v3862
        %v4122 = vunpack.c.h.b16 %v3862
        %v4123 = vunpack.c.l.b16 %v3863
        %v4124 = vunpack.c.h.b16 %v3863
        %v4125 = vunpack.c.l.b16 %v3864
        %v4126 = vunpack.c.h.b16 %v3864
        %v4127 = vunpack.c.l.b16 %v3865
        %v4128 = vunpack.c.h.b16 %v3865
        %v4129 = vunpack.c.l.b16 %v3866
        %v4130 = vunpack.c.h.b16 %v3866
        %v4131 = vunpack.c.l.b16 %v3867
        %v4132 = vunpack.c.h.b16 %v3867
        %v4133 = vunpack.c.l.b16 %v3868
        %v4134 = vunpack.c.h.b16 %v3868
        %v4135 = vunpack.c.l.b16 %v3869
        %v4136 = vunpack.c.h.b16 %v3869
        %v4137 = vunpack.c.l.b16 %v3870
        %v4138 = vunpack.c.h.b16 %v3870
        %v4139 = vunpack.c.l.b16 %v3871
        %v4140 = vunpack.c.h.b16 %v3871
        %v4141 = vunpack.c.l.b16 %v3872
        %v4142 = vunpack.c.h.b16 %v3872
        %v4143 = vunpack.c.l.b16 %v3873
        %v4144 = vunpack.c.h.b16 %v3873
        %v4145 = vunpack.c.l.b16 %v3874
        %v4146 = vunpack.c.h.b16 %v3874
        %v4147 = vunpack.c.l.b16 %v3875
        %v4148 = vunpack.c.h.b16 %v3875
        %v4149 = vunpack.c.l.b16 %v3876
        %v4150 = vunpack.c.h.b16 %v3876
        %v4151 = vunpack.c.l.b16 %v3877
        %v4152 = vunpack.c.h.b16 %v3877
        %v4153 = vunpack.c.l.b16 %v3878
        %v4154 = vunpack.c.h.b16 %v3878
        %v4155 = vunpack.c.l.b16 %v3879
        %v4156 = vunpack.c.h.b16 %v3879
        %v4157 = vunpack.c.l.b16 %v3880
        %v4158 = vunpack.c.h.b16 %v3880
        %v4159 = vunpack.c.l.b16 %v3881
        %v4160 = vunpack.c.h.b16 %v3881
        %v4161 = vunpack.c.l.b16 %v3882
        %v4162 = vunpack.c.h.b16 %v3882
        %v4163 = vunpack.c.l.b16 %v3883
        %v4164 = vunpack.c.h.b16 %v3883
        %v4165 = vunpack.c.l.b16 %v3884
        %v4166 = vunpack.c.h.b16 %v3884
        %v4167 = vunpack.c.l.b16 %v3885
        %v4168 = vunpack.c.h.b16 %v3885
        %v4169 = vunpack.c.l.b16 %v3886
        %v4170 = vunpack.c.h.b16 %v3886
        %v4171 = vunpack.c.l.b16 %v3887
        %v4172 = vunpack.c.h.b16 %v3887
        %v4173 = vunpack.c.l.b16 %v3888
        %v4174 = vunpack.c.h.b16 %v3888
        %v4175 = vunpack.c.l.b16 %v3889
        %v4176 = vunpack.c.h.b16 %v3889
        %v4177 = vunpack.c.l.b16 %v3890
        %v4178 = vunpack.c.h.b16 %v3890
        %v4179 = vunpack.c.l.b16 %v3891
        %v4180 = vunpack.c.h.b16 %v3891
        %v4181 = vunpack.c.l.b16 %v3892
        %v4182 = vunpack.c.h.b16 %v3892
        %v4183 = vunpack.c.l.b16 %v3893
        %v4184 = vunpack.c.h.b16 %v3893
        %v4185 = vunpack.c.l.b16 %v3894
        %v4186 = vunpack.c.h.b16 %v3894
        %v4187 = vunpack.c.l.b16 %v3895
        %v4188 = vunpack.c.h.b16 %v3895
        %v4189 = vunpack.c.l.b16 %v3896
        %v4190 = vunpack.c.h.b16 %v3896
        %v4191 = vunpack.c.l.b16 %v3897
        %v4192 = vunpack.c.h.b16 %v3897
        %v4193 = vunpack.c.l.b16 %v3898
        %v4194 = vunpack.c.h.b16 %v3898
        %v4195 = vunpack.c.l.b16 %v3899
        %v4196 = vunpack.c.h.b16 %v3899
        %v4197 = vunpack.c.l.b16 %v3900
        %v4198 = vunpack.c.h.b16 %v3900
        %v4199 = vunpack.c.l.b16 %v3901
        %v4200 = vunpack.c.h.b16 %v3901
        %v4201 = vunpack.c.l.b16 %v3902
        %v4202 = vunpack.c.h.b16 %v3902
        %v4203 = vunpack.c.l.b16 %v3903
        %v4204 = vunpack.c.h.b16 %v3903
        %v4205 = vunpack.c.l.b16 %v3904
        %v4206 = vunpack.c.h.b16 %v3904
        %v4207 = vunpack.c.l.b16 %v3905
        %v4208 = vunpack.c.h.b16 %v3905
        %v4209 = vunpack.c.l.b16 %v3906
        %v4210 = vunpack.c.h.b16 %v3906
        %v4211 = vunpack.c.l.b16 %v3907
        %v4212 = vunpack.c.h.b16 %v3907
        %v4213 = vunpack.c.l.b16 %v3908
        %v4214 = vunpack.c.h.b16 %v3908
        %v4215 = vunpack.c.l.b16 %v3909
        %v4216 = vunpack.c.h.b16 %v3909
        %v4217 = vunpack.c.l.b16 %v3910
        %v4218 = vunpack.c.h.b16 %v3910
        %v4219 = vunpack.c.l.b16 %v3911
        %v4220 = vunpack.c.h.b16 %v3911
        %v4221 = vunpack.c.l.b16 %v3912
        %v4222 = vunpack.c.h.b16 %v3912
        %v4223 = vunpack.c.l.b16 %v3913
        %v4224 = vunpack.c.h.b16 %v3913
        %v4225 = vunpack.c.l.b16 %v3914
        %v4226 = vunpack.c.h.b16 %v3914
        %v4227 = vunpack.c.l.b16 %v3915
        %v4228 = vunpack.c.h.b16 %v3915
        %v4229 = vunpack.c.l.b16 %v3916
        %v4230 = vunpack.c.h.b16 %v3916
        %v4231 = vunpack.c.l.b16 %v3917
        %v4232 = vunpack.c.h.b16 %v3917
        %v4233 = vunpack.c.l.b16 %v3918
        %v4234 = vunpack.c.h.b16 %v3918
        %v4235 = vunpack.c.l.b16 %v3919
        %v4236 = vunpack.c.h.b16 %v3919
        %v4237 = vunpack.c.l.b16 %v3920
        %v4238 = vunpack.c.h.b16 %v3920
        %v4239 = vunpack.c.l.b16 %v3921
        %v4240 = vunpack.c.h.b16 %v3921
        %v4241 = vunpack.c.l.b16 %v3922
        %v4242 = vunpack.c.h.b16 %v3922
        %v4243 = vunpack.c.l.b16 %v3923
        %v4244 = vunpack.c.h.b16 %v3923
        %v4245 = vpack.c.b16 %v4059, %v4053
        %v4246 = vpack.c.b16 %v4060, %v4054
        %v4247 = vpack.c.b16 %v4061, %v4055
        %v4248 = vpack.c.b16 %v4062, %v4056
        %v4249 = vpack.c.b16 %v4063, %v4057
        %v4250 = vpack.c.b16 %v4064, %v4058
        %v4251 = vpack.c.b16 %v4071, %v4065
        %v4252 = vpack.c.b16 %v4072, %v4066
        %v4253 = vpack.c.b16 %v4073, %v4067
        %v4254 = vpack.c.b16 %v4074, %v4068
        %v4255 = vpack.c.b16 %v4075, %v4069
        %v4256 = vpack.c.b16 %v4076, %v4070
        %v4257 = vpack.c.b16 %v4083, %v4077
        %v4258 = vpack.c.b16 %v4084, %v4078
        %v4259 = vpack.c.b16 %v4085, %v4079
        %v4260 = vpack.c.b16 %v4086, %v4080
        %v4261 = vpack.c.b16 %v4087, %v4081
        %v4262 = vpack.c.b16 %v4088, %v4082
        %v4263 = vpack.c.b16 %v4095, %v4089
        %v4264 = vpack.c.b16 %v4096, %v4090
        %v4265 = vpack.c.b16 %v4097, %v4091
        %v4266 = vpack.c.b16 %v4098, %v4092
        %v4267 = vpack.c.b16 %v4099, %v4093
        %v4268 = vpack.c.b16 %v4100, %v4094
        %v4269 = vpack.c.b16 %v4107, %v4101
        %v4270 = vpack.c.b16 %v4108, %v4102
        %v4271 = vpack.c.b16 %v4109, %v4103
        %v4272 = vpack.c.b16 %v4110, %v4104
        %v4273 = vpack.c.b16 %v4111, %v4105
        %v4274 = vpack.c.b16 %v4112, %v4106
        %v4275 = vpack.c.b16 %v4119, %v4113
        %v4276 = vpack.c.b16 %v4120, %v4114
        %v4277 = vpack.c.b16 %v4121, %v4115
        %v4278 = vpack.c.b16 %v4122, %v4116
        %v4279 = vpack.c.b16 %v4123, %v4117
        %v4280 = vpack.c.b16 %v4124, %v4118
        %v4281 = vpack.c.b16 %v4131, %v4125
        %v4282 = vpack.c.b16 %v4132, %v4126
        %v4283 = vpack.c.b16 %v4133, %v4127
        %v4284 = vpack.c.b16 %v4134, %v4128
        %v4285 = vpack.c.b16 %v4135, %v4129
        %v4286 = vpack.c.b16 %v4136, %v4130
        %v4287 = vpack.c.b16 %v4143, %v4137
        %v4288 = vpack.c.b16 %v4144, %v4138
        %v4289 = vpack.c.b16 %v4145, %v4139
        %v4290 = vpack.c.b16 %v4146, %v4140
        %v4291 = vpack.c.b16 %v4147, %v4141
        %v4292 = vpack.c.b16 %v4148, %v4142
        %v4293 = vpack.c.b16 %v4155, %v4149
        %v4294 = vpack.c.b16 %v4156, %v4150
        %v4295 = vpack.c.b16 %v4157, %v4151
        %v4296 = vpack.c.b16 %v4158, %v4152
        %v4297 = vpack.c.b16 %v4159, %v4153
        %v4298 = vpack.c.b16 %v4160, %v4154
        %v4299 = vpack.c.b16 %v4167, %v4161
        %v4300 = vpack.c.b16 %v4168, %v4162
        %v4301 = vpack.c.b16 %v4169, %v4163
        %v4302 = vpack.c.b16 %v4170, %v4164
        %v4303 = vpack.c.b16 %v4171, %v4165
        %v4304 = vpack.c.b16 %v4172, %v4166
        %v4305 = vpack.c.b16 %v4179, %v4173
        %v4306 = vpack.c.b16 %v4180, %v4174
        %v4307 = vpack.c.b16 %v4181, %v4175
        %v4308 = vpack.c.b16 %v4182, %v4176
        %v4309 = vpack.c.b16 %v4183, %v4177
        %v4310 = vpack.c.b16 %v4184, %v4178
        %v4311 = vpack.c.b16 %v4191, %v4185
        %v4312 = vpack.c.b16 %v4192, %v4186
        %v4313 = vpack.c.b16 %v4193, %v4187
        %v4314 = vpack.c.b16 %v4194, %v4188
        %v4315 = vpack.c.b16 %v4195, %v4189
        %v4316 = vpack.c.b16 %v4196, %v4190
        %v4317 = vpack.c.b16 %v4203, %v4197
        %v4318 = vpack.c.b16 %v4204, %v4198
        %v4319 = vpack.c.b16 %v4205, %v4199
        %v4320 = vpack.c.b16 %v4206, %v4200
        %v4321 = vpack.c.b16 %v4207, %v4201
        %v4322 = vpack.c.b16 %v4208, %v4202
        %v4323 = vpack.c.b16 %v4215, %v4209
        %v4324 = vpack.c.b16 %v4216, %v4210
        %v4325 = vpack.c.b16 %v4217, %v4211
        %v4326 = vpack.c.b16 %v4218, %v4212
        %v4327 = vpack.c.b16 %v4219, %v4213
        %v4328 = vpack.c.b16 %v4220, %v4214
        %v4329 = vpack.c.b16 %v4227, %v4221
        %v4330 = vpack.c.b16 %v4228, %v4222
        %v4331 = vpack.c.b16 %v4229, %v4223
        %v4332 = vpack.c.b16 %v4230, %v4224
        %v4333 = vpack.c.b16 %v4231, %v4225
        %v4334 = vpack.c.b16 %v4232, %v4226
        %v4335 = vpack.c.b16 %v4239, %v4233
        %v4336 = vpack.c.b16 %v4240, %v4234
        %v4337 = vpack.c.b16 %v4241, %v4235
        %v4338 = vpack.c.b16 %v4242, %v4236
        %v4339 = vpack.c.b16 %v4243, %v4237
        %v4340 = vpack.c.b16 %v4244, %v4238
        %4437 = vmatprep.subr.bf16.mxu0 %v4288
        %4438 = vmatpush1.bf16.msra.mxu0 %v4287
        %4439 = vmatprep.subr.bf16.mxu0 %v4282
        %4440 = vmatpush1.bf16.msra.mxu0 %v4281
        %4441 = vmatprep.subr.bf16.mxu0 %v4276
        %4442 = vmatpush1.bf16.msra.mxu0 %v4275
        %4443 = vmatprep.subr.bf16.mxu0 %v4270
        %4444 = vmatpush1.bf16.msra.mxu0 %v4269
        %4445 = vmatprep.subr.bf16.mxu0 %v4264
        %4446 = vmatpush1.bf16.msra.mxu0 %v4263
        %4447 = vmatprep.subr.bf16.mxu0 %v4258
        %4448 = vmatpush1.bf16.msra.mxu0 %v4257
        %4449 = vmatprep.subr.bf16.mxu0 %v4252
        %4450 = vmatpush1.bf16.msra.mxu0 %v4251
        %4451 = vmatprep.subr.bf16.mxu0 %v4246
        %4452 = vmatpush1.bf16.msra.mxu0 %v4245
        %4453 = vmatprep.subr.bf16.mxu0 %v4336
        %4454 = vmatpush2.bf16.msra.mxu0 %v4335
        %4455 = vmatprep.subr.bf16.mxu0 %v4330
        %4456 = vmatpush2.bf16.msra.mxu0 %v4329
        %4457 = vmatprep.subr.bf16.mxu0 %v4324
        %4458 = vmatpush2.bf16.msra.mxu0 %v4323
        %4459 = vmatprep.subr.bf16.mxu0 %v4318
        %4460 = vmatpush2.bf16.msra.mxu0 %v4317
        %4461 = vmatprep.subr.bf16.mxu0 %v4312
        %4462 = vmatpush2.bf16.msra.mxu0 %v4311
        %4463 = vmatprep.subr.bf16.mxu0 %v4306
        %4464 = vmatpush2.bf16.msra.mxu0 %v4305
        %4465 = vmatprep.subr.bf16.mxu0 %v4300
        %4466 = vmatpush2.bf16.msra.mxu0 %v4299
        %4467 = vmatprep.subr.bf16.mxu0 %v4294
        %4468 = vmatpush2.bf16.msra.mxu0 %v4293
        %4469 = vmatprep.mubr.bf16.mxu0 %v3824
        %4470 = vmatmul.mubr.bf16.gmra.mxu0 %v3823
        %v4471 = vpop.f32.mrf.mxu0
        %v4472 = vadd.f32 %v3930, %v4471
        %v4473 = vpop.f32.mrf.mxu0
        %v4474 = vadd.f32 %v3934, %v4473
        %v4475 = vpop.f32.mrf.mxu0
        %v4476 = vadd.f32 %v3930, %v4475
        %v4477 = vpop.f32.mrf.mxu0
        %v4478 = vadd.f32 %v3934, %v4477
        %4479 = vmatprep.mubr.bf16.mxu0 %v3826
        %4480 = vmatmul.mubr.bf16.gmra.mxu0 %v3825
        %v4481 = vpop.f32.mrf.mxu0
        %v4482 = vadd.f32 %v3930, %v4481
        %v4483 = vpop.f32.mrf.mxu0
        %v4484 = vadd.f32 %v3934, %v4483
        %v4485 = vpop.f32.mrf.mxu0
        %v4486 = vpop.f32.mrf.mxu0
        %4487 = vdwg.mxu0
        %4488 = vmatprep.subr.bf16.mxu0 %v4290
        %4489 = vmatpush1.bf16.msra.mxu0 %v4289
        %4490 = vmatprep.subr.bf16.mxu0 %v4284
        %4491 = vmatpush1.bf16.msra.mxu0 %v4283
        %4492 = vmatprep.subr.bf16.mxu0 %v4278
        %4493 = vmatpush1.bf16.msra.mxu0 %v4277
        %4494 = vmatprep.subr.bf16.mxu0 %v4272
        %4495 = vmatpush1.bf16.msra.mxu0 %v4271
        %4496 = vmatprep.subr.bf16.mxu0 %v4266
        %4497 = vmatpush1.bf16.msra.mxu0 %v4265
        %4498 = vmatprep.subr.bf16.mxu0 %v4260
        %4499 = vmatpush1.bf16.msra.mxu0 %v4259
        %4500 = vmatprep.subr.bf16.mxu0 %v4254
        %4501 = vmatpush1.bf16.msra.mxu0 %v4253
        %4502 = vmatprep.subr.bf16.mxu0 %v4248
        %4503 = vmatpush1.bf16.msra.mxu0 %v4247
        %4504 = vmatprep.subr.bf16.mxu0 %v4338
        %4505 = vmatpush2.bf16.msra.mxu0 %v4337
        %4506 = vmatprep.subr.bf16.mxu0 %v4332
        %4507 = vmatpush2.bf16.msra.mxu0 %v4331
        %4508 = vmatprep.subr.bf16.mxu0 %v4326
        %4509 = vmatpush2.bf16.msra.mxu0 %v4325
        %4510 = vmatprep.subr.bf16.mxu0 %v4320
        %4511 = vmatpush2.bf16.msra.mxu0 %v4319
        %4512 = vmatprep.subr.bf16.mxu0 %v4314
        %4513 = vmatpush2.bf16.msra.mxu0 %v4313
        %4514 = vmatprep.subr.bf16.mxu0 %v4308
        %4515 = vmatpush2.bf16.msra.mxu0 %v4307
        %4516 = vmatprep.subr.bf16.mxu0 %v4302
        %4517 = vmatpush2.bf16.msra.mxu0 %v4301
        %4518 = vmatprep.subr.bf16.mxu0 %v4296
        %4519 = vmatpush2.bf16.msra.mxu0 %v4295
        %4520 = vmatprep.mubr.bf16.mxu0 %v3824
        %4521 = vmatmul.mubr.bf16.gmra.mxu0 %v3823
        %v4522 = vpop.f32.mrf.mxu0
        %v4523 = vadd.f32 %v3938, %v4522
        %v4524 = vpop.f32.mrf.mxu0
        %v4525 = vadd.f32 %v3942, %v4524
        %v4526 = vpop.f32.mrf.mxu0
        %v4527 = vadd.f32 %v3938, %v4526
        %v4528 = vpop.f32.mrf.mxu0
        %v4529 = vadd.f32 %v3942, %v4528
        %4530 = vmatprep.mubr.bf16.mxu0 %v3826
        %4531 = vmatmul.mubr.bf16.gmra.mxu0 %v3825
        %v4532 = vpop.f32.mrf.mxu0
        %v4533 = vadd.f32 %v3938, %v4532
        %v4534 = vpop.f32.mrf.mxu0
        %v4535 = vadd.f32 %v3942, %v4534
        %v4536 = vpop.f32.mrf.mxu0
        %v4537 = vpop.f32.mrf.mxu0
        %4538 = vdwg.mxu0
        %4539 = vmatprep.subr.bf16.mxu0 %v4292
        %4540 = vmatpush1.bf16.msra.mxu0 %v4291
        %4541 = vmatprep.subr.bf16.mxu0 %v4286
        %4542 = vmatpush1.bf16.msra.mxu0 %v4285
        %4543 = vmatprep.subr.bf16.mxu0 %v4280
        %4544 = vmatpush1.bf16.msra.mxu0 %v4279
        %4545 = vmatprep.subr.bf16.mxu0 %v4274
        %4546 = vmatpush1.bf16.msra.mxu0 %v4273
        %4547 = vmatprep.subr.bf16.mxu0 %v4268
        %4548 = vmatpush1.bf16.msra.mxu0 %v4267
        %4549 = vmatprep.subr.bf16.mxu0 %v4262
        %4550 = vmatpush1.bf16.msra.mxu0 %v4261
        %4551 = vmatprep.subr.bf16.mxu0 %v4256
        %4552 = vmatpush1.bf16.msra.mxu0 %v4255
        %4553 = vmatprep.subr.bf16.mxu0 %v4250
        %4554 = vmatpush1.bf16.msra.mxu0 %v4249
        %4555 = vmatprep.subr.bf16.mxu0 %v4340
        %4556 = vmatpush2.bf16.msra.mxu0 %v4339
        %4557 = vmatprep.subr.bf16.mxu0 %v4334
        %4558 = vmatpush2.bf16.msra.mxu0 %v4333
        %4559 = vmatprep.subr.bf16.mxu0 %v4328
        %4560 = vmatpush2.bf16.msra.mxu0 %v4327
        %4561 = vmatprep.subr.bf16.mxu0 %v4322
        %4562 = vmatpush2.bf16.msra.mxu0 %v4321
        %4563 = vmatprep.subr.bf16.mxu0 %v4316
        %4564 = vmatpush2.bf16.msra.mxu0 %v4315
        %4565 = vmatprep.subr.bf16.mxu0 %v4310
        %4566 = vmatpush2.bf16.msra.mxu0 %v4309
        %4567 = vmatprep.subr.bf16.mxu0 %v4304
        %4568 = vmatpush2.bf16.msra.mxu0 %v4303
        %4569 = vmatprep.subr.bf16.mxu0 %v4298
        %4570 = vmatpush2.bf16.msra.mxu0 %v4297
        %4571 = vmatprep.mubr.bf16.mxu0 %v3824
        %4572 = vmatmul.mubr.bf16.gmra.mxu0 %v3823
        %v4573 = vpop.f32.mrf.mxu0
        %v4574 = vadd.f32 %v3946, %v4573
        %v4575 = vpop.f32.mrf.mxu0
        %v4576 = vadd.f32 %v3950, %v4575
        %v4577 = vpop.f32.mrf.mxu0
        %v4578 = vadd.f32 %v3946, %v4577
        %v4579 = vpop.f32.mrf.mxu0
        %v4580 = vadd.f32 %v3950, %v4579
        %4581 = vmatprep.mubr.bf16.mxu0 %v3826
        %4582 = vmatmul.mubr.bf16.gmra.mxu0 %v3825
        %v4583 = vpop.f32.mrf.mxu0
        %v4584 = vadd.f32 %v3946, %v4583
        %v4585 = vpop.f32.mrf.mxu0
        %v4586 = vadd.f32 %v3950, %v4585
        %v4587 = vpop.f32.mrf.mxu0
        %v4588 = vpop.f32.mrf.mxu0
        %4589 = vdwg.mxu0
        %s4590 = scalar_lea.vmem [#allocation11], 256
        %v4591 = vld [vmem:[%s4590] sm:$0xff]
        %v4592 = vld [vmem:[%s4590 + $0x8] sm:$0xff]
        %v4593 = vld [vmem:[%s4590 + $0x10] sm:$0xff]
        %v4594 = vld [vmem:[%s4590 + $0x18] sm:$0xff]
        %v4595 = vld [vmem:[%s4590 + $0x20] sm:$0xff]
        %v4596 = vld [vmem:[%s4590 + $0x28] sm:$0xff]
        %v4597 = vld [vmem:[%s4590 + $0x30] sm:$0xff]
        %v4598 = vld [vmem:[%s4590 + $0x38] sm:$0xff]
        %v4599 = vld [vmem:[%s4590 + $0x40] sm:$0xff]
        %v4600 = vld [vmem:[%s4590 + $0x48] sm:$0xff]
        %v4601 = vld [vmem:[%s4590 + $0x50] sm:$0xff]
        %v4602 = vld [vmem:[%s4590 + $0x58] sm:$0xff]
        %v4603 = vld [vmem:[%s4590 + $0x60] sm:$0xff]
        %v4604 = vld [vmem:[%s4590 + $0x68] sm:$0xff]
        %v4605 = vld [vmem:[%s4590 + $0x70] sm:$0xff]
        %v4606 = vld [vmem:[%s4590 + $0x78] sm:$0xff]
        %v4607 = vld [vmem:[%s4590 + $0x80] sm:$0xff]
        %v4608 = vld [vmem:[%s4590 + $0x88] sm:$0xff]
        %v4609 = vld [vmem:[%s4590 + $0x90] sm:$0xff]
        %v4610 = vld [vmem:[%s4590 + $0x98] sm:$0xff]
        %v4611 = vld [vmem:[%s4590 + $0xa0] sm:$0xff]
        %v4612 = vld [vmem:[%s4590 + $0xa8] sm:$0xff]
        %v4613 = vld [vmem:[%s4590 + $0xb0] sm:$0xff]
        %v4614 = vld [vmem:[%s4590 + $0xb8] sm:$0xff]
        %v4615 = vld [vmem:[%s4590 + $0xc0] sm:$0xff]
        %v4616 = vld [vmem:[%s4590 + $0xc8] sm:$0xff]
        %v4617 = vld [vmem:[%s4590 + $0xd0] sm:$0xff]
        %v4618 = vld [vmem:[%s4590 + $0xd8] sm:$0xff]
        %v4619 = vld [vmem:[%s4590 + $0xe0] sm:$0xff]
        %v4620 = vld [vmem:[%s4590 + $0xe8] sm:$0xff]
        %v4621 = vld [vmem:[%s4590 + $0xf0] sm:$0xff]
        %v4622 = vld [vmem:[%s4590 + $0xf8] sm:$0xff]
        %v4623 = vpack.c.bf16 %v4472, %v4472
        %v4624 = vpack.c.bf16 %v4476, %v4476
        %v4625 = vpack.c.bf16 %v4482, %v4482
        %v4626 = vpack.c.bf16 %v4523, %v4523
        %v4627 = vpack.c.bf16 %v4527, %v4527
        %v4628 = vpack.c.bf16 %v4533, %v4533
        %4629 = vmatprep.subr.bf16.mxu0 0
        %4630 = vmatpush1.bf16.xpose.msra.mxu0 0
        %4631 = vmatprep.subr.bf16.mxu0 0
        %4632 = vmatpush1.bf16.xpose.msra.mxu0 0
        %4633 = vmatprep.subr.bf16.mxu0 0
        %4634 = vmatpush1.bf16.xpose.msra.mxu0 0
        %4635 = vmatprep.subr.bf16.mxu0 0
        %4636 = vmatpush1.bf16.xpose.msra.mxu0 0
        %4637 = vmatprep.subr.bf16.mxu0 0
        %4638 = vmatpush1.bf16.xpose.msra.mxu0 0
        %4639 = vmatprep.subr.bf16.mxu0 0
        %4640 = vmatpush1.bf16.xpose.msra.mxu0 0
        %4641 = vmatprep.subr.bf16.mxu0 0
        %4642 = vmatpush1.bf16.xpose.msra.mxu0 0
        %4643 = vmatprep.subr.bf16.mxu0 0
        %4644 = vmatpush1.bf16.xpose.msra.mxu0 %v4626
        %4645 = vmatprep.subr.bf16.mxu0 0
        %4646 = vmatpush2.bf16.xpose.msra.mxu0 0
        %4647 = vmatprep.subr.bf16.mxu0 0
        %4648 = vmatpush2.bf16.xpose.msra.mxu0 0
        %4649 = vmatprep.subr.bf16.mxu0 0
        %4650 = vmatpush2.bf16.xpose.msra.mxu0 0
        %4651 = vmatprep.subr.bf16.mxu0 0
        %4652 = vmatpush2.bf16.xpose.msra.mxu0 0
        %4653 = vmatprep.subr.bf16.mxu0 0
        %4654 = vmatpush2.bf16.xpose.msra.mxu0 0
        %4655 = vmatprep.subr.bf16.mxu0 0
        %4656 = vmatpush2.bf16.xpose.msra.mxu0 0
        %4657 = vmatprep.subr.bf16.mxu0 0
        %4658 = vmatpush2.bf16.xpose.msra.mxu0 0
        %4659 = vmatprep.subr.bf16.mxu0 0
        %4660 = vmatpush2.bf16.xpose.msra.mxu0 0
        %4661 = vmatprep.mubr.bf16.mxu0 0
        %4662 = vmatmul.mubr.bf16.gmra.mxu0 %v4623
        %v4663 = vpop.f32.mrf.mxu0
        %v4664 = vadd.f32 0.0, %v4663
        %v4665 = vpop.f32.mrf.mxu0
        %v4666 = vpop.f32.mrf.mxu0
        %v4667 = vpop.f32.mrf.mxu0
        %4668 = vdwg.mxu0
        %4669 = vmatprep.subr.bf16.mxu0 0
        %4670 = vmatpush1.bf16.xpose.msra.mxu0 0
        %4671 = vmatprep.subr.bf16.mxu0 0
        %4672 = vmatpush1.bf16.xpose.msra.mxu0 0
        %4673 = vmatprep.subr.bf16.mxu0 0
        %4674 = vmatpush1.bf16.xpose.msra.mxu0 0
        %4675 = vmatprep.subr.bf16.mxu0 0
        %4676 = vmatpush1.bf16.xpose.msra.mxu0 0
        %4677 = vmatprep.subr.bf16.mxu0 0
        %4678 = vmatpush1.bf16.xpose.msra.mxu0 0
        %4679 = vmatprep.subr.bf16.mxu0 0
        %4680 = vmatpush1.bf16.xpose.msra.mxu0 0
        %4681 = vmatprep.subr.bf16.mxu0 0
        %4682 = vmatpush1.bf16.xpose.msra.mxu0 0
        %4683 = vmatprep.subr.bf16.mxu0 0
        %4684 = vmatpush1.bf16.xpose.msra.mxu0 %v4627
        %4685 = vmatprep.subr.bf16.mxu0 0
        %4686 = vmatpush2.bf16.xpose.msra.mxu0 0
        %4687 = vmatprep.subr.bf16.mxu0 0
        %4688 = vmatpush2.bf16.xpose.msra.mxu0 0
        %4689 = vmatprep.subr.bf16.mxu0 0
        %4690 = vmatpush2.bf16.xpose.msra.mxu0 0
        %4691 = vmatprep.subr.bf16.mxu0 0
        %4692 = vmatpush2.bf16.xpose.msra.mxu0 0
        %4693 = vmatprep.subr.bf16.mxu0 0
        %4694 = vmatpush2.bf16.xpose.msra.mxu0 0
        %4695 = vmatprep.subr.bf16.mxu0 0
        %4696 = vmatpush2.bf16.xpose.msra.mxu0 0
        %4697 = vmatprep.subr.bf16.mxu0 0
        %4698 = vmatpush2.bf16.xpose.msra.mxu0 0
        %4699 = vmatprep.subr.bf16.mxu0 0
        %4700 = vmatpush2.bf16.xpose.msra.mxu0 0
        %4701 = vmatprep.mubr.bf16.mxu0 0
        %4702 = vmatmul.mubr.bf16.gmra.mxu0 %v4624
        %v4703 = vpop.f32.mrf.mxu0
        %v4704 = vadd.f32 0.0, %v4703
        %v4705 = vpop.f32.mrf.mxu0
        %v4706 = vpop.f32.mrf.mxu0
        %v4707 = vpop.f32.mrf.mxu0
        %4708 = vdwg.mxu0
        %4709 = vmatprep.subr.bf16.mxu0 0
        %4710 = vmatpush1.bf16.xpose.msra.mxu0 0
        %4711 = vmatprep.subr.bf16.mxu0 0
        %4712 = vmatpush1.bf16.xpose.msra.mxu0 0
        %4713 = vmatprep.subr.bf16.mxu0 0
        %4714 = vmatpush1.bf16.xpose.msra.mxu0 0
        %4715 = vmatprep.subr.bf16.mxu0 0
        %4716 = vmatpush1.bf16.xpose.msra.mxu0 0
        %4717 = vmatprep.subr.bf16.mxu0 0
        %4718 = vmatpush1.bf16.xpose.msra.mxu0 0
        %4719 = vmatprep.subr.bf16.mxu0 0
        %4720 = vmatpush1.bf16.xpose.msra.mxu0 0
        %4721 = vmatprep.subr.bf16.mxu0 0
        %4722 = vmatpush1.bf16.xpose.msra.mxu0 0
        %4723 = vmatprep.subr.bf16.mxu0 0
        %4724 = vmatpush1.bf16.xpose.msra.mxu0 %v4628
        %4725 = vmatprep.subr.bf16.mxu0 0
        %4726 = vmatpush2.bf16.xpose.msra.mxu0 0
        %4727 = vmatprep.subr.bf16.mxu0 0
        %4728 = vmatpush2.bf16.xpose.msra.mxu0 0
        %4729 = vmatprep.subr.bf16.mxu0 0
        %4730 = vmatpush2.bf16.xpose.msra.mxu0 0
        %4731 = vmatprep.subr.bf16.mxu0 0
        %4732 = vmatpush2.bf16.xpose.msra.mxu0 0
        %4733 = vmatprep.subr.bf16.mxu0 0
        %4734 = vmatpush2.bf16.xpose.msra.mxu0 0
        %4735 = vmatprep.subr.bf16.mxu0 0
        %4736 = vmatpush2.bf16.xpose.msra.mxu0 0
        %4737 = vmatprep.subr.bf16.mxu0 0
        %4738 = vmatpush2.bf16.xpose.msra.mxu0 0
        %4739 = vmatprep.subr.bf16.mxu0 0
        %4740 = vmatpush2.bf16.xpose.msra.mxu0 0
        %4741 = vmatprep.mubr.bf16.mxu0 0
        %4742 = vmatmul.mubr.bf16.gmra.mxu0 %v4625
        %v4743 = vpop.f32.mrf.mxu0
        %v4744 = vadd.f32 0.0, %v4743
        %v4745 = vpop.f32.mrf.mxu0
        %v4746 = vpop.f32.mrf.mxu0
        %v4747 = vpop.f32.mrf.mxu0
        %4748 = vdwg.mxu0
        %v4749 = vmul.f32 %v4664, 0.088388346
        %v4750 = vmul.f32 %v4704, 0.088388346
        %v4751 = vmul.f32 %v4744, 0.088388346
        %v4752 = vsel %vm1794, %v4749, -inf
        %4753 = vmax.xlane.f32.xlu0 %v4752
        %v4754 = vpop.xlane.xlu0 %4753
        %v4755 = vsel %vm1794, %v4750, -inf
        %4756 = vmax.xlane.f32.xlu0 %v4755
        %v4757 = vpop.xlane.xlu0 %4756
        %v4758 = vsel %vm1794, %v4751, -inf
        %4759 = vmax.xlane.f32.xlu0 %v4758
        %v4760 = vpop.xlane.xlu0 %4759
        %v4761 = vsub.f32 %v4749, %v4754
        %v4762 = vsub.f32 %v4750, %v4757
        %v4763 = vsub.f32 %v4751, %v4760
        %v4764 = vmul.f32 %v4761, 1.442695
        %v4765 = vpow.pop %v4764
        %v4766 = vmul.f32 %v4762, 1.442695
        %v4767 = vpow.pop %v4766
        %v4768 = vmul.f32 %v4763, 1.442695
        %v4769 = vpow.pop %v4768
        %v4770 = vsel %vm1794, %v4765, 0.0
        %4771 = vadd.xlane.f32.xlu0 %v4770
        %v4772 = vpop.xlane.xlu0 %4771
        %v4773 = vsel %vm1794, %v4767, 0.0
        %4774 = vadd.xlane.f32.xlu0 %v4773
        %v4775 = vpop.xlane.xlu0 %4774
        %v4776 = vsel %vm1794, %v4769, 0.0
        %4777 = vadd.xlane.f32.xlu0 %v4776
        %v4778 = vpop.xlane.xlu0 %4777
        %v4779 = vrcp.pop %v4772
        %v4780 = vrcp.pop %v4775
        %v4781 = vrcp.pop %v4778
        %v4782 = vmul.f32 %v4765, %v4779
        %v4783 = vmul.f32 %v4767, %v4780
        %v4784 = vmul.f32 %v4769, %v4781
        %v4785 = vpack.c.bf16 %v4782, %v4782
        %v4786 = vpack.c.bf16 %v4783, %v4783
        %v4787 = vpack.c.bf16 %v4784, %v4784
        %v4788 = vpack.c.bf16 %v4574, %v4574
        %v4789 = vpack.c.bf16 %v4578, %v4578
        %v4790 = vpack.c.bf16 %v4584, %v4584
        %v4792 = vsel %vm1794, %v4785, 0
        %v4795 = vsel %vm1837, %v4788, 0
        %4797 = vmatprep.subr.bf16.mxu0 0
        %4798 = vmatpush1.bf16.msra.mxu0 0
        %4799 = vmatprep.subr.bf16.mxu0 0
        %4800 = vmatpush1.bf16.msra.mxu0 0
        %4801 = vmatprep.subr.bf16.mxu0 0
        %4802 = vmatpush1.bf16.msra.mxu0 0
        %4803 = vmatprep.subr.bf16.mxu0 0
        %4804 = vmatpush1.bf16.msra.mxu0 0
        %4805 = vmatprep.subr.bf16.mxu0 0
        %4806 = vmatpush1.bf16.msra.mxu0 0
        %4807 = vmatprep.subr.bf16.mxu0 0
        %4808 = vmatpush1.bf16.msra.mxu0 0
        %4809 = vmatprep.subr.bf16.mxu0 0
        %4810 = vmatpush1.bf16.msra.mxu0 0
        %4811 = vmatprep.subr.bf16.mxu0 0
        %4812 = vmatpush1.bf16.msra.mxu0 %v4795
        %4813 = vmatprep.subr.bf16.mxu0 0
        %4814 = vmatpush2.bf16.msra.mxu0 0
        %4815 = vmatprep.subr.bf16.mxu0 0
        %4816 = vmatpush2.bf16.msra.mxu0 0
        %4817 = vmatprep.subr.bf16.mxu0 0
        %4818 = vmatpush2.bf16.msra.mxu0 0
        %4819 = vmatprep.subr.bf16.mxu0 0
        %4820 = vmatpush2.bf16.msra.mxu0 0
        %4821 = vmatprep.subr.bf16.mxu0 0
        %4822 = vmatpush2.bf16.msra.mxu0 0
        %4823 = vmatprep.subr.bf16.mxu0 0
        %4824 = vmatpush2.bf16.msra.mxu0 0
        %4825 = vmatprep.subr.bf16.mxu0 0
        %4826 = vmatpush2.bf16.msra.mxu0 0
        %4827 = vmatprep.subr.bf16.mxu0 0
        %4828 = vmatpush2.bf16.msra.mxu0 0
        %4829 = vmatprep.mubr.bf16.mxu0 0
        %4830 = vmatmul.mubr.bf16.gmra.mxu0 %v4792
        %v4831 = vpop.f32.mrf.mxu0
        %v4832 = vadd.f32 0.0, %v4831
        %v4833 = vpop.f32.mrf.mxu0
        %v4834 = vpop.f32.mrf.mxu0
        %v4835 = vpop.f32.mrf.mxu0
        %4836 = vdwg.mxu0
        %v4838 = vsel %vm1794, %v4786, 0
        %v4841 = vsel %vm1837, %v4789, 0
        %4843 = vmatprep.subr.bf16.mxu0 0
        %4844 = vmatpush1.bf16.msra.mxu0 0
        %4845 = vmatprep.subr.bf16.mxu0 0
        %4846 = vmatpush1.bf16.msra.mxu0 0
        %4847 = vmatprep.subr.bf16.mxu0 0
        %4848 = vmatpush1.bf16.msra.mxu0 0
        %4849 = vmatprep.subr.bf16.mxu0 0
        %4850 = vmatpush1.bf16.msra.mxu0 0
        %4851 = vmatprep.subr.bf16.mxu0 0
        %4852 = vmatpush1.bf16.msra.mxu0 0
        %4853 = vmatprep.subr.bf16.mxu0 0
        %4854 = vmatpush1.bf16.msra.mxu0 0
        %4855 = vmatprep.subr.bf16.mxu0 0
        %4856 = vmatpush1.bf16.msra.mxu0 0
        %4857 = vmatprep.subr.bf16.mxu0 0
        %4858 = vmatpush1.bf16.msra.mxu0 %v4841
        %4859 = vmatprep.subr.bf16.mxu0 0
        %4860 = vmatpush2.bf16.msra.mxu0 0
        %4861 = vmatprep.subr.bf16.mxu0 0
        %4862 = vmatpush2.bf16.msra.mxu0 0
        %4863 = vmatprep.subr.bf16.mxu0 0
        %4864 = vmatpush2.bf16.msra.mxu0 0
        %4865 = vmatprep.subr.bf16.mxu0 0
        %4866 = vmatpush2.bf16.msra.mxu0 0
        %4867 = vmatprep.subr.bf16.mxu0 0
        %4868 = vmatpush2.bf16.msra.mxu0 0
        %4869 = vmatprep.subr.bf16.mxu0 0
        %4870 = vmatpush2.bf16.msra.mxu0 0
        %4871 = vmatprep.subr.bf16.mxu0 0
        %4872 = vmatpush2.bf16.msra.mxu0 0
        %4873 = vmatprep.subr.bf16.mxu0 0
        %4874 = vmatpush2.bf16.msra.mxu0 0
        %4875 = vmatprep.mubr.bf16.mxu0 0
        %4876 = vmatmul.mubr.bf16.gmra.mxu0 %v4838
        %v4877 = vpop.f32.mrf.mxu0
        %v4878 = vadd.f32 0.0, %v4877
        %v4879 = vpop.f32.mrf.mxu0
        %v4880 = vpop.f32.mrf.mxu0
        %v4881 = vpop.f32.mrf.mxu0
        %4882 = vdwg.mxu0
        %v4884 = vsel %vm1794, %v4787, 0
        %v4887 = vsel %vm1837, %v4790, 0
        %4889 = vmatprep.subr.bf16.mxu0 0
        %4890 = vmatpush1.bf16.msra.mxu0 0
        %4891 = vmatprep.subr.bf16.mxu0 0
        %4892 = vmatpush1.bf16.msra.mxu0 0
        %4893 = vmatprep.subr.bf16.mxu0 0
        %4894 = vmatpush1.bf16.msra.mxu0 0
        %4895 = vmatprep.subr.bf16.mxu0 0
        %4896 = vmatpush1.bf16.msra.mxu0 0
        %4897 = vmatprep.subr.bf16.mxu0 0
        %4898 = vmatpush1.bf16.msra.mxu0 0
        %4899 = vmatprep.subr.bf16.mxu0 0
        %4900 = vmatpush1.bf16.msra.mxu0 0
        %4901 = vmatprep.subr.bf16.mxu0 0
        %4902 = vmatpush1.bf16.msra.mxu0 0
        %4903 = vmatprep.subr.bf16.mxu0 0
        %4904 = vmatpush1.bf16.msra.mxu0 %v4887
        %4905 = vmatprep.subr.bf16.mxu0 0
        %4906 = vmatpush2.bf16.msra.mxu0 0
        %4907 = vmatprep.subr.bf16.mxu0 0
        %4908 = vmatpush2.bf16.msra.mxu0 0
        %4909 = vmatprep.subr.bf16.mxu0 0
        %4910 = vmatpush2.bf16.msra.mxu0 0
        %4911 = vmatprep.subr.bf16.mxu0 0
        %4912 = vmatpush2.bf16.msra.mxu0 0
        %4913 = vmatprep.subr.bf16.mxu0 0
        %4914 = vmatpush2.bf16.msra.mxu0 0
        %4915 = vmatprep.subr.bf16.mxu0 0
        %4916 = vmatpush2.bf16.msra.mxu0 0
        %4917 = vmatprep.subr.bf16.mxu0 0
        %4918 = vmatpush2.bf16.msra.mxu0 0
        %4919 = vmatprep.subr.bf16.mxu0 0
        %4920 = vmatpush2.bf16.msra.mxu0 0
        %4921 = vmatprep.mubr.bf16.mxu0 0
        %4922 = vmatmul.mubr.bf16.gmra.mxu0 %v4884
        %v4923 = vpop.f32.mrf.mxu0
        %v4924 = vadd.f32 0.0, %v4923
        %v4925 = vpop.f32.mrf.mxu0
        %v4926 = vpop.f32.mrf.mxu0
        %v4927 = vpop.f32.mrf.mxu0
        %4928 = vdwg.mxu0
        %v4929 = vpack.c.bf16 %v4878, %v4832
        %v4930 = vpack.c.bf16 %v4924, %v4924
        %v4931 = vpack.c.bf16 %v4474, %v4474
        %v4932 = vpack.c.bf16 %v4478, %v4478
        %v4933 = vpack.c.bf16 %v4484, %v4484
        %v4934 = vpack.c.bf16 %v4525, %v4525
        %v4935 = vpack.c.bf16 %v4529, %v4529
        %v4936 = vpack.c.bf16 %v4535, %v4535
        %4937 = vmatprep.subr.bf16.mxu0 0
        %4938 = vmatpush1.bf16.xpose.msra.mxu0 0
        %4939 = vmatprep.subr.bf16.mxu0 0
        %4940 = vmatpush1.bf16.xpose.msra.mxu0 0
        %4941 = vmatprep.subr.bf16.mxu0 0
        %4942 = vmatpush1.bf16.xpose.msra.mxu0 0
        %4943 = vmatprep.subr.bf16.mxu0 0
        %4944 = vmatpush1.bf16.xpose.msra.mxu0 0
        %4945 = vmatprep.subr.bf16.mxu0 0
        %4946 = vmatpush1.bf16.xpose.msra.mxu0 0
        %4947 = vmatprep.subr.bf16.mxu0 0
        %4948 = vmatpush1.bf16.xpose.msra.mxu0 0
        %4949 = vmatprep.subr.bf16.mxu0 0
        %4950 = vmatpush1.bf16.xpose.msra.mxu0 0
        %4951 = vmatprep.subr.bf16.mxu0 0
        %4952 = vmatpush1.bf16.xpose.msra.mxu0 %v4934
        %4953 = vmatprep.subr.bf16.mxu0 0
        %4954 = vmatpush2.bf16.xpose.msra.mxu0 0
        %4955 = vmatprep.subr.bf16.mxu0 0
        %4956 = vmatpush2.bf16.xpose.msra.mxu0 0
        %4957 = vmatprep.subr.bf16.mxu0 0
        %4958 = vmatpush2.bf16.xpose.msra.mxu0 0
        %4959 = vmatprep.subr.bf16.mxu0 0
        %4960 = vmatpush2.bf16.xpose.msra.mxu0 0
        %4961 = vmatprep.subr.bf16.mxu0 0
        %4962 = vmatpush2.bf16.xpose.msra.mxu0 0
        %4963 = vmatprep.subr.bf16.mxu0 0
        %4964 = vmatpush2.bf16.xpose.msra.mxu0 0
        %4965 = vmatprep.subr.bf16.mxu0 0
        %4966 = vmatpush2.bf16.xpose.msra.mxu0 0
        %4967 = vmatprep.subr.bf16.mxu0 0
        %4968 = vmatpush2.bf16.xpose.msra.mxu0 0
        %4969 = vmatprep.mubr.bf16.mxu0 0
        %4970 = vmatmul.mubr.bf16.gmra.mxu0 %v4931
        %v4971 = vpop.f32.mrf.mxu0
        %v4972 = vadd.f32 0.0, %v4971
        %v4973 = vpop.f32.mrf.mxu0
        %v4974 = vpop.f32.mrf.mxu0
        %v4975 = vpop.f32.mrf.mxu0
        %4976 = vdwg.mxu0
        %4977 = vmatprep.subr.bf16.mxu0 0
        %4978 = vmatpush1.bf16.xpose.msra.mxu0 0
        %4979 = vmatprep.subr.bf16.mxu0 0
        %4980 = vmatpush1.bf16.xpose.msra.mxu0 0
        %4981 = vmatprep.subr.bf16.mxu0 0
        %4982 = vmatpush1.bf16.xpose.msra.mxu0 0
        %4983 = vmatprep.subr.bf16.mxu0 0
        %4984 = vmatpush1.bf16.xpose.msra.mxu0 0
        %4985 = vmatprep.subr.bf16.mxu0 0
        %4986 = vmatpush1.bf16.xpose.msra.mxu0 0
        %4987 = vmatprep.subr.bf16.mxu0 0
        %4988 = vmatpush1.bf16.xpose.msra.mxu0 0
        %4989 = vmatprep.subr.bf16.mxu0 0
        %4990 = vmatpush1.bf16.xpose.msra.mxu0 0
        %4991 = vmatprep.subr.bf16.mxu0 0
        %4992 = vmatpush1.bf16.xpose.msra.mxu0 %v4935
        %4993 = vmatprep.subr.bf16.mxu0 0
        %4994 = vmatpush2.bf16.xpose.msra.mxu0 0
        %4995 = vmatprep.subr.bf16.mxu0 0
        %4996 = vmatpush2.bf16.xpose.msra.mxu0 0
        %4997 = vmatprep.subr.bf16.mxu0 0
        %4998 = vmatpush2.bf16.xpose.msra.mxu0 0
        %4999 = vmatprep.subr.bf16.mxu0 0
        %5000 = vmatpush2.bf16.xpose.msra.mxu0 0
        %5001 = vmatprep.subr.bf16.mxu0 0
        %5002 = vmatpush2.bf16.xpose.msra.mxu0 0
        %5003 = vmatprep.subr.bf16.mxu0 0
        %5004 = vmatpush2.bf16.xpose.msra.mxu0 0
        %5005 = vmatprep.subr.bf16.mxu0 0
        %5006 = vmatpush2.bf16.xpose.msra.mxu0 0
        %5007 = vmatprep.subr.bf16.mxu0 0
        %5008 = vmatpush2.bf16.xpose.msra.mxu0 0
        %5009 = vmatprep.mubr.bf16.mxu0 0
        %5010 = vmatmul.mubr.bf16.gmra.mxu0 %v4932
        %v5011 = vpop.f32.mrf.mxu0
        %v5012 = vadd.f32 0.0, %v5011
        %v5013 = vpop.f32.mrf.mxu0
        %v5014 = vpop.f32.mrf.mxu0
        %v5015 = vpop.f32.mrf.mxu0
        %5016 = vdwg.mxu0
        %5017 = vmatprep.subr.bf16.mxu0 0
        %5018 = vmatpush1.bf16.xpose.msra.mxu0 0
        %5019 = vmatprep.subr.bf16.mxu0 0
        %5020 = vmatpush1.bf16.xpose.msra.mxu0 0
        %5021 = vmatprep.subr.bf16.mxu0 0
        %5022 = vmatpush1.bf16.xpose.msra.mxu0 0
        %5023 = vmatprep.subr.bf16.mxu0 0
        %5024 = vmatpush1.bf16.xpose.msra.mxu0 0
        %5025 = vmatprep.subr.bf16.mxu0 0
        %5026 = vmatpush1.bf16.xpose.msra.mxu0 0
        %5027 = vmatprep.subr.bf16.mxu0 0
        %5028 = vmatpush1.bf16.xpose.msra.mxu0 0
        %5029 = vmatprep.subr.bf16.mxu0 0
        %5030 = vmatpush1.bf16.xpose.msra.mxu0 0
        %5031 = vmatprep.subr.bf16.mxu0 0
        %5032 = vmatpush1.bf16.xpose.msra.mxu0 %v4936
        %5033 = vmatprep.subr.bf16.mxu0 0
        %5034 = vmatpush2.bf16.xpose.msra.mxu0 0
        %5035 = vmatprep.subr.bf16.mxu0 0
        %5036 = vmatpush2.bf16.xpose.msra.mxu0 0
        %5037 = vmatprep.subr.bf16.mxu0 0
        %5038 = vmatpush2.bf16.xpose.msra.mxu0 0
        %5039 = vmatprep.subr.bf16.mxu0 0
        %5040 = vmatpush2.bf16.xpose.msra.mxu0 0
        %5041 = vmatprep.subr.bf16.mxu0 0
        %5042 = vmatpush2.bf16.xpose.msra.mxu0 0
        %5043 = vmatprep.subr.bf16.mxu0 0
        %5044 = vmatpush2.bf16.xpose.msra.mxu0 0
        %5045 = vmatprep.subr.bf16.mxu0 0
        %5046 = vmatpush2.bf16.xpose.msra.mxu0 0
        %5047 = vmatprep.subr.bf16.mxu0 0
        %5048 = vmatpush2.bf16.xpose.msra.mxu0 0
        %5049 = vmatprep.mubr.bf16.mxu0 0
        %5050 = vmatmul.mubr.bf16.gmra.mxu0 %v4933
        %v5051 = vpop.f32.mrf.mxu0
        %v5052 = vadd.f32 0.0, %v5051
        %v5053 = vpop.f32.mrf.mxu0
        %v5054 = vpop.f32.mrf.mxu0
        %v5055 = vpop.f32.mrf.mxu0
        %5056 = vdwg.mxu0
        %v5057 = vmul.f32 %v4972, 0.088388346
        %v5058 = vmul.f32 %v5012, 0.088388346
        %v5059 = vmul.f32 %v5052, 0.088388346
        %v5060 = vsel %vm1794, %v5057, -inf
        %5061 = vmax.xlane.f32.xlu0 %v5060
        %v5062 = vpop.xlane.xlu0 %5061
        %v5063 = vsel %vm1794, %v5058, -inf
        %5064 = vmax.xlane.f32.xlu0 %v5063
        %v5065 = vpop.xlane.xlu0 %5064
        %v5066 = vsel %vm1794, %v5059, -inf
        %5067 = vmax.xlane.f32.xlu0 %v5066
        %v5068 = vpop.xlane.xlu0 %5067
        %v5069 = vsub.f32 %v5057, %v5062
        %v5070 = vsub.f32 %v5058, %v5065
        %v5071 = vsub.f32 %v5059, %v5068
        %v5072 = vmul.f32 %v5069, 1.442695
        %v5073 = vpow.pop %v5072
        %v5074 = vmul.f32 %v5070, 1.442695
        %v5075 = vpow.pop %v5074
        %v5076 = vmul.f32 %v5071, 1.442695
        %v5077 = vpow.pop %v5076
        %v5078 = vsel %vm1794, %v5073, 0.0
        %5079 = vadd.xlane.f32.xlu0 %v5078
        %v5080 = vpop.xlane.xlu0 %5079
        %v5081 = vsel %vm1794, %v5075, 0.0
        %5082 = vadd.xlane.f32.xlu0 %v5081
        %v5083 = vpop.xlane.xlu0 %5082
        %v5084 = vsel %vm1794, %v5077, 0.0
        %5085 = vadd.xlane.f32.xlu0 %v5084
        %v5086 = vpop.xlane.xlu0 %5085
        %v5087 = vrcp.pop %v5080
        %v5088 = vrcp.pop %v5083
        %v5089 = vrcp.pop %v5086
        %v5090 = vmul.f32 %v5073, %v5087
        %v5091 = vmul.f32 %v5075, %v5088
        %v5092 = vmul.f32 %v5077, %v5089
        %v5093 = vpack.c.bf16 %v5090, %v5090
        %v5094 = vpack.c.bf16 %v5091, %v5091
        %v5095 = vpack.c.bf16 %v5092, %v5092
        %v5096 = vpack.c.bf16 %v4576, %v4576
        %v5097 = vpack.c.bf16 %v4580, %v4580
        %v5098 = vpack.c.bf16 %v4586, %v4586
        %v5100 = vsel %vm1794, %v5093, 0
        %v5103 = vsel %vm1837, %v5096, 0
        %5105 = vmatprep.subr.bf16.mxu0 0
        %5106 = vmatpush1.bf16.msra.mxu0 0
        %5107 = vmatprep.subr.bf16.mxu0 0
        %5108 = vmatpush1.bf16.msra.mxu0 0
        %5109 = vmatprep.subr.bf16.mxu0 0
        %5110 = vmatpush1.bf16.msra.mxu0 0
        %5111 = vmatprep.subr.bf16.mxu0 0
        %5112 = vmatpush1.bf16.msra.mxu0 0
        %5113 = vmatprep.subr.bf16.mxu0 0
        %5114 = vmatpush1.bf16.msra.mxu0 0
        %5115 = vmatprep.subr.bf16.mxu0 0
        %5116 = vmatpush1.bf16.msra.mxu0 0
        %5117 = vmatprep.subr.bf16.mxu0 0
        %5118 = vmatpush1.bf16.msra.mxu0 0
        %5119 = vmatprep.subr.bf16.mxu0 0
        %5120 = vmatpush1.bf16.msra.mxu0 %v5103
        %5121 = vmatprep.subr.bf16.mxu0 0
        %5122 = vmatpush2.bf16.msra.mxu0 0
        %5123 = vmatprep.subr.bf16.mxu0 0
        %5124 = vmatpush2.bf16.msra.mxu0 0
        %5125 = vmatprep.subr.bf16.mxu0 0
        %5126 = vmatpush2.bf16.msra.mxu0 0
        %5127 = vmatprep.subr.bf16.mxu0 0
        %5128 = vmatpush2.bf16.msra.mxu0 0
        %5129 = vmatprep.subr.bf16.mxu0 0
        %5130 = vmatpush2.bf16.msra.mxu0 0
        %5131 = vmatprep.subr.bf16.mxu0 0
        %5132 = vmatpush2.bf16.msra.mxu0 0
        %5133 = vmatprep.subr.bf16.mxu0 0
        %5134 = vmatpush2.bf16.msra.mxu0 0
        %5135 = vmatprep.subr.bf16.mxu0 0
        %5136 = vmatpush2.bf16.msra.mxu0 0
        %5137 = vmatprep.mubr.bf16.mxu0 0
        %5138 = vmatmul.mubr.bf16.gmra.mxu0 %v5100
        %v5139 = vpop.f32.mrf.mxu0
        %v5140 = vadd.f32 0.0, %v5139
        %v5141 = vpop.f32.mrf.mxu0
        %v5142 = vpop.f32.mrf.mxu0
        %v5143 = vpop.f32.mrf.mxu0
        %5144 = vdwg.mxu0
        %v5146 = vsel %vm1794, %v5094, 0
        %v5149 = vsel %vm1837, %v5097, 0
        %5151 = vmatprep.subr.bf16.mxu0 0
        %5152 = vmatpush1.bf16.msra.mxu0 0
        %5153 = vmatprep.subr.bf16.mxu0 0
        %5154 = vmatpush1.bf16.msra.mxu0 0
        %5155 = vmatprep.subr.bf16.mxu0 0
        %5156 = vmatpush1.bf16.msra.mxu0 0
        %5157 = vmatprep.subr.bf16.mxu0 0
        %5158 = vmatpush1.bf16.msra.mxu0 0
        %5159 = vmatprep.subr.bf16.mxu0 0
        %5160 = vmatpush1.bf16.msra.mxu0 0
        %5161 = vmatprep.subr.bf16.mxu0 0
        %5162 = vmatpush1.bf16.msra.mxu0 0
        %5163 = vmatprep.subr.bf16.mxu0 0
        %5164 = vmatpush1.bf16.msra.mxu0 0
        %5165 = vmatprep.subr.bf16.mxu0 0
        %5166 = vmatpush1.bf16.msra.mxu0 %v5149
        %5167 = vmatprep.subr.bf16.mxu0 0
        %5168 = vmatpush2.bf16.msra.mxu0 0
        %5169 = vmatprep.subr.bf16.mxu0 0
        %5170 = vmatpush2.bf16.msra.mxu0 0
        %5171 = vmatprep.subr.bf16.mxu0 0
        %5172 = vmatpush2.bf16.msra.mxu0 0
        %5173 = vmatprep.subr.bf16.mxu0 0
        %5174 = vmatpush2.bf16.msra.mxu0 0
        %5175 = vmatprep.subr.bf16.mxu0 0
        %5176 = vmatpush2.bf16.msra.mxu0 0
        %5177 = vmatprep.subr.bf16.mxu0 0
        %5178 = vmatpush2.bf16.msra.mxu0 0
        %5179 = vmatprep.subr.bf16.mxu0 0
        %5180 = vmatpush2.bf16.msra.mxu0 0
        %5181 = vmatprep.subr.bf16.mxu0 0
        %5182 = vmatpush2.bf16.msra.mxu0 0
        %5183 = vmatprep.mubr.bf16.mxu0 0
        %5184 = vmatmul.mubr.bf16.gmra.mxu0 %v5146
        %v5185 = vpop.f32.mrf.mxu0
        %v5186 = vadd.f32 0.0, %v5185
        %v5187 = vpop.f32.mrf.mxu0
        %v5188 = vpop.f32.mrf.mxu0
        %v5189 = vpop.f32.mrf.mxu0
        %5190 = vdwg.mxu0
        %v5192 = vsel %vm1794, %v5095, 0
        %v5195 = vsel %vm1837, %v5098, 0
        %5197 = vmatprep.subr.bf16.mxu0 0
        %5198 = vmatpush1.bf16.msra.mxu0 0
        %5199 = vmatprep.subr.bf16.mxu0 0
        %5200 = vmatpush1.bf16.msra.mxu0 0
        %5201 = vmatprep.subr.bf16.mxu0 0
        %5202 = vmatpush1.bf16.msra.mxu0 0
        %5203 = vmatprep.subr.bf16.mxu0 0
        %5204 = vmatpush1.bf16.msra.mxu0 0
        %5205 = vmatprep.subr.bf16.mxu0 0
        %5206 = vmatpush1.bf16.msra.mxu0 0
        %5207 = vmatprep.subr.bf16.mxu0 0
        %5208 = vmatpush1.bf16.msra.mxu0 0
        %5209 = vmatprep.subr.bf16.mxu0 0
        %5210 = vmatpush1.bf16.msra.mxu0 0
        %5211 = vmatprep.subr.bf16.mxu0 0
        %5212 = vmatpush1.bf16.msra.mxu0 %v5195
        %5213 = vmatprep.subr.bf16.mxu0 0
        %5214 = vmatpush2.bf16.msra.mxu0 0
        %5215 = vmatprep.subr.bf16.mxu0 0
        %5216 = vmatpush2.bf16.msra.mxu0 0
        %5217 = vmatprep.subr.bf16.mxu0 0
        %5218 = vmatpush2.bf16.msra.mxu0 0
        %5219 = vmatprep.subr.bf16.mxu0 0
        %5220 = vmatpush2.bf16.msra.mxu0 0
        %5221 = vmatprep.subr.bf16.mxu0 0
        %5222 = vmatpush2.bf16.msra.mxu0 0
        %5223 = vmatprep.subr.bf16.mxu0 0
        %5224 = vmatpush2.bf16.msra.mxu0 0
        %5225 = vmatprep.subr.bf16.mxu0 0
        %5226 = vmatpush2.bf16.msra.mxu0 0
        %5227 = vmatprep.subr.bf16.mxu0 0
        %5228 = vmatpush2.bf16.msra.mxu0 0
        %5229 = vmatprep.mubr.bf16.mxu0 0
        %5230 = vmatmul.mubr.bf16.gmra.mxu0 %v5192
        %v5231 = vpop.f32.mrf.mxu0
        %v5232 = vadd.f32 0.0, %v5231
        %v5233 = vpop.f32.mrf.mxu0
        %v5234 = vpop.f32.mrf.mxu0
        %v5235 = vpop.f32.mrf.mxu0
        %5236 = vdwg.mxu0
        %v5237 = vpack.c.bf16 %v5186, %v5140
        %v5238 = vpack.c.bf16 %v5232, %v5232
        %v5255 = vunpack.c.l.b16 %v4607
        %v5256 = vunpack.c.h.b16 %v4607
        %v5257 = vunpack.c.l.b16 %v4608
        %v5258 = vunpack.c.h.b16 %v4608
        %v5259 = vunpack.c.l.b16 %v4609
        %v5260 = vunpack.c.h.b16 %v4609
        %v5261 = vunpack.c.l.b16 %v4610
        %v5262 = vunpack.c.h.b16 %v4610
        %v5263 = vunpack.c.l.b16 %v4611
        %v5264 = vunpack.c.h.b16 %v4611
        %v5265 = vunpack.c.l.b16 %v4612
        %v5266 = vunpack.c.h.b16 %v4612
        %v5267 = vunpack.c.l.b16 %v4613
        %v5268 = vunpack.c.h.b16 %v4613
        %v5269 = vunpack.c.l.b16 %v4614
        %v5270 = vunpack.c.h.b16 %v4614
        %v5271 = vunpack.c.l.b16 %v4615
        %v5272 = vunpack.c.h.b16 %v4615
        %v5273 = vunpack.c.l.b16 %v4616
        %v5274 = vunpack.c.h.b16 %v4616
        %v5275 = vunpack.c.l.b16 %v4617
        %v5276 = vunpack.c.h.b16 %v4617
        %v5277 = vunpack.c.l.b16 %v4618
        %v5278 = vunpack.c.h.b16 %v4618
        %v5279 = vunpack.c.l.b16 %v4619
        %v5280 = vunpack.c.h.b16 %v4619
        %v5281 = vunpack.c.l.b16 %v4620
        %v5282 = vunpack.c.h.b16 %v4620
        %v5283 = vunpack.c.l.b16 %v4621
        %v5284 = vunpack.c.h.b16 %v4621
        %v5285 = vunpack.c.l.b16 %v4622
        %v5286 = vunpack.c.h.b16 %v4622
        %v5287 = vpack.c.b16 %v5257, %v5255
        %v5288 = vpack.c.b16 %v5258, %v5256
        %v5289 = vpack.c.b16 %v5261, %v5259
        %v5290 = vpack.c.b16 %v5262, %v5260
        %v5291 = vpack.c.b16 %v5265, %v5263
        %v5292 = vpack.c.b16 %v5266, %v5264
        %v5293 = vpack.c.b16 %v5269, %v5267
        %v5294 = vpack.c.b16 %v5270, %v5268
        %v5295 = vpack.c.b16 %v5273, %v5271
        %v5296 = vpack.c.b16 %v5274, %v5272
        %v5297 = vpack.c.b16 %v5277, %v5275
        %v5298 = vpack.c.b16 %v5278, %v5276
        %v5299 = vpack.c.b16 %v5281, %v5279
        %v5300 = vpack.c.b16 %v5282, %v5280
        %v5301 = vpack.c.b16 %v5285, %v5283
        %v5302 = vpack.c.b16 %v5286, %v5284
        %5319 = vmatprep.subr.bf16.mxu0 %v5302
        %5320 = vmatpush1.bf16.msra.mxu0 %v5301
        %5321 = vmatprep.subr.bf16.mxu0 %v5300
        %5322 = vmatpush1.bf16.msra.mxu0 %v5299
        %5323 = vmatprep.subr.bf16.mxu0 %v5298
        %5324 = vmatpush1.bf16.msra.mxu0 %v5297
        %5325 = vmatprep.subr.bf16.mxu0 %v5296
        %5326 = vmatpush1.bf16.msra.mxu0 %v5295
        %5327 = vmatprep.subr.bf16.mxu0 %v5294
        %5328 = vmatpush1.bf16.msra.mxu0 %v5293
        %5329 = vmatprep.subr.bf16.mxu0 %v5292
        %5330 = vmatpush1.bf16.msra.mxu0 %v5291
        %5331 = vmatprep.subr.bf16.mxu0 %v5290
        %5332 = vmatpush1.bf16.msra.mxu0 %v5289
        %5333 = vmatprep.subr.bf16.mxu0 %v5288
        %5334 = vmatpush1.bf16.msra.mxu0 %v5287
        %5335 = vmatprep.subr.bf16.mxu0 0
        %5336 = vmatpush2.bf16.msra.mxu0 0
        %5337 = vmatprep.subr.bf16.mxu0 0
        %5338 = vmatpush2.bf16.msra.mxu0 0
        %5339 = vmatprep.subr.bf16.mxu0 0
        %5340 = vmatpush2.bf16.msra.mxu0 0
        %5341 = vmatprep.subr.bf16.mxu0 0
        %5342 = vmatpush2.bf16.msra.mxu0 0
        %5343 = vmatprep.subr.bf16.mxu0 0
        %5344 = vmatpush2.bf16.msra.mxu0 0
        %5345 = vmatprep.subr.bf16.mxu0 0
        %5346 = vmatpush2.bf16.msra.mxu0 0
        %5347 = vmatprep.subr.bf16.mxu0 0
        %5348 = vmatpush2.bf16.msra.mxu0 0
        %5349 = vmatprep.subr.bf16.mxu0 0
        %5350 = vmatpush2.bf16.msra.mxu0 0
        %5351 = vmatprep.mubr.bf16.mxu0 0
        %5352 = vmatmul.mubr.bf16.gmra.mxu0 %v5237
        %v5353 = vpop.f32.mrf.mxu0
        %v5354 = vadd.f32 0.0, %v5353
        %v5355 = vpop.f32.mrf.mxu0
        %v5356 = vadd.f32 0.0, %v5355
        %v5357 = vpop.f32.mrf.mxu0
        %v5358 = vadd.f32 0.0, %v5357
        %v5359 = vpop.f32.mrf.mxu0
        %v5360 = vadd.f32 0.0, %v5359
        %5361 = vmatprep.mubr.bf16.mxu0 0
        %5362 = vmatmul.mubr.bf16.gmra.mxu0 %v5238
        %v5363 = vpop.f32.mrf.mxu0
        %v5364 = vadd.f32 0.0, %v5363
        %v5365 = vpop.f32.mrf.mxu0
        %v5366 = vadd.f32 0.0, %v5365
        %v5367 = vpop.f32.mrf.mxu0
        %v5368 = vpop.f32.mrf.mxu0
        %5369 = vdwg.mxu0
        %v5386 = vunpack.c.l.b16 %v4591
        %v5387 = vunpack.c.h.b16 %v4591
        %v5388 = vunpack.c.l.b16 %v4592
        %v5389 = vunpack.c.h.b16 %v4592
        %v5390 = vunpack.c.l.b16 %v4593
        %v5391 = vunpack.c.h.b16 %v4593
        %v5392 = vunpack.c.l.b16 %v4594
        %v5393 = vunpack.c.h.b16 %v4594
        %v5394 = vunpack.c.l.b16 %v4595
        %v5395 = vunpack.c.h.b16 %v4595
        %v5396 = vunpack.c.l.b16 %v4596
        %v5397 = vunpack.c.h.b16 %v4596
        %v5398 = vunpack.c.l.b16 %v4597
        %v5399 = vunpack.c.h.b16 %v4597
        %v5400 = vunpack.c.l.b16 %v4598
        %v5401 = vunpack.c.h.b16 %v4598
        %v5402 = vunpack.c.l.b16 %v4599
        %v5403 = vunpack.c.h.b16 %v4599
        %v5404 = vunpack.c.l.b16 %v4600
        %v5405 = vunpack.c.h.b16 %v4600
        %v5406 = vunpack.c.l.b16 %v4601
        %v5407 = vunpack.c.h.b16 %v4601
        %v5408 = vunpack.c.l.b16 %v4602
        %v5409 = vunpack.c.h.b16 %v4602
        %v5410 = vunpack.c.l.b16 %v4603
        %v5411 = vunpack.c.h.b16 %v4603
        %v5412 = vunpack.c.l.b16 %v4604
        %v5413 = vunpack.c.h.b16 %v4604
        %v5414 = vunpack.c.l.b16 %v4605
        %v5415 = vunpack.c.h.b16 %v4605
        %v5416 = vunpack.c.l.b16 %v4606
        %v5417 = vunpack.c.h.b16 %v4606
        %v5418 = vpack.c.b16 %v5388, %v5386
        %v5419 = vpack.c.b16 %v5389, %v5387
        %v5420 = vpack.c.b16 %v5392, %v5390
        %v5421 = vpack.c.b16 %v5393, %v5391
        %v5422 = vpack.c.b16 %v5396, %v5394
        %v5423 = vpack.c.b16 %v5397, %v5395
        %v5424 = vpack.c.b16 %v5400, %v5398
        %v5425 = vpack.c.b16 %v5401, %v5399
        %v5426 = vpack.c.b16 %v5404, %v5402
        %v5427 = vpack.c.b16 %v5405, %v5403
        %v5428 = vpack.c.b16 %v5408, %v5406
        %v5429 = vpack.c.b16 %v5409, %v5407
        %v5430 = vpack.c.b16 %v5412, %v5410
        %v5431 = vpack.c.b16 %v5413, %v5411
        %v5432 = vpack.c.b16 %v5416, %v5414
        %v5433 = vpack.c.b16 %v5417, %v5415
        %5450 = vmatprep.subr.bf16.mxu0 %v5433
        %5451 = vmatpush1.bf16.msra.mxu0 %v5432
        %5452 = vmatprep.subr.bf16.mxu0 %v5431
        %5453 = vmatpush1.bf16.msra.mxu0 %v5430
        %5454 = vmatprep.subr.bf16.mxu0 %v5429
        %5455 = vmatpush1.bf16.msra.mxu0 %v5428
        %5456 = vmatprep.subr.bf16.mxu0 %v5427
        %5457 = vmatpush1.bf16.msra.mxu0 %v5426
        %5458 = vmatprep.subr.bf16.mxu0 %v5425
        %5459 = vmatpush1.bf16.msra.mxu0 %v5424
        %5460 = vmatprep.subr.bf16.mxu0 %v5423
        %5461 = vmatpush1.bf16.msra.mxu0 %v5422
        %5462 = vmatprep.subr.bf16.mxu0 %v5421
        %5463 = vmatpush1.bf16.msra.mxu0 %v5420
        %5464 = vmatprep.subr.bf16.mxu0 %v5419
        %5465 = vmatpush1.bf16.msra.mxu0 %v5418
        %5466 = vmatprep.subr.bf16.mxu0 0
        %5467 = vmatpush2.bf16.msra.mxu0 0
        %5468 = vmatprep.subr.bf16.mxu0 0
        %5469 = vmatpush2.bf16.msra.mxu0 0
        %5470 = vmatprep.subr.bf16.mxu0 0
        %5471 = vmatpush2.bf16.msra.mxu0 0
        %5472 = vmatprep.subr.bf16.mxu0 0
        %5473 = vmatpush2.bf16.msra.mxu0 0
        %5474 = vmatprep.subr.bf16.mxu0 0
        %5475 = vmatpush2.bf16.msra.mxu0 0
        %5476 = vmatprep.subr.bf16.mxu0 0
        %5477 = vmatpush2.bf16.msra.mxu0 0
        %5478 = vmatprep.subr.bf16.mxu0 0
        %5479 = vmatpush2.bf16.msra.mxu0 0
        %5480 = vmatprep.subr.bf16.mxu0 0
        %5481 = vmatpush2.bf16.msra.mxu0 0
        %5482 = vmatprep.mubr.bf16.mxu0 0
        %5483 = vmatmul.mubr.bf16.gmra.mxu0 %v4929
        %v5484 = vpop.f32.mrf.mxu0
        %v5485 = vadd.f32 %v5354, %v5484
        %v5486 = vpop.f32.mrf.mxu0
        %v5487 = vadd.f32 %v5356, %v5486
        %v5488 = vpop.f32.mrf.mxu0
        %v5489 = vadd.f32 %v5358, %v5488
        %v5490 = vpop.f32.mrf.mxu0
        %v5491 = vadd.f32 %v5360, %v5490
        %5492 = vmatprep.mubr.bf16.mxu0 0
        %5493 = vmatmul.mubr.bf16.gmra.mxu0 %v4930
        %v5494 = vpop.f32.mrf.mxu0
        %v5495 = vadd.f32 %v5364, %v5494
        %v5496 = vpop.f32.mrf.mxu0
        %v5497 = vadd.f32 %v5366, %v5496
        %v5498 = vpop.f32.mrf.mxu0
        %v5499 = vpop.f32.mrf.mxu0
        %5500 = vdwg.mxu0
        %v5501 = vadd.f32 %v3731, %v5485
        %v5502 = vadd.f32 %v3732, %v5487
        %v5503 = vadd.f32 %v3733, %v5489
        %v5504 = vadd.f32 %v3734, %v5491
        %v5505 = vadd.f32 %v3735, %v5495
        %v5506 = vadd.f32 %v3736, %v5497
        %s5507 = scalar_lea.vmem %s7, 2
        %v5508 = vld [vmem:[%s5507] sm:$0x3]
        %v5510 = vlaneseq
        %v5511 = vshrl.u32 %v5510, 7
        %v5512 = vsub.s32 0, %v5511
        %v5513 = vrot.slane %v5508, %v5512
        %v5514 = vlaneseq
        %v5515 = vshrl.u32 %v5514, 7
        %v5516 = vsub.s32 1, %v5515
        %v5517 = vrot.slane %v5508, %v5516
        %v5520 = vadd.f32 %v5501, %v5513
        %v5521 = vadd.f32 %v5502, %v5517
        %v5522 = vadd.f32 %v5503, %v5513
        %v5523 = vadd.f32 %v5504, %v5517
        %v5524 = vadd.f32 %v5505, %v5513
        %v5525 = vadd.f32 %v5506, %v5517
        %s5526 = scalar_lea.vmem [#allocation13], 2
        %v5527 = vld [vmem:[%s5526] sm:$0x3]
        %s5528 = scalar_lea.vmem [#allocation14], 2
        %v5529 = vld [vmem:[%s5528] sm:$0x3]
        %v5530 = vadd.f32 %v5520, %v5521
        %5531 = vadd.xlane.f32.xlu0 %v5530
        %v5532 = vpop.xlane.xlu0 %5531
        %v5533 = vadd.f32 %v5522, %v5523
        %5534 = vadd.xlane.f32.xlu0 %v5533
        %v5535 = vpop.xlane.xlu0 %5534
        %v5536 = vadd.f32 %v5524, %v5525
        %5537 = vadd.xlane.f32.xlu0 %v5536
        %v5538 = vpop.xlane.xlu0 %5537
        %v5539 = vmul.f32 %v5532, %v794
        %v5540 = vmul.f32 %v5535, %v794
        %v5541 = vmul.f32 %v5538, %v794
        %v5542 = vsub.f32 %v5520, %v5539
        %v5543 = vsub.f32 %v5521, %v5539
        %v5544 = vsub.f32 %v5522, %v5540
        %v5545 = vsub.f32 %v5523, %v5540
        %v5546 = vsub.f32 %v5524, %v5541
        %v5547 = vsub.f32 %v5525, %v5541
        %v5548 = vmul.f32 %v5542, %v5542
        %v5549 = vmul.f32 %v5543, %v5543
        %v5550 = vmul.f32 %v5544, %v5544
        %v5551 = vmul.f32 %v5545, %v5545
        %v5552 = vmul.f32 %v5546, %v5546
        %v5553 = vmul.f32 %v5547, %v5547
        %v5554 = vadd.f32 %v5548, %v5549
        %5555 = vadd.xlane.f32.xlu0 %v5554
        %v5556 = vpop.xlane.xlu0 %5555
        %v5557 = vadd.f32 %v5550, %v5551
        %5558 = vadd.xlane.f32.xlu0 %v5557
        %v5559 = vpop.xlane.xlu0 %5558
        %v5560 = vadd.f32 %v5552, %v5553
        %5561 = vadd.xlane.f32.xlu0 %v5560
        %v5562 = vpop.xlane.xlu0 %5561
        %v5563 = vmul.f32 %v5556, %v794
        %v5564 = vmul.f32 %v5559, %v794
        %v5565 = vmul.f32 %v5562, %v794
        %v5566 = vadd.f32 %v5563, 1e-06
        %v5567 = vadd.f32 %v5564, 1e-06
        %v5568 = vadd.f32 %v5565, 1e-06
        %v5569 = vrsqrt.pop %v5566
        %v5570 = vrsqrt.pop %v5567
        %v5571 = vrsqrt.pop %v5568
        %v5572 = vmul.f32 %v5542, %v5569
        %v5573 = vmul.f32 %v5543, %v5569
        %v5574 = vmul.f32 %v5544, %v5570
        %v5575 = vmul.f32 %v5545, %v5570
        %v5576 = vmul.f32 %v5546, %v5571
        %v5577 = vmul.f32 %v5547, %v5571
        %v5579 = vlaneseq
        %v5580 = vshrl.u32 %v5579, 7
        %v5581 = vsub.s32 0, %v5580
        %v5582 = vrot.slane %v5527, %v5581
        %v5583 = vlaneseq
        %v5584 = vshrl.u32 %v5583, 7
        %v5585 = vsub.s32 1, %v5584
        %v5586 = vrot.slane %v5527, %v5585
        %v5589 = vmul.f32 %v5572, %v5582
        %v5590 = vmul.f32 %v5573, %v5586
        %v5591 = vmul.f32 %v5574, %v5582
        %v5592 = vmul.f32 %v5575, %v5586
        %v5593 = vmul.f32 %v5576, %v5582
        %v5594 = vmul.f32 %v5577, %v5586
        %v5596 = vlaneseq
        %v5597 = vshrl.u32 %v5596, 7
        %v5598 = vsub.s32 0, %v5597
        %v5599 = vrot.slane %v5529, %v5598
        %v5600 = vlaneseq
        %v5601 = vshrl.u32 %v5600, 7
        %v5602 = vsub.s32 1, %v5601
        %v5603 = vrot.slane %v5529, %v5602
        %v5606 = vadd.f32 %v5589, %v5599
        %v5607 = vadd.f32 %v5590, %v5603
        %v5608 = vadd.f32 %v5591, %v5599
        %v5609 = vadd.f32 %v5592, %v5603
        %v5610 = vadd.f32 %v5593, %v5599
        %v5611 = vadd.f32 %v5594, %v5603
        %v5612 = vpack.c.bf16 %v5608, %v5606
        %v5613 = vpack.c.bf16 %v5609, %v5607
        %v5614 = vpack.c.bf16 %v5610, %v5610
        %v5615 = vpack.c.bf16 %v5611, %v5611
        %s5616 = scalar_lea.vmem [#allocation16], 512
        %v5617 = vld [vmem:[%s5616] sm:$0xff]
        %v5618 = vld [vmem:[%s5616 + $0x8] sm:$0xff]
        %v5619 = vld [vmem:[%s5616 + $0x10] sm:$0xff]
        %v5620 = vld [vmem:[%s5616 + $0x18] sm:$0xff]
        %v5621 = vld [vmem:[%s5616 + $0x20] sm:$0xff]
        %v5622 = vld [vmem:[%s5616 + $0x28] sm:$0xff]
        %v5623 = vld [vmem:[%s5616 + $0x30] sm:$0xff]
        %v5624 = vld [vmem:[%s5616 + $0x38] sm:$0xff]
        %v5625 = vld [vmem:[%s5616 + $0x40] sm:$0xff]
        %v5626 = vld [vmem:[%s5616 + $0x48] sm:$0xff]
        %v5627 = vld [vmem:[%s5616 + $0x50] sm:$0xff]
        %v5628 = vld [vmem:[%s5616 + $0x58] sm:$0xff]
        %v5629 = vld [vmem:[%s5616 + $0x60] sm:$0xff]
        %v5630 = vld [vmem:[%s5616 + $0x68] sm:$0xff]
        %v5631 = vld [vmem:[%s5616 + $0x70] sm:$0xff]
        %v5632 = vld [vmem:[%s5616 + $0x78] sm:$0xff]
        %v5633 = vld [vmem:[%s5616 + $0x80] sm:$0xff]
        %v5634 = vld [vmem:[%s5616 + $0x88] sm:$0xff]
        %v5635 = vld [vmem:[%s5616 + $0x90] sm:$0xff]
        %v5636 = vld [vmem:[%s5616 + $0x98] sm:$0xff]
        %v5637 = vld [vmem:[%s5616 + $0xa0] sm:$0xff]
        %v5638 = vld [vmem:[%s5616 + $0xa8] sm:$0xff]
        %v5639 = vld [vmem:[%s5616 + $0xb0] sm:$0xff]
        %v5640 = vld [vmem:[%s5616 + $0xb8] sm:$0xff]
        %v5641 = vld [vmem:[%s5616 + $0xc0] sm:$0xff]
        %v5642 = vld [vmem:[%s5616 + $0xc8] sm:$0xff]
        %v5643 = vld [vmem:[%s5616 + $0xd0] sm:$0xff]
        %v5644 = vld [vmem:[%s5616 + $0xd8] sm:$0xff]
        %v5645 = vld [vmem:[%s5616 + $0xe0] sm:$0xff]
        %v5646 = vld [vmem:[%s5616 + $0xe8] sm:$0xff]
        %v5647 = vld [vmem:[%s5616 + $0xf0] sm:$0xff]
        %v5648 = vld [vmem:[%s5616 + $0xf8] sm:$0xff]
        %v5649 = vld [vmem:[%s5616 + $0x100] sm:$0xff]
        %v5650 = vld [vmem:[%s5616 + $0x108] sm:$0xff]
        %v5651 = vld [vmem:[%s5616 + $0x110] sm:$0xff]
        %v5652 = vld [vmem:[%s5616 + $0x118] sm:$0xff]
        %v5653 = vld [vmem:[%s5616 + $0x120] sm:$0xff]
        %v5654 = vld [vmem:[%s5616 + $0x128] sm:$0xff]
        %v5655 = vld [vmem:[%s5616 + $0x130] sm:$0xff]
        %v5656 = vld [vmem:[%s5616 + $0x138] sm:$0xff]
        %v5657 = vld [vmem:[%s5616 + $0x140] sm:$0xff]
        %v5658 = vld [vmem:[%s5616 + $0x148] sm:$0xff]
        %v5659 = vld [vmem:[%s5616 + $0x150] sm:$0xff]
        %v5660 = vld [vmem:[%s5616 + $0x158] sm:$0xff]
        %v5661 = vld [vmem:[%s5616 + $0x160] sm:$0xff]
        %v5662 = vld [vmem:[%s5616 + $0x168] sm:$0xff]
        %v5663 = vld [vmem:[%s5616 + $0x170] sm:$0xff]
        %v5664 = vld [vmem:[%s5616 + $0x178] sm:$0xff]
        %v5665 = vld [vmem:[%s5616 + $0x180] sm:$0xff]
        %v5666 = vld [vmem:[%s5616 + $0x188] sm:$0xff]
        %v5667 = vld [vmem:[%s5616 + $0x190] sm:$0xff]
        %v5668 = vld [vmem:[%s5616 + $0x198] sm:$0xff]
        %v5669 = vld [vmem:[%s5616 + $0x1a0] sm:$0xff]
        %v5670 = vld [vmem:[%s5616 + $0x1a8] sm:$0xff]
        %v5671 = vld [vmem:[%s5616 + $0x1b0] sm:$0xff]
        %v5672 = vld [vmem:[%s5616 + $0x1b8] sm:$0xff]
        %v5673 = vld [vmem:[%s5616 + $0x1c0] sm:$0xff]
        %v5674 = vld [vmem:[%s5616 + $0x1c8] sm:$0xff]
        %v5675 = vld [vmem:[%s5616 + $0x1d0] sm:$0xff]
        %v5676 = vld [vmem:[%s5616 + $0x1d8] sm:$0xff]
        %v5677 = vld [vmem:[%s5616 + $0x1e0] sm:$0xff]
        %v5678 = vld [vmem:[%s5616 + $0x1e8] sm:$0xff]
        %v5679 = vld [vmem:[%s5616 + $0x1f0] sm:$0xff]
        %v5680 = vld [vmem:[%s5616 + $0x1f8] sm:$0xff]
        %s5681 = scalar_lea.vmem %s11, 4
        %v5682 = vld [vmem:[%s5681] sm:$0xf]
        %v5684 = vlaneseq
        %v5685 = vshrl.u32 %v5684, 7
        %v5686 = vsub.s32 0, %v5685
        %v5687 = vrot.slane %v5682, %v5686
        %v5688 = vlaneseq
        %v5689 = vshrl.u32 %v5688, 7
        %v5690 = vsub.s32 1, %v5689
        %v5691 = vrot.slane %v5682, %v5690
        %v5692 = vlaneseq
        %v5693 = vshrl.u32 %v5692, 7
        %v5694 = vsub.s32 2, %v5693
        %v5695 = vrot.slane %v5682, %v5694
        %v5696 = vlaneseq
        %v5697 = vshrl.u32 %v5696, 7
        %v5698 = vsub.s32 3, %v5697
        %v5699 = vrot.slane %v5682, %v5698
        %v5768 = vunpack.c.l.b16 %v5617
        %v5769 = vunpack.c.h.b16 %v5617
        %v5770 = vunpack.c.l.b16 %v5618
        %v5771 = vunpack.c.h.b16 %v5618
        %v5772 = vunpack.c.l.b16 %v5619
        %v5773 = vunpack.c.h.b16 %v5619
        %v5774 = vunpack.c.l.b16 %v5620
        %v5775 = vunpack.c.h.b16 %v5620
        %v5776 = vunpack.c.l.b16 %v5621
        %v5777 = vunpack.c.h.b16 %v5621
        %v5778 = vunpack.c.l.b16 %v5622
        %v5779 = vunpack.c.h.b16 %v5622
        %v5780 = vunpack.c.l.b16 %v5623
        %v5781 = vunpack.c.h.b16 %v5623
        %v5782 = vunpack.c.l.b16 %v5624
        %v5783 = vunpack.c.h.b16 %v5624
        %v5784 = vunpack.c.l.b16 %v5625
        %v5785 = vunpack.c.h.b16 %v5625
        %v5786 = vunpack.c.l.b16 %v5626
        %v5787 = vunpack.c.h.b16 %v5626
        %v5788 = vunpack.c.l.b16 %v5627
        %v5789 = vunpack.c.h.b16 %v5627
        %v5790 = vunpack.c.l.b16 %v5628
        %v5791 = vunpack.c.h.b16 %v5628
        %v5792 = vunpack.c.l.b16 %v5629
        %v5793 = vunpack.c.h.b16 %v5629
        %v5794 = vunpack.c.l.b16 %v5630
        %v5795 = vunpack.c.h.b16 %v5630
        %v5796 = vunpack.c.l.b16 %v5631
        %v5797 = vunpack.c.h.b16 %v5631
        %v5798 = vunpack.c.l.b16 %v5632
        %v5799 = vunpack.c.h.b16 %v5632
        %v5800 = vunpack.c.l.b16 %v5633
        %v5801 = vunpack.c.h.b16 %v5633
        %v5802 = vunpack.c.l.b16 %v5634
        %v5803 = vunpack.c.h.b16 %v5634
        %v5804 = vunpack.c.l.b16 %v5635
        %v5805 = vunpack.c.h.b16 %v5635
        %v5806 = vunpack.c.l.b16 %v5636
        %v5807 = vunpack.c.h.b16 %v5636
        %v5808 = vunpack.c.l.b16 %v5637
        %v5809 = vunpack.c.h.b16 %v5637
        %v5810 = vunpack.c.l.b16 %v5638
        %v5811 = vunpack.c.h.b16 %v5638
        %v5812 = vunpack.c.l.b16 %v5639
        %v5813 = vunpack.c.h.b16 %v5639
        %v5814 = vunpack.c.l.b16 %v5640
        %v5815 = vunpack.c.h.b16 %v5640
        %v5816 = vunpack.c.l.b16 %v5641
        %v5817 = vunpack.c.h.b16 %v5641
        %v5818 = vunpack.c.l.b16 %v5642
        %v5819 = vunpack.c.h.b16 %v5642
        %v5820 = vunpack.c.l.b16 %v5643
        %v5821 = vunpack.c.h.b16 %v5643
        %v5822 = vunpack.c.l.b16 %v5644
        %v5823 = vunpack.c.h.b16 %v5644
        %v5824 = vunpack.c.l.b16 %v5645
        %v5825 = vunpack.c.h.b16 %v5645
        %v5826 = vunpack.c.l.b16 %v5646
        %v5827 = vunpack.c.h.b16 %v5646
        %v5828 = vunpack.c.l.b16 %v5647
        %v5829 = vunpack.c.h.b16 %v5647
        %v5830 = vunpack.c.l.b16 %v5648
        %v5831 = vunpack.c.h.b16 %v5648
        %v5832 = vunpack.c.l.b16 %v5649
        %v5833 = vunpack.c.h.b16 %v5649
        %v5834 = vunpack.c.l.b16 %v5650
        %v5835 = vunpack.c.h.b16 %v5650
        %v5836 = vunpack.c.l.b16 %v5651
        %v5837 = vunpack.c.h.b16 %v5651
        %v5838 = vunpack.c.l.b16 %v5652
        %v5839 = vunpack.c.h.b16 %v5652
        %v5840 = vunpack.c.l.b16 %v5653
        %v5841 = vunpack.c.h.b16 %v5653
        %v5842 = vunpack.c.l.b16 %v5654
        %v5843 = vunpack.c.h.b16 %v5654
        %v5844 = vunpack.c.l.b16 %v5655
        %v5845 = vunpack.c.h.b16 %v5655
        %v5846 = vunpack.c.l.b16 %v5656
        %v5847 = vunpack.c.h.b16 %v5656
        %v5848 = vunpack.c.l.b16 %v5657
        %v5849 = vunpack.c.h.b16 %v5657
        %v5850 = vunpack.c.l.b16 %v5658
        %v5851 = vunpack.c.h.b16 %v5658
        %v5852 = vunpack.c.l.b16 %v5659
        %v5853 = vunpack.c.h.b16 %v5659
        %v5854 = vunpack.c.l.b16 %v5660
        %v5855 = vunpack.c.h.b16 %v5660
        %v5856 = vunpack.c.l.b16 %v5661
        %v5857 = vunpack.c.h.b16 %v5661
        %v5858 = vunpack.c.l.b16 %v5662
        %v5859 = vunpack.c.h.b16 %v5662
        %v5860 = vunpack.c.l.b16 %v5663
        %v5861 = vunpack.c.h.b16 %v5663
        %v5862 = vunpack.c.l.b16 %v5664
        %v5863 = vunpack.c.h.b16 %v5664
        %v5864 = vunpack.c.l.b16 %v5665
        %v5865 = vunpack.c.h.b16 %v5665
        %v5866 = vunpack.c.l.b16 %v5666
        %v5867 = vunpack.c.h.b16 %v5666
        %v5868 = vunpack.c.l.b16 %v5667
        %v5869 = vunpack.c.h.b16 %v5667
        %v5870 = vunpack.c.l.b16 %v5668
        %v5871 = vunpack.c.h.b16 %v5668
        %v5872 = vunpack.c.l.b16 %v5669
        %v5873 = vunpack.c.h.b16 %v5669
        %v5874 = vunpack.c.l.b16 %v5670
        %v5875 = vunpack.c.h.b16 %v5670
        %v5876 = vunpack.c.l.b16 %v5671
        %v5877 = vunpack.c.h.b16 %v5671
        %v5878 = vunpack.c.l.b16 %v5672
        %v5879 = vunpack.c.h.b16 %v5672
        %v5880 = vunpack.c.l.b16 %v5673
        %v5881 = vunpack.c.h.b16 %v5673
        %v5882 = vunpack.c.l.b16 %v5674
        %v5883 = vunpack.c.h.b16 %v5674
        %v5884 = vunpack.c.l.b16 %v5675
        %v5885 = vunpack.c.h.b16 %v5675
        %v5886 = vunpack.c.l.b16 %v5676
        %v5887 = vunpack.c.h.b16 %v5676
        %v5888 = vunpack.c.l.b16 %v5677
        %v5889 = vunpack.c.h.b16 %v5677
        %v5890 = vunpack.c.l.b16 %v5678
        %v5891 = vunpack.c.h.b16 %v5678
        %v5892 = vunpack.c.l.b16 %v5679
        %v5893 = vunpack.c.h.b16 %v5679
        %v5894 = vunpack.c.l.b16 %v5680
        %v5895 = vunpack.c.h.b16 %v5680
        %v5896 = vpack.c.b16 %v5772, %v5768
        %v5897 = vpack.c.b16 %v5773, %v5769
        %v5898 = vpack.c.b16 %v5774, %v5770
        %v5899 = vpack.c.b16 %v5775, %v5771
        %v5900 = vpack.c.b16 %v5780, %v5776
        %v5901 = vpack.c.b16 %v5781, %v5777
        %v5902 = vpack.c.b16 %v5782, %v5778
        %v5903 = vpack.c.b16 %v5783, %v5779
        %v5904 = vpack.c.b16 %v5788, %v5784
        %v5905 = vpack.c.b16 %v5789, %v5785
        %v5906 = vpack.c.b16 %v5790, %v5786
        %v5907 = vpack.c.b16 %v5791, %v5787
        %v5908 = vpack.c.b16 %v5796, %v5792
        %v5909 = vpack.c.b16 %v5797, %v5793
        %v5910 = vpack.c.b16 %v5798, %v5794
        %v5911 = vpack.c.b16 %v5799, %v5795
        %v5912 = vpack.c.b16 %v5804, %v5800
        %v5913 = vpack.c.b16 %v5805, %v5801
        %v5914 = vpack.c.b16 %v5806, %v5802
        %v5915 = vpack.c.b16 %v5807, %v5803
        %v5916 = vpack.c.b16 %v5812, %v5808
        %v5917 = vpack.c.b16 %v5813, %v5809
        %v5918 = vpack.c.b16 %v5814, %v5810
        %v5919 = vpack.c.b16 %v5815, %v5811
        %v5920 = vpack.c.b16 %v5820, %v5816
        %v5921 = vpack.c.b16 %v5821, %v5817
        %v5922 = vpack.c.b16 %v5822, %v5818
        %v5923 = vpack.c.b16 %v5823, %v5819
        %v5924 = vpack.c.b16 %v5828, %v5824
        %v5925 = vpack.c.b16 %v5829, %v5825
        %v5926 = vpack.c.b16 %v5830, %v5826
        %v5927 = vpack.c.b16 %v5831, %v5827
        %v5928 = vpack.c.b16 %v5836, %v5832
        %v5929 = vpack.c.b16 %v5837, %v5833
        %v5930 = vpack.c.b16 %v5838, %v5834
        %v5931 = vpack.c.b16 %v5839, %v5835
        %v5932 = vpack.c.b16 %v5844, %v5840
        %v5933 = vpack.c.b16 %v5845, %v5841
        %v5934 = vpack.c.b16 %v5846, %v5842
        %v5935 = vpack.c.b16 %v5847, %v5843
        %v5936 = vpack.c.b16 %v5852, %v5848
        %v5937 = vpack.c.b16 %v5853, %v5849
        %v5938 = vpack.c.b16 %v5854, %v5850
        %v5939 = vpack.c.b16 %v5855, %v5851
        %v5940 = vpack.c.b16 %v5860, %v5856
        %v5941 = vpack.c.b16 %v5861, %v5857
        %v5942 = vpack.c.b16 %v5862, %v5858
        %v5943 = vpack.c.b16 %v5863, %v5859
        %v5944 = vpack.c.b16 %v5868, %v5864
        %v5945 = vpack.c.b16 %v5869, %v5865
        %v5946 = vpack.c.b16 %v5870, %v5866
        %v5947 = vpack.c.b16 %v5871, %v5867
        %v5948 = vpack.c.b16 %v5876, %v5872
        %v5949 = vpack.c.b16 %v5877, %v5873
        %v5950 = vpack.c.b16 %v5878, %v5874
        %v5951 = vpack.c.b16 %v5879, %v5875
        %v5952 = vpack.c.b16 %v5884, %v5880
        %v5953 = vpack.c.b16 %v5885, %v5881
        %v5954 = vpack.c.b16 %v5886, %v5882
        %v5955 = vpack.c.b16 %v5887, %v5883
        %v5956 = vpack.c.b16 %v5892, %v5888
        %v5957 = vpack.c.b16 %v5893, %v5889
        %v5958 = vpack.c.b16 %v5894, %v5890
        %v5959 = vpack.c.b16 %v5895, %v5891
        %6024 = vmatprep.subr.bf16.mxu0 %v5925
        %6025 = vmatpush1.bf16.msra.mxu0 %v5924
        %6026 = vmatprep.subr.bf16.mxu0 %v5921
        %6027 = vmatpush1.bf16.msra.mxu0 %v5920
        %6028 = vmatprep.subr.bf16.mxu0 %v5917
        %6029 = vmatpush1.bf16.msra.mxu0 %v5916
        %6030 = vmatprep.subr.bf16.mxu0 %v5913
        %6031 = vmatpush1.bf16.msra.mxu0 %v5912
        %6032 = vmatprep.subr.bf16.mxu0 %v5909
        %6033 = vmatpush1.bf16.msra.mxu0 %v5908
        %6034 = vmatprep.subr.bf16.mxu0 %v5905
        %6035 = vmatpush1.bf16.msra.mxu0 %v5904
        %6036 = vmatprep.subr.bf16.mxu0 %v5901
        %6037 = vmatpush1.bf16.msra.mxu0 %v5900
        %6038 = vmatprep.subr.bf16.mxu0 %v5897
        %6039 = vmatpush1.bf16.msra.mxu0 %v5896
        %6040 = vmatprep.subr.bf16.mxu0 %v5957
        %6041 = vmatpush2.bf16.msra.mxu0 %v5956
        %6042 = vmatprep.subr.bf16.mxu0 %v5953
        %6043 = vmatpush2.bf16.msra.mxu0 %v5952
        %6044 = vmatprep.subr.bf16.mxu0 %v5949
        %6045 = vmatpush2.bf16.msra.mxu0 %v5948
        %6046 = vmatprep.subr.bf16.mxu0 %v5945
        %6047 = vmatpush2.bf16.msra.mxu0 %v5944
        %6048 = vmatprep.subr.bf16.mxu0 %v5941
        %6049 = vmatpush2.bf16.msra.mxu0 %v5940
        %6050 = vmatprep.subr.bf16.mxu0 %v5937
        %6051 = vmatpush2.bf16.msra.mxu0 %v5936
        %6052 = vmatprep.subr.bf16.mxu0 %v5933
        %6053 = vmatpush2.bf16.msra.mxu0 %v5932
        %6054 = vmatprep.subr.bf16.mxu0 %v5929
        %6055 = vmatpush2.bf16.msra.mxu0 %v5928
        %6056 = vmatprep.mubr.bf16.mxu0 %v5613
        %6057 = vmatmul.mubr.bf16.gmra.mxu0 %v5612
        %v6058 = vpop.f32.mrf.mxu0
        %v6059 = vadd.f32 %v5687, %v6058
        %v6060 = vpop.f32.mrf.mxu0
        %v6061 = vadd.f32 %v5691, %v6060
        %v6062 = vpop.f32.mrf.mxu0
        %v6063 = vadd.f32 %v5687, %v6062
        %v6064 = vpop.f32.mrf.mxu0
        %v6065 = vadd.f32 %v5691, %v6064
        %6066 = vmatprep.mubr.bf16.mxu0 %v5615
        %6067 = vmatmul.mubr.bf16.gmra.mxu0 %v5614
        %v6068 = vpop.f32.mrf.mxu0
        %v6069 = vadd.f32 %v5687, %v6068
        %v6070 = vpop.f32.mrf.mxu0
        %v6071 = vadd.f32 %v5691, %v6070
        %v6072 = vpop.f32.mrf.mxu0
        %v6073 = vpop.f32.mrf.mxu0
        %6074 = vdwg.mxu0
        %6075 = vmatprep.subr.bf16.mxu0 %v5927
        %6076 = vmatpush1.bf16.msra.mxu0 %v5926
        %6077 = vmatprep.subr.bf16.mxu0 %v5923
        %6078 = vmatpush1.bf16.msra.mxu0 %v5922
        %6079 = vmatprep.subr.bf16.mxu0 %v5919
        %6080 = vmatpush1.bf16.msra.mxu0 %v5918
        %6081 = vmatprep.subr.bf16.mxu0 %v5915
        %6082 = vmatpush1.bf16.msra.mxu0 %v5914
        %6083 = vmatprep.subr.bf16.mxu0 %v5911
        %6084 = vmatpush1.bf16.msra.mxu0 %v5910
        %6085 = vmatprep.subr.bf16.mxu0 %v5907
        %6086 = vmatpush1.bf16.msra.mxu0 %v5906
        %6087 = vmatprep.subr.bf16.mxu0 %v5903
        %6088 = vmatpush1.bf16.msra.mxu0 %v5902
        %6089 = vmatprep.subr.bf16.mxu0 %v5899
        %6090 = vmatpush1.bf16.msra.mxu0 %v5898
        %6091 = vmatprep.subr.bf16.mxu0 %v5959
        %6092 = vmatpush2.bf16.msra.mxu0 %v5958
        %6093 = vmatprep.subr.bf16.mxu0 %v5955
        %6094 = vmatpush2.bf16.msra.mxu0 %v5954
        %6095 = vmatprep.subr.bf16.mxu0 %v5951
        %6096 = vmatpush2.bf16.msra.mxu0 %v5950
        %6097 = vmatprep.subr.bf16.mxu0 %v5947
        %6098 = vmatpush2.bf16.msra.mxu0 %v5946
        %6099 = vmatprep.subr.bf16.mxu0 %v5943
        %6100 = vmatpush2.bf16.msra.mxu0 %v5942
        %6101 = vmatprep.subr.bf16.mxu0 %v5939
        %6102 = vmatpush2.bf16.msra.mxu0 %v5938
        %6103 = vmatprep.subr.bf16.mxu0 %v5935
        %6104 = vmatpush2.bf16.msra.mxu0 %v5934
        %6105 = vmatprep.subr.bf16.mxu0 %v5931
        %6106 = vmatpush2.bf16.msra.mxu0 %v5930
        %6107 = vmatprep.mubr.bf16.mxu0 %v5613
        %6108 = vmatmul.mubr.bf16.gmra.mxu0 %v5612
        %v6109 = vpop.f32.mrf.mxu0
        %v6110 = vadd.f32 %v5695, %v6109
        %v6111 = vpop.f32.mrf.mxu0
        %v6112 = vadd.f32 %v5699, %v6111
        %v6113 = vpop.f32.mrf.mxu0
        %v6114 = vadd.f32 %v5695, %v6113
        %v6115 = vpop.f32.mrf.mxu0
        %v6116 = vadd.f32 %v5699, %v6115
        %6117 = vmatprep.mubr.bf16.mxu0 %v5615
        %6118 = vmatmul.mubr.bf16.gmra.mxu0 %v5614
        %v6119 = vpop.f32.mrf.mxu0
        %v6120 = vadd.f32 %v5695, %v6119
        %v6121 = vpop.f32.mrf.mxu0
        %v6122 = vadd.f32 %v5699, %v6121
        %v6123 = vpop.f32.mrf.mxu0
        %v6124 = vpop.f32.mrf.mxu0
        %6125 = vdwg.mxu0
        %v6126 = vmul.f32 %v6059, 0.5
        %v6127 = vmul.f32 %v6061, 0.5
        %v6128 = vmul.f32 %v6110, 0.5
        %v6129 = vmul.f32 %v6112, 0.5
        %v6130 = vmul.f32 %v6063, 0.5
        %v6131 = vmul.f32 %v6065, 0.5
        %v6132 = vmul.f32 %v6114, 0.5
        %v6133 = vmul.f32 %v6116, 0.5
        %v6134 = vmul.f32 %v6069, 0.5
        %v6135 = vmul.f32 %v6071, 0.5
        %v6136 = vmul.f32 %v6120, 0.5
        %v6137 = vmul.f32 %v6122, 0.5
        %v6138 = vmul.f32 %v6059, 0.70710677
        %v6139 = vmul.f32 %v6061, 0.70710677
        %v6140 = vmul.f32 %v6110, 0.70710677
        %v6141 = vmul.f32 %v6112, 0.70710677
        %v6142 = vmul.f32 %v6063, 0.70710677
        %v6143 = vmul.f32 %v6065, 0.70710677
        %v6144 = vmul.f32 %v6114, 0.70710677
        %v6145 = vmul.f32 %v6116, 0.70710677
        %v6146 = vmul.f32 %v6069, 0.70710677
        %v6147 = vmul.f32 %v6071, 0.70710677
        %v6148 = vmul.f32 %v6120, 0.70710677
        %v6149 = vmul.f32 %v6122, 0.70710677
        %v6150 = verf.f32.pop %v6138
        %v6151 = verf.f32.pop %v6139
        %v6152 = verf.f32.pop %v6140
        %v6153 = verf.f32.pop %v6141
        %v6154 = verf.f32.pop %v6142
        %v6155 = verf.f32.pop %v6143
        %v6156 = verf.f32.pop %v6144
        %v6157 = verf.f32.pop %v6145
        %v6158 = verf.f32.pop %v6146
        %v6159 = verf.f32.pop %v6147
        %v6160 = verf.f32.pop %v6148
        %v6161 = verf.f32.pop %v6149
        %v6162 = vadd.f32 %v6150, 1.0
        %v6163 = vadd.f32 %v6151, 1.0
        %v6164 = vadd.f32 %v6152, 1.0
        %v6165 = vadd.f32 %v6153, 1.0
        %v6166 = vadd.f32 %v6154, 1.0
        %v6167 = vadd.f32 %v6155, 1.0
        %v6168 = vadd.f32 %v6156, 1.0
        %v6169 = vadd.f32 %v6157, 1.0
        %v6170 = vadd.f32 %v6158, 1.0
        %v6171 = vadd.f32 %v6159, 1.0
        %v6172 = vadd.f32 %v6160, 1.0
        %v6173 = vadd.f32 %v6161, 1.0
        %v6174 = vmul.f32 %v6126, %v6162
        %v6175 = vmul.f32 %v6127, %v6163
        %v6176 = vmul.f32 %v6128, %v6164
        %v6177 = vmul.f32 %v6129, %v6165
        %v6178 = vmul.f32 %v6130, %v6166
        %v6179 = vmul.f32 %v6131, %v6167
        %v6180 = vmul.f32 %v6132, %v6168
        %v6181 = vmul.f32 %v6133, %v6169
        %v6182 = vmul.f32 %v6134, %v6170
        %v6183 = vmul.f32 %v6135, %v6171
        %v6184 = vmul.f32 %v6136, %v6172
        %v6185 = vmul.f32 %v6137, %v6173
        %v6186 = vpack.c.bf16 %v6178, %v6174
        %v6187 = vpack.c.bf16 %v6179, %v6175
        %v6188 = vpack.c.bf16 %v6180, %v6176
        %v6189 = vpack.c.bf16 %v6181, %v6177
        %v6190 = vpack.c.bf16 %v6182, %v6182
        %v6191 = vpack.c.bf16 %v6183, %v6183
        %v6192 = vpack.c.bf16 %v6184, %v6184
        %v6193 = vpack.c.bf16 %v6185, %v6185
        %s6194 = scalar_lea.vmem [#allocation17], 512
        %v6195 = vld [vmem:[%s6194] sm:$0xff]
        %v6196 = vld [vmem:[%s6194 + $0x8] sm:$0xff]
        %v6197 = vld [vmem:[%s6194 + $0x10] sm:$0xff]
        %v6198 = vld [vmem:[%s6194 + $0x18] sm:$0xff]
        %v6199 = vld [vmem:[%s6194 + $0x20] sm:$0xff]
        %v6200 = vld [vmem:[%s6194 + $0x28] sm:$0xff]
        %v6201 = vld [vmem:[%s6194 + $0x30] sm:$0xff]
        %v6202 = vld [vmem:[%s6194 + $0x38] sm:$0xff]
        %v6203 = vld [vmem:[%s6194 + $0x40] sm:$0xff]
        %v6204 = vld [vmem:[%s6194 + $0x48] sm:$0xff]
        %v6205 = vld [vmem:[%s6194 + $0x50] sm:$0xff]
        %v6206 = vld [vmem:[%s6194 + $0x58] sm:$0xff]
        %v6207 = vld [vmem:[%s6194 + $0x60] sm:$0xff]
        %v6208 = vld [vmem:[%s6194 + $0x68] sm:$0xff]
        %v6209 = vld [vmem:[%s6194 + $0x70] sm:$0xff]
        %v6210 = vld [vmem:[%s6194 + $0x78] sm:$0xff]
        %v6211 = vld [vmem:[%s6194 + $0x80] sm:$0xff]
        %v6212 = vld [vmem:[%s6194 + $0x88] sm:$0xff]
        %v6213 = vld [vmem:[%s6194 + $0x90] sm:$0xff]
        %v6214 = vld [vmem:[%s6194 + $0x98] sm:$0xff]
        %v6215 = vld [vmem:[%s6194 + $0xa0] sm:$0xff]
        %v6216 = vld [vmem:[%s6194 + $0xa8] sm:$0xff]
        %v6217 = vld [vmem:[%s6194 + $0xb0] sm:$0xff]
        %v6218 = vld [vmem:[%s6194 + $0xb8] sm:$0xff]
        %v6219 = vld [vmem:[%s6194 + $0xc0] sm:$0xff]
        %v6220 = vld [vmem:[%s6194 + $0xc8] sm:$0xff]
        %v6221 = vld [vmem:[%s6194 + $0xd0] sm:$0xff]
        %v6222 = vld [vmem:[%s6194 + $0xd8] sm:$0xff]
        %v6223 = vld [vmem:[%s6194 + $0xe0] sm:$0xff]
        %v6224 = vld [vmem:[%s6194 + $0xe8] sm:$0xff]
        %v6225 = vld [vmem:[%s6194 + $0xf0] sm:$0xff]
        %v6226 = vld [vmem:[%s6194 + $0xf8] sm:$0xff]
        %v6227 = vld [vmem:[%s6194 + $0x100] sm:$0xff]
        %v6228 = vld [vmem:[%s6194 + $0x108] sm:$0xff]
        %v6229 = vld [vmem:[%s6194 + $0x110] sm:$0xff]
        %v6230 = vld [vmem:[%s6194 + $0x118] sm:$0xff]
        %v6231 = vld [vmem:[%s6194 + $0x120] sm:$0xff]
        %v6232 = vld [vmem:[%s6194 + $0x128] sm:$0xff]
        %v6233 = vld [vmem:[%s6194 + $0x130] sm:$0xff]
        %v6234 = vld [vmem:[%s6194 + $0x138] sm:$0xff]
        %v6235 = vld [vmem:[%s6194 + $0x140] sm:$0xff]
        %v6236 = vld [vmem:[%s6194 + $0x148] sm:$0xff]
        %v6237 = vld [vmem:[%s6194 + $0x150] sm:$0xff]
        %v6238 = vld [vmem:[%s6194 + $0x158] sm:$0xff]
        %v6239 = vld [vmem:[%s6194 + $0x160] sm:$0xff]
        %v6240 = vld [vmem:[%s6194 + $0x168] sm:$0xff]
        %v6241 = vld [vmem:[%s6194 + $0x170] sm:$0xff]
        %v6242 = vld [vmem:[%s6194 + $0x178] sm:$0xff]
        %v6243 = vld [vmem:[%s6194 + $0x180] sm:$0xff]
        %v6244 = vld [vmem:[%s6194 + $0x188] sm:$0xff]
        %v6245 = vld [vmem:[%s6194 + $0x190] sm:$0xff]
        %v6246 = vld [vmem:[%s6194 + $0x198] sm:$0xff]
        %v6247 = vld [vmem:[%s6194 + $0x1a0] sm:$0xff]
        %v6248 = vld [vmem:[%s6194 + $0x1a8] sm:$0xff]
        %v6249 = vld [vmem:[%s6194 + $0x1b0] sm:$0xff]
        %v6250 = vld [vmem:[%s6194 + $0x1b8] sm:$0xff]
        %v6251 = vld [vmem:[%s6194 + $0x1c0] sm:$0xff]
        %v6252 = vld [vmem:[%s6194 + $0x1c8] sm:$0xff]
        %v6253 = vld [vmem:[%s6194 + $0x1d0] sm:$0xff]
        %v6254 = vld [vmem:[%s6194 + $0x1d8] sm:$0xff]
        %v6255 = vld [vmem:[%s6194 + $0x1e0] sm:$0xff]
        %v6256 = vld [vmem:[%s6194 + $0x1e8] sm:$0xff]
        %v6257 = vld [vmem:[%s6194 + $0x1f0] sm:$0xff]
        %v6258 = vld [vmem:[%s6194 + $0x1f8] sm:$0xff]
        %s6259 = scalar_lea.vmem %s13, 2
        %v6260 = vld [vmem:[%s6259] sm:$0x3]
        %v6262 = vlaneseq
        %v6263 = vshrl.u32 %v6262, 7
        %v6264 = vsub.s32 0, %v6263
        %v6265 = vrot.slane %v6260, %v6264
        %v6266 = vlaneseq
        %v6267 = vshrl.u32 %v6266, 7
        %v6268 = vsub.s32 1, %v6267
        %v6269 = vrot.slane %v6260, %v6268
        %v6336 = vunpack.c.l.b16 %v6195
        %v6337 = vunpack.c.h.b16 %v6195
        %v6338 = vunpack.c.l.b16 %v6196
        %v6339 = vunpack.c.h.b16 %v6196
        %v6340 = vunpack.c.l.b16 %v6197
        %v6341 = vunpack.c.h.b16 %v6197
        %v6342 = vunpack.c.l.b16 %v6198
        %v6343 = vunpack.c.h.b16 %v6198
        %v6344 = vunpack.c.l.b16 %v6199
        %v6345 = vunpack.c.h.b16 %v6199
        %v6346 = vunpack.c.l.b16 %v6200
        %v6347 = vunpack.c.h.b16 %v6200
        %v6348 = vunpack.c.l.b16 %v6201
        %v6349 = vunpack.c.h.b16 %v6201
        %v6350 = vunpack.c.l.b16 %v6202
        %v6351 = vunpack.c.h.b16 %v6202
        %v6352 = vunpack.c.l.b16 %v6203
        %v6353 = vunpack.c.h.b16 %v6203
        %v6354 = vunpack.c.l.b16 %v6204
        %v6355 = vunpack.c.h.b16 %v6204
        %v6356 = vunpack.c.l.b16 %v6205
        %v6357 = vunpack.c.h.b16 %v6205
        %v6358 = vunpack.c.l.b16 %v6206
        %v6359 = vunpack.c.h.b16 %v6206
        %v6360 = vunpack.c.l.b16 %v6207
        %v6361 = vunpack.c.h.b16 %v6207
        %v6362 = vunpack.c.l.b16 %v6208
        %v6363 = vunpack.c.h.b16 %v6208
        %v6364 = vunpack.c.l.b16 %v6209
        %v6365 = vunpack.c.h.b16 %v6209
        %v6366 = vunpack.c.l.b16 %v6210
        %v6367 = vunpack.c.h.b16 %v6210
        %v6368 = vunpack.c.l.b16 %v6211
        %v6369 = vunpack.c.h.b16 %v6211
        %v6370 = vunpack.c.l.b16 %v6212
        %v6371 = vunpack.c.h.b16 %v6212
        %v6372 = vunpack.c.l.b16 %v6213
        %v6373 = vunpack.c.h.b16 %v6213
        %v6374 = vunpack.c.l.b16 %v6214
        %v6375 = vunpack.c.h.b16 %v6214
        %v6376 = vunpack.c.l.b16 %v6215
        %v6377 = vunpack.c.h.b16 %v6215
        %v6378 = vunpack.c.l.b16 %v6216
        %v6379 = vunpack.c.h.b16 %v6216
        %v6380 = vunpack.c.l.b16 %v6217
        %v6381 = vunpack.c.h.b16 %v6217
        %v6382 = vunpack.c.l.b16 %v6218
        %v6383 = vunpack.c.h.b16 %v6218
        %v6384 = vunpack.c.l.b16 %v6219
        %v6385 = vunpack.c.h.b16 %v6219
        %v6386 = vunpack.c.l.b16 %v6220
        %v6387 = vunpack.c.h.b16 %v6220
        %v6388 = vunpack.c.l.b16 %v6221
        %v6389 = vunpack.c.h.b16 %v6221
        %v6390 = vunpack.c.l.b16 %v6222
        %v6391 = vunpack.c.h.b16 %v6222
        %v6392 = vunpack.c.l.b16 %v6223
        %v6393 = vunpack.c.h.b16 %v6223
        %v6394 = vunpack.c.l.b16 %v6224
        %v6395 = vunpack.c.h.b16 %v6224
        %v6396 = vunpack.c.l.b16 %v6225
        %v6397 = vunpack.c.h.b16 %v6225
        %v6398 = vunpack.c.l.b16 %v6226
        %v6399 = vunpack.c.h.b16 %v6226
        %v6400 = vunpack.c.l.b16 %v6227
        %v6401 = vunpack.c.h.b16 %v6227
        %v6402 = vunpack.c.l.b16 %v6228
        %v6403 = vunpack.c.h.b16 %v6228
        %v6404 = vunpack.c.l.b16 %v6229
        %v6405 = vunpack.c.h.b16 %v6229
        %v6406 = vunpack.c.l.b16 %v6230
        %v6407 = vunpack.c.h.b16 %v6230
        %v6408 = vunpack.c.l.b16 %v6231
        %v6409 = vunpack.c.h.b16 %v6231
        %v6410 = vunpack.c.l.b16 %v6232
        %v6411 = vunpack.c.h.b16 %v6232
        %v6412 = vunpack.c.l.b16 %v6233
        %v6413 = vunpack.c.h.b16 %v6233
        %v6414 = vunpack.c.l.b16 %v6234
        %v6415 = vunpack.c.h.b16 %v6234
        %v6416 = vunpack.c.l.b16 %v6235
        %v6417 = vunpack.c.h.b16 %v6235
        %v6418 = vunpack.c.l.b16 %v6236
        %v6419 = vunpack.c.h.b16 %v6236
        %v6420 = vunpack.c.l.b16 %v6237
        %v6421 = vunpack.c.h.b16 %v6237
        %v6422 = vunpack.c.l.b16 %v6238
        %v6423 = vunpack.c.h.b16 %v6238
        %v6424 = vunpack.c.l.b16 %v6239
        %v6425 = vunpack.c.h.b16 %v6239
        %v6426 = vunpack.c.l.b16 %v6240
        %v6427 = vunpack.c.h.b16 %v6240
        %v6428 = vunpack.c.l.b16 %v6241
        %v6429 = vunpack.c.h.b16 %v6241
        %v6430 = vunpack.c.l.b16 %v6242
        %v6431 = vunpack.c.h.b16 %v6242
        %v6432 = vunpack.c.l.b16 %v6243
        %v6433 = vunpack.c.h.b16 %v6243
        %v6434 = vunpack.c.l.b16 %v6244
        %v6435 = vunpack.c.h.b16 %v6244
        %v6436 = vunpack.c.l.b16 %v6245
        %v6437 = vunpack.c.h.b16 %v6245
        %v6438 = vunpack.c.l.b16 %v6246
        %v6439 = vunpack.c.h.b16 %v6246
        %v6440 = vunpack.c.l.b16 %v6247
        %v6441 = vunpack.c.h.b16 %v6247
        %v6442 = vunpack.c.l.b16 %v6248
        %v6443 = vunpack.c.h.b16 %v6248
        %v6444 = vunpack.c.l.b16 %v6249
        %v6445 = vunpack.c.h.b16 %v6249
        %v6446 = vunpack.c.l.b16 %v6250
        %v6447 = vunpack.c.h.b16 %v6250
        %v6448 = vunpack.c.l.b16 %v6251
        %v6449 = vunpack.c.h.b16 %v6251
        %v6450 = vunpack.c.l.b16 %v6252
        %v6451 = vunpack.c.h.b16 %v6252
        %v6452 = vunpack.c.l.b16 %v6253
        %v6453 = vunpack.c.h.b16 %v6253
        %v6454 = vunpack.c.l.b16 %v6254
        %v6455 = vunpack.c.h.b16 %v6254
        %v6456 = vunpack.c.l.b16 %v6255
        %v6457 = vunpack.c.h.b16 %v6255
        %v6458 = vunpack.c.l.b16 %v6256
        %v6459 = vunpack.c.h.b16 %v6256
        %v6460 = vunpack.c.l.b16 %v6257
        %v6461 = vunpack.c.h.b16 %v6257
        %v6462 = vunpack.c.l.b16 %v6258
        %v6463 = vunpack.c.h.b16 %v6258
        %v6464 = vpack.c.b16 %v6338, %v6336
        %v6465 = vpack.c.b16 %v6339, %v6337
        %v6466 = vpack.c.b16 %v6342, %v6340
        %v6467 = vpack.c.b16 %v6343, %v6341
        %v6468 = vpack.c.b16 %v6346, %v6344
        %v6469 = vpack.c.b16 %v6347, %v6345
        %v6470 = vpack.c.b16 %v6350, %v6348
        %v6471 = vpack.c.b16 %v6351, %v6349
        %v6472 = vpack.c.b16 %v6354, %v6352
        %v6473 = vpack.c.b16 %v6355, %v6353
        %v6474 = vpack.c.b16 %v6358, %v6356
        %v6475 = vpack.c.b16 %v6359, %v6357
        %v6476 = vpack.c.b16 %v6362, %v6360
        %v6477 = vpack.c.b16 %v6363, %v6361
        %v6478 = vpack.c.b16 %v6366, %v6364
        %v6479 = vpack.c.b16 %v6367, %v6365
        %v6480 = vpack.c.b16 %v6370, %v6368
        %v6481 = vpack.c.b16 %v6371, %v6369
        %v6482 = vpack.c.b16 %v6374, %v6372
        %v6483 = vpack.c.b16 %v6375, %v6373
        %v6484 = vpack.c.b16 %v6378, %v6376
        %v6485 = vpack.c.b16 %v6379, %v6377
        %v6486 = vpack.c.b16 %v6382, %v6380
        %v6487 = vpack.c.b16 %v6383, %v6381
        %v6488 = vpack.c.b16 %v6386, %v6384
        %v6489 = vpack.c.b16 %v6387, %v6385
        %v6490 = vpack.c.b16 %v6390, %v6388
        %v6491 = vpack.c.b16 %v6391, %v6389
        %v6492 = vpack.c.b16 %v6394, %v6392
        %v6493 = vpack.c.b16 %v6395, %v6393
        %v6494 = vpack.c.b16 %v6398, %v6396
        %v6495 = vpack.c.b16 %v6399, %v6397
        %v6496 = vpack.c.b16 %v6402, %v6400
        %v6497 = vpack.c.b16 %v6403, %v6401
        %v6498 = vpack.c.b16 %v6406, %v6404
        %v6499 = vpack.c.b16 %v6407, %v6405
        %v6500 = vpack.c.b16 %v6410, %v6408
        %v6501 = vpack.c.b16 %v6411, %v6409
        %v6502 = vpack.c.b16 %v6414, %v6412
        %v6503 = vpack.c.b16 %v6415, %v6413
        %v6504 = vpack.c.b16 %v6418, %v6416
        %v6505 = vpack.c.b16 %v6419, %v6417
        %v6506 = vpack.c.b16 %v6422, %v6420
        %v6507 = vpack.c.b16 %v6423, %v6421
        %v6508 = vpack.c.b16 %v6426, %v6424
        %v6509 = vpack.c.b16 %v6427, %v6425
        %v6510 = vpack.c.b16 %v6430, %v6428
        %v6511 = vpack.c.b16 %v6431, %v6429
        %v6512 = vpack.c.b16 %v6434, %v6432
        %v6513 = vpack.c.b16 %v6435, %v6433
        %v6514 = vpack.c.b16 %v6438, %v6436
        %v6515 = vpack.c.b16 %v6439, %v6437
        %v6516 = vpack.c.b16 %v6442, %v6440
        %v6517 = vpack.c.b16 %v6443, %v6441
        %v6518 = vpack.c.b16 %v6446, %v6444
        %v6519 = vpack.c.b16 %v6447, %v6445
        %v6520 = vpack.c.b16 %v6450, %v6448
        %v6521 = vpack.c.b16 %v6451, %v6449
        %v6522 = vpack.c.b16 %v6454, %v6452
        %v6523 = vpack.c.b16 %v6455, %v6453
        %v6524 = vpack.c.b16 %v6458, %v6456
        %v6525 = vpack.c.b16 %v6459, %v6457
        %v6526 = vpack.c.b16 %v6462, %v6460
        %v6527 = vpack.c.b16 %v6463, %v6461
        %6592 = vmatprep.subr.bf16.mxu0 %v6479
        %6593 = vmatpush1.bf16.msra.mxu0 %v6478
        %6594 = vmatprep.subr.bf16.mxu0 %v6477
        %6595 = vmatpush1.bf16.msra.mxu0 %v6476
        %6596 = vmatprep.subr.bf16.mxu0 %v6475
        %6597 = vmatpush1.bf16.msra.mxu0 %v6474
        %6598 = vmatprep.subr.bf16.mxu0 %v6473
        %6599 = vmatpush1.bf16.msra.mxu0 %v6472
        %6600 = vmatprep.subr.bf16.mxu0 %v6471
        %6601 = vmatpush1.bf16.msra.mxu0 %v6470
        %6602 = vmatprep.subr.bf16.mxu0 %v6469
        %6603 = vmatpush1.bf16.msra.mxu0 %v6468
        %6604 = vmatprep.subr.bf16.mxu0 %v6467
        %6605 = vmatpush1.bf16.msra.mxu0 %v6466
        %6606 = vmatprep.subr.bf16.mxu0 %v6465
        %6607 = vmatpush1.bf16.msra.mxu0 %v6464
        %6608 = vmatprep.subr.bf16.mxu0 %v6495
        %6609 = vmatpush2.bf16.msra.mxu0 %v6494
        %6610 = vmatprep.subr.bf16.mxu0 %v6493
        %6611 = vmatpush2.bf16.msra.mxu0 %v6492
        %6612 = vmatprep.subr.bf16.mxu0 %v6491
        %6613 = vmatpush2.bf16.msra.mxu0 %v6490
        %6614 = vmatprep.subr.bf16.mxu0 %v6489
        %6615 = vmatpush2.bf16.msra.mxu0 %v6488
        %6616 = vmatprep.subr.bf16.mxu0 %v6487
        %6617 = vmatpush2.bf16.msra.mxu0 %v6486
        %6618 = vmatprep.subr.bf16.mxu0 %v6485
        %6619 = vmatpush2.bf16.msra.mxu0 %v6484
        %6620 = vmatprep.subr.bf16.mxu0 %v6483
        %6621 = vmatpush2.bf16.msra.mxu0 %v6482
        %6622 = vmatprep.subr.bf16.mxu0 %v6481
        %6623 = vmatpush2.bf16.msra.mxu0 %v6480
        %6624 = vmatprep.mubr.bf16.mxu0 %v6187
        %6625 = vmatmul.mubr.bf16.gmra.mxu0 %v6186
        %v6626 = vpop.f32.mrf.mxu0
        %v6627 = vadd.f32 %v6265, %v6626
        %v6628 = vpop.f32.mrf.mxu0
        %v6629 = vadd.f32 %v6269, %v6628
        %v6630 = vpop.f32.mrf.mxu0
        %v6631 = vadd.f32 %v6265, %v6630
        %v6632 = vpop.f32.mrf.mxu0
        %v6633 = vadd.f32 %v6269, %v6632
        %6634 = vmatprep.mubr.bf16.mxu0 %v6191
        %6635 = vmatmul.mubr.bf16.gmra.mxu0 %v6190
        %v6636 = vpop.f32.mrf.mxu0
        %v6637 = vadd.f32 %v6265, %v6636
        %v6638 = vpop.f32.mrf.mxu0
        %v6639 = vadd.f32 %v6269, %v6638
        %v6640 = vpop.f32.mrf.mxu0
        %v6641 = vpop.f32.mrf.mxu0
        %6642 = vdwg.mxu0
        %6643 = vmatprep.subr.bf16.mxu0 %v6511
        %6644 = vmatpush1.bf16.msra.mxu0 %v6510
        %6645 = vmatprep.subr.bf16.mxu0 %v6509
        %6646 = vmatpush1.bf16.msra.mxu0 %v6508
        %6647 = vmatprep.subr.bf16.mxu0 %v6507
        %6648 = vmatpush1.bf16.msra.mxu0 %v6506
        %6649 = vmatprep.subr.bf16.mxu0 %v6505
        %6650 = vmatpush1.bf16.msra.mxu0 %v6504
        %6651 = vmatprep.subr.bf16.mxu0 %v6503
        %6652 = vmatpush1.bf16.msra.mxu0 %v6502
        %6653 = vmatprep.subr.bf16.mxu0 %v6501
        %6654 = vmatpush1.bf16.msra.mxu0 %v6500
        %6655 = vmatprep.subr.bf16.mxu0 %v6499
        %6656 = vmatpush1.bf16.msra.mxu0 %v6498
        %6657 = vmatprep.subr.bf16.mxu0 %v6497
        %6658 = vmatpush1.bf16.msra.mxu0 %v6496
        %6659 = vmatprep.subr.bf16.mxu0 %v6527
        %6660 = vmatpush2.bf16.msra.mxu0 %v6526
        %6661 = vmatprep.subr.bf16.mxu0 %v6525
        %6662 = vmatpush2.bf16.msra.mxu0 %v6524
        %6663 = vmatprep.subr.bf16.mxu0 %v6523
        %6664 = vmatpush2.bf16.msra.mxu0 %v6522
        %6665 = vmatprep.subr.bf16.mxu0 %v6521
        %6666 = vmatpush2.bf16.msra.mxu0 %v6520
        %6667 = vmatprep.subr.bf16.mxu0 %v6519
        %6668 = vmatpush2.bf16.msra.mxu0 %v6518
        %6669 = vmatprep.subr.bf16.mxu0 %v6517
        %6670 = vmatpush2.bf16.msra.mxu0 %v6516
        %6671 = vmatprep.subr.bf16.mxu0 %v6515
        %6672 = vmatpush2.bf16.msra.mxu0 %v6514
        %6673 = vmatprep.subr.bf16.mxu0 %v6513
        %6674 = vmatpush2.bf16.msra.mxu0 %v6512
        %6675 = vmatprep.mubr.bf16.mxu0 %v6189
        %6676 = vmatmul.mubr.bf16.gmra.mxu0 %v6188
        %v6677 = vpop.f32.mrf.mxu0
        %v6678 = vadd.f32 %v6627, %v6677
        %v6679 = vpop.f32.mrf.mxu0
        %v6680 = vadd.f32 %v6629, %v6679
        %v6681 = vpop.f32.mrf.mxu0
        %v6682 = vadd.f32 %v6631, %v6681
        %v6683 = vpop.f32.mrf.mxu0
        %v6684 = vadd.f32 %v6633, %v6683
        %6685 = vmatprep.mubr.bf16.mxu0 %v6193
        %6686 = vmatmul.mubr.bf16.gmra.mxu0 %v6192
        %v6687 = vpop.f32.mrf.mxu0
        %v6688 = vadd.f32 %v6637, %v6687
        %v6689 = vpop.f32.mrf.mxu0
        %v6690 = vadd.f32 %v6639, %v6689
        %v6691 = vpop.f32.mrf.mxu0
        %v6692 = vpop.f32.mrf.mxu0
        %6693 = vdwg.mxu0
        %v6694 = vadd.f32 %v5520, %v6678
        %v6695 = vadd.f32 %v5521, %v6680
        %v6696 = vadd.f32 %v5522, %v6682
        %v6697 = vadd.f32 %v5523, %v6684
        %v6698 = vadd.f32 %v5524, %v6688
        %v6699 = vadd.f32 %v5525, %v6690
        %v6700 = vld [vmem:[%s14] sm:$0x3]
        %v6701 = vld [vmem:[%s15] sm:$0x3]
        %v6702 = vadd.f32 %v6694, %v6695
        %6703 = vadd.xlane.f32.xlu0 %v6702
        %v6704 = vpop.xlane.xlu0 %6703
        %v6705 = vadd.f32 %v6696, %v6697
        %6706 = vadd.xlane.f32.xlu0 %v6705
        %v6707 = vpop.xlane.xlu0 %6706
        %v6708 = vadd.f32 %v6698, %v6699
        %6709 = vadd.xlane.f32.xlu0 %v6708
        %v6710 = vpop.xlane.xlu0 %6709
        %v6711 = vmul.f32 %v6704, %v794
        %v6712 = vmul.f32 %v6707, %v794
        %v6713 = vmul.f32 %v6710, %v794
        %v6714 = vsub.f32 %v6694, %v6711
        %v6715 = vsub.f32 %v6695, %v6711
        %v6716 = vsub.f32 %v6696, %v6712
        %v6717 = vsub.f32 %v6697, %v6712
        %v6718 = vsub.f32 %v6698, %v6713
        %v6719 = vsub.f32 %v6699, %v6713
        %v6720 = vmul.f32 %v6714, %v6714
        %v6721 = vmul.f32 %v6715, %v6715
        %v6722 = vmul.f32 %v6716, %v6716
        %v6723 = vmul.f32 %v6717, %v6717
        %v6724 = vmul.f32 %v6718, %v6718
        %v6725 = vmul.f32 %v6719, %v6719
        %v6726 = vadd.f32 %v6720, %v6721
        %6727 = vadd.xlane.f32.xlu0 %v6726
        %v6728 = vpop.xlane.xlu0 %6727
        %v6729 = vadd.f32 %v6722, %v6723
        %6730 = vadd.xlane.f32.xlu0 %v6729
        %v6731 = vpop.xlane.xlu0 %6730
        %v6732 = vadd.f32 %v6724, %v6725
        %6733 = vadd.xlane.f32.xlu0 %v6732
        %v6734 = vpop.xlane.xlu0 %6733
        %v6735 = vmul.f32 %v6728, %v794
        %v6736 = vmul.f32 %v6731, %v794
        %v6737 = vmul.f32 %v6734, %v794
        %v6738 = vadd.f32 %v6735, 1e-06
        %v6739 = vadd.f32 %v6736, 1e-06
        %v6740 = vadd.f32 %v6737, 1e-06
        %v6741 = vrsqrt.pop %v6738
        %v6742 = vrsqrt.pop %v6739
        %v6743 = vrsqrt.pop %v6740
        %v6744 = vmul.f32 %v6714, %v6741
        %v6745 = vmul.f32 %v6715, %v6741
        %v6746 = vmul.f32 %v6716, %v6742
        %v6747 = vmul.f32 %v6717, %v6742
        %v6748 = vmul.f32 %v6718, %v6743
        %v6749 = vmul.f32 %v6719, %v6743
        %v6751 = vlaneseq
        %v6752 = vshrl.u32 %v6751, 7
        %v6753 = vsub.s32 0, %v6752
        %v6754 = vrot.slane %v6700, %v6753
        %v6755 = vlaneseq
        %v6756 = vshrl.u32 %v6755, 7
        %v6757 = vsub.s32 1, %v6756
        %v6758 = vrot.slane %v6700, %v6757
        %v6761 = vmul.f32 %v6744, %v6754
        %v6762 = vmul.f32 %v6745, %v6758
        %v6763 = vmul.f32 %v6746, %v6754
        %v6764 = vmul.f32 %v6747, %v6758
        %v6765 = vmul.f32 %v6748, %v6754
        %v6766 = vmul.f32 %v6749, %v6758
        %v6768 = vlaneseq
        %v6769 = vshrl.u32 %v6768, 7
        %v6770 = vsub.s32 0, %v6769
        %v6771 = vrot.slane %v6701, %v6770
        %v6772 = vlaneseq
        %v6773 = vshrl.u32 %v6772, 7
        %v6774 = vsub.s32 1, %v6773
        %v6775 = vrot.slane %v6701, %v6774
        %v6778 = vadd.f32 %v6761, %v6771
        %v6779 = vadd.f32 %v6762, %v6775
        %v6780 = vadd.f32 %v6763, %v6771
        %v6781 = vadd.f32 %v6764, %v6775
        %v6782 = vadd.f32 %v6765, %v6771
        %v6783 = vadd.f32 %v6766, %v6775
        %s6784 = sld [smem:[#allocation19]]
        %v6785 = vstv %s6784
        %v6786 = vmul.f32 %v6785, %v6778
        %v6787 = vmul.f32 %v6785, %v6779
        %v6788 = vmul.f32 %v6785, %v6780
        %v6789 = vmul.f32 %v6785, %v6781
        %v6790 = vmul.f32 %v6785, %v6782
        %v6791 = vmul.f32 %v6785, %v6783
        %v6792 = vadd.f32 %v6786, 0.0
        %v6793 = vadd.f32 %v6787, 0.0
        %v6794 = vadd.f32 %v6788, 0.0
        %v6795 = vadd.f32 %v6789, 0.0
        %v6796 = vadd.f32 %v6790, 0.0
        %v6797 = vadd.f32 %v6791, 0.0
        %s6798 = sld [smem:[#allocation19 + $0x1]]
        %v6799 = vstv %s6798
        %v6800 = vmul.f32 %v6799, %v6778
        %v6801 = vmul.f32 %v6799, %v6779
        %v6802 = vmul.f32 %v6799, %v6780
        %v6803 = vmul.f32 %v6799, %v6781
        %v6804 = vmul.f32 %v6799, %v6782
        %v6805 = vmul.f32 %v6799, %v6783
        %v6812 = vrot.slane %v6800, 1
        %v6813 = vrot.slane %v6801, 1
        %v6814 = vrot.slane %v6802, 1
        %v6815 = vrot.slane %v6803, 1
        %v6816 = vrot.slane %v6804, 1
        %v6817 = vrot.slane %v6805, 1
        %v6824 = vadd.f32 %v6792, %v6812
        %v6825 = vadd.f32 %v6793, %v6813
        %v6826 = vadd.f32 %v6794, %v6814
        %v6827 = vadd.f32 %v6795, %v6815
        %v6828 = vadd.f32 %v6796, %v6816
        %v6829 = vadd.f32 %v6797, %v6817
        %s6830 = sld [smem:[#allocation19 + $0x2]]
        %v6831 = vstv %s6830
        %v6832 = vmul.f32 %v6831, %v6778
        %v6833 = vmul.f32 %v6831, %v6779
        %v6834 = vmul.f32 %v6831, %v6780
        %v6835 = vmul.f32 %v6831, %v6781
        %v6836 = vmul.f32 %v6831, %v6782
        %v6837 = vmul.f32 %v6831, %v6783
        %v6844 = vrot.slane %v6832, 2
        %v6845 = vrot.slane %v6833, 2
        %v6846 = vrot.slane %v6834, 2
        %v6847 = vrot.slane %v6835, 2
        %v6848 = vrot.slane %v6836, 2
        %v6849 = vrot.slane %v6837, 2
        %v6856 = vadd.f32 %v6824, %v6844
        %v6857 = vadd.f32 %v6825, %v6845
        %v6858 = vadd.f32 %v6826, %v6846
        %v6859 = vadd.f32 %v6827, %v6847
        %v6860 = vadd.f32 %v6828, %v6848
        %v6861 = vadd.f32 %v6829, %v6849
        %s6862 = sld [smem:[#allocation19 + $0x3]]
        %v6863 = vstv %s6862
        %v6864 = vmul.f32 %v6863, %v6778
        %v6865 = vmul.f32 %v6863, %v6779
        %v6866 = vmul.f32 %v6863, %v6780
        %v6867 = vmul.f32 %v6863, %v6781
        %v6868 = vmul.f32 %v6863, %v6782
        %v6869 = vmul.f32 %v6863, %v6783
        %v6876 = vrot.slane %v6864, 3
        %v6877 = vrot.slane %v6865, 3
        %v6878 = vrot.slane %v6866, 3
        %v6879 = vrot.slane %v6867, 3
        %v6880 = vrot.slane %v6868, 3
        %v6881 = vrot.slane %v6869, 3
        %v6888 = vadd.f32 %v6856, %v6876
        %v6889 = vadd.f32 %v6857, %v6877
        %v6890 = vadd.f32 %v6858, %v6878
        %v6891 = vadd.f32 %v6859, %v6879
        %v6892 = vadd.f32 %v6860, %v6880
        %v6893 = vadd.f32 %v6861, %v6881
        %s6894 = sld [smem:[#allocation19 + $0x4]]
        %v6895 = vstv %s6894
        %v6896 = vmul.f32 %v6895, %v6778
        %v6897 = vmul.f32 %v6895, %v6779
        %v6898 = vmul.f32 %v6895, %v6780
        %v6899 = vmul.f32 %v6895, %v6781
        %v6900 = vmul.f32 %v6895, %v6782
        %v6901 = vmul.f32 %v6895, %v6783
        %v6908 = vrot.slane %v6896, 4
        %v6909 = vrot.slane %v6897, 4
        %v6910 = vrot.slane %v6898, 4
        %v6911 = vrot.slane %v6899, 4
        %v6912 = vrot.slane %v6900, 4
        %v6913 = vrot.slane %v6901, 4
        %v6920 = vadd.f32 %v6888, %v6908
        %v6921 = vadd.f32 %v6889, %v6909
        %v6922 = vadd.f32 %v6890, %v6910
        %v6923 = vadd.f32 %v6891, %v6911
        %v6924 = vadd.f32 %v6892, %v6912
        %v6925 = vadd.f32 %v6893, %v6913
        %s6926 = sld [smem:[#allocation19 + $0x5]]
        %v6927 = vstv %s6926
        %v6928 = vmul.f32 %v6927, %v6778
        %v6929 = vmul.f32 %v6927, %v6779
        %v6930 = vmul.f32 %v6927, %v6780
        %v6931 = vmul.f32 %v6927, %v6781
        %v6932 = vmul.f32 %v6927, %v6782
        %v6933 = vmul.f32 %v6927, %v6783
        %v6940 = vrot.slane %v6928, 5
        %v6941 = vrot.slane %v6929, 5
        %v6942 = vrot.slane %v6930, 5
        %v6943 = vrot.slane %v6931, 5
        %v6944 = vrot.slane %v6932, 5
        %v6945 = vrot.slane %v6933, 5
        %v6952 = vadd.f32 %v6920, %v6940
        %v6953 = vadd.f32 %v6921, %v6941
        %v6954 = vadd.f32 %v6922, %v6942
        %v6955 = vadd.f32 %v6923, %v6943
        %v6956 = vadd.f32 %v6924, %v6944
        %v6957 = vadd.f32 %v6925, %v6945
        %s6958 = sld [smem:[#allocation19 + $0x6]]
        %v6959 = vstv %s6958
        %v6960 = vmul.f32 %v6959, %v6778
        %v6961 = vmul.f32 %v6959, %v6779
        %v6962 = vmul.f32 %v6959, %v6780
        %v6963 = vmul.f32 %v6959, %v6781
        %v6964 = vmul.f32 %v6959, %v6782
        %v6965 = vmul.f32 %v6959, %v6783
        %v6972 = vrot.slane %v6960, 6
        %v6973 = vrot.slane %v6961, 6
        %v6974 = vrot.slane %v6962, 6
        %v6975 = vrot.slane %v6963, 6
        %v6976 = vrot.slane %v6964, 6
        %v6977 = vrot.slane %v6965, 6
        %v6984 = vadd.f32 %v6952, %v6972
        %v6985 = vadd.f32 %v6953, %v6973
        %v6986 = vadd.f32 %v6954, %v6974
        %v6987 = vadd.f32 %v6955, %v6975
        %v6988 = vadd.f32 %v6956, %v6976
        %v6989 = vadd.f32 %v6957, %v6977
        %s6990 = sld [smem:[#allocation19 + $0x7]]
        %v6991 = vstv %s6990
        %v6992 = vmul.f32 %v6991, %v6778
        %v6993 = vmul.f32 %v6991, %v6779
        %v6994 = vmul.f32 %v6991, %v6780
        %v6995 = vmul.f32 %v6991, %v6781
        %v6996 = vmul.f32 %v6991, %v6782
        %v6997 = vmul.f32 %v6991, %v6783
        %v7004 = vrot.slane %v6992, 7
        %v7005 = vrot.slane %v6993, 7
        %v7006 = vrot.slane %v6994, 7
        %v7007 = vrot.slane %v6995, 7
        %v7008 = vrot.slane %v6996, 7
        %v7009 = vrot.slane %v6997, 7
        %v7016 = vadd.f32 %v6984, %v7004
        %v7017 = vadd.f32 %v6985, %v7005
        %v7018 = vadd.f32 %v6986, %v7006
        %v7019 = vadd.f32 %v6987, %v7007
        %v7020 = vadd.f32 %v6988, %v7008
        %v7021 = vadd.f32 %v6989, %v7009
        %s7022 = sld [smem:[#allocation19 + $0x8]]
        %v7023 = vstv %s7022
        %v7024 = vadd.f32 %v7016, %v7023
        %v7025 = vadd.f32 %v7017, %v7023
        %v7026 = vadd.f32 %v7018, %v7023
        %v7027 = vadd.f32 %v7019, %v7023
        %v7028 = vadd.f32 %v7020, %v7023
        %v7029 = vadd.f32 %v7021, %v7023
        %v7030 = vld [vmem:[%s16] sm:$0x3]
        %v7031 = vld [vmem:[%s17] sm:$0x3]
        %v7033 = vlaneseq
        %v7034 = vshrl.u32 %v7033, 7
        %v7035 = vsub.s32 0, %v7034
        %v7036 = vrot.slane %v7031, %v7035
        %v7037 = vlaneseq
        %v7038 = vshrl.u32 %v7037, 7
        %v7039 = vsub.s32 1, %v7038
        %v7040 = vrot.slane %v7031, %v7039
        %v7043 = vmul.f32 %v7024, %v7036
        %v7044 = vmul.f32 %v7025, %v7040
        %v7045 = vmul.f32 %v7026, %v7036
        %v7046 = vmul.f32 %v7027, %v7040
        %v7047 = vmul.f32 %v7028, %v7036
        %v7048 = vmul.f32 %v7029, %v7040
        %v7055 = vrot.slane %v7045, 7
        %vm7056 = vcmask 1041409
        %v7057 = vsel %vm7056, %v7055, %v7043
        %v7058 = vrot.slane %v7047, 6
        %vm7059 = vcmask 1042434
        %v7060 = vsel %vm7059, %v7058, %v7057
        %v7061 = vrot.slane %v7046, 7
        %v7062 = vsel %vm7056, %v7061, %v7044
        %v7063 = vrot.slane %v7048, 6
        %v7064 = vsel %vm7059, %v7063, %v7062
        %vm7067 = vcmask 1042432
        %v7068 = vsel %vm7067, %v7060, 0.0
        %v7069 = vsel %vm7067, %v7064, 0.0
        %v7070 = vadd.f32 %v7068, %v7069
        %7071 = vadd.xlane.f32.xlu0 %v7070
        %v7072 = vpop.xlane.xlu0 %7071
        %s7073 = sld [smem:[#allocation19 + $0x9]]
        %v7074 = vstv %s7073
        %v7075 = vadd.f32 %v7072, %v7074
        %v7077 = vlaneseq
        %v7078 = vshrl.u32 %v7077, 7
        %v7079 = vsub.s32 0, %v7078
        %v7080 = vrot.slane %v7030, %v7079
        %v7081 = vlaneseq
        %v7082 = vshrl.u32 %v7081, 7
        %v7083 = vsub.s32 1, %v7082
        %v7084 = vrot.slane %v7030, %v7083
        %v7087 = vmul.f32 %v6778, %v7080
        %v7088 = vmul.f32 %v6779, %v7084
        %v7089 = vmul.f32 %v6780, %v7080
        %v7090 = vmul.f32 %v6781, %v7084
        %v7091 = vmul.f32 %v6782, %v7080
        %v7092 = vmul.f32 %v6783, %v7084
        %v7093 = vadd.f32 %v7087, %v7088
        %7094 = vadd.xlane.f32.xlu0 %v7093
        %v7095 = vpop.xlane.xlu0 %7094
        %v7096 = vadd.f32 %v7089, %v7090
        %7097 = vadd.xlane.f32.xlu0 %v7096
        %v7098 = vpop.xlane.xlu0 %7097
        %v7099 = vadd.f32 %v7091, %v7092
        %7100 = vadd.xlane.f32.xlu0 %v7099
        %v7101 = vpop.xlane.xlu0 %7100
        %v7103 = vlaneseq
        %v7104 = vshrl.u32 %v7103, 7
        %v7105 = vsub.s32 0, %v7104
        %v7106 = vrot.slane %v7075, %v7105
        %v7107 = vlaneseq
        %v7108 = vshrl.u32 %v7107, 7
        %v7109 = vsub.s32 1, %v7108
        %v7110 = vrot.slane %v7075, %v7109
        %v7111 = vlaneseq
        %v7112 = vshrl.u32 %v7111, 7
        %v7113 = vsub.s32 2, %v7112
        %v7114 = vrot.slane %v7075, %v7113
        %v7118 = vadd.f32 %v7095, %v7106
        %v7119 = vadd.f32 %v7098, %v7110
        %v7120 = vadd.f32 %v7101, %v7114
        %7122 = vset.pattern.permute.xlu0 0
        %7123 = vperm.xlu0 %7122, %v7118
        %v7124 = vpop.permute.xlu0 %7123
        %7127 = vset.pattern.permute.xlu0 0
        %7128 = vperm.xlu0 %7127, %v7119
        %v7129 = vpop.permute.xlu0 %7128
        %7132 = vset.pattern.permute.xlu0 0
        %7133 = vperm.xlu0 %7132, %v7120
        %v7134 = vpop.permute.xlu0 %7133
        %v7136 = vmul.f32 %v6778, %v7124
        %v7137 = vmul.f32 %v6779, %v7124
        %v7138 = vmul.f32 %v6780, %v7129
        %v7139 = vmul.f32 %v6781, %v7129
        %v7140 = vmul.f32 %v6782, %v7134
        %v7141 = vmul.f32 %v6783, %v7134
        %v7142 = vrot.slane %v7136, 4
        %v7143 = vadd.f32 %v7136, %v7142
        %v7144 = vrot.slane %v7143, 2
        %v7145 = vadd.f32 %v7143, %v7144
        %v7146 = vrot.slane %v7145, 1
        %v7147 = vadd.f32 %v7145, %v7146
        %v7148 = vrot.slane %v7137, 4
        %v7149 = vadd.f32 %v7137, %v7148
        %v7150 = vrot.slane %v7149, 2
        %v7151 = vadd.f32 %v7149, %v7150
        %v7152 = vrot.slane %v7151, 1
        %v7153 = vadd.f32 %v7151, %v7152
        %v7154 = vrot.slane %v7138, 4
        %v7155 = vadd.f32 %v7138, %v7154
        %v7156 = vrot.slane %v7155, 2
        %v7157 = vadd.f32 %v7155, %v7156
        %v7158 = vrot.slane %v7157, 1
        %v7159 = vadd.f32 %v7157, %v7158
        %v7160 = vrot.slane %v7139, 4
        %v7161 = vadd.f32 %v7139, %v7160
        %v7162 = vrot.slane %v7161, 2
        %v7163 = vadd.f32 %v7161, %v7162
        %v7164 = vrot.slane %v7163, 1
        %v7165 = vadd.f32 %v7163, %v7164
        %v7166 = vrot.slane %v7140, 4
        %v7167 = vadd.f32 %v7140, %v7166
        %v7168 = vrot.slane %v7167, 2
        %v7169 = vadd.f32 %v7167, %v7168
        %v7170 = vrot.slane %v7169, 1
        %v7171 = vadd.f32 %v7169, %v7170
        %v7172 = vrot.slane %v7141, 4
        %v7173 = vadd.f32 %v7141, %v7172
        %v7174 = vrot.slane %v7173, 2
        %v7175 = vadd.f32 %v7173, %v7174
        %v7176 = vrot.slane %v7175, 1
        %v7177 = vadd.f32 %v7175, %v7176
        %v7178 = vlaneseq
        %v7179 = vand.u32 %v7178, 127
        %v7180 = vlaneseq
        %v7181 = vshrl.u32 %v7180, 7
        %v7182 = vsub.s32 %v7179, %v7181
        %v7183 = vrot.slane %v7124, %v7182
        %v7184 = vlaneseq
        %v7185 = vshrl.u32 %v7184, 7
        %v7186 = vsub.s32 %v7179, %v7185
        %v7187 = vrot.slane %v7129, %v7186
        %v7188 = vlaneseq
        %v7189 = vshrl.u32 %v7188, 7
        %v7190 = vsub.s32 %v7179, %v7189
        %v7191 = vrot.slane %v7134, %v7190
        %v7192 = vsel %vm7056, %v7187, %v7183
        %v7193 = vsel %vm7059, %v7191, %v7192
        %vm7195 = vcmask 59392
        %v7196 = vsel %vm7195, %v7193, 0.0
        %7197 = vadd.xlane.f32.xlu0 %v7196
        %v7198 = vpop.xlane.xlu0 %7197
        %v7199 = vrcp.pop %v7198
        %v7201 = vrot.slane %v7199, 1
        %v7202 = vrot.slane %v7199, 2
        %v7206 = vmul.f32 %v7147, %v7199
        %v7207 = vmul.f32 %v7153, %v7199
        %v7208 = vmul.f32 %v7159, %v7201
        %v7209 = vmul.f32 %v7165, %v7201
        %v7210 = vmul.f32 %v7171, %v7202
        %v7211 = vmul.f32 %v7177, %v7202
        %v7218 = vcombine.low %v7206, %v7207
        %v7219 = vcombine.low %v7208, %v7209
        %v7220 = vcombine.low %v7210, %v7211
        %v7221 = vrot.slane %v7219, 7
        %v7222 = vsel %vm7056, %v7221, %v7218
        %vm7223 = vcmask 1045509
        %v7224 = vsel %vm7223, %v7221, %v7222
        %v7225 = vrot.slane %v7220, 6
        %v7226 = vsel %vm7059, %v7225, %v7224
        %vm7227 = vcmask 1046534
        %v7228 = vsel %vm7227, %v7225, %v7226
        %7230 = vst [vmem:[%s767] sm:$0x77] %v7228
        %p7231 = scmp.lt.s32.totalorder %s39, 1
        %s7232 = scalar_select %p7231, %s39, 1
        %s7233 = smul.addr %s7232, 2
        %s7234 = smul.addr %s7233, 4
        %s7235 = scalar_lea.vmem %s19, %s7234
        // Predicated region
        $region141: #{tpu_custom_call.1} parent=95 // pred_check
          %p7236 = pneg %p461
        $region142: #{tpu_custom_call.1} parent=95 // pred_check_branch
          %7238 = sbr.rel (%p7236) target = $region144
        $region143: #{tpu_custom_call.1} parent=95 // pred_region
          _
        $region144: #{tpu_custom_call.1} parent=95 // pred_fallthru
          _
      $region96: #{tpu_custom_call.1} parent=5 // pred_fallthru
        _
      %p7239 = scmp.le.s32.totalorder 2, %s34
      // Predicated region
      $region145: #{tpu_custom_call.1} parent=5 // pred_check
        %p7240 = pneg %p7239
      $region146: #{tpu_custom_call.1} parent=5 // pred_check_branch
        %7242 = sbr.rel (%p7240) target = $region148
      $region147: #{tpu_custom_call.1} parent=5 // pred_region
        %s7243 = ssub.s32 %s34, 2
        // Predicated region
        $region149: #{tpu_custom_call.1} parent=147 // pred_check
          %p7244 = pneg %p467
        $region150: #{tpu_custom_call.1} parent=147 // pred_check_branch
          %7246 = sbr.rel (%p7244) target = $region152
        $region151: #{tpu_custom_call.1} parent=147 // pred_region
          %p7247 = scmp.lt.s32.totalorder %s40, 1
          %s7248 = scalar_select %p7247, %s40, 1
          %s7249 = smul.addr %s7248, 2
          %s7250 = smul.addr %s7249, 4
          %s7251 = scalar_lea.vmem %s19, %s7250
        $region152: #{tpu_custom_call.1} parent=147 // pred_fallthru
          _
      $region148: #{tpu_custom_call.1} parent=5 // pred_fallthru
        _
    $region6: #{tpu_custom_call.1} parent=1 // loop_footer
      %s38 = sadd.s32 1, %s34
    $region7: #{tpu_custom_call.1} parent=1 // loop_footer_branch
      %33 = sbr.rel target = $region3
    $region8: #{tpu_custom_call.1} parent=1 // loop_exit
      _
    %7252 = vsyncpa [#allocation3], 1
    %s7253 = scalar_lea.sflag [#allocation3], 1
    %7254 = vsyncpa %s7253, 1
    %7255 = vsyncpa [#allocation6], 1
    %7256 = vsyncpa [#allocation9], 1
    %7257 = vsyncpa [#allocation12], 1
    %7258 = vsyncpa [#allocation15], 1
    %7259 = vsyncpa [#allocation18], 1
    %7260 = vsyncpa [#allocation4], 1
    %s7261 = scalar_lea.sflag [#allocation4], 1
    %7262 = vsyncpa %s7261, 1

</llo_original>
